<compile_context>
chip_gen: v5e
topology: v5e:2x2
jax: 0.10.0
libtpu: 0.0.40
codegen_flags: <defaults>
</compile_context>

<pallas_src>
import functools

import jax
import jax.numpy as jnp
from jax.experimental import pallas as pl
from jax.experimental.pallas import tpu as pltpu

IN_FEATURES = 1536          # efficientnet_b3 classifier.in_features
LANE = 128


def _round_up(x, m):
    return (x + m - 1) // m * m


# ---------------------------------------------------------------------------
# Fused backbone + GAP + classifier kernel (one M-tile of one image per grid step)
# ---------------------------------------------------------------------------
def _fused_backbone_kernel(p_ref, ws_ref, bs_ref, we_ref, be_ref, wph_ref, bph_ref,
                           wc_ref, bc_ref,
                           o_ref, acc_ref, *, hw, tm, head_dtype):
    m = pl.program_id(1)

    @pl.when(m == 0)
    def _init():
        acc_ref[...] = jnp.zeros_like(acc_ref)

    x = p_ref[...]                                                        # (TM, Kp) bf16

    # stem conv (im2col matmul) + folded BN + SiLU
    h = jnp.dot(x, ws_ref[...], preferred_element_type=jnp.float32) + bs_ref[...]
    h = (h * jax.nn.sigmoid(h)).astype(jnp.bfloat16)                      # (TM, 32)

    # simplified MBConv: 1x1 expand (SiLU); the linear 1x1 project is folded into the head
    h = jnp.dot(h, we_ref[...], preferred_element_type=jnp.float32) + be_ref[...]
    h = (h * jax.nn.sigmoid(h)).astype(jnp.bfloat16)                      # (TM, 128)

    # fused project·head 1x1 conv to 1536 features (K=128 contraction) + SiLU -- stays in VMEM
    f = jnp.dot(h, wph_ref[...], preferred_element_type=jnp.float32) + bph_ref[...]
    f = f.astype(head_dtype)
    f = f * jax.nn.sigmoid(f)                                             # (TM, 1536)

    # masked partial global-average-pool as an MXU dot: (1, TM) 0/1 mask x (TM, 1536).
    # Padded rows (nonzero only via biases) are zeroed by the mask; /HW is applied at finalize.
    col = m * tm + jax.lax.broadcasted_iota(jnp.int32, (1, tm), 1)
    mask_row = jnp.where(col < hw, 1.0, 0.0).astype(head_dtype)           # (1, TM)
    acc_ref[...] += jnp.dot(mask_row, f, preferred_element_type=jnp.float32)

    @pl.when(m == pl.num_programs(1) - 1)
    def _finalize():
        pooled = (acc_ref[...] * (1.0 / hw)).astype(jnp.bfloat16)         # GAP mean, (1, 1536)
        logits = jnp.dot(pooled, wc_ref[...],
                         preferred_element_type=jnp.float32) + bc_ref[...]
        o_ref[...] = logits.astype(o_ref.dtype)                           # (1, NC_pad)


def fused_backbone_head(patches, params, *, hw, tm, head_dtype=jnp.float32):
    """patches: (B, HW_pad, Kp) bf16 -> logits (B, NC_pad) f32."""
    B, hw_pad, kp = patches.shape
    assert hw_pad % tm == 0
    n_m = hw_pad // tm
    nc_pad = params["w_cls"].shape[1]

    def wspec(arr):
        return pl.BlockSpec(arr.shape, lambda b, m: (0, 0))   # resident full-weight block

    grid_spec = pltpu.PrefetchScalarGridSpec(
        num_scalar_prefetch=0,
        grid=(B, n_m),
        in_specs=[
            pl.BlockSpec((None, tm, kp), lambda b, m: (b, m, 0)),          # patch M-tile
            wspec(params["w_stem"]), wspec(params["b_stem"]),
            wspec(params["w_exp"]),  wspec(params["b_exp"]),
            wspec(params["w_ph"]),   wspec(params["b_ph"]),
            wspec(params["w_cls"]),  wspec(params["b_cls"]),
        ],
        out_specs=pl.BlockSpec((None, 1, nc_pad), lambda b, m: (b, 0, 0)),
        scratch_shapes=[pltpu.VMEM((1, IN_FEATURES), jnp.float32)],        # GAP accumulator
    )

    out = pl.pallas_call(
        functools.partial(_fused_backbone_kernel, hw=hw, tm=tm, head_dtype=head_dtype),
        out_shape=jax.ShapeDtypeStruct((B, 1, nc_pad), jnp.float32),
        grid_spec=grid_spec,
        compiler_params=pltpu.CompilerParams(
            dimension_semantics=("parallel", "arbitrary")),
    )(patches,
      params["w_stem"], params["b_stem"],
      params["w_exp"], params["b_exp"],
      params["w_ph"], params["b_ph"],
      params["w_cls"], params["b_cls"])
    return out[:, 0, :]


# ---------------------------------------------------------------------------
# Glue (plain JAX): im2col for the 3x3 / stride-2 / pad-1 stem conv (runs in bf16)
# ---------------------------------------------------------------------------
def im2col_3x3_s2_pad1(x_nhwc):
    """Extract 3x3 / stride-2 / pad-1 patches -> (N, Ho*Wo, 9*Cin); handles odd H/W correctly."""
    N, H, W, C = x_nhwc.shape
    Ho = (H - 1) // 2 + 1          # == ceil(H/2), matches conv(3, s=2, p=1) output size
    Wo = (W - 1) // 2 + 1
    xp = jnp.pad(x_nhwc, ((0, 0), (1, 1), (1, 1), (0, 0)))
    cols = []
    for kh in range(3):
        for kw in range(3):
            cols.append(xp[:, kh:kh + 2 * Ho - 1:2, kw:kw + 2 * Wo - 1:2, :])
    patches = jnp.concatenate(cols, axis=-1)                              # (N, Ho, Wo, 9*C)
    return patches.reshape(N, Ho * Wo, 9 * C), (Ho, Wo)


# ---------------------------------------------------------------------------
# Model: MyModel(num_classes) parameters + forward
# ---------------------------------------------------------------------------
def init_params(key, num_classes, c_in=3, c_stem=32, c_exp=128, c_proj=32):
    nc_pad = _round_up(num_classes, LANE)
    ks = jax.random.split(key, 6)

    def w(k, shape, fan_in):
        return jax.random.normal(k, shape, jnp.float32) / jnp.sqrt(fan_in)

    w_stem = w(ks[0], (9 * c_in, c_stem), 9 * c_in)
    w_exp = w(ks[1], (c_stem, c_exp), c_stem)
    w_proj = w(ks[2], (c_exp, c_proj), c_exp)
    w_head = w(ks[3], (c_proj, IN_FEATURES), c_proj)
    b_proj = jnp.zeros((1, c_proj), jnp.float32)
    b_head = jnp.zeros((1, IN_FEATURES), jnp.float32)

    # Fold the linear 1x1 project into the head 1x1 conv (perf review): one fused
    # (c_exp -> 1536) matmul with K=128 instead of project(K=128->32) + head(K=32->1536).
    w_ph = w_proj @ w_head                                                # (c_exp, 1536)
    b_ph = b_proj @ w_head + b_head                                       # (1, 1536)

    # replaced classifier nn.Linear(1536, num_classes); columns padded to 128 lanes with zeros
    w_cls = jnp.pad(w(ks[4], (IN_FEATURES, num_classes), IN_FEATURES),
                    ((0, 0), (0, nc_pad - num_classes)))

    return {
        "w_stem": w_stem.astype(jnp.bfloat16),
        "b_stem": jnp.zeros((1, c_stem), jnp.float32),
        "w_exp":  w_exp.astype(jnp.bfloat16),
        "b_exp":  jnp.zeros((1, c_exp), jnp.float32),
        "w_ph":   w_ph.astype(jnp.bfloat16),
        "b_ph":   b_ph.astype(jnp.float32),
        "w_cls":  w_cls.astype(jnp.bfloat16),
        "b_cls":  jnp.zeros((1, nc_pad), jnp.float32),
    }


@functools.partial(jax.jit, static_argnames=("num_classes", "tm", "head_silu_bf16"))
def my_model_forward(x_nchw, params, *, num_classes, tm=512, head_silu_bf16=False):
    # NCHW (PyTorch) -> NHWC, fused with the bf16 cast so the im2col concat/pad glue
    # moves half the bytes.
    x = jnp.transpose(x_nchw, (0, 2, 3, 1)).astype(jnp.bfloat16)

    # stem im2col (plain JAX; Cin=3 so traffic is small)
    patches, (Ho, Wo) = im2col_3x3_s2_pad1(x)                             # (B, HW, 27) bf16
    B, hw, kp = patches.shape

    # pad HW to a multiple of the M-tile; padded rows are masked out of the GAP dot in-kernel
    hw_pad = _round_up(hw, tm)
    if hw_pad != hw:
        patches = jnp.pad(patches, ((0, 0), (0, hw_pad - hw), (0, 0)))

    # bf16 head SiLU is an EUP/VPU win on v6e/v7x; keep f32 on v5e (no bf16 VPU/EUP).
    head_dtype = jnp.bfloat16 if head_silu_bf16 else jnp.float32

    logits_pad = fused_backbone_head(patches, params, hw=hw, tm=tm,
                                     head_dtype=head_dtype)               # (B, NC_pad) f32
    return logits_pad[:, :num_classes]


# ---------------------------------------------------------------------------
# Demo
# ---------------------------------------------------------------------------
if __name__ == "__main__":
    key = jax.random.PRNGKey(0)
    k_x, k_p = jax.random.split(key)

    num_classes = 10
    batch, c_in, spatial = 2, 3, 32                   # small demo image (B3 normally 300x300)
    x = jax.random.normal(k_x, (batch, c_in, spatial, spatial), jnp.float32)   # NCHW, like PyTorch

    params = init_params(k_p, num_classes)
    # tm=128 -> 2 M-tiles per image: exercises the VMEM GAP accumulator across grid steps.
    # (Default tm=512 for real 300x300 inputs.)
    logits = my_model_forward(x, params, num_classes=num_classes, tm=128)
    jax.block_until_ready(logits)

    assert logits.shape == (batch, num_classes), logits.shape
    assert logits.dtype == jnp.float32
    assert bool(jnp.all(jnp.isfinite(logits)))
    print("KERNEL_OK")
</pallas_src>

<mosaic_0001>
module attributes {stable_mosaic.version = 11 : i64} {
  func.func @_fused_backbone_kernel(%arg0: i32, %arg1: i32, %arg2: memref<1x128x27xbf16, #tpu.memory_space<vmem>>, %arg3: memref<27x32xbf16, #tpu.memory_space<vmem>>, %arg4: memref<1x32xf32, #tpu.memory_space<vmem>>, %arg5: memref<32x128xbf16, #tpu.memory_space<vmem>>, %arg6: memref<1x128xf32, #tpu.memory_space<vmem>>, %arg7: memref<128x1536xbf16, #tpu.memory_space<vmem>>, %arg8: memref<1x1536xf32, #tpu.memory_space<vmem>>, %arg9: memref<1536x128xbf16, #tpu.memory_space<vmem>>, %arg10: memref<1x128xf32, #tpu.memory_space<vmem>>, %arg11: memref<1x1x128xf32, #tpu.memory_space<vmem>>, %arg12: memref<1x1536xf32, #tpu.memory_space<vmem>>) attributes {dimension_semantics = [#tpu.dimension_semantics<parallel>, #tpu.dimension_semantics<arbitrary>], iteration_bounds = array<i64: 2, 2>, scalar_prefetch = 0 : i64, scratch_operands = 1 : i64, tpu.core_type = #tpu.core_type<tc>, window_params = [{transform_indices = @transform_0, window_bounds = array<i64: 1, 128, 27>}, {pipeline_mode = #tpu.pipeline_mode<synchronous>, transform_indices = @transform_1, window_bounds = array<i64: 27, 32>}, {pipeline_mode = #tpu.pipeline_mode<synchronous>, transform_indices = @transform_2, window_bounds = array<i64: 1, 32>}, {pipeline_mode = #tpu.pipeline_mode<synchronous>, transform_indices = @transform_3, window_bounds = array<i64: 32, 128>}, {pipeline_mode = #tpu.pipeline_mode<synchronous>, transform_indices = @transform_4, window_bounds = array<i64: 1, 128>}, {pipeline_mode = #tpu.pipeline_mode<synchronous>, transform_indices = @transform_5, window_bounds = array<i64: 128, 1536>}, {pipeline_mode = #tpu.pipeline_mode<synchronous>, transform_indices = @transform_6, window_bounds = array<i64: 1, 1536>}, {pipeline_mode = #tpu.pipeline_mode<synchronous>, transform_indices = @transform_7, window_bounds = array<i64: 1536, 128>}, {pipeline_mode = #tpu.pipeline_mode<synchronous>, transform_indices = @transform_8, window_bounds = array<i64: 1, 128>}, {transform_indices = @transform_9, window_bounds = array<i64: 1, 1, 128>}]} {
    %c0_i32 = arith.constant 0 : i32
    %0 = arith.cmpi eq, %arg1, %c0_i32 : i32
    %1 = arith.extui %0 : i1 to i32
    %c0_i32_0 = arith.constant 0 : i32
    %2 = arith.cmpi ne, %1, %c0_i32_0 : i32
    scf.if %2 {
      %cst_28 = arith.constant 0.000000e+00 : f32
      %56 = vector.broadcast %cst_28 : f32 to vector<1x1536xf32>
      %c0_29 = arith.constant 0 : index
      %c0_30 = arith.constant 0 : index
      %57 = vector.load %arg12[%c0_29, %c0_30] : memref<1x1536xf32, #tpu.memory_space<vmem>>, vector<1x1536xf32>
      tpu.vector_store %arg12[%c0_29, %c0_30], %56 {strides = array<i32>} : memref<1x1536xf32, #tpu.memory_space<vmem>>, vector<1x1536xf32>,
    } else {
    }
    %c0 = arith.constant 0 : index
    %c0_1 = arith.constant 0 : index
    %c0_2 = arith.constant 0 : index
    %3 = vector.load %arg2[%c0, %c0_1, %c0_2] : memref<1x128x27xbf16, #tpu.memory_space<vmem>>, vector<1x128x27xbf16>
    %4 = vector.shape_cast %3 : vector<1x128x27xbf16> to vector<128x27xbf16>
    %c0_3 = arith.constant 0 : index
    %c0_4 = arith.constant 0 : index
    %5 = vector.load %arg3[%c0_3, %c0_4] : memref<27x32xbf16, #tpu.memory_space<vmem>>, vector<27x32xbf16>
    %cst = arith.constant dense<0.000000e+00> : vector<128x32xf32>
    %6 = tpu.matmul %4, %5, %cst {dimension_numbers = #tpu.dot_dimension_numbers<[1], [0], [0], [1], [0, 0, 1, 1], [], []>} : vector<128x27xbf16>, vector<27x32xbf16>, vector<128x32xf32> -> vector<128x32xf32>
    %c0_5 = arith.constant 0 : index
    %c0_6 = arith.constant 0 : index
    %7 = vector.load %arg4[%c0_5, %c0_6] : memref<1x32xf32, #tpu.memory_space<vmem>>, vector<1x32xf32>
    %8 = vector.broadcast %7 : vector<1x32xf32> to vector<128x32xf32>
    %9 = arith.addf %6, %8 : vector<128x32xf32>
    %10 = arith.negf %9 : vector<128x32xf32>
    %11 = math.exp %10 : vector<128x32xf32>
    %cst_7 = arith.constant 1.000000e+00 : f32
    %12 = vector.broadcast %cst_7 : f32 to vector<128x32xf32>
    %13 = arith.addf %12, %11 : vector<128x32xf32>
    %14 = arith.divf %12, %13 : vector<128x32xf32>
    %15 = arith.mulf %9, %14 : vector<128x32xf32>
    %16 = arith.truncf %15 : vector<128x32xf32> to vector<128x32xbf16>
    %c0_8 = arith.constant 0 : index
    %c0_9 = arith.constant 0 : index
    %17 = vector.load %arg5[%c0_8, %c0_9] : memref<32x128xbf16, #tpu.memory_space<vmem>>, vector<32x128xbf16>
    %cst_10 = arith.constant dense<0.000000e+00> : vector<128x128xf32>
    %18 = tpu.matmul %16, %17, %cst_10 {dimension_numbers = #tpu.dot_dimension_numbers<[1], [0], [0], [1], [0, 0, 1, 1], [], []>} : vector<128x32xbf16>, vector<32x128xbf16>, vector<128x128xf32> -> vector<128x128xf32>
    %c0_11 = arith.constant 0 : index
    %c0_12 = arith.constant 0 : index
    %19 = vector.load %arg6[%c0_11, %c0_12] : memref<1x128xf32, #tpu.memory_space<vmem>>, vector<1x128xf32>
    %20 = vector.broadcast %19 : vector<1x128xf32> to vector<128x128xf32>
    %21 = arith.addf %18, %20 : vector<128x128xf32>
    %22 = arith.negf %21 : vector<128x128xf32>
    %23 = math.exp %22 : vector<128x128xf32>
    %cst_13 = arith.constant 1.000000e+00 : f32
    %24 = vector.broadcast %cst_13 : f32 to vector<128x128xf32>
    %25 = arith.addf %24, %23 : vector<128x128xf32>
    %26 = arith.divf %24, %25 : vector<128x128xf32>
    %27 = arith.mulf %21, %26 : vector<128x128xf32>
    %28 = arith.truncf %27 : vector<128x128xf32> to vector<128x128xbf16>
    %c0_14 = arith.constant 0 : index
    %c0_15 = arith.constant 0 : index
    %29 = vector.load %arg7[%c0_14, %c0_15] : memref<128x1536xbf16, #tpu.memory_space<vmem>>, vector<128x1536xbf16>
    %cst_16 = arith.constant dense<0.000000e+00> : vector<128x1536xf32>
    %30 = tpu.matmul %28, %29, %cst_16 {dimension_numbers = #tpu.dot_dimension_numbers<[1], [0], [0], [1], [0, 0, 1, 1], [], []>} : vector<128x128xbf16>, vector<128x1536xbf16>, vector<128x1536xf32> -> vector<128x1536xf32>
    %c0_17 = arith.constant 0 : index
    %c0_18 = arith.constant 0 : index
    %31 = vector.load %arg8[%c0_17, %c0_18] : memref<1x1536xf32, #tpu.memory_space<vmem>>, vector<1x1536xf32>
    %32 = vector.broadcast %31 : vector<1x1536xf32> to vector<128x1536xf32>
    %33 = arith.addf %30, %32 : vector<128x1536xf32>
    %34 = arith.negf %33 : vector<128x1536xf32>
    %35 = math.exp %34 : vector<128x1536xf32>
    %cst_19 = arith.constant 1.000000e+00 : f32
    %36 = vector.broadcast %cst_19 : f32 to vector<128x1536xf32>
    %37 = arith.addf %36, %35 : vector<128x1536xf32>
    %38 = arith.divf %36, %37 : vector<128x1536xf32>
    %39 = arith.mulf %33, %38 : vector<128x1536xf32>
    %c128_i32 = arith.constant 128 : i32
    %40 = arith.muli %arg1, %c128_i32 : i32
    %41 = tpu.iota {dimensions = array<i32: 1>} : vector<1x128xi32>
    %42 = vector.broadcast %40 : i32 to vector<1x128xi32>
    %43 = arith.addi %42, %41 : vector<1x128xi32>
    %c256_i32 = arith.constant 256 : i32
    %44 = vector.broadcast %c256_i32 : i32 to vector<1x128xi32>
    %45 = arith.cmpi slt, %43, %44 : vector<1x128xi32>
    %cst_20 = arith.constant 1.000000e+00 : f32
    %cst_21 = arith.constant 0.000000e+00 : f32
    %46 = vector.broadcast %cst_20 : f32 to vector<1x128xf32>
    %47 = vector.broadcast %cst_21 : f32 to vector<1x128xf32>
    %48 = arith.select %45, %46, %47 : vector<1x128xi1>, vector<1x128xf32>
    %c0_22 = arith.constant 0 : index
    %c0_23 = arith.constant 0 : index
    %49 = vector.load %arg12[%c0_22, %c0_23] : memref<1x1536xf32, #tpu.memory_space<vmem>>, vector<1x1536xf32>
    %cst_24 = arith.constant dense<0.000000e+00> : vector<1x1536xf32>
    %50 = tpu.matmul %48, %39, %cst_24 {dimension_numbers = #tpu.dot_dimension_numbers<[1], [0], [0], [1], [0, 0, 1, 1], [], []>} : vector<1x128xf32>, vector<128x1536xf32>, vector<1x1536xf32> -> vector<1x1536xf32>
    %51 = arith.addf %49, %50 : vector<1x1536xf32>
    %c0_25 = arith.constant 0 : index
    %c0_26 = arith.constant 0 : index
    %52 = vector.load %arg12[%c0_25, %c0_26] : memref<1x1536xf32, #tpu.memory_space<vmem>>, vector<1x1536xf32>
    tpu.vector_store %arg12[%c0_25, %c0_26], %51 {strides = array<i32>} : memref<1x1536xf32, #tpu.memory_space<vmem>>, vector<1x1536xf32>,
    %c1_i32 = arith.constant 1 : i32
    %53 = arith.cmpi eq, %arg1, %c1_i32 : i32
    %54 = arith.extui %53 : i1 to i32
    %c0_i32_27 = arith.constant 0 : i32
    %55 = arith.cmpi ne, %54, %c0_i32_27 : i32
    scf.if %55 {
      %c0_28 = arith.constant 0 : index
      %c0_29 = arith.constant 0 : index
      %56 = vector.load %arg12[%c0_28, %c0_29] : memref<1x1536xf32, #tpu.memory_space<vmem>>, vector<1x1536xf32>
      %cst_30 = arith.constant 3.906250e-03 : f32
      %57 = vector.broadcast %cst_30 : f32 to vector<1x1536xf32>
      %58 = arith.mulf %56, %57 : vector<1x1536xf32>
      %59 = arith.truncf %58 : vector<1x1536xf32> to vector<1x1536xbf16>
      %c0_31 = arith.constant 0 : index
      %c0_32 = arith.constant 0 : index
      %60 = vector.load %arg9[%c0_31, %c0_32] : memref<1536x128xbf16, #tpu.memory_space<vmem>>, vector<1536x128xbf16>
      %cst_33 = arith.constant dense<0.000000e+00> : vector<1x128xf32>
      %61 = tpu.matmul %59, %60, %cst_33 {dimension_numbers = #tpu.dot_dimension_numbers<[1], [0], [0], [1], [0, 0, 1, 1], [], []>} : vector<1x1536xbf16>, vector<1536x128xbf16>, vector<1x128xf32> -> vector<1x128xf32>
      %c0_34 = arith.constant 0 : index
      %c0_35 = arith.constant 0 : index
      %62 = vector.load %arg10[%c0_34, %c0_35] : memref<1x128xf32, #tpu.memory_space<vmem>>, vector<1x128xf32>
      %63 = arith.addf %61, %62 : vector<1x128xf32>
      %c0_36 = arith.constant 0 : index
      %c0_37 = arith.constant 0 : index
      %c0_38 = arith.constant 0 : index
      %64 = vector.load %arg11[%c0_36, %c0_37, %c0_38] : memref<1x1x128xf32, #tpu.memory_space<vmem>>, vector<1x1x128xf32>
      %65 = vector.shape_cast %64 : vector<1x1x128xf32> to vector<1x128xf32>
      %66 = vector.shape_cast %63 : vector<1x128xf32> to vector<1x1x128xf32>
      tpu.vector_store %arg11[%c0_36, %c0_37, %c0_38], %66 {strides = array<i32>} : memref<1x1x128xf32, #tpu.memory_space<vmem>>, vector<1x1x128xf32>,
    } else {
    }
    return
  }
  func.func @transform_0(%arg0: i32, %arg1: i32) -> (i32, i32, i32) {
    %c0_i32 = arith.constant 0 : i32
    %c0_i32_0 = arith.constant 0 : i32
    return %arg0, %arg1, %c0_i32 : i32, i32, i32
  }
  func.func @transform_1(%arg0: i32, %arg1: i32) -> (i32, i32) {
    %c0_i32 = arith.constant 0 : i32
    %c0_i32_0 = arith.constant 0 : i32
    %c0_i32_1 = arith.constant 0 : i32
    return %c0_i32, %c0_i32_0 : i32, i32
  }
  func.func @transform_2(%arg0: i32, %arg1: i32) -> (i32, i32) {
    %c0_i32 = arith.constant 0 : i32
    %c0_i32_0 = arith.constant 0 : i32
    %c0_i32_1 = arith.constant 0 : i32
    return %c0_i32, %c0_i32_0 : i32, i32
  }
  func.func @transform_3(%arg0: i32, %arg1: i32) -> (i32, i32) {
    %c0_i32 = arith.constant 0 : i32
    %c0_i32_0 = arith.constant 0 : i32
    %c0_i32_1 = arith.constant 0 : i32
    return %c0_i32, %c0_i32_0 : i32, i32
  }
  func.func @transform_4(%arg0: i32, %arg1: i32) -> (i32, i32) {
    %c0_i32 = arith.constant 0 : i32
    %c0_i32_0 = arith.constant 0 : i32
    %c0_i32_1 = arith.constant 0 : i32
    return %c0_i32, %c0_i32_0 : i32, i32
  }
  func.func @transform_5(%arg0: i32, %arg1: i32) -> (i32, i32) {
    %c0_i32 = arith.constant 0 : i32
    %c0_i32_0 = arith.constant 0 : i32
    %c0_i32_1 = arith.constant 0 : i32
    return %c0_i32, %c0_i32_0 : i32, i32
  }
  func.func @transform_6(%arg0: i32, %arg1: i32) -> (i32, i32) {
    %c0_i32 = arith.constant 0 : i32
    %c0_i32_0 = arith.constant 0 : i32
    %c0_i32_1 = arith.constant 0 : i32
    return %c0_i32, %c0_i32_0 : i32, i32
  }
  func.func @transform_7(%arg0: i32, %arg1: i32) -> (i32, i32) {
    %c0_i32 = arith.constant 0 : i32
    %c0_i32_0 = arith.constant 0 : i32
    %c0_i32_1 = arith.constant 0 : i32
    return %c0_i32, %c0_i32_0 : i32, i32
  }
  func.func @transform_8(%arg0: i32, %arg1: i32) -> (i32, i32) {
    %c0_i32 = arith.constant 0 : i32
    %c0_i32_0 = arith.constant 0 : i32
    %c0_i32_1 = arith.constant 0 : i32
    return %c0_i32, %c0_i32_0 : i32, i32
  }
  func.func @transform_9(%arg0: i32, %arg1: i32) -> (i32, i32, i32) {
    %c0_i32 = arith.constant 0 : i32
    %c0_i32_0 = arith.constant 0 : i32
    %c0_i32_1 = arith.constant 0 : i32
    return %arg0, %c0_i32, %c0_i32_0 : i32, i32, i32
  }
}

</mosaic_0001>

<llo_original>
// kernel: my_model_forward.1
$region0: #{my_model_forward.1}
  #allocation0 [shape = 'u32[]', space=smem, size = 0x4, offset = 0x4, fixed_abs, tag = 'smem constant byte address 0x4 - core index']
  #allocation1 [shape = 'u32[72,128]{1,0:T(1,128)}', space=vmem, size = 0x9000, scoped, tag = 'internal scratch']
  #allocation2 [shape = 'f32[1,1536]{1,0:T(1,128)}', space=vmem, size = 0x1800, scoped, tag = 'scratch operand']
  %s0 = inlined_call_operand.vmem [shape: bf16[2,256,27], index: 0, kind: input, shape index: {}]
  %s1 = inlined_call_operand.vmem [shape: bf16[27,32], index: 1, kind: input, shape index: {}]
  %s2 = inlined_call_operand.vmem [shape: f32[1,32], index: 2, kind: input, shape index: {}]
  %s3 = inlined_call_operand.vmem [shape: bf16[32,128], index: 3, kind: input, shape index: {}]
  %s4 = inlined_call_operand.vmem [shape: f32[1,128], index: 4, kind: input, shape index: {}]
  %s5 = inlined_call_operand.vmem [shape: bf16[128,1536], index: 5, kind: input, shape index: {}]
  %s6 = inlined_call_operand.vmem [shape: f32[1,1536], index: 6, kind: input, shape index: {}]
  %s7 = inlined_call_operand.vmem [shape: bf16[1536,128], index: 7, kind: input, shape index: {}]
  %s8 = inlined_call_operand.vmem [shape: f32[1,128], index: 8, kind: input, shape index: {}]
  %s9 = inlined_call_operand.hbm [shape: f32[2,1,128], index: 9, kind: output, shape index: {}]
  %s10 = sld [smem:[#allocation0]]
  $region77: #{my_model_forward.1} parent=0
    _
  %s12 = ssub.s32 1, %s10
  %s13 = scalar_select 0, %s12, %s10
  $region1: #{my_model_forward.1} parent=0
    #allocation3 [shape = 'u8[1024]{0}', space=vmem, size = 0x400, scoped, tag = 'output window, operand 0']
    #allocation4 [shape = 's32[2]{0}', space=sflag, size = 0x8, scoped, tag = 'scoped memory for my_model_forward.1']
    %14 = vsyncpa [#allocation4], 0
    %s15 = scalar_lea.sflag [#allocation4], 1
    %16 = vsyncpa %s15, 0
    loop: start=0, step=1, limit=6
    $region2: #{my_model_forward.1} parent=1 // loop_pre_header
      _
    $region3: #{my_model_forward.1} parent=1 // loop_header
      %s18 = sphi 0, %s22
      %p19 = scmp.ge.s32.totalorder %s18, 6
      %s25 = sphi 0, %s37
      %s26 = sphi 0, %s33
      %s27 = sphi 0, %s25
      %s28 = sphi 0, %s26
      %s29 = sphi 0, %s27
      %s30 = sphi 0, %s28
      %s42 = sphi 0, %s44
      %s45 = sphi 0, %s42
      %s46 = sphi 0, %s45
      %s62 = sphi 0, %s46
      %s66 = sphi 0, %s66
      %s68 = sphi 0, %s66
      %s69 = sphi 0, %s68
      %s83 = sphi 0, %s69
      %s87 = sphi 0, %s87
      %s89 = sphi 0, %s87
      %s90 = sphi 0, %s89
      %s104 = sphi 0, %s90
      %s108 = sphi 0, %s108
      %s110 = sphi 0, %s108
      %s111 = sphi 0, %s110
      %s125 = sphi 0, %s111
      %s129 = sphi 0, %s129
      %s131 = sphi 0, %s129
      %s132 = sphi 0, %s131
      %s146 = sphi 0, %s132
      %s150 = sphi 0, %s150
      %s152 = sphi 0, %s150
      %s153 = sphi 0, %s152
      %s167 = sphi 0, %s153
      %s171 = sphi 0, %s171
      %s173 = sphi 0, %s171
      %s174 = sphi 0, %s173
      %s188 = sphi 0, %s174
      %s192 = sphi 0, %s192
      %s194 = sphi 0, %s192
      %s195 = sphi 0, %s194
      %s209 = sphi 0, %s195
      %s213 = sphi 0, %s213
      %s215 = sphi 0, %s213
      %s216 = sphi 0, %s215
      %s230 = sphi 0, %s216
      %s236 = sphi 0, %s238
      %s239 = sphi 0, %s236
      %s240 = sphi 0, %s239
      %s256 = sphi 0, %s240
    $region4: #{my_model_forward.1} parent=1 // loop_header_branch
      %21 = sbr.rel (%p19) target = $region8
    $region5: #{my_model_forward.1} parent=1 // loop_body
      %s23 = ssub.s32 %s18, 1
      %s24 = ssub.s32 %s18, 2
      %s31 = sadd.s32 1, %s26
      %p32 = scmp.ge.s32.totalorder %s31, 2
      %s33 = scalar_select %p32, 0, %s31
      %s34 = sadd.s32 1, %s25
      %s35 = scalar_select %p32, %s34, %s25
      %p36 = scmp.ge.s32.totalorder %s35, 2
      %s37 = scalar_select %p36, 0, %s35
      %s38 = ssub.s32 %s25, %s37
      %s39 = ssub.s32 %s26, %s33
      %s40 = sor.u32 %s38, %s39
      %p41 = scmp.eq.s32.totalorder %s40, 0
      %s43 = sadd.s32 %s42, 1
      %s44 = scalar_select %p41, %s42, %s43
      %p47 = pneg %p41
      %p48 = scmp.eq.s32.totalorder %s18, 3
      %p49 = por %p47, %p48
      %p50 = scmp.ne.s32.totalorder %s42, %s45
      %p51 = scmp.eq.s32.totalorder %s18, 0
      %p52 = por %p50, %p51
      %p53 = scmp.ne.s32.totalorder %s42, %s45
      %p54 = scmp.eq.s32.totalorder %s23, 3
      %p55 = por %p53, %p54
      %p56 = scmp.ne.s32.totalorder %s45, %s46
      %p57 = scmp.eq.s32.totalorder %s23, 0
      %p58 = por %p56, %p57
      %p59 = scmp.ne.s32.totalorder %s45, %s46
      %p60 = scmp.eq.s32.totalorder %s24, 3
      %p61 = por %p59, %p60
      %p63 = scmp.ne.s32.totalorder %s46, %s62
      %p64 = scmp.eq.s32.totalorder %s24, 0
      %p65 = por %p63, %p64
      %s67 = sadd.s32 %s66, 1
      %p70 = scmp.eq.s32.totalorder %s18, 3
      %p71 = scmp.ne.s32.totalorder %s66, %s68
      %p72 = scmp.eq.s32.totalorder %s18, 0
      %p73 = por %p71, %p72
      %p74 = scmp.ne.s32.totalorder %s66, %s68
      %p75 = scmp.eq.s32.totalorder %s23, 3
      %p76 = por %p74, %p75
      %p77 = scmp.ne.s32.totalorder %s68, %s69
      %p78 = scmp.eq.s32.totalorder %s23, 0
      %p79 = por %p77, %p78
      %p80 = scmp.ne.s32.totalorder %s68, %s69
      %p81 = scmp.eq.s32.totalorder %s24, 3
      %p82 = por %p80, %p81
      %p84 = scmp.ne.s32.totalorder %s69, %s83
      %p85 = scmp.eq.s32.totalorder %s24, 0
      %p86 = por %p84, %p85
      %s88 = sadd.s32 %s87, 1
      %p91 = scmp.eq.s32.totalorder %s18, 3
      %p92 = scmp.ne.s32.totalorder %s87, %s89
      %p93 = scmp.eq.s32.totalorder %s18, 0
      %p94 = por %p92, %p93
      %p95 = scmp.ne.s32.totalorder %s87, %s89
      %p96 = scmp.eq.s32.totalorder %s23, 3
      %p97 = por %p95, %p96
      %p98 = scmp.ne.s32.totalorder %s89, %s90
      %p99 = scmp.eq.s32.totalorder %s23, 0
      %p100 = por %p98, %p99
      %p101 = scmp.ne.s32.totalorder %s89, %s90
      %p102 = scmp.eq.s32.totalorder %s24, 3
      %p103 = por %p101, %p102
      %p105 = scmp.ne.s32.totalorder %s90, %s104
      %p106 = scmp.eq.s32.totalorder %s24, 0
      %p107 = por %p105, %p106
      %s109 = sadd.s32 %s108, 1
      %p112 = scmp.eq.s32.totalorder %s18, 3
      %p113 = scmp.ne.s32.totalorder %s108, %s110
      %p114 = scmp.eq.s32.totalorder %s18, 0
      %p115 = por %p113, %p114
      %p116 = scmp.ne.s32.totalorder %s108, %s110
      %p117 = scmp.eq.s32.totalorder %s23, 3
      %p118 = por %p116, %p117
      %p119 = scmp.ne.s32.totalorder %s110, %s111
      %p120 = scmp.eq.s32.totalorder %s23, 0
      %p121 = por %p119, %p120
      %p122 = scmp.ne.s32.totalorder %s110, %s111
      %p123 = scmp.eq.s32.totalorder %s24, 3
      %p124 = por %p122, %p123
      %p126 = scmp.ne.s32.totalorder %s111, %s125
      %p127 = scmp.eq.s32.totalorder %s24, 0
      %p128 = por %p126, %p127
      %s130 = sadd.s32 %s129, 1
      %p133 = scmp.eq.s32.totalorder %s18, 3
      %p134 = scmp.ne.s32.totalorder %s129, %s131
      %p135 = scmp.eq.s32.totalorder %s18, 0
      %p136 = por %p134, %p135
      %p137 = scmp.ne.s32.totalorder %s129, %s131
      %p138 = scmp.eq.s32.totalorder %s23, 3
      %p139 = por %p137, %p138
      %p140 = scmp.ne.s32.totalorder %s131, %s132
      %p141 = scmp.eq.s32.totalorder %s23, 0
      %p142 = por %p140, %p141
      %p143 = scmp.ne.s32.totalorder %s131, %s132
      %p144 = scmp.eq.s32.totalorder %s24, 3
      %p145 = por %p143, %p144
      %p147 = scmp.ne.s32.totalorder %s132, %s146
      %p148 = scmp.eq.s32.totalorder %s24, 0
      %p149 = por %p147, %p148
      %s151 = sadd.s32 %s150, 1
      %p154 = scmp.eq.s32.totalorder %s18, 3
      %p155 = scmp.ne.s32.totalorder %s150, %s152
      %p156 = scmp.eq.s32.totalorder %s18, 0
      %p157 = por %p155, %p156
      %p158 = scmp.ne.s32.totalorder %s150, %s152
      %p159 = scmp.eq.s32.totalorder %s23, 3
      %p160 = por %p158, %p159
      %p161 = scmp.ne.s32.totalorder %s152, %s153
      %p162 = scmp.eq.s32.totalorder %s23, 0
      %p163 = por %p161, %p162
      %p164 = scmp.ne.s32.totalorder %s152, %s153
      %p165 = scmp.eq.s32.totalorder %s24, 3
      %p166 = por %p164, %p165
      %p168 = scmp.ne.s32.totalorder %s153, %s167
      %p169 = scmp.eq.s32.totalorder %s24, 0
      %p170 = por %p168, %p169
      %s172 = sadd.s32 %s171, 1
      %p175 = scmp.eq.s32.totalorder %s18, 3
      %p176 = scmp.ne.s32.totalorder %s171, %s173
      %p177 = scmp.eq.s32.totalorder %s18, 0
      %p178 = por %p176, %p177
      %p179 = scmp.ne.s32.totalorder %s171, %s173
      %p180 = scmp.eq.s32.totalorder %s23, 3
      %p181 = por %p179, %p180
      %p182 = scmp.ne.s32.totalorder %s173, %s174
      %p183 = scmp.eq.s32.totalorder %s23, 0
      %p184 = por %p182, %p183
      %p185 = scmp.ne.s32.totalorder %s173, %s174
      %p186 = scmp.eq.s32.totalorder %s24, 3
      %p187 = por %p185, %p186
      %p189 = scmp.ne.s32.totalorder %s174, %s188
      %p190 = scmp.eq.s32.totalorder %s24, 0
      %p191 = por %p189, %p190
      %s193 = sadd.s32 %s192, 1
      %p196 = scmp.eq.s32.totalorder %s18, 3
      %p197 = scmp.ne.s32.totalorder %s192, %s194
      %p198 = scmp.eq.s32.totalorder %s18, 0
      %p199 = por %p197, %p198
      %p200 = scmp.ne.s32.totalorder %s192, %s194
      %p201 = scmp.eq.s32.totalorder %s23, 3
      %p202 = por %p200, %p201
      %p203 = scmp.ne.s32.totalorder %s194, %s195
      %p204 = scmp.eq.s32.totalorder %s23, 0
      %p205 = por %p203, %p204
      %p206 = scmp.ne.s32.totalorder %s194, %s195
      %p207 = scmp.eq.s32.totalorder %s24, 3
      %p208 = por %p206, %p207
      %p210 = scmp.ne.s32.totalorder %s195, %s209
      %p211 = scmp.eq.s32.totalorder %s24, 0
      %p212 = por %p210, %p211
      %s214 = sadd.s32 %s213, 1
      %p217 = scmp.eq.s32.totalorder %s18, 3
      %p218 = scmp.ne.s32.totalorder %s213, %s215
      %p219 = scmp.eq.s32.totalorder %s18, 0
      %p220 = por %p218, %p219
      %p221 = scmp.ne.s32.totalorder %s213, %s215
      %p222 = scmp.eq.s32.totalorder %s23, 3
      %p223 = por %p221, %p222
      %p224 = scmp.ne.s32.totalorder %s215, %s216
      %p225 = scmp.eq.s32.totalorder %s23, 0
      %p226 = por %p224, %p225
      %p227 = scmp.ne.s32.totalorder %s215, %s216
      %p228 = scmp.eq.s32.totalorder %s24, 3
      %p229 = por %p227, %p228
      %p231 = scmp.ne.s32.totalorder %s216, %s230
      %p232 = scmp.eq.s32.totalorder %s24, 0
      %p233 = por %p231, %p232
      %s234 = ssub.s32 %s25, %s37
      %p235 = scmp.eq.s32.totalorder %s234, 0
      %s237 = sadd.s32 %s236, 1
      %s238 = scalar_select %p235, %s236, %s237
      %p241 = pneg %p235
      %p242 = scmp.eq.s32.totalorder %s18, 3
      %p243 = por %p241, %p242
      %p244 = scmp.ne.s32.totalorder %s236, %s239
      %p245 = scmp.eq.s32.totalorder %s18, 0
      %p246 = por %p244, %p245
      %p247 = scmp.ne.s32.totalorder %s236, %s239
      %p248 = scmp.eq.s32.totalorder %s23, 3
      %p249 = por %p247, %p248
      %p250 = scmp.ne.s32.totalorder %s239, %s240
      %p251 = scmp.eq.s32.totalorder %s23, 0
      %p252 = por %p250, %p251
      %p253 = scmp.ne.s32.totalorder %s239, %s240
      %p254 = scmp.eq.s32.totalorder %s24, 3
      %p255 = por %p253, %p254
      %p257 = scmp.ne.s32.totalorder %s240, %s256
      %p258 = scmp.eq.s32.totalorder %s24, 0
      %p259 = por %p257, %p258
      %p260 = scmp.le.s32.totalorder 1, %s18
      %p261 = scmp.lt.s32.totalorder %s18, 5
      %p262 = pnand %p260, %p261
      %p263 = pneg %p262
      // Predicated region
      $region9: #{my_model_forward.1} parent=5 // pred_check
        _
      $region10: #{my_model_forward.1} parent=5 // pred_check_branch
        %265 = sbr.rel (%p262) target = $region12
      $region11: #{my_model_forward.1} parent=5 // pred_region
        %s266 = ssub.s32 %s18, 1
        // Predicated region
        $region13: #{my_model_forward.1} parent=11 // pred_check
          %p267 = pneg %p79
        $region14: #{my_model_forward.1} parent=11 // pred_check_branch
          %269 = sbr.rel (%p267) target = $region16
        $region15: #{my_model_forward.1} parent=11 // pred_region
          _
        $region16: #{my_model_forward.1} parent=11 // pred_fallthru
          _
        // Predicated region
        $region17: #{my_model_forward.1} parent=11 // pred_check
          %p270 = pneg %p100
        $region18: #{my_model_forward.1} parent=11 // pred_check_branch
          %272 = sbr.rel (%p270) target = $region20
        $region19: #{my_model_forward.1} parent=11 // pred_region
          _
        $region20: #{my_model_forward.1} parent=11 // pred_fallthru
          _
        // Predicated region
        $region21: #{my_model_forward.1} parent=11 // pred_check
          %p273 = pneg %p121
        $region22: #{my_model_forward.1} parent=11 // pred_check_branch
          %275 = sbr.rel (%p273) target = $region24
        $region23: #{my_model_forward.1} parent=11 // pred_region
          _
        $region24: #{my_model_forward.1} parent=11 // pred_fallthru
          _
        // Predicated region
        $region25: #{my_model_forward.1} parent=11 // pred_check
          %p276 = pneg %p142
        $region26: #{my_model_forward.1} parent=11 // pred_check_branch
          %278 = sbr.rel (%p276) target = $region28
        $region27: #{my_model_forward.1} parent=11 // pred_region
          _
        $region28: #{my_model_forward.1} parent=11 // pred_fallthru
          _
        // Predicated region
        $region29: #{my_model_forward.1} parent=11 // pred_check
          %p279 = pneg %p163
        $region30: #{my_model_forward.1} parent=11 // pred_check_branch
          %281 = sbr.rel (%p279) target = $region32
        $region31: #{my_model_forward.1} parent=11 // pred_region
          _
        $region32: #{my_model_forward.1} parent=11 // pred_fallthru
          _
        // Predicated region
        $region33: #{my_model_forward.1} parent=11 // pred_check
          %p282 = pneg %p184
        $region34: #{my_model_forward.1} parent=11 // pred_check_branch
          %284 = sbr.rel (%p282) target = $region36
        $region35: #{my_model_forward.1} parent=11 // pred_region
          _
        $region36: #{my_model_forward.1} parent=11 // pred_fallthru
          _
        // Predicated region
        $region37: #{my_model_forward.1} parent=11 // pred_check
          %p285 = pneg %p205
        $region38: #{my_model_forward.1} parent=11 // pred_check_branch
          %287 = sbr.rel (%p285) target = $region40
        $region39: #{my_model_forward.1} parent=11 // pred_region
          _
        $region40: #{my_model_forward.1} parent=11 // pred_fallthru
          _
        // Predicated region
        $region41: #{my_model_forward.1} parent=11 // pred_check
          %p288 = pneg %p226
        $region42: #{my_model_forward.1} parent=11 // pred_check_branch
          %290 = sbr.rel (%p288) target = $region44
        $region43: #{my_model_forward.1} parent=11 // pred_region
          _
        $region44: #{my_model_forward.1} parent=11 // pred_fallthru
          _
      $region12: #{my_model_forward.1} parent=5 // pred_fallthru
        _
      %p291 = scmp.lt.s32.totalorder %s18, 4
      // Predicated region
      $region45: #{my_model_forward.1} parent=5 // pred_check
        %p292 = pneg %p291
      $region46: #{my_model_forward.1} parent=5 // pred_check_branch
        %294 = sbr.rel (%p292) target = $region48
      $region47: #{my_model_forward.1} parent=5 // pred_region
        // Predicated region
        $region49: #{my_model_forward.1} parent=47 // pred_check
          %p295 = pneg %p52
        $region50: #{my_model_forward.1} parent=47 // pred_check_branch
          %297 = sbr.rel (%p295) target = $region52
        $region51: #{my_model_forward.1} parent=47 // pred_region
          %s298 = smul.u32 16, %s26
          %p299 = scmp.lt.s32.totalorder %s25, 1
          %s300 = scalar_select %p299, %s25, 1
          %p301 = scmp.lt.s32.totalorder %s298, 31
          %s302 = scalar_select %p301, %s298, 31
          %s303 = smul.addr %s300, 32
          %s304 = sadd.s32 %s302, %s303
          %s305 = smul.addr %s304, 4
          %s306 = scalar_lea.vmem %s0, %s305
          %s307 = smul.u32 16, %s26
        $region52: #{my_model_forward.1} parent=47 // pred_fallthru
          _
      $region48: #{my_model_forward.1} parent=5 // pred_fallthru
        _
      %p308 = scmp.le.s32.totalorder 1, %s18
      %p309 = scmp.lt.s32.totalorder %s18, 5
      %p310 = pnand %p308, %p309
      %p311 = pneg %p310
      // Predicated region
      $region53: #{my_model_forward.1} parent=5 // pred_check
        _
      $region54: #{my_model_forward.1} parent=5 // pred_check_branch
        %313 = sbr.rel (%p310) target = $region56
      $region55: #{my_model_forward.1} parent=5 // pred_region
        %s314 = ssub.s32 %s18, 1
        %s315 = smul.u32 16, %s28
        %p316 = scmp.lt.s32.totalorder %s27, 1
        %s317 = scalar_select %p316, %s27, 1
        %p318 = scmp.lt.s32.totalorder %s315, 31
        %s319 = scalar_select %p318, %s315, 31
        %s320 = smul.addr %s317, 32
        %s321 = sadd.s32 %s319, %s320
        %s322 = smul.addr %s321, 4
        %s323 = scalar_lea.vmem %s0, %s322
        %p324 = pneg %p58
        %p325 = pneg %p55
        %p326 = pneg %p79
        %p327 = pneg %p76
        %p328 = pneg %p100
        %p329 = pneg %p97
        %p330 = pneg %p121
        %p331 = pneg %p118
        %p332 = pneg %p142
        %p333 = pneg %p139
        %p334 = pneg %p163
        %p335 = pneg %p160
        %p336 = pneg %p184
        %p337 = pneg %p181
        %p338 = pneg %p205
        %p339 = pneg %p202
        %p340 = pneg %p226
        %p341 = pneg %p223
        %p342 = pneg %p252
        %p343 = pneg %p249
        %s344 = sand.u32 %s239, 1
        %s345 = scalar_lea.sflag [#allocation4], %s344
        %s346 = sand.u32 %s239, 1
        %s347 = scalar_lea.vmem [#allocation3], %s346
        %s348 = smul.u32 16, %s28
        %p349 = scmp.lt.s32.totalorder %s27, 1
        %s350 = scalar_select %p349, %s27, 1
        %p351 = scmp.lt.s32.totalorder %s348, 31
        %s352 = scalar_select %p351, %s348, 31
        %s353 = smul.addr %s350, 32
        %s354 = sadd.s32 %s352, %s353
        %s355 = smul.addr %s354, 4
        %s356 = scalar_lea.vmem %s0, %s355
        %s357 = smul.u32 16, %s28
        %p359 = scmp.eq.s32.totalorder %s28, 0
        // Predicated region
        $region57: #{my_model_forward.1} parent=55 // pred_check
          %p360 = pneg %p359
        $region58: #{my_model_forward.1} parent=55 // pred_check_branch
          %362 = sbr.rel (%p360) target = $region60
        $region59: #{my_model_forward.1} parent=55 // pred_region
          %363 = vst [vmem:[#allocation2] sm:$0xff] 0.0
          %v364 = vlaneseq
          %vm365 = vcmp.ge.s32.totalorder %v364, 0
          %vm366 = vcmp.lt.s32.totalorder %v364, 512
          %vm367 = vmand %vm365, %vm366
          %368 = vst.msk [vmem:[#allocation2 + $0x8] sm:$0xf] %vm367, 0.0
        $region60: #{my_model_forward.1} parent=55 // pred_fallthru
          _
        %v369 = vld [vmem:[%s356] sm:$0xf]
        %v370 = vld [vmem:[%s356 + $0x4] sm:$0xf]
        %v371 = vld [vmem:[%s356 + $0x8] sm:$0xf]
        %v372 = vld [vmem:[%s356 + $0xc] sm:$0xf]
        %v373 = vld [vmem:[%s356 + $0x10] sm:$0xf]
        %v374 = vld [vmem:[%s356 + $0x14] sm:$0xf]
        %v375 = vld [vmem:[%s356 + $0x18] sm:$0xf]
        %v376 = vld [vmem:[%s356 + $0x1c] sm:$0xf]
        %v377 = vld [vmem:[%s356 + $0x20] sm:$0xf]
        %v378 = vld [vmem:[%s356 + $0x24] sm:$0xf]
        %v379 = vld [vmem:[%s356 + $0x28] sm:$0xf]
        %v380 = vld [vmem:[%s356 + $0x2c] sm:$0xf]
        %v381 = vld [vmem:[%s356 + $0x30] sm:$0xf]
        %v382 = vld [vmem:[%s356 + $0x34] sm:$0xf]
        %v383 = vld [vmem:[%s356 + $0x38] sm:$0xf]
        %v384 = vld [vmem:[%s356 + $0x3c] sm:$0xf]
        %v385 = vld [vmem:[%s1] sm:$0xf]
        %v386 = vld [vmem:[%s1 + $0x4] sm:$0xf]
        %v387 = vld [vmem:[%s1 + $0x8] sm:$0xf]
        %v388 = vld [vmem:[%s1 + $0xc] sm:$0x3]
        %v389 = vld [vmem:[%s2] sm:$0x1]
        %v391 = vperm.slane %v389, 0
        %v409 = vunpack.c.l.b16 %v369
        %v410 = vunpack.c.l.b16 %v370
        %v411 = vunpack.c.l.b16 %v371
        %v412 = vunpack.c.l.b16 %v372
        %v413 = vunpack.c.l.b16 %v373
        %v414 = vunpack.c.l.b16 %v374
        %v415 = vunpack.c.l.b16 %v375
        %v416 = vunpack.c.l.b16 %v376
        %v417 = vunpack.c.l.b16 %v377
        %v418 = vunpack.c.l.b16 %v378
        %v419 = vunpack.c.l.b16 %v379
        %v420 = vunpack.c.l.b16 %v380
        %v421 = vunpack.c.l.b16 %v381
        %v422 = vunpack.c.l.b16 %v382
        %v423 = vunpack.c.l.b16 %v383
        %v424 = vunpack.c.l.b16 %v384
        %v425 = vpack.c.b16 %v410, %v409
        %v426 = vpack.c.b16 %v412, %v411
        %v427 = vpack.c.b16 %v414, %v413
        %v428 = vpack.c.b16 %v416, %v415
        %v429 = vpack.c.b16 %v418, %v417
        %v430 = vpack.c.b16 %v420, %v419
        %v431 = vpack.c.b16 %v422, %v421
        %v432 = vpack.c.b16 %v424, %v423
        %v437 = vunpack.c.l.b16 %v385
        %v438 = vunpack.c.l.b16 %v386
        %v439 = vunpack.c.l.b16 %v387
        %v440 = vunpack.c.l.b16 %v388
        %v441 = vpack.c.b16 %v438, %v437
        %v442 = vpack.c.b16 %v440, %v439
        %vm444 = vcmask 220160
        %v446 = vsel %vm444, %v425, 0
        %v449 = vsel %vm444, %v426, 0
        %v452 = vsel %vm444, %v427, 0
        %v455 = vsel %vm444, %v428, 0
        %v458 = vsel %vm444, %v429, 0
        %v461 = vsel %vm444, %v430, 0
        %v464 = vsel %vm444, %v431, 0
        %v467 = vsel %vm444, %v432, 0
        %vm469 = vcmask 1044480
        %vm470 = vcmask 1045504
        %v471 = vsel %vm469, 4294967295, 65535
        %v472 = vsel %vm470, %v471, 0
        %v474 = vand.u32 %v442, %v472
        %476 = vmatpush.bf16.msra.mxu0 0
        %477 = vmatpush.bf16.msra.mxu0 0
        %478 = vmatpush.bf16.msra.mxu0 0
        %479 = vmatpush.bf16.msra.mxu0 0
        %480 = vmatpush.bf16.msra.mxu0 0
        %481 = vmatpush.bf16.msra.mxu0 0
        %482 = vmatpush.bf16.msra.mxu0 %v474
        %483 = vmatpush.bf16.msra.mxu0 %v441
        %484 = vmatmul.bf16.gmra.mxu0 %v446
        %v485 = vpop.f32.mrf.mxu0
        %v486 = vadd.f32 %v391, %v485
        %v487 = vpop.f32.mrf.mxu0
        %v488 = vadd.f32 %v391, %v487
        %489 = vmatmul.bf16.gmra.mxu0 %v449
        %v490 = vpop.f32.mrf.mxu0
        %v491 = vadd.f32 %v391, %v490
        %v492 = vpop.f32.mrf.mxu0
        %v493 = vadd.f32 %v391, %v492
        %494 = vmatmul.bf16.gmra.mxu0 %v452
        %v495 = vpop.f32.mrf.mxu0
        %v496 = vadd.f32 %v391, %v495
        %v497 = vpop.f32.mrf.mxu0
        %v498 = vadd.f32 %v391, %v497
        %499 = vmatmul.bf16.gmra.mxu0 %v455
        %v500 = vpop.f32.mrf.mxu0
        %v501 = vadd.f32 %v391, %v500
        %v502 = vpop.f32.mrf.mxu0
        %v503 = vadd.f32 %v391, %v502
        %504 = vmatmul.bf16.gmra.mxu0 %v458
        %v505 = vpop.f32.mrf.mxu0
        %v506 = vadd.f32 %v391, %v505
        %v507 = vpop.f32.mrf.mxu0
        %v508 = vadd.f32 %v391, %v507
        %509 = vmatmul.bf16.gmra.mxu0 %v461
        %v510 = vpop.f32.mrf.mxu0
        %v511 = vadd.f32 %v391, %v510
        %v512 = vpop.f32.mrf.mxu0
        %v513 = vadd.f32 %v391, %v512
        %514 = vmatmul.bf16.gmra.mxu0 %v464
        %v515 = vpop.f32.mrf.mxu0
        %v516 = vadd.f32 %v391, %v515
        %v517 = vpop.f32.mrf.mxu0
        %v518 = vadd.f32 %v391, %v517
        %519 = vmatmul.bf16.gmra.mxu0 %v467
        %v520 = vpop.f32.mrf.mxu0
        %v521 = vadd.f32 %v391, %v520
        %v522 = vpop.f32.mrf.mxu0
        %v523 = vadd.f32 %v391, %v522
        %524 = vdwg.mxu0
        %v525 = vxor.u32 %v486, 2147483648
        %v526 = vxor.u32 %v488, 2147483648
        %v527 = vxor.u32 %v491, 2147483648
        %v528 = vxor.u32 %v493, 2147483648
        %v529 = vxor.u32 %v496, 2147483648
        %v530 = vxor.u32 %v498, 2147483648
        %v531 = vxor.u32 %v501, 2147483648
        %v532 = vxor.u32 %v503, 2147483648
        %v533 = vxor.u32 %v506, 2147483648
        %v534 = vxor.u32 %v508, 2147483648
        %v535 = vxor.u32 %v511, 2147483648
        %v536 = vxor.u32 %v513, 2147483648
        %v537 = vxor.u32 %v516, 2147483648
        %v538 = vxor.u32 %v518, 2147483648
        %v539 = vxor.u32 %v521, 2147483648
        %v540 = vxor.u32 %v523, 2147483648
        %v541 = vmul.f32 %v525, 1.442695
        %v542 = vpow.pop %v541
        %v543 = vmul.f32 %v526, 1.442695
        %v544 = vpow.pop %v543
        %v545 = vmul.f32 %v527, 1.442695
        %v546 = vpow.pop %v545
        %v547 = vmul.f32 %v528, 1.442695
        %v548 = vpow.pop %v547
        %v549 = vmul.f32 %v529, 1.442695
        %v550 = vpow.pop %v549
        %v551 = vmul.f32 %v530, 1.442695
        %v552 = vpow.pop %v551
        %v553 = vmul.f32 %v531, 1.442695
        %v554 = vpow.pop %v553
        %v555 = vmul.f32 %v532, 1.442695
        %v556 = vpow.pop %v555
        %v557 = vmul.f32 %v533, 1.442695
        %v558 = vpow.pop %v557
        %v559 = vmul.f32 %v534, 1.442695
        %v560 = vpow.pop %v559
        %v561 = vmul.f32 %v535, 1.442695
        %v562 = vpow.pop %v561
        %v563 = vmul.f32 %v536, 1.442695
        %v564 = vpow.pop %v563
        %v565 = vmul.f32 %v537, 1.442695
        %v566 = vpow.pop %v565
        %v567 = vmul.f32 %v538, 1.442695
        %v568 = vpow.pop %v567
        %v569 = vmul.f32 %v539, 1.442695
        %v570 = vpow.pop %v569
        %v571 = vmul.f32 %v540, 1.442695
        %v572 = vpow.pop %v571
        %v573 = vadd.f32 %v542, 1.0
        %v574 = vadd.f32 %v544, 1.0
        %v575 = vadd.f32 %v546, 1.0
        %v576 = vadd.f32 %v548, 1.0
        %v577 = vadd.f32 %v550, 1.0
        %v578 = vadd.f32 %v552, 1.0
        %v579 = vadd.f32 %v554, 1.0
        %v580 = vadd.f32 %v556, 1.0
        %v581 = vadd.f32 %v558, 1.0
        %v582 = vadd.f32 %v560, 1.0
        %v583 = vadd.f32 %v562, 1.0
        %v584 = vadd.f32 %v564, 1.0
        %v585 = vadd.f32 %v566, 1.0
        %v586 = vadd.f32 %v568, 1.0
        %v587 = vadd.f32 %v570, 1.0
        %v588 = vadd.f32 %v572, 1.0
        %v589 = vrcp.pop %v573
        %v590 = vmul.f32 %v573, %v589
        %v591 = vsub.f32 1.0, %v590
        %v592 = vmul.f32 %v589, %v591
        %v593 = vadd.f32 %v589, %v592
        %vm594 = vweird.f32 %v573
        %vm595 = vweird.f32 %v589
        %vm596 = vmor %vm594, %vm595
        %v597 = vsel %vm596, %v589, %v593
        %v598 = vand.u32 2147483647, %v573
        %vm599 = vcmp.eq.f32.partialorder %v598, 8.507059e+37
        %v600 = vand.u32 %v573, 2147483648
        %v601 = vor.u32 1.1754944e-38, %v600
        %v602 = vsel %vm599, %v601, %v597
        %v603 = vmul.f32 1.0, %v602
        %v604 = vrcp.pop %v574
        %v605 = vmul.f32 %v574, %v604
        %v606 = vsub.f32 1.0, %v605
        %v607 = vmul.f32 %v604, %v606
        %v608 = vadd.f32 %v604, %v607
        %vm609 = vweird.f32 %v574
        %vm610 = vweird.f32 %v604
        %vm611 = vmor %vm609, %vm610
        %v612 = vsel %vm611, %v604, %v608
        %v613 = vand.u32 2147483647, %v574
        %vm614 = vcmp.eq.f32.partialorder %v613, 8.507059e+37
        %v615 = vand.u32 %v574, 2147483648
        %v616 = vor.u32 1.1754944e-38, %v615
        %v617 = vsel %vm614, %v616, %v612
        %v618 = vmul.f32 1.0, %v617
        %v619 = vrcp.pop %v575
        %v620 = vmul.f32 %v575, %v619
        %v621 = vsub.f32 1.0, %v620
        %v622 = vmul.f32 %v619, %v621
        %v623 = vadd.f32 %v619, %v622
        %vm624 = vweird.f32 %v575
        %vm625 = vweird.f32 %v619
        %vm626 = vmor %vm624, %vm625
        %v627 = vsel %vm626, %v619, %v623
        %v628 = vand.u32 2147483647, %v575
        %vm629 = vcmp.eq.f32.partialorder %v628, 8.507059e+37
        %v630 = vand.u32 %v575, 2147483648
        %v631 = vor.u32 1.1754944e-38, %v630
        %v632 = vsel %vm629, %v631, %v627
        %v633 = vmul.f32 1.0, %v632
        %v634 = vrcp.pop %v576
        %v635 = vmul.f32 %v576, %v634
        %v636 = vsub.f32 1.0, %v635
        %v637 = vmul.f32 %v634, %v636
        %v638 = vadd.f32 %v634, %v637
        %vm639 = vweird.f32 %v576
        %vm640 = vweird.f32 %v634
        %vm641 = vmor %vm639, %vm640
        %v642 = vsel %vm641, %v634, %v638
        %v643 = vand.u32 2147483647, %v576
        %vm644 = vcmp.eq.f32.partialorder %v643, 8.507059e+37
        %v645 = vand.u32 %v576, 2147483648
        %v646 = vor.u32 1.1754944e-38, %v645
        %v647 = vsel %vm644, %v646, %v642
        %v648 = vmul.f32 1.0, %v647
        %v649 = vrcp.pop %v577
        %v650 = vmul.f32 %v577, %v649
        %v651 = vsub.f32 1.0, %v650
        %v652 = vmul.f32 %v649, %v651
        %v653 = vadd.f32 %v649, %v652
        %vm654 = vweird.f32 %v577
        %vm655 = vweird.f32 %v649
        %vm656 = vmor %vm654, %vm655
        %v657 = vsel %vm656, %v649, %v653
        %v658 = vand.u32 2147483647, %v577
        %vm659 = vcmp.eq.f32.partialorder %v658, 8.507059e+37
        %v660 = vand.u32 %v577, 2147483648
        %v661 = vor.u32 1.1754944e-38, %v660
        %v662 = vsel %vm659, %v661, %v657
        %v663 = vmul.f32 1.0, %v662
        %v664 = vrcp.pop %v578
        %v665 = vmul.f32 %v578, %v664
        %v666 = vsub.f32 1.0, %v665
        %v667 = vmul.f32 %v664, %v666
        %v668 = vadd.f32 %v664, %v667
        %vm669 = vweird.f32 %v578
        %vm670 = vweird.f32 %v664
        %vm671 = vmor %vm669, %vm670
        %v672 = vsel %vm671, %v664, %v668
        %v673 = vand.u32 2147483647, %v578
        %vm674 = vcmp.eq.f32.partialorder %v673, 8.507059e+37
        %v675 = vand.u32 %v578, 2147483648
        %v676 = vor.u32 1.1754944e-38, %v675
        %v677 = vsel %vm674, %v676, %v672
        %v678 = vmul.f32 1.0, %v677
        %v679 = vrcp.pop %v579
        %v680 = vmul.f32 %v579, %v679
        %v681 = vsub.f32 1.0, %v680
        %v682 = vmul.f32 %v679, %v681
        %v683 = vadd.f32 %v679, %v682
        %vm684 = vweird.f32 %v579
        %vm685 = vweird.f32 %v679
        %vm686 = vmor %vm684, %vm685
        %v687 = vsel %vm686, %v679, %v683
        %v688 = vand.u32 2147483647, %v579
        %vm689 = vcmp.eq.f32.partialorder %v688, 8.507059e+37
        %v690 = vand.u32 %v579, 2147483648
        %v691 = vor.u32 1.1754944e-38, %v690
        %v692 = vsel %vm689, %v691, %v687
        %v693 = vmul.f32 1.0, %v692
        %v694 = vrcp.pop %v580
        %v695 = vmul.f32 %v580, %v694
        %v696 = vsub.f32 1.0, %v695
        %v697 = vmul.f32 %v694, %v696
        %v698 = vadd.f32 %v694, %v697
        %vm699 = vweird.f32 %v580
        %vm700 = vweird.f32 %v694
        %vm701 = vmor %vm699, %vm700
        %v702 = vsel %vm701, %v694, %v698
        %v703 = vand.u32 2147483647, %v580
        %vm704 = vcmp.eq.f32.partialorder %v703, 8.507059e+37
        %v705 = vand.u32 %v580, 2147483648
        %v706 = vor.u32 1.1754944e-38, %v705
        %v707 = vsel %vm704, %v706, %v702
        %v708 = vmul.f32 1.0, %v707
        %v709 = vrcp.pop %v581
        %v710 = vmul.f32 %v581, %v709
        %v711 = vsub.f32 1.0, %v710
        %v712 = vmul.f32 %v709, %v711
        %v713 = vadd.f32 %v709, %v712
        %vm714 = vweird.f32 %v581
        %vm715 = vweird.f32 %v709
        %vm716 = vmor %vm714, %vm715
        %v717 = vsel %vm716, %v709, %v713
        %v718 = vand.u32 2147483647, %v581
        %vm719 = vcmp.eq.f32.partialorder %v718, 8.507059e+37
        %v720 = vand.u32 %v581, 2147483648
        %v721 = vor.u32 1.1754944e-38, %v720
        %v722 = vsel %vm719, %v721, %v717
        %v723 = vmul.f32 1.0, %v722
        %v724 = vrcp.pop %v582
        %v725 = vmul.f32 %v582, %v724
        %v726 = vsub.f32 1.0, %v725
        %v727 = vmul.f32 %v724, %v726
        %v728 = vadd.f32 %v724, %v727
        %vm729 = vweird.f32 %v582
        %vm730 = vweird.f32 %v724
        %vm731 = vmor %vm729, %vm730
        %v732 = vsel %vm731, %v724, %v728
        %v733 = vand.u32 2147483647, %v582
        %vm734 = vcmp.eq.f32.partialorder %v733, 8.507059e+37
        %v735 = vand.u32 %v582, 2147483648
        %v736 = vor.u32 1.1754944e-38, %v735
        %v737 = vsel %vm734, %v736, %v732
        %v738 = vmul.f32 1.0, %v737
        %v739 = vrcp.pop %v583
        %v740 = vmul.f32 %v583, %v739
        %v741 = vsub.f32 1.0, %v740
        %v742 = vmul.f32 %v739, %v741
        %v743 = vadd.f32 %v739, %v742
        %vm744 = vweird.f32 %v583
        %vm745 = vweird.f32 %v739
        %vm746 = vmor %vm744, %vm745
        %v747 = vsel %vm746, %v739, %v743
        %v748 = vand.u32 2147483647, %v583
        %vm749 = vcmp.eq.f32.partialorder %v748, 8.507059e+37
        %v750 = vand.u32 %v583, 2147483648
        %v751 = vor.u32 1.1754944e-38, %v750
        %v752 = vsel %vm749, %v751, %v747
        %v753 = vmul.f32 1.0, %v752
        %v754 = vrcp.pop %v584
        %v755 = vmul.f32 %v584, %v754
        %v756 = vsub.f32 1.0, %v755
        %v757 = vmul.f32 %v754, %v756
        %v758 = vadd.f32 %v754, %v757
        %vm759 = vweird.f32 %v584
        %vm760 = vweird.f32 %v754
        %vm761 = vmor %vm759, %vm760
        %v762 = vsel %vm761, %v754, %v758
        %v763 = vand.u32 2147483647, %v584
        %vm764 = vcmp.eq.f32.partialorder %v763, 8.507059e+37
        %v765 = vand.u32 %v584, 2147483648
        %v766 = vor.u32 1.1754944e-38, %v765
        %v767 = vsel %vm764, %v766, %v762
        %v768 = vmul.f32 1.0, %v767
        %v769 = vrcp.pop %v585
        %v770 = vmul.f32 %v585, %v769
        %v771 = vsub.f32 1.0, %v770
        %v772 = vmul.f32 %v769, %v771
        %v773 = vadd.f32 %v769, %v772
        %vm774 = vweird.f32 %v585
        %vm775 = vweird.f32 %v769
        %vm776 = vmor %vm774, %vm775
        %v777 = vsel %vm776, %v769, %v773
        %v778 = vand.u32 2147483647, %v585
        %vm779 = vcmp.eq.f32.partialorder %v778, 8.507059e+37
        %v780 = vand.u32 %v585, 2147483648
        %v781 = vor.u32 1.1754944e-38, %v780
        %v782 = vsel %vm779, %v781, %v777
        %v783 = vmul.f32 1.0, %v782
        %v784 = vrcp.pop %v586
        %v785 = vmul.f32 %v586, %v784
        %v786 = vsub.f32 1.0, %v785
        %v787 = vmul.f32 %v784, %v786
        %v788 = vadd.f32 %v784, %v787
        %vm789 = vweird.f32 %v586
        %vm790 = vweird.f32 %v784
        %vm791 = vmor %vm789, %vm790
        %v792 = vsel %vm791, %v784, %v788
        %v793 = vand.u32 2147483647, %v586
        %vm794 = vcmp.eq.f32.partialorder %v793, 8.507059e+37
        %v795 = vand.u32 %v586, 2147483648
        %v796 = vor.u32 1.1754944e-38, %v795
        %v797 = vsel %vm794, %v796, %v792
        %v798 = vmul.f32 1.0, %v797
        %v799 = vrcp.pop %v587
        %v800 = vmul.f32 %v587, %v799
        %v801 = vsub.f32 1.0, %v800
        %v802 = vmul.f32 %v799, %v801
        %v803 = vadd.f32 %v799, %v802
        %vm804 = vweird.f32 %v587
        %vm805 = vweird.f32 %v799
        %vm806 = vmor %vm804, %vm805
        %v807 = vsel %vm806, %v799, %v803
        %v808 = vand.u32 2147483647, %v587
        %vm809 = vcmp.eq.f32.partialorder %v808, 8.507059e+37
        %v810 = vand.u32 %v587, 2147483648
        %v811 = vor.u32 1.1754944e-38, %v810
        %v812 = vsel %vm809, %v811, %v807
        %v813 = vmul.f32 1.0, %v812
        %v814 = vrcp.pop %v588
        %v815 = vmul.f32 %v588, %v814
        %v816 = vsub.f32 1.0, %v815
        %v817 = vmul.f32 %v814, %v816
        %v818 = vadd.f32 %v814, %v817
        %vm819 = vweird.f32 %v588
        %vm820 = vweird.f32 %v814
        %vm821 = vmor %vm819, %vm820
        %v822 = vsel %vm821, %v814, %v818
        %v823 = vand.u32 2147483647, %v588
        %vm824 = vcmp.eq.f32.partialorder %v823, 8.507059e+37
        %v825 = vand.u32 %v588, 2147483648
        %v826 = vor.u32 1.1754944e-38, %v825
        %v827 = vsel %vm824, %v826, %v822
        %v828 = vmul.f32 1.0, %v827
        %v829 = vmul.f32 %v486, %v603
        %v830 = vmul.f32 %v488, %v618
        %v831 = vmul.f32 %v491, %v633
        %v832 = vmul.f32 %v493, %v648
        %v833 = vmul.f32 %v496, %v663
        %v834 = vmul.f32 %v498, %v678
        %v835 = vmul.f32 %v501, %v693
        %v836 = vmul.f32 %v503, %v708
        %v837 = vmul.f32 %v506, %v723
        %v838 = vmul.f32 %v508, %v738
        %v839 = vmul.f32 %v511, %v753
        %v840 = vmul.f32 %v513, %v768
        %v841 = vmul.f32 %v516, %v783
        %v842 = vmul.f32 %v518, %v798
        %v843 = vmul.f32 %v521, %v813
        %v844 = vmul.f32 %v523, %v828
        %v845 = vpack.c.bf16 %v830, %v829
        %v846 = vpack.c.bf16 %v832, %v831
        %v847 = vpack.c.bf16 %v834, %v833
        %v848 = vpack.c.bf16 %v836, %v835
        %v849 = vpack.c.bf16 %v838, %v837
        %v850 = vpack.c.bf16 %v840, %v839
        %v851 = vpack.c.bf16 %v842, %v841
        %v852 = vpack.c.bf16 %v844, %v843
        %v853 = vld [vmem:[%s3] sm:$0xf]
        %v854 = vld [vmem:[%s3 + $0x4] sm:$0xf]
        %v855 = vld [vmem:[%s3 + $0x8] sm:$0xf]
        %v856 = vld [vmem:[%s3 + $0xc] sm:$0xf]
        %v857 = vld [vmem:[%s4] sm:$0x1]
        %v859 = vperm.slane %v857, 0
        %v865 = vunpack.c.l.b16 %v853
        %v866 = vunpack.c.l.b16 %v854
        %v867 = vunpack.c.l.b16 %v855
        %v868 = vunpack.c.l.b16 %v856
        %v869 = vpack.c.b16 %v866, %v865
        %v870 = vpack.c.b16 %v868, %v867
        %vm873 = vcmask 261120
        %v875 = vsel %vm873, %v845, 0
        %v878 = vsel %vm873, %v846, 0
        %v881 = vsel %vm873, %v847, 0
        %v884 = vsel %vm873, %v848, 0
        %v887 = vsel %vm873, %v849, 0
        %v890 = vsel %vm873, %v850, 0
        %v893 = vsel %vm873, %v851, 0
        %v896 = vsel %vm873, %v852, 0
        %898 = vmatpush.bf16.msra.mxu0 0
        %899 = vmatpush.bf16.msra.mxu0 0
        %900 = vmatpush.bf16.msra.mxu0 0
        %901 = vmatpush.bf16.msra.mxu0 0
        %902 = vmatpush.bf16.msra.mxu0 0
        %903 = vmatpush.bf16.msra.mxu0 0
        %904 = vmatpush.bf16.msra.mxu0 %v870
        %905 = vmatpush.bf16.msra.mxu0 %v869
        %906 = vmatmul.bf16.gmra.mxu0 %v875
        %v907 = vpop.f32.mrf.mxu0
        %v908 = vadd.f32 %v859, %v907
        %v909 = vpop.f32.mrf.mxu0
        %v910 = vadd.f32 %v859, %v909
        %911 = vmatmul.bf16.gmra.mxu0 %v878
        %v912 = vpop.f32.mrf.mxu0
        %v913 = vadd.f32 %v859, %v912
        %v914 = vpop.f32.mrf.mxu0
        %v915 = vadd.f32 %v859, %v914
        %916 = vmatmul.bf16.gmra.mxu0 %v881
        %v917 = vpop.f32.mrf.mxu0
        %v918 = vadd.f32 %v859, %v917
        %v919 = vpop.f32.mrf.mxu0
        %v920 = vadd.f32 %v859, %v919
        %921 = vmatmul.bf16.gmra.mxu0 %v884
        %v922 = vpop.f32.mrf.mxu0
        %v923 = vadd.f32 %v859, %v922
        %v924 = vpop.f32.mrf.mxu0
        %v925 = vadd.f32 %v859, %v924
        %926 = vmatmul.bf16.gmra.mxu0 %v887
        %v927 = vpop.f32.mrf.mxu0
        %v928 = vadd.f32 %v859, %v927
        %v929 = vpop.f32.mrf.mxu0
        %v930 = vadd.f32 %v859, %v929
        %931 = vmatmul.bf16.gmra.mxu0 %v890
        %v932 = vpop.f32.mrf.mxu0
        %v933 = vadd.f32 %v859, %v932
        %v934 = vpop.f32.mrf.mxu0
        %v935 = vadd.f32 %v859, %v934
        %936 = vmatmul.bf16.gmra.mxu0 %v893
        %v937 = vpop.f32.mrf.mxu0
        %v938 = vadd.f32 %v859, %v937
        %v939 = vpop.f32.mrf.mxu0
        %v940 = vadd.f32 %v859, %v939
        %941 = vmatmul.bf16.gmra.mxu0 %v896
        %v942 = vpop.f32.mrf.mxu0
        %v943 = vadd.f32 %v859, %v942
        %v944 = vpop.f32.mrf.mxu0
        %v945 = vadd.f32 %v859, %v944
        %946 = vdwg.mxu0
        %v947 = vxor.u32 %v908, 2147483648
        %v948 = vxor.u32 %v910, 2147483648
        %v949 = vxor.u32 %v913, 2147483648
        %v950 = vxor.u32 %v915, 2147483648
        %v951 = vxor.u32 %v918, 2147483648
        %v952 = vxor.u32 %v920, 2147483648
        %v953 = vxor.u32 %v923, 2147483648
        %v954 = vxor.u32 %v925, 2147483648
        %v955 = vxor.u32 %v928, 2147483648
        %v956 = vxor.u32 %v930, 2147483648
        %v957 = vxor.u32 %v933, 2147483648
        %v958 = vxor.u32 %v935, 2147483648
        %v959 = vxor.u32 %v938, 2147483648
        %v960 = vxor.u32 %v940, 2147483648
        %v961 = vxor.u32 %v943, 2147483648
        %v962 = vxor.u32 %v945, 2147483648
        %v963 = vmul.f32 %v947, 1.442695
        %v964 = vpow.pop %v963
        %v965 = vmul.f32 %v948, 1.442695
        %v966 = vpow.pop %v965
        %v967 = vmul.f32 %v949, 1.442695
        %v968 = vpow.pop %v967
        %v969 = vmul.f32 %v950, 1.442695
        %v970 = vpow.pop %v969
        %v971 = vmul.f32 %v951, 1.442695
        %v972 = vpow.pop %v971
        %v973 = vmul.f32 %v952, 1.442695
        %v974 = vpow.pop %v973
        %v975 = vmul.f32 %v953, 1.442695
        %v976 = vpow.pop %v975
        %v977 = vmul.f32 %v954, 1.442695
        %v978 = vpow.pop %v977
        %v979 = vmul.f32 %v955, 1.442695
        %v980 = vpow.pop %v979
        %v981 = vmul.f32 %v956, 1.442695
        %v982 = vpow.pop %v981
        %v983 = vmul.f32 %v957, 1.442695
        %v984 = vpow.pop %v983
        %v985 = vmul.f32 %v958, 1.442695
        %v986 = vpow.pop %v985
        %v987 = vmul.f32 %v959, 1.442695
        %v988 = vpow.pop %v987
        %v989 = vmul.f32 %v960, 1.442695
        %v990 = vpow.pop %v989
        %v991 = vmul.f32 %v961, 1.442695
        %v992 = vpow.pop %v991
        %v993 = vmul.f32 %v962, 1.442695
        %v994 = vpow.pop %v993
        %v995 = vadd.f32 %v964, 1.0
        %v996 = vadd.f32 %v966, 1.0
        %v997 = vadd.f32 %v968, 1.0
        %v998 = vadd.f32 %v970, 1.0
        %v999 = vadd.f32 %v972, 1.0
        %v1000 = vadd.f32 %v974, 1.0
        %v1001 = vadd.f32 %v976, 1.0
        %v1002 = vadd.f32 %v978, 1.0
        %v1003 = vadd.f32 %v980, 1.0
        %v1004 = vadd.f32 %v982, 1.0
        %v1005 = vadd.f32 %v984, 1.0
        %v1006 = vadd.f32 %v986, 1.0
        %v1007 = vadd.f32 %v988, 1.0
        %v1008 = vadd.f32 %v990, 1.0
        %v1009 = vadd.f32 %v992, 1.0
        %v1010 = vadd.f32 %v994, 1.0
        %v1011 = vrcp.pop %v995
        %v1012 = vmul.f32 %v995, %v1011
        %v1013 = vsub.f32 1.0, %v1012
        %v1014 = vmul.f32 %v1011, %v1013
        %v1015 = vadd.f32 %v1011, %v1014
        %vm1016 = vweird.f32 %v995
        %vm1017 = vweird.f32 %v1011
        %vm1018 = vmor %vm1016, %vm1017
        %v1019 = vsel %vm1018, %v1011, %v1015
        %v1020 = vand.u32 2147483647, %v995
        %vm1021 = vcmp.eq.f32.partialorder %v1020, 8.507059e+37
        %v1022 = vand.u32 %v995, 2147483648
        %v1023 = vor.u32 1.1754944e-38, %v1022
        %v1024 = vsel %vm1021, %v1023, %v1019
        %v1025 = vmul.f32 1.0, %v1024
        %v1026 = vrcp.pop %v996
        %v1027 = vmul.f32 %v996, %v1026
        %v1028 = vsub.f32 1.0, %v1027
        %v1029 = vmul.f32 %v1026, %v1028
        %v1030 = vadd.f32 %v1026, %v1029
        %vm1031 = vweird.f32 %v996
        %vm1032 = vweird.f32 %v1026
        %vm1033 = vmor %vm1031, %vm1032
        %v1034 = vsel %vm1033, %v1026, %v1030
        %v1035 = vand.u32 2147483647, %v996
        %vm1036 = vcmp.eq.f32.partialorder %v1035, 8.507059e+37
        %v1037 = vand.u32 %v996, 2147483648
        %v1038 = vor.u32 1.1754944e-38, %v1037
        %v1039 = vsel %vm1036, %v1038, %v1034
        %v1040 = vmul.f32 1.0, %v1039
        %v1041 = vrcp.pop %v997
        %v1042 = vmul.f32 %v997, %v1041
        %v1043 = vsub.f32 1.0, %v1042
        %v1044 = vmul.f32 %v1041, %v1043
        %v1045 = vadd.f32 %v1041, %v1044
        %vm1046 = vweird.f32 %v997
        %vm1047 = vweird.f32 %v1041
        %vm1048 = vmor %vm1046, %vm1047
        %v1049 = vsel %vm1048, %v1041, %v1045
        %v1050 = vand.u32 2147483647, %v997
        %vm1051 = vcmp.eq.f32.partialorder %v1050, 8.507059e+37
        %v1052 = vand.u32 %v997, 2147483648
        %v1053 = vor.u32 1.1754944e-38, %v1052
        %v1054 = vsel %vm1051, %v1053, %v1049
        %v1055 = vmul.f32 1.0, %v1054
        %v1056 = vrcp.pop %v998
        %v1057 = vmul.f32 %v998, %v1056
        %v1058 = vsub.f32 1.0, %v1057
        %v1059 = vmul.f32 %v1056, %v1058
        %v1060 = vadd.f32 %v1056, %v1059
        %vm1061 = vweird.f32 %v998
        %vm1062 = vweird.f32 %v1056
        %vm1063 = vmor %vm1061, %vm1062
        %v1064 = vsel %vm1063, %v1056, %v1060
        %v1065 = vand.u32 2147483647, %v998
        %vm1066 = vcmp.eq.f32.partialorder %v1065, 8.507059e+37
        %v1067 = vand.u32 %v998, 2147483648
        %v1068 = vor.u32 1.1754944e-38, %v1067
        %v1069 = vsel %vm1066, %v1068, %v1064
        %v1070 = vmul.f32 1.0, %v1069
        %v1071 = vrcp.pop %v999
        %v1072 = vmul.f32 %v999, %v1071
        %v1073 = vsub.f32 1.0, %v1072
        %v1074 = vmul.f32 %v1071, %v1073
        %v1075 = vadd.f32 %v1071, %v1074
        %vm1076 = vweird.f32 %v999
        %vm1077 = vweird.f32 %v1071
        %vm1078 = vmor %vm1076, %vm1077
        %v1079 = vsel %vm1078, %v1071, %v1075
        %v1080 = vand.u32 2147483647, %v999
        %vm1081 = vcmp.eq.f32.partialorder %v1080, 8.507059e+37
        %v1082 = vand.u32 %v999, 2147483648
        %v1083 = vor.u32 1.1754944e-38, %v1082
        %v1084 = vsel %vm1081, %v1083, %v1079
        %v1085 = vmul.f32 1.0, %v1084
        %v1086 = vrcp.pop %v1000
        %v1087 = vmul.f32 %v1000, %v1086
        %v1088 = vsub.f32 1.0, %v1087
        %v1089 = vmul.f32 %v1086, %v1088
        %v1090 = vadd.f32 %v1086, %v1089
        %vm1091 = vweird.f32 %v1000
        %vm1092 = vweird.f32 %v1086
        %vm1093 = vmor %vm1091, %vm1092
        %v1094 = vsel %vm1093, %v1086, %v1090
        %v1095 = vand.u32 2147483647, %v1000
        %vm1096 = vcmp.eq.f32.partialorder %v1095, 8.507059e+37
        %v1097 = vand.u32 %v1000, 2147483648
        %v1098 = vor.u32 1.1754944e-38, %v1097
        %v1099 = vsel %vm1096, %v1098, %v1094
        %v1100 = vmul.f32 1.0, %v1099
        %v1101 = vrcp.pop %v1001
        %v1102 = vmul.f32 %v1001, %v1101
        %v1103 = vsub.f32 1.0, %v1102
        %v1104 = vmul.f32 %v1101, %v1103
        %v1105 = vadd.f32 %v1101, %v1104
        %vm1106 = vweird.f32 %v1001
        %vm1107 = vweird.f32 %v1101
        %vm1108 = vmor %vm1106, %vm1107
        %v1109 = vsel %vm1108, %v1101, %v1105
        %v1110 = vand.u32 2147483647, %v1001
        %vm1111 = vcmp.eq.f32.partialorder %v1110, 8.507059e+37
        %v1112 = vand.u32 %v1001, 2147483648
        %v1113 = vor.u32 1.1754944e-38, %v1112
        %v1114 = vsel %vm1111, %v1113, %v1109
        %v1115 = vmul.f32 1.0, %v1114
        %v1116 = vrcp.pop %v1002
        %v1117 = vmul.f32 %v1002, %v1116
        %v1118 = vsub.f32 1.0, %v1117
        %v1119 = vmul.f32 %v1116, %v1118
        %v1120 = vadd.f32 %v1116, %v1119
        %vm1121 = vweird.f32 %v1002
        %vm1122 = vweird.f32 %v1116
        %vm1123 = vmor %vm1121, %vm1122
        %v1124 = vsel %vm1123, %v1116, %v1120
        %v1125 = vand.u32 2147483647, %v1002
        %vm1126 = vcmp.eq.f32.partialorder %v1125, 8.507059e+37
        %v1127 = vand.u32 %v1002, 2147483648
        %v1128 = vor.u32 1.1754944e-38, %v1127
        %v1129 = vsel %vm1126, %v1128, %v1124
        %v1130 = vmul.f32 1.0, %v1129
        %v1131 = vrcp.pop %v1003
        %v1132 = vmul.f32 %v1003, %v1131
        %v1133 = vsub.f32 1.0, %v1132
        %v1134 = vmul.f32 %v1131, %v1133
        %v1135 = vadd.f32 %v1131, %v1134
        %vm1136 = vweird.f32 %v1003
        %vm1137 = vweird.f32 %v1131
        %vm1138 = vmor %vm1136, %vm1137
        %v1139 = vsel %vm1138, %v1131, %v1135
        %v1140 = vand.u32 2147483647, %v1003
        %vm1141 = vcmp.eq.f32.partialorder %v1140, 8.507059e+37
        %v1142 = vand.u32 %v1003, 2147483648
        %v1143 = vor.u32 1.1754944e-38, %v1142
        %v1144 = vsel %vm1141, %v1143, %v1139
        %v1145 = vmul.f32 1.0, %v1144
        %v1146 = vrcp.pop %v1004
        %v1147 = vmul.f32 %v1004, %v1146
        %v1148 = vsub.f32 1.0, %v1147
        %v1149 = vmul.f32 %v1146, %v1148
        %v1150 = vadd.f32 %v1146, %v1149
        %vm1151 = vweird.f32 %v1004
        %vm1152 = vweird.f32 %v1146
        %vm1153 = vmor %vm1151, %vm1152
        %v1154 = vsel %vm1153, %v1146, %v1150
        %v1155 = vand.u32 2147483647, %v1004
        %vm1156 = vcmp.eq.f32.partialorder %v1155, 8.507059e+37
        %v1157 = vand.u32 %v1004, 2147483648
        %v1158 = vor.u32 1.1754944e-38, %v1157
        %v1159 = vsel %vm1156, %v1158, %v1154
        %v1160 = vmul.f32 1.0, %v1159
        %v1161 = vrcp.pop %v1005
        %v1162 = vmul.f32 %v1005, %v1161
        %v1163 = vsub.f32 1.0, %v1162
        %v1164 = vmul.f32 %v1161, %v1163
        %v1165 = vadd.f32 %v1161, %v1164
        %vm1166 = vweird.f32 %v1005
        %vm1167 = vweird.f32 %v1161
        %vm1168 = vmor %vm1166, %vm1167
        %v1169 = vsel %vm1168, %v1161, %v1165
        %v1170 = vand.u32 2147483647, %v1005
        %vm1171 = vcmp.eq.f32.partialorder %v1170, 8.507059e+37
        %v1172 = vand.u32 %v1005, 2147483648
        %v1173 = vor.u32 1.1754944e-38, %v1172
        %v1174 = vsel %vm1171, %v1173, %v1169
        %v1175 = vmul.f32 1.0, %v1174
        %v1176 = vrcp.pop %v1006
        %v1177 = vmul.f32 %v1006, %v1176
        %v1178 = vsub.f32 1.0, %v1177
        %v1179 = vmul.f32 %v1176, %v1178
        %v1180 = vadd.f32 %v1176, %v1179
        %vm1181 = vweird.f32 %v1006
        %vm1182 = vweird.f32 %v1176
        %vm1183 = vmor %vm1181, %vm1182
        %v1184 = vsel %vm1183, %v1176, %v1180
        %v1185 = vand.u32 2147483647, %v1006
        %vm1186 = vcmp.eq.f32.partialorder %v1185, 8.507059e+37
        %v1187 = vand.u32 %v1006, 2147483648
        %v1188 = vor.u32 1.1754944e-38, %v1187
        %v1189 = vsel %vm1186, %v1188, %v1184
        %v1190 = vmul.f32 1.0, %v1189
        %v1191 = vrcp.pop %v1007
        %v1192 = vmul.f32 %v1007, %v1191
        %v1193 = vsub.f32 1.0, %v1192
        %v1194 = vmul.f32 %v1191, %v1193
        %v1195 = vadd.f32 %v1191, %v1194
        %vm1196 = vweird.f32 %v1007
        %vm1197 = vweird.f32 %v1191
        %vm1198 = vmor %vm1196, %vm1197
        %v1199 = vsel %vm1198, %v1191, %v1195
        %v1200 = vand.u32 2147483647, %v1007
        %vm1201 = vcmp.eq.f32.partialorder %v1200, 8.507059e+37
        %v1202 = vand.u32 %v1007, 2147483648
        %v1203 = vor.u32 1.1754944e-38, %v1202
        %v1204 = vsel %vm1201, %v1203, %v1199
        %v1205 = vmul.f32 1.0, %v1204
        %v1206 = vrcp.pop %v1008
        %v1207 = vmul.f32 %v1008, %v1206
        %v1208 = vsub.f32 1.0, %v1207
        %v1209 = vmul.f32 %v1206, %v1208
        %v1210 = vadd.f32 %v1206, %v1209
        %vm1211 = vweird.f32 %v1008
        %vm1212 = vweird.f32 %v1206
        %vm1213 = vmor %vm1211, %vm1212
        %v1214 = vsel %vm1213, %v1206, %v1210
        %v1215 = vand.u32 2147483647, %v1008
        %vm1216 = vcmp.eq.f32.partialorder %v1215, 8.507059e+37
        %v1217 = vand.u32 %v1008, 2147483648
        %v1218 = vor.u32 1.1754944e-38, %v1217
        %v1219 = vsel %vm1216, %v1218, %v1214
        %v1220 = vmul.f32 1.0, %v1219
        %v1221 = vrcp.pop %v1009
        %v1222 = vmul.f32 %v1009, %v1221
        %v1223 = vsub.f32 1.0, %v1222
        %v1224 = vmul.f32 %v1221, %v1223
        %v1225 = vadd.f32 %v1221, %v1224
        %vm1226 = vweird.f32 %v1009
        %vm1227 = vweird.f32 %v1221
        %vm1228 = vmor %vm1226, %vm1227
        %v1229 = vsel %vm1228, %v1221, %v1225
        %v1230 = vand.u32 2147483647, %v1009
        %vm1231 = vcmp.eq.f32.partialorder %v1230, 8.507059e+37
        %v1232 = vand.u32 %v1009, 2147483648
        %v1233 = vor.u32 1.1754944e-38, %v1232
        %v1234 = vsel %vm1231, %v1233, %v1229
        %v1235 = vmul.f32 1.0, %v1234
        %v1236 = vrcp.pop %v1010
        %v1237 = vmul.f32 %v1010, %v1236
        %v1238 = vsub.f32 1.0, %v1237
        %v1239 = vmul.f32 %v1236, %v1238
        %v1240 = vadd.f32 %v1236, %v1239
        %vm1241 = vweird.f32 %v1010
        %vm1242 = vweird.f32 %v1236
        %vm1243 = vmor %vm1241, %vm1242
        %v1244 = vsel %vm1243, %v1236, %v1240
        %v1245 = vand.u32 2147483647, %v1010
        %vm1246 = vcmp.eq.f32.partialorder %v1245, 8.507059e+37
        %v1247 = vand.u32 %v1010, 2147483648
        %v1248 = vor.u32 1.1754944e-38, %v1247
        %v1249 = vsel %vm1246, %v1248, %v1244
        %v1250 = vmul.f32 1.0, %v1249
        %v1251 = vmul.f32 %v908, %v1025
        %v1252 = vmul.f32 %v910, %v1040
        %v1253 = vmul.f32 %v913, %v1055
        %v1254 = vmul.f32 %v915, %v1070
        %v1255 = vmul.f32 %v918, %v1085
        %v1256 = vmul.f32 %v920, %v1100
        %v1257 = vmul.f32 %v923, %v1115
        %v1258 = vmul.f32 %v925, %v1130
        %v1259 = vmul.f32 %v928, %v1145
        %v1260 = vmul.f32 %v930, %v1160
        %v1261 = vmul.f32 %v933, %v1175
        %v1262 = vmul.f32 %v935, %v1190
        %v1263 = vmul.f32 %v938, %v1205
        %v1264 = vmul.f32 %v940, %v1220
        %v1265 = vmul.f32 %v943, %v1235
        %v1266 = vmul.f32 %v945, %v1250
        %v1267 = vpack.c.bf16 %v1252, %v1251
        %v1268 = vpack.c.bf16 %v1254, %v1253
        %v1269 = vpack.c.bf16 %v1256, %v1255
        %v1270 = vpack.c.bf16 %v1258, %v1257
        %v1271 = vpack.c.bf16 %v1260, %v1259
        %v1272 = vpack.c.bf16 %v1262, %v1261
        %v1273 = vpack.c.bf16 %v1264, %v1263
        %v1274 = vpack.c.bf16 %v1266, %v1265
        %v1275 = vld [vmem:[%s5] sm:$0xff]
        %v1276 = vld [vmem:[%s5 + $0x8] sm:$0xff]
        %v1277 = vld [vmem:[%s5 + $0x10] sm:$0xff]
        %v1278 = vld [vmem:[%s5 + $0x18] sm:$0xff]
        %v1279 = vld [vmem:[%s5 + $0x20] sm:$0xff]
        %v1280 = vld [vmem:[%s5 + $0x28] sm:$0xff]
        %v1281 = vld [vmem:[%s5 + $0x30] sm:$0xff]
        %v1282 = vld [vmem:[%s5 + $0x38] sm:$0xff]
        %v1283 = vld [vmem:[%s5 + $0x40] sm:$0xff]
        %v1284 = vld [vmem:[%s5 + $0x48] sm:$0xff]
        %v1285 = vld [vmem:[%s5 + $0x50] sm:$0xff]
        %v1286 = vld [vmem:[%s5 + $0x58] sm:$0xff]
        %v1287 = vld [vmem:[%s5 + $0x60] sm:$0xff]
        %v1288 = vld [vmem:[%s5 + $0x68] sm:$0xff]
        %v1289 = vld [vmem:[%s5 + $0x70] sm:$0xff]
        %v1290 = vld [vmem:[%s5 + $0x78] sm:$0xff]
        %v1291 = vld [vmem:[%s5 + $0x80] sm:$0xff]
        %v1292 = vld [vmem:[%s5 + $0x88] sm:$0xff]
        %v1293 = vld [vmem:[%s5 + $0x90] sm:$0xff]
        %v1294 = vld [vmem:[%s5 + $0x98] sm:$0xff]
        %v1295 = vld [vmem:[%s5 + $0xa0] sm:$0xff]
        %v1296 = vld [vmem:[%s5 + $0xa8] sm:$0xff]
        %v1297 = vld [vmem:[%s5 + $0xb0] sm:$0xff]
        %v1298 = vld [vmem:[%s5 + $0xb8] sm:$0xff]
        %v1299 = vld [vmem:[%s5 + $0xc0] sm:$0xff]
        %v1300 = vld [vmem:[%s5 + $0xc8] sm:$0xff]
        %v1301 = vld [vmem:[%s5 + $0xd0] sm:$0xff]
        %v1302 = vld [vmem:[%s5 + $0xd8] sm:$0xff]
        %v1303 = vld [vmem:[%s5 + $0xe0] sm:$0xff]
        %v1304 = vld [vmem:[%s5 + $0xe8] sm:$0xff]
        %v1305 = vld [vmem:[%s5 + $0xf0] sm:$0xff]
        %v1306 = vld [vmem:[%s5 + $0xf8] sm:$0xff]
        %v1307 = vld [vmem:[%s5 + $0x100] sm:$0xff]
        %v1308 = vld [vmem:[%s5 + $0x108] sm:$0xff]
        %v1309 = vld [vmem:[%s5 + $0x110] sm:$0xff]
        %v1310 = vld [vmem:[%s5 + $0x118] sm:$0xff]
        %v1311 = vld [vmem:[%s5 + $0x120] sm:$0xff]
        %v1312 = vld [vmem:[%s5 + $0x128] sm:$0xff]
        %v1313 = vld [vmem:[%s5 + $0x130] sm:$0xff]
        %v1314 = vld [vmem:[%s5 + $0x138] sm:$0xff]
        %v1315 = vld [vmem:[%s5 + $0x140] sm:$0xff]
        %v1316 = vld [vmem:[%s5 + $0x148] sm:$0xff]
        %v1317 = vld [vmem:[%s5 + $0x150] sm:$0xff]
        %v1318 = vld [vmem:[%s5 + $0x158] sm:$0xff]
        %v1319 = vld [vmem:[%s5 + $0x160] sm:$0xff]
        %v1320 = vld [vmem:[%s5 + $0x168] sm:$0xff]
        %v1321 = vld [vmem:[%s5 + $0x170] sm:$0xff]
        %v1322 = vld [vmem:[%s5 + $0x178] sm:$0xff]
        %v1323 = vld [vmem:[%s5 + $0x180] sm:$0xff]
        %v1324 = vld [vmem:[%s5 + $0x188] sm:$0xff]
        %v1325 = vld [vmem:[%s5 + $0x190] sm:$0xff]
        %v1326 = vld [vmem:[%s5 + $0x198] sm:$0xff]
        %v1327 = vld [vmem:[%s5 + $0x1a0] sm:$0xff]
        %v1328 = vld [vmem:[%s5 + $0x1a8] sm:$0xff]
        %v1329 = vld [vmem:[%s5 + $0x1b0] sm:$0xff]
        %v1330 = vld [vmem:[%s5 + $0x1b8] sm:$0xff]
        %v1331 = vld [vmem:[%s5 + $0x1c0] sm:$0xff]
        %v1332 = vld [vmem:[%s5 + $0x1c8] sm:$0xff]
        %v1333 = vld [vmem:[%s5 + $0x1d0] sm:$0xff]
        %v1334 = vld [vmem:[%s5 + $0x1d8] sm:$0xff]
        %v1335 = vld [vmem:[%s5 + $0x1e0] sm:$0xff]
        %v1336 = vld [vmem:[%s5 + $0x1e8] sm:$0xff]
        %v1337 = vld [vmem:[%s5 + $0x1f0] sm:$0xff]
        %v1338 = vld [vmem:[%s5 + $0x1f8] sm:$0xff]
        %v1339 = vld [vmem:[%s5 + $0x200] sm:$0xff]
        %v1340 = vld [vmem:[%s5 + $0x208] sm:$0xff]
        %v1341 = vld [vmem:[%s5 + $0x210] sm:$0xff]
        %v1342 = vld [vmem:[%s5 + $0x218] sm:$0xff]
        %v1343 = vld [vmem:[%s5 + $0x220] sm:$0xff]
        %v1344 = vld [vmem:[%s5 + $0x228] sm:$0xff]
        %v1345 = vld [vmem:[%s5 + $0x230] sm:$0xff]
        %v1346 = vld [vmem:[%s5 + $0x238] sm:$0xff]
        %v1347 = vld [vmem:[%s5 + $0x240] sm:$0xff]
        %v1348 = vld [vmem:[%s5 + $0x248] sm:$0xff]
        %v1349 = vld [vmem:[%s5 + $0x250] sm:$0xff]
        %v1350 = vld [vmem:[%s5 + $0x258] sm:$0xff]
        %v1351 = vld [vmem:[%s5 + $0x260] sm:$0xff]
        %v1352 = vld [vmem:[%s5 + $0x268] sm:$0xff]
        %v1353 = vld [vmem:[%s5 + $0x270] sm:$0xff]
        %v1354 = vld [vmem:[%s5 + $0x278] sm:$0xff]
        %v1355 = vld [vmem:[%s5 + $0x280] sm:$0xff]
        %v1356 = vld [vmem:[%s5 + $0x288] sm:$0xff]
        %v1357 = vld [vmem:[%s5 + $0x290] sm:$0xff]
        %v1358 = vld [vmem:[%s5 + $0x298] sm:$0xff]
        %v1359 = vld [vmem:[%s5 + $0x2a0] sm:$0xff]
        %v1360 = vld [vmem:[%s5 + $0x2a8] sm:$0xff]
        %v1361 = vld [vmem:[%s5 + $0x2b0] sm:$0xff]
        %v1362 = vld [vmem:[%s5 + $0x2b8] sm:$0xff]
        %v1363 = vld [vmem:[%s5 + $0x2c0] sm:$0xff]
        %v1364 = vld [vmem:[%s5 + $0x2c8] sm:$0xff]
        %v1365 = vld [vmem:[%s5 + $0x2d0] sm:$0xff]
        %v1366 = vld [vmem:[%s5 + $0x2d8] sm:$0xff]
        %v1367 = vld [vmem:[%s5 + $0x2e0] sm:$0xff]
        %v1368 = vld [vmem:[%s5 + $0x2e8] sm:$0xff]
        %v1369 = vld [vmem:[%s5 + $0x2f0] sm:$0xff]
        %v1370 = vld [vmem:[%s5 + $0x2f8] sm:$0xff]
        %v1371 = vld [vmem:[%s6] sm:$0xff]
        %v1372 = vld [vmem:[%s6 + $0x8] sm:$0xf]
        %v1375 = vperm.slane %v1371, 0
        %v1376 = vperm.slane %v1371, 1
        %v1377 = vperm.slane %v1371, 2
        %v1378 = vperm.slane %v1371, 3
        %v1379 = vperm.slane %v1371, 4
        %v1380 = vperm.slane %v1371, 5
        %v1381 = vperm.slane %v1371, 6
        %v1382 = vperm.slane %v1371, 7
        %v1383 = vperm.slane %v1372, 0
        %v1384 = vperm.slane %v1372, 1
        %v1385 = vperm.slane %v1372, 2
        %v1386 = vperm.slane %v1372, 3
        %v1495 = vunpack.c.l.b16 %v1275
        %v1496 = vunpack.c.h.b16 %v1275
        %v1497 = vunpack.c.l.b16 %v1276
        %v1498 = vunpack.c.h.b16 %v1276
        %v1499 = vunpack.c.l.b16 %v1277
        %v1500 = vunpack.c.h.b16 %v1277
        %v1501 = vunpack.c.l.b16 %v1278
        %v1502 = vunpack.c.h.b16 %v1278
        %v1503 = vunpack.c.l.b16 %v1279
        %v1504 = vunpack.c.h.b16 %v1279
        %v1505 = vunpack.c.l.b16 %v1280
        %v1506 = vunpack.c.h.b16 %v1280
        %v1507 = vunpack.c.l.b16 %v1281
        %v1508 = vunpack.c.h.b16 %v1281
        %v1509 = vunpack.c.l.b16 %v1282
        %v1510 = vunpack.c.h.b16 %v1282
        %v1511 = vunpack.c.l.b16 %v1283
        %v1512 = vunpack.c.h.b16 %v1283
        %v1513 = vunpack.c.l.b16 %v1284
        %v1514 = vunpack.c.h.b16 %v1284
        %v1515 = vunpack.c.l.b16 %v1285
        %v1516 = vunpack.c.h.b16 %v1285
        %v1517 = vunpack.c.l.b16 %v1286
        %v1518 = vunpack.c.h.b16 %v1286
        %v1519 = vunpack.c.l.b16 %v1287
        %v1520 = vunpack.c.h.b16 %v1287
        %v1521 = vunpack.c.l.b16 %v1288
        %v1522 = vunpack.c.h.b16 %v1288
        %v1523 = vunpack.c.l.b16 %v1289
        %v1524 = vunpack.c.h.b16 %v1289
        %v1525 = vunpack.c.l.b16 %v1290
        %v1526 = vunpack.c.h.b16 %v1290
        %v1527 = vunpack.c.l.b16 %v1291
        %v1528 = vunpack.c.h.b16 %v1291
        %v1529 = vunpack.c.l.b16 %v1292
        %v1530 = vunpack.c.h.b16 %v1292
        %v1531 = vunpack.c.l.b16 %v1293
        %v1532 = vunpack.c.h.b16 %v1293
        %v1533 = vunpack.c.l.b16 %v1294
        %v1534 = vunpack.c.h.b16 %v1294
        %v1535 = vunpack.c.l.b16 %v1295
        %v1536 = vunpack.c.h.b16 %v1295
        %v1537 = vunpack.c.l.b16 %v1296
        %v1538 = vunpack.c.h.b16 %v1296
        %v1539 = vunpack.c.l.b16 %v1297
        %v1540 = vunpack.c.h.b16 %v1297
        %v1541 = vunpack.c.l.b16 %v1298
        %v1542 = vunpack.c.h.b16 %v1298
        %v1543 = vunpack.c.l.b16 %v1299
        %v1544 = vunpack.c.h.b16 %v1299
        %v1545 = vunpack.c.l.b16 %v1300
        %v1546 = vunpack.c.h.b16 %v1300
        %v1547 = vunpack.c.l.b16 %v1301
        %v1548 = vunpack.c.h.b16 %v1301
        %v1549 = vunpack.c.l.b16 %v1302
        %v1550 = vunpack.c.h.b16 %v1302
        %v1551 = vunpack.c.l.b16 %v1303
        %v1552 = vunpack.c.h.b16 %v1303
        %v1553 = vunpack.c.l.b16 %v1304
        %v1554 = vunpack.c.h.b16 %v1304
        %v1555 = vunpack.c.l.b16 %v1305
        %v1556 = vunpack.c.h.b16 %v1305
        %v1557 = vunpack.c.l.b16 %v1306
        %v1558 = vunpack.c.h.b16 %v1306
        %v1559 = vunpack.c.l.b16 %v1307
        %v1560 = vunpack.c.h.b16 %v1307
        %v1561 = vunpack.c.l.b16 %v1308
        %v1562 = vunpack.c.h.b16 %v1308
        %v1563 = vunpack.c.l.b16 %v1309
        %v1564 = vunpack.c.h.b16 %v1309
        %v1565 = vunpack.c.l.b16 %v1310
        %v1566 = vunpack.c.h.b16 %v1310
        %v1567 = vunpack.c.l.b16 %v1311
        %v1568 = vunpack.c.h.b16 %v1311
        %v1569 = vunpack.c.l.b16 %v1312
        %v1570 = vunpack.c.h.b16 %v1312
        %v1571 = vunpack.c.l.b16 %v1313
        %v1572 = vunpack.c.h.b16 %v1313
        %v1573 = vunpack.c.l.b16 %v1314
        %v1574 = vunpack.c.h.b16 %v1314
        %v1575 = vunpack.c.l.b16 %v1315
        %v1576 = vunpack.c.h.b16 %v1315
        %v1577 = vunpack.c.l.b16 %v1316
        %v1578 = vunpack.c.h.b16 %v1316
        %v1579 = vunpack.c.l.b16 %v1317
        %v1580 = vunpack.c.h.b16 %v1317
        %v1581 = vunpack.c.l.b16 %v1318
        %v1582 = vunpack.c.h.b16 %v1318
        %v1583 = vunpack.c.l.b16 %v1319
        %v1584 = vunpack.c.h.b16 %v1319
        %v1585 = vunpack.c.l.b16 %v1320
        %v1586 = vunpack.c.h.b16 %v1320
        %v1587 = vunpack.c.l.b16 %v1321
        %v1588 = vunpack.c.h.b16 %v1321
        %v1589 = vunpack.c.l.b16 %v1322
        %v1590 = vunpack.c.h.b16 %v1322
        %v1591 = vunpack.c.l.b16 %v1323
        %v1592 = vunpack.c.h.b16 %v1323
        %v1593 = vunpack.c.l.b16 %v1324
        %v1594 = vunpack.c.h.b16 %v1324
        %v1595 = vunpack.c.l.b16 %v1325
        %v1596 = vunpack.c.h.b16 %v1325
        %v1597 = vunpack.c.l.b16 %v1326
        %v1598 = vunpack.c.h.b16 %v1326
        %v1599 = vunpack.c.l.b16 %v1327
        %v1600 = vunpack.c.h.b16 %v1327
        %v1601 = vunpack.c.l.b16 %v1328
        %v1602 = vunpack.c.h.b16 %v1328
        %v1603 = vunpack.c.l.b16 %v1329
        %v1604 = vunpack.c.h.b16 %v1329
        %v1605 = vunpack.c.l.b16 %v1330
        %v1606 = vunpack.c.h.b16 %v1330
        %v1607 = vunpack.c.l.b16 %v1331
        %v1608 = vunpack.c.h.b16 %v1331
        %v1609 = vunpack.c.l.b16 %v1332
        %v1610 = vunpack.c.h.b16 %v1332
        %v1611 = vunpack.c.l.b16 %v1333
        %v1612 = vunpack.c.h.b16 %v1333
        %v1613 = vunpack.c.l.b16 %v1334
        %v1614 = vunpack.c.h.b16 %v1334
        %v1615 = vunpack.c.l.b16 %v1335
        %v1616 = vunpack.c.h.b16 %v1335
        %v1617 = vunpack.c.l.b16 %v1336
        %v1618 = vunpack.c.h.b16 %v1336
        %v1619 = vunpack.c.l.b16 %v1337
        %v1620 = vunpack.c.h.b16 %v1337
        %v1621 = vunpack.c.l.b16 %v1338
        %v1622 = vunpack.c.h.b16 %v1338
        %v1623 = vunpack.c.l.b16 %v1339
        %v1624 = vunpack.c.h.b16 %v1339
        %v1625 = vunpack.c.l.b16 %v1340
        %v1626 = vunpack.c.h.b16 %v1340
        %v1627 = vunpack.c.l.b16 %v1341
        %v1628 = vunpack.c.h.b16 %v1341
        %v1629 = vunpack.c.l.b16 %v1342
        %v1630 = vunpack.c.h.b16 %v1342
        %v1631 = vunpack.c.l.b16 %v1343
        %v1632 = vunpack.c.h.b16 %v1343
        %v1633 = vunpack.c.l.b16 %v1344
        %v1634 = vunpack.c.h.b16 %v1344
        %v1635 = vunpack.c.l.b16 %v1345
        %v1636 = vunpack.c.h.b16 %v1345
        %v1637 = vunpack.c.l.b16 %v1346
        %v1638 = vunpack.c.h.b16 %v1346
        %v1639 = vunpack.c.l.b16 %v1347
        %v1640 = vunpack.c.h.b16 %v1347
        %v1641 = vunpack.c.l.b16 %v1348
        %v1642 = vunpack.c.h.b16 %v1348
        %v1643 = vunpack.c.l.b16 %v1349
        %v1644 = vunpack.c.h.b16 %v1349
        %v1645 = vunpack.c.l.b16 %v1350
        %v1646 = vunpack.c.h.b16 %v1350
        %v1647 = vunpack.c.l.b16 %v1351
        %v1648 = vunpack.c.h.b16 %v1351
        %v1649 = vunpack.c.l.b16 %v1352
        %v1650 = vunpack.c.h.b16 %v1352
        %v1651 = vunpack.c.l.b16 %v1353
        %v1652 = vunpack.c.h.b16 %v1353
        %v1653 = vunpack.c.l.b16 %v1354
        %v1654 = vunpack.c.h.b16 %v1354
        %v1655 = vunpack.c.l.b16 %v1355
        %v1656 = vunpack.c.h.b16 %v1355
        %v1657 = vunpack.c.l.b16 %v1356
        %v1658 = vunpack.c.h.b16 %v1356
        %v1659 = vunpack.c.l.b16 %v1357
        %v1660 = vunpack.c.h.b16 %v1357
        %v1661 = vunpack.c.l.b16 %v1358
        %v1662 = vunpack.c.h.b16 %v1358
        %v1663 = vunpack.c.l.b16 %v1359
        %v1664 = vunpack.c.h.b16 %v1359
        %v1665 = vunpack.c.l.b16 %v1360
        %v1666 = vunpack.c.h.b16 %v1360
        %v1667 = vunpack.c.l.b16 %v1361
        %v1668 = vunpack.c.h.b16 %v1361
        %v1669 = vunpack.c.l.b16 %v1362
        %v1670 = vunpack.c.h.b16 %v1362
        %v1671 = vunpack.c.l.b16 %v1363
        %v1672 = vunpack.c.h.b16 %v1363
        %v1673 = vunpack.c.l.b16 %v1364
        %v1674 = vunpack.c.h.b16 %v1364
        %v1675 = vunpack.c.l.b16 %v1365
        %v1676 = vunpack.c.h.b16 %v1365
        %v1677 = vunpack.c.l.b16 %v1366
        %v1678 = vunpack.c.h.b16 %v1366
        %v1679 = vunpack.c.l.b16 %v1367
        %v1680 = vunpack.c.h.b16 %v1367
        %v1681 = vunpack.c.l.b16 %v1368
        %v1682 = vunpack.c.h.b16 %v1368
        %v1683 = vunpack.c.l.b16 %v1369
        %v1684 = vunpack.c.h.b16 %v1369
        %v1685 = vunpack.c.l.b16 %v1370
        %v1686 = vunpack.c.h.b16 %v1370
        %v1687 = vpack.c.b16 %v1507, %v1495
        %v1688 = vpack.c.b16 %v1508, %v1496
        %v1689 = vpack.c.b16 %v1509, %v1497
        %v1690 = vpack.c.b16 %v1510, %v1498
        %v1691 = vpack.c.b16 %v1511, %v1499
        %v1692 = vpack.c.b16 %v1512, %v1500
        %v1693 = vpack.c.b16 %v1513, %v1501
        %v1694 = vpack.c.b16 %v1514, %v1502
        %v1695 = vpack.c.b16 %v1515, %v1503
        %v1696 = vpack.c.b16 %v1516, %v1504
        %v1697 = vpack.c.b16 %v1517, %v1505
        %v1698 = vpack.c.b16 %v1518, %v1506
        %v1699 = vpack.c.b16 %v1531, %v1519
        %v1700 = vpack.c.b16 %v1532, %v1520
        %v1701 = vpack.c.b16 %v1533, %v1521
        %v1702 = vpack.c.b16 %v1534, %v1522
        %v1703 = vpack.c.b16 %v1535, %v1523
        %v1704 = vpack.c.b16 %v1536, %v1524
        %v1705 = vpack.c.b16 %v1537, %v1525
        %v1706 = vpack.c.b16 %v1538, %v1526
        %v1707 = vpack.c.b16 %v1539, %v1527
        %v1708 = vpack.c.b16 %v1540, %v1528
        %v1709 = vpack.c.b16 %v1541, %v1529
        %v1710 = vpack.c.b16 %v1542, %v1530
        %v1711 = vpack.c.b16 %v1555, %v1543
        %v1712 = vpack.c.b16 %v1556, %v1544
        %v1713 = vpack.c.b16 %v1557, %v1545
        %v1714 = vpack.c.b16 %v1558, %v1546
        %v1715 = vpack.c.b16 %v1559, %v1547
        %v1716 = vpack.c.b16 %v1560, %v1548
        %v1717 = vpack.c.b16 %v1561, %v1549
        %v1718 = vpack.c.b16 %v1562, %v1550
        %v1719 = vpack.c.b16 %v1563, %v1551
        %v1720 = vpack.c.b16 %v1564, %v1552
        %v1721 = vpack.c.b16 %v1565, %v1553
        %v1722 = vpack.c.b16 %v1566, %v1554
        %v1723 = vpack.c.b16 %v1579, %v1567
        %v1724 = vpack.c.b16 %v1580, %v1568
        %v1725 = vpack.c.b16 %v1581, %v1569
        %v1726 = vpack.c.b16 %v1582, %v1570
        %v1727 = vpack.c.b16 %v1583, %v1571
        %v1728 = vpack.c.b16 %v1584, %v1572
        %v1729 = vpack.c.b16 %v1585, %v1573
        %v1730 = vpack.c.b16 %v1586, %v1574
        %v1731 = vpack.c.b16 %v1587, %v1575
        %v1732 = vpack.c.b16 %v1588, %v1576
        %v1733 = vpack.c.b16 %v1589, %v1577
        %v1734 = vpack.c.b16 %v1590, %v1578
        %v1735 = vpack.c.b16 %v1603, %v1591
        %v1736 = vpack.c.b16 %v1604, %v1592
        %v1737 = vpack.c.b16 %v1605, %v1593
        %v1738 = vpack.c.b16 %v1606, %v1594
        %v1739 = vpack.c.b16 %v1607, %v1595
        %v1740 = vpack.c.b16 %v1608, %v1596
        %v1741 = vpack.c.b16 %v1609, %v1597
        %v1742 = vpack.c.b16 %v1610, %v1598
        %v1743 = vpack.c.b16 %v1611, %v1599
        %v1744 = vpack.c.b16 %v1612, %v1600
        %v1745 = vpack.c.b16 %v1613, %v1601
        %v1746 = vpack.c.b16 %v1614, %v1602
        %v1747 = vpack.c.b16 %v1627, %v1615
        %v1748 = vpack.c.b16 %v1628, %v1616
        %v1749 = vpack.c.b16 %v1629, %v1617
        %v1750 = vpack.c.b16 %v1630, %v1618
        %v1751 = vpack.c.b16 %v1631, %v1619
        %v1752 = vpack.c.b16 %v1632, %v1620
        %v1753 = vpack.c.b16 %v1633, %v1621
        %v1754 = vpack.c.b16 %v1634, %v1622
        %v1755 = vpack.c.b16 %v1635, %v1623
        %v1756 = vpack.c.b16 %v1636, %v1624
        %v1757 = vpack.c.b16 %v1637, %v1625
        %v1758 = vpack.c.b16 %v1638, %v1626
        %v1759 = vpack.c.b16 %v1651, %v1639
        %v1760 = vpack.c.b16 %v1652, %v1640
        %v1761 = vpack.c.b16 %v1653, %v1641
        %v1762 = vpack.c.b16 %v1654, %v1642
        %v1763 = vpack.c.b16 %v1655, %v1643
        %v1764 = vpack.c.b16 %v1656, %v1644
        %v1765 = vpack.c.b16 %v1657, %v1645
        %v1766 = vpack.c.b16 %v1658, %v1646
        %v1767 = vpack.c.b16 %v1659, %v1647
        %v1768 = vpack.c.b16 %v1660, %v1648
        %v1769 = vpack.c.b16 %v1661, %v1649
        %v1770 = vpack.c.b16 %v1662, %v1650
        %v1771 = vpack.c.b16 %v1675, %v1663
        %v1772 = vpack.c.b16 %v1676, %v1664
        %v1773 = vpack.c.b16 %v1677, %v1665
        %v1774 = vpack.c.b16 %v1678, %v1666
        %v1775 = vpack.c.b16 %v1679, %v1667
        %v1776 = vpack.c.b16 %v1680, %v1668
        %v1777 = vpack.c.b16 %v1681, %v1669
        %v1778 = vpack.c.b16 %v1682, %v1670
        %v1779 = vpack.c.b16 %v1683, %v1671
        %v1780 = vpack.c.b16 %v1684, %v1672
        %v1781 = vpack.c.b16 %v1685, %v1673
        %v1782 = vpack.c.b16 %v1686, %v1674
        %1879 = vmatpush.bf16.msra.mxu0 %v1771
        %1880 = vmatpush.bf16.msra.mxu0 %v1759
        %1881 = vmatpush.bf16.msra.mxu0 %v1747
        %1882 = vmatpush.bf16.msra.mxu0 %v1735
        %1883 = vmatpush.bf16.msra.mxu0 %v1723
        %1884 = vmatpush.bf16.msra.mxu0 %v1711
        %1885 = vmatpush.bf16.msra.mxu0 %v1699
        %1886 = vmatpush.bf16.msra.mxu0 %v1687
        %1887 = vmatmul.bf16.gmra.mxu0 %v1267
        %v1888 = vpop.f32.mrf.mxu0
        %v1889 = vadd.f32 %v1375, %v1888
        %v1890 = vpop.f32.mrf.mxu0
        %v1891 = vadd.f32 %v1375, %v1890
        %1892 = vmatmul.bf16.gmra.mxu0 %v1268
        %v1893 = vpop.f32.mrf.mxu0
        %v1894 = vadd.f32 %v1375, %v1893
        %v1895 = vpop.f32.mrf.mxu0
        %v1896 = vadd.f32 %v1375, %v1895
        %1897 = vmatmul.bf16.gmra.mxu0 %v1269
        %v1898 = vpop.f32.mrf.mxu0
        %v1899 = vadd.f32 %v1375, %v1898
        %v1900 = vpop.f32.mrf.mxu0
        %v1901 = vadd.f32 %v1375, %v1900
        %1902 = vmatmul.bf16.gmra.mxu0 %v1270
        %v1903 = vpop.f32.mrf.mxu0
        %v1904 = vadd.f32 %v1375, %v1903
        %v1905 = vpop.f32.mrf.mxu0
        %v1906 = vadd.f32 %v1375, %v1905
        %1907 = vmatmul.bf16.gmra.mxu0 %v1271
        %v1908 = vpop.f32.mrf.mxu0
        %v1909 = vadd.f32 %v1375, %v1908
        %v1910 = vpop.f32.mrf.mxu0
        %v1911 = vadd.f32 %v1375, %v1910
        %1912 = vmatmul.bf16.gmra.mxu0 %v1272
        %v1913 = vpop.f32.mrf.mxu0
        %v1914 = vadd.f32 %v1375, %v1913
        %v1915 = vpop.f32.mrf.mxu0
        %v1916 = vadd.f32 %v1375, %v1915
        %1917 = vmatmul.bf16.gmra.mxu0 %v1273
        %v1918 = vpop.f32.mrf.mxu0
        %v1919 = vadd.f32 %v1375, %v1918
        %v1920 = vpop.f32.mrf.mxu0
        %v1921 = vadd.f32 %v1375, %v1920
        %1922 = vmatmul.bf16.gmra.mxu0 %v1274
        %v1923 = vpop.f32.mrf.mxu0
        %v1924 = vadd.f32 %v1375, %v1923
        %v1925 = vpop.f32.mrf.mxu0
        %v1926 = vadd.f32 %v1375, %v1925
        %1927 = vdwg.mxu0
        %1928 = vmatpush.bf16.msra.mxu0 %v1772
        %1929 = vmatpush.bf16.msra.mxu0 %v1760
        %1930 = vmatpush.bf16.msra.mxu0 %v1748
        %1931 = vmatpush.bf16.msra.mxu0 %v1736
        %1932 = vmatpush.bf16.msra.mxu0 %v1724
        %1933 = vmatpush.bf16.msra.mxu0 %v1712
        %1934 = vmatpush.bf16.msra.mxu0 %v1700
        %1935 = vmatpush.bf16.msra.mxu0 %v1688
        %1936 = vmatmul.bf16.gmra.mxu0 %v1267
        %v1937 = vpop.f32.mrf.mxu0
        %v1938 = vadd.f32 %v1376, %v1937
        %v1939 = vpop.f32.mrf.mxu0
        %v1940 = vadd.f32 %v1376, %v1939
        %1941 = vmatmul.bf16.gmra.mxu0 %v1268
        %v1942 = vpop.f32.mrf.mxu0
        %v1943 = vadd.f32 %v1376, %v1942
        %v1944 = vpop.f32.mrf.mxu0
        %v1945 = vadd.f32 %v1376, %v1944
        %1946 = vmatmul.bf16.gmra.mxu0 %v1269
        %v1947 = vpop.f32.mrf.mxu0
        %v1948 = vadd.f32 %v1376, %v1947
        %v1949 = vpop.f32.mrf.mxu0
        %v1950 = vadd.f32 %v1376, %v1949
        %1951 = vmatmul.bf16.gmra.mxu0 %v1270
        %v1952 = vpop.f32.mrf.mxu0
        %v1953 = vadd.f32 %v1376, %v1952
        %v1954 = vpop.f32.mrf.mxu0
        %v1955 = vadd.f32 %v1376, %v1954
        %1956 = vmatmul.bf16.gmra.mxu0 %v1271
        %v1957 = vpop.f32.mrf.mxu0
        %v1958 = vadd.f32 %v1376, %v1957
        %v1959 = vpop.f32.mrf.mxu0
        %v1960 = vadd.f32 %v1376, %v1959
        %1961 = vmatmul.bf16.gmra.mxu0 %v1272
        %v1962 = vpop.f32.mrf.mxu0
        %v1963 = vadd.f32 %v1376, %v1962
        %v1964 = vpop.f32.mrf.mxu0
        %v1965 = vadd.f32 %v1376, %v1964
        %1966 = vmatmul.bf16.gmra.mxu0 %v1273
        %v1967 = vpop.f32.mrf.mxu0
        %v1968 = vadd.f32 %v1376, %v1967
        %v1969 = vpop.f32.mrf.mxu0
        %v1970 = vadd.f32 %v1376, %v1969
        %1971 = vmatmul.bf16.gmra.mxu0 %v1274
        %v1972 = vpop.f32.mrf.mxu0
        %v1973 = vadd.f32 %v1376, %v1972
        %v1974 = vpop.f32.mrf.mxu0
        %v1975 = vadd.f32 %v1376, %v1974
        %1976 = vdwg.mxu0
        %1977 = vmatpush.bf16.msra.mxu0 %v1773
        %1978 = vmatpush.bf16.msra.mxu0 %v1761
        %1979 = vmatpush.bf16.msra.mxu0 %v1749
        %1980 = vmatpush.bf16.msra.mxu0 %v1737
        %1981 = vmatpush.bf16.msra.mxu0 %v1725
        %1982 = vmatpush.bf16.msra.mxu0 %v1713
        %1983 = vmatpush.bf16.msra.mxu0 %v1701
        %1984 = vmatpush.bf16.msra.mxu0 %v1689
        %1985 = vmatmul.bf16.gmra.mxu0 %v1267
        %v1986 = vpop.f32.mrf.mxu0
        %v1987 = vadd.f32 %v1377, %v1986
        %v1988 = vpop.f32.mrf.mxu0
        %v1989 = vadd.f32 %v1377, %v1988
        %1990 = vmatmul.bf16.gmra.mxu0 %v1268
        %v1991 = vpop.f32.mrf.mxu0
        %v1992 = vadd.f32 %v1377, %v1991
        %v1993 = vpop.f32.mrf.mxu0
        %v1994 = vadd.f32 %v1377, %v1993
        %1995 = vmatmul.bf16.gmra.mxu0 %v1269
        %v1996 = vpop.f32.mrf.mxu0
        %v1997 = vadd.f32 %v1377, %v1996
        %v1998 = vpop.f32.mrf.mxu0
        %v1999 = vadd.f32 %v1377, %v1998
        %2000 = vmatmul.bf16.gmra.mxu0 %v1270
        %v2001 = vpop.f32.mrf.mxu0
        %v2002 = vadd.f32 %v1377, %v2001
        %v2003 = vpop.f32.mrf.mxu0
        %v2004 = vadd.f32 %v1377, %v2003
        %2005 = vmatmul.bf16.gmra.mxu0 %v1271
        %v2006 = vpop.f32.mrf.mxu0
        %v2007 = vadd.f32 %v1377, %v2006
        %v2008 = vpop.f32.mrf.mxu0
        %v2009 = vadd.f32 %v1377, %v2008
        %2010 = vmatmul.bf16.gmra.mxu0 %v1272
        %v2011 = vpop.f32.mrf.mxu0
        %v2012 = vadd.f32 %v1377, %v2011
        %v2013 = vpop.f32.mrf.mxu0
        %v2014 = vadd.f32 %v1377, %v2013
        %2015 = vmatmul.bf16.gmra.mxu0 %v1273
        %v2016 = vpop.f32.mrf.mxu0
        %v2017 = vadd.f32 %v1377, %v2016
        %v2018 = vpop.f32.mrf.mxu0
        %v2019 = vadd.f32 %v1377, %v2018
        %2020 = vmatmul.bf16.gmra.mxu0 %v1274
        %v2021 = vpop.f32.mrf.mxu0
        %v2022 = vadd.f32 %v1377, %v2021
        %v2023 = vpop.f32.mrf.mxu0
        %v2024 = vadd.f32 %v1377, %v2023
        %2025 = vdwg.mxu0
        %2026 = vmatpush.bf16.msra.mxu0 %v1774
        %2027 = vmatpush.bf16.msra.mxu0 %v1762
        %2028 = vmatpush.bf16.msra.mxu0 %v1750
        %2029 = vmatpush.bf16.msra.mxu0 %v1738
        %2030 = vmatpush.bf16.msra.mxu0 %v1726
        %2031 = vmatpush.bf16.msra.mxu0 %v1714
        %2032 = vmatpush.bf16.msra.mxu0 %v1702
        %2033 = vmatpush.bf16.msra.mxu0 %v1690
        %2034 = vmatmul.bf16.gmra.mxu0 %v1267
        %v2035 = vpop.f32.mrf.mxu0
        %v2036 = vadd.f32 %v1378, %v2035
        %v2037 = vpop.f32.mrf.mxu0
        %v2038 = vadd.f32 %v1378, %v2037
        %2039 = vmatmul.bf16.gmra.mxu0 %v1268
        %v2040 = vpop.f32.mrf.mxu0
        %v2041 = vadd.f32 %v1378, %v2040
        %v2042 = vpop.f32.mrf.mxu0
        %v2043 = vadd.f32 %v1378, %v2042
        %2044 = vmatmul.bf16.gmra.mxu0 %v1269
        %v2045 = vpop.f32.mrf.mxu0
        %v2046 = vadd.f32 %v1378, %v2045
        %v2047 = vpop.f32.mrf.mxu0
        %v2048 = vadd.f32 %v1378, %v2047
        %2049 = vmatmul.bf16.gmra.mxu0 %v1270
        %v2050 = vpop.f32.mrf.mxu0
        %v2051 = vadd.f32 %v1378, %v2050
        %v2052 = vpop.f32.mrf.mxu0
        %v2053 = vadd.f32 %v1378, %v2052
        %2054 = vmatmul.bf16.gmra.mxu0 %v1271
        %v2055 = vpop.f32.mrf.mxu0
        %v2056 = vadd.f32 %v1378, %v2055
        %v2057 = vpop.f32.mrf.mxu0
        %v2058 = vadd.f32 %v1378, %v2057
        %2059 = vmatmul.bf16.gmra.mxu0 %v1272
        %v2060 = vpop.f32.mrf.mxu0
        %v2061 = vadd.f32 %v1378, %v2060
        %v2062 = vpop.f32.mrf.mxu0
        %v2063 = vadd.f32 %v1378, %v2062
        %2064 = vmatmul.bf16.gmra.mxu0 %v1273
        %v2065 = vpop.f32.mrf.mxu0
        %v2066 = vadd.f32 %v1378, %v2065
        %v2067 = vpop.f32.mrf.mxu0
        %v2068 = vadd.f32 %v1378, %v2067
        %2069 = vmatmul.bf16.gmra.mxu0 %v1274
        %v2070 = vpop.f32.mrf.mxu0
        %v2071 = vadd.f32 %v1378, %v2070
        %v2072 = vpop.f32.mrf.mxu0
        %v2073 = vadd.f32 %v1378, %v2072
        %2074 = vdwg.mxu0
        %2075 = vmatpush.bf16.msra.mxu0 %v1775
        %2076 = vmatpush.bf16.msra.mxu0 %v1763
        %2077 = vmatpush.bf16.msra.mxu0 %v1751
        %2078 = vmatpush.bf16.msra.mxu0 %v1739
        %2079 = vmatpush.bf16.msra.mxu0 %v1727
        %2080 = vmatpush.bf16.msra.mxu0 %v1715
        %2081 = vmatpush.bf16.msra.mxu0 %v1703
        %2082 = vmatpush.bf16.msra.mxu0 %v1691
        %2083 = vmatmul.bf16.gmra.mxu0 %v1267
        %v2084 = vpop.f32.mrf.mxu0
        %v2085 = vadd.f32 %v1379, %v2084
        %v2086 = vpop.f32.mrf.mxu0
        %v2087 = vadd.f32 %v1379, %v2086
        %2088 = vmatmul.bf16.gmra.mxu0 %v1268
        %v2089 = vpop.f32.mrf.mxu0
        %v2090 = vadd.f32 %v1379, %v2089
        %v2091 = vpop.f32.mrf.mxu0
        %v2092 = vadd.f32 %v1379, %v2091
        %2093 = vmatmul.bf16.gmra.mxu0 %v1269
        %v2094 = vpop.f32.mrf.mxu0
        %v2095 = vadd.f32 %v1379, %v2094
        %v2096 = vpop.f32.mrf.mxu0
        %v2097 = vadd.f32 %v1379, %v2096
        %2098 = vmatmul.bf16.gmra.mxu0 %v1270
        %v2099 = vpop.f32.mrf.mxu0
        %v2100 = vadd.f32 %v1379, %v2099
        %v2101 = vpop.f32.mrf.mxu0
        %v2102 = vadd.f32 %v1379, %v2101
        %2103 = vmatmul.bf16.gmra.mxu0 %v1271
        %v2104 = vpop.f32.mrf.mxu0
        %v2105 = vadd.f32 %v1379, %v2104
        %v2106 = vpop.f32.mrf.mxu0
        %v2107 = vadd.f32 %v1379, %v2106
        %2108 = vmatmul.bf16.gmra.mxu0 %v1272
        %v2109 = vpop.f32.mrf.mxu0
        %v2110 = vadd.f32 %v1379, %v2109
        %v2111 = vpop.f32.mrf.mxu0
        %v2112 = vadd.f32 %v1379, %v2111
        %2113 = vmatmul.bf16.gmra.mxu0 %v1273
        %v2114 = vpop.f32.mrf.mxu0
        %v2115 = vadd.f32 %v1379, %v2114
        %v2116 = vpop.f32.mrf.mxu0
        %v2117 = vadd.f32 %v1379, %v2116
        %2118 = vmatmul.bf16.gmra.mxu0 %v1274
        %v2119 = vpop.f32.mrf.mxu0
        %v2120 = vadd.f32 %v1379, %v2119
        %v2121 = vpop.f32.mrf.mxu0
        %v2122 = vadd.f32 %v1379, %v2121
        %2123 = vdwg.mxu0
        %2124 = vmatpush.bf16.msra.mxu0 %v1776
        %2125 = vmatpush.bf16.msra.mxu0 %v1764
        %2126 = vmatpush.bf16.msra.mxu0 %v1752
        %2127 = vmatpush.bf16.msra.mxu0 %v1740
        %2128 = vmatpush.bf16.msra.mxu0 %v1728
        %2129 = vmatpush.bf16.msra.mxu0 %v1716
        %2130 = vmatpush.bf16.msra.mxu0 %v1704
        %2131 = vmatpush.bf16.msra.mxu0 %v1692
        %2132 = vmatmul.bf16.gmra.mxu0 %v1267
        %v2133 = vpop.f32.mrf.mxu0
        %v2134 = vadd.f32 %v1380, %v2133
        %v2135 = vpop.f32.mrf.mxu0
        %v2136 = vadd.f32 %v1380, %v2135
        %2137 = vmatmul.bf16.gmra.mxu0 %v1268
        %v2138 = vpop.f32.mrf.mxu0
        %v2139 = vadd.f32 %v1380, %v2138
        %v2140 = vpop.f32.mrf.mxu0
        %v2141 = vadd.f32 %v1380, %v2140
        %2142 = vmatmul.bf16.gmra.mxu0 %v1269
        %v2143 = vpop.f32.mrf.mxu0
        %v2144 = vadd.f32 %v1380, %v2143
        %v2145 = vpop.f32.mrf.mxu0
        %v2146 = vadd.f32 %v1380, %v2145
        %2147 = vmatmul.bf16.gmra.mxu0 %v1270
        %v2148 = vpop.f32.mrf.mxu0
        %v2149 = vadd.f32 %v1380, %v2148
        %v2150 = vpop.f32.mrf.mxu0
        %v2151 = vadd.f32 %v1380, %v2150
        %2152 = vmatmul.bf16.gmra.mxu0 %v1271
        %v2153 = vpop.f32.mrf.mxu0
        %v2154 = vadd.f32 %v1380, %v2153
        %v2155 = vpop.f32.mrf.mxu0
        %v2156 = vadd.f32 %v1380, %v2155
        %2157 = vmatmul.bf16.gmra.mxu0 %v1272
        %v2158 = vpop.f32.mrf.mxu0
        %v2159 = vadd.f32 %v1380, %v2158
        %v2160 = vpop.f32.mrf.mxu0
        %v2161 = vadd.f32 %v1380, %v2160
        %2162 = vmatmul.bf16.gmra.mxu0 %v1273
        %v2163 = vpop.f32.mrf.mxu0
        %v2164 = vadd.f32 %v1380, %v2163
        %v2165 = vpop.f32.mrf.mxu0
        %v2166 = vadd.f32 %v1380, %v2165
        %2167 = vmatmul.bf16.gmra.mxu0 %v1274
        %v2168 = vpop.f32.mrf.mxu0
        %v2169 = vadd.f32 %v1380, %v2168
        %v2170 = vpop.f32.mrf.mxu0
        %v2171 = vadd.f32 %v1380, %v2170
        %2172 = vdwg.mxu0
        %2173 = vmatpush.bf16.msra.mxu0 %v1777
        %2174 = vmatpush.bf16.msra.mxu0 %v1765
        %2175 = vmatpush.bf16.msra.mxu0 %v1753
        %2176 = vmatpush.bf16.msra.mxu0 %v1741
        %2177 = vmatpush.bf16.msra.mxu0 %v1729
        %2178 = vmatpush.bf16.msra.mxu0 %v1717
        %2179 = vmatpush.bf16.msra.mxu0 %v1705
        %2180 = vmatpush.bf16.msra.mxu0 %v1693
        %2181 = vmatmul.bf16.gmra.mxu0 %v1267
        %v2182 = vpop.f32.mrf.mxu0
        %v2183 = vadd.f32 %v1381, %v2182
        %v2184 = vpop.f32.mrf.mxu0
        %v2185 = vadd.f32 %v1381, %v2184
        %2186 = vmatmul.bf16.gmra.mxu0 %v1268
        %v2187 = vpop.f32.mrf.mxu0
        %v2188 = vadd.f32 %v1381, %v2187
        %v2189 = vpop.f32.mrf.mxu0
        %v2190 = vadd.f32 %v1381, %v2189
        %2191 = vmatmul.bf16.gmra.mxu0 %v1269
        %v2192 = vpop.f32.mrf.mxu0
        %v2193 = vadd.f32 %v1381, %v2192
        %v2194 = vpop.f32.mrf.mxu0
        %v2195 = vadd.f32 %v1381, %v2194
        %2196 = vmatmul.bf16.gmra.mxu0 %v1270
        %v2197 = vpop.f32.mrf.mxu0
        %v2198 = vadd.f32 %v1381, %v2197
        %v2199 = vpop.f32.mrf.mxu0
        %v2200 = vadd.f32 %v1381, %v2199
        %2201 = vmatmul.bf16.gmra.mxu0 %v1271
        %v2202 = vpop.f32.mrf.mxu0
        %v2203 = vadd.f32 %v1381, %v2202
        %v2204 = vpop.f32.mrf.mxu0
        %v2205 = vadd.f32 %v1381, %v2204
        %2206 = vmatmul.bf16.gmra.mxu0 %v1272
        %v2207 = vpop.f32.mrf.mxu0
        %v2208 = vadd.f32 %v1381, %v2207
        %v2209 = vpop.f32.mrf.mxu0
        %v2210 = vadd.f32 %v1381, %v2209
        %2211 = vmatmul.bf16.gmra.mxu0 %v1273
        %v2212 = vpop.f32.mrf.mxu0
        %v2213 = vadd.f32 %v1381, %v2212
        %v2214 = vpop.f32.mrf.mxu0
        %v2215 = vadd.f32 %v1381, %v2214
        %2216 = vmatmul.bf16.gmra.mxu0 %v1274
        %v2217 = vpop.f32.mrf.mxu0
        %v2218 = vadd.f32 %v1381, %v2217
        %v2219 = vpop.f32.mrf.mxu0
        %v2220 = vadd.f32 %v1381, %v2219
        %2221 = vdwg.mxu0
        %2222 = vmatpush.bf16.msra.mxu0 %v1778
        %2223 = vmatpush.bf16.msra.mxu0 %v1766
        %2224 = vmatpush.bf16.msra.mxu0 %v1754
        %2225 = vmatpush.bf16.msra.mxu0 %v1742
        %2226 = vmatpush.bf16.msra.mxu0 %v1730
        %2227 = vmatpush.bf16.msra.mxu0 %v1718
        %2228 = vmatpush.bf16.msra.mxu0 %v1706
        %2229 = vmatpush.bf16.msra.mxu0 %v1694
        %2230 = vmatmul.bf16.gmra.mxu0 %v1267
        %v2231 = vpop.f32.mrf.mxu0
        %v2232 = vadd.f32 %v1382, %v2231
        %v2233 = vpop.f32.mrf.mxu0
        %v2234 = vadd.f32 %v1382, %v2233
        %2235 = vmatmul.bf16.gmra.mxu0 %v1268
        %v2236 = vpop.f32.mrf.mxu0
        %v2237 = vadd.f32 %v1382, %v2236
        %v2238 = vpop.f32.mrf.mxu0
        %v2239 = vadd.f32 %v1382, %v2238
        %2240 = vmatmul.bf16.gmra.mxu0 %v1269
        %v2241 = vpop.f32.mrf.mxu0
        %v2242 = vadd.f32 %v1382, %v2241
        %v2243 = vpop.f32.mrf.mxu0
        %v2244 = vadd.f32 %v1382, %v2243
        %2245 = vmatmul.bf16.gmra.mxu0 %v1270
        %v2246 = vpop.f32.mrf.mxu0
        %v2247 = vadd.f32 %v1382, %v2246
        %v2248 = vpop.f32.mrf.mxu0
        %v2249 = vadd.f32 %v1382, %v2248
        %2250 = vmatmul.bf16.gmra.mxu0 %v1271
        %v2251 = vpop.f32.mrf.mxu0
        %v2252 = vadd.f32 %v1382, %v2251
        %v2253 = vpop.f32.mrf.mxu0
        %v2254 = vadd.f32 %v1382, %v2253
        %2255 = vmatmul.bf16.gmra.mxu0 %v1272
        %v2256 = vpop.f32.mrf.mxu0
        %v2257 = vadd.f32 %v1382, %v2256
        %v2258 = vpop.f32.mrf.mxu0
        %v2259 = vadd.f32 %v1382, %v2258
        %2260 = vmatmul.bf16.gmra.mxu0 %v1273
        %v2261 = vpop.f32.mrf.mxu0
        %v2262 = vadd.f32 %v1382, %v2261
        %v2263 = vpop.f32.mrf.mxu0
        %v2264 = vadd.f32 %v1382, %v2263
        %2265 = vmatmul.bf16.gmra.mxu0 %v1274
        %v2266 = vpop.f32.mrf.mxu0
        %v2267 = vadd.f32 %v1382, %v2266
        %v2268 = vpop.f32.mrf.mxu0
        %v2269 = vadd.f32 %v1382, %v2268
        %2270 = vdwg.mxu0
        %2271 = vmatpush.bf16.msra.mxu0 %v1779
        %2272 = vmatpush.bf16.msra.mxu0 %v1767
        %2273 = vmatpush.bf16.msra.mxu0 %v1755
        %2274 = vmatpush.bf16.msra.mxu0 %v1743
        %2275 = vmatpush.bf16.msra.mxu0 %v1731
        %2276 = vmatpush.bf16.msra.mxu0 %v1719
        %2277 = vmatpush.bf16.msra.mxu0 %v1707
        %2278 = vmatpush.bf16.msra.mxu0 %v1695
        %2279 = vmatmul.bf16.gmra.mxu0 %v1267
        %v2280 = vpop.f32.mrf.mxu0
        %v2281 = vadd.f32 %v1383, %v2280
        %v2282 = vpop.f32.mrf.mxu0
        %v2283 = vadd.f32 %v1383, %v2282
        %2284 = vmatmul.bf16.gmra.mxu0 %v1268
        %v2285 = vpop.f32.mrf.mxu0
        %v2286 = vadd.f32 %v1383, %v2285
        %v2287 = vpop.f32.mrf.mxu0
        %v2288 = vadd.f32 %v1383, %v2287
        %2289 = vmatmul.bf16.gmra.mxu0 %v1269
        %v2290 = vpop.f32.mrf.mxu0
        %v2291 = vadd.f32 %v1383, %v2290
        %v2292 = vpop.f32.mrf.mxu0
        %v2293 = vadd.f32 %v1383, %v2292
        %2294 = vmatmul.bf16.gmra.mxu0 %v1270
        %v2295 = vpop.f32.mrf.mxu0
        %v2296 = vadd.f32 %v1383, %v2295
        %v2297 = vpop.f32.mrf.mxu0
        %v2298 = vadd.f32 %v1383, %v2297
        %2299 = vmatmul.bf16.gmra.mxu0 %v1271
        %v2300 = vpop.f32.mrf.mxu0
        %v2301 = vadd.f32 %v1383, %v2300
        %v2302 = vpop.f32.mrf.mxu0
        %v2303 = vadd.f32 %v1383, %v2302
        %2304 = vmatmul.bf16.gmra.mxu0 %v1272
        %v2305 = vpop.f32.mrf.mxu0
        %v2306 = vadd.f32 %v1383, %v2305
        %v2307 = vpop.f32.mrf.mxu0
        %v2308 = vadd.f32 %v1383, %v2307
        %2309 = vmatmul.bf16.gmra.mxu0 %v1273
        %v2310 = vpop.f32.mrf.mxu0
        %v2311 = vadd.f32 %v1383, %v2310
        %v2312 = vpop.f32.mrf.mxu0
        %v2313 = vadd.f32 %v1383, %v2312
        %2314 = vmatmul.bf16.gmra.mxu0 %v1274
        %v2315 = vpop.f32.mrf.mxu0
        %v2316 = vadd.f32 %v1383, %v2315
        %v2317 = vpop.f32.mrf.mxu0
        %v2318 = vadd.f32 %v1383, %v2317
        %2319 = vdwg.mxu0
        %2320 = vmatpush.bf16.msra.mxu0 %v1780
        %2321 = vmatpush.bf16.msra.mxu0 %v1768
        %2322 = vmatpush.bf16.msra.mxu0 %v1756
        %2323 = vmatpush.bf16.msra.mxu0 %v1744
        %2324 = vmatpush.bf16.msra.mxu0 %v1732
        %2325 = vmatpush.bf16.msra.mxu0 %v1720
        %2326 = vmatpush.bf16.msra.mxu0 %v1708
        %2327 = vmatpush.bf16.msra.mxu0 %v1696
        %2328 = vmatmul.bf16.gmra.mxu0 %v1267
        %v2329 = vpop.f32.mrf.mxu0
        %v2330 = vadd.f32 %v1384, %v2329
        %v2331 = vpop.f32.mrf.mxu0
        %v2332 = vadd.f32 %v1384, %v2331
        %2333 = vmatmul.bf16.gmra.mxu0 %v1268
        %v2334 = vpop.f32.mrf.mxu0
        %v2335 = vadd.f32 %v1384, %v2334
        %v2336 = vpop.f32.mrf.mxu0
        %v2337 = vadd.f32 %v1384, %v2336
        %2338 = vmatmul.bf16.gmra.mxu0 %v1269
        %v2339 = vpop.f32.mrf.mxu0
        %v2340 = vadd.f32 %v1384, %v2339
        %v2341 = vpop.f32.mrf.mxu0
        %v2342 = vadd.f32 %v1384, %v2341
        %2343 = vmatmul.bf16.gmra.mxu0 %v1270
        %v2344 = vpop.f32.mrf.mxu0
        %v2345 = vadd.f32 %v1384, %v2344
        %v2346 = vpop.f32.mrf.mxu0
        %v2347 = vadd.f32 %v1384, %v2346
        %2348 = vmatmul.bf16.gmra.mxu0 %v1271
        %v2349 = vpop.f32.mrf.mxu0
        %v2350 = vadd.f32 %v1384, %v2349
        %v2351 = vpop.f32.mrf.mxu0
        %v2352 = vadd.f32 %v1384, %v2351
        %2353 = vmatmul.bf16.gmra.mxu0 %v1272
        %v2354 = vpop.f32.mrf.mxu0
        %v2355 = vadd.f32 %v1384, %v2354
        %v2356 = vpop.f32.mrf.mxu0
        %v2357 = vadd.f32 %v1384, %v2356
        %2358 = vmatmul.bf16.gmra.mxu0 %v1273
        %v2359 = vpop.f32.mrf.mxu0
        %v2360 = vadd.f32 %v1384, %v2359
        %v2361 = vpop.f32.mrf.mxu0
        %v2362 = vadd.f32 %v1384, %v2361
        %2363 = vmatmul.bf16.gmra.mxu0 %v1274
        %v2364 = vpop.f32.mrf.mxu0
        %v2365 = vadd.f32 %v1384, %v2364
        %v2366 = vpop.f32.mrf.mxu0
        %v2367 = vadd.f32 %v1384, %v2366
        %2368 = vdwg.mxu0
        %2369 = vmatpush.bf16.msra.mxu0 %v1781
        %2370 = vmatpush.bf16.msra.mxu0 %v1769
        %2371 = vmatpush.bf16.msra.mxu0 %v1757
        %2372 = vmatpush.bf16.msra.mxu0 %v1745
        %2373 = vmatpush.bf16.msra.mxu0 %v1733
        %2374 = vmatpush.bf16.msra.mxu0 %v1721
        %2375 = vmatpush.bf16.msra.mxu0 %v1709
        %2376 = vmatpush.bf16.msra.mxu0 %v1697
        %2377 = vmatmul.bf16.gmra.mxu0 %v1267
        %v2378 = vpop.f32.mrf.mxu0
        %v2379 = vadd.f32 %v1385, %v2378
        %v2380 = vpop.f32.mrf.mxu0
        %v2381 = vadd.f32 %v1385, %v2380
        %2382 = vmatmul.bf16.gmra.mxu0 %v1268
        %v2383 = vpop.f32.mrf.mxu0
        %v2384 = vadd.f32 %v1385, %v2383
        %v2385 = vpop.f32.mrf.mxu0
        %v2386 = vadd.f32 %v1385, %v2385
        %2387 = vmatmul.bf16.gmra.mxu0 %v1269
        %v2388 = vpop.f32.mrf.mxu0
        %v2389 = vadd.f32 %v1385, %v2388
        %v2390 = vpop.f32.mrf.mxu0
        %v2391 = vadd.f32 %v1385, %v2390
        %2392 = vmatmul.bf16.gmra.mxu0 %v1270
        %v2393 = vpop.f32.mrf.mxu0
        %v2394 = vadd.f32 %v1385, %v2393
        %v2395 = vpop.f32.mrf.mxu0
        %v2396 = vadd.f32 %v1385, %v2395
        %2397 = vmatmul.bf16.gmra.mxu0 %v1271
        %v2398 = vpop.f32.mrf.mxu0
        %v2399 = vadd.f32 %v1385, %v2398
        %v2400 = vpop.f32.mrf.mxu0
        %v2401 = vadd.f32 %v1385, %v2400
        %2402 = vmatmul.bf16.gmra.mxu0 %v1272
        %v2403 = vpop.f32.mrf.mxu0
        %v2404 = vadd.f32 %v1385, %v2403
        %v2405 = vpop.f32.mrf.mxu0
        %v2406 = vadd.f32 %v1385, %v2405
        %2407 = vmatmul.bf16.gmra.mxu0 %v1273
        %v2408 = vpop.f32.mrf.mxu0
        %v2409 = vadd.f32 %v1385, %v2408
        %v2410 = vpop.f32.mrf.mxu0
        %v2411 = vadd.f32 %v1385, %v2410
        %2412 = vmatmul.bf16.gmra.mxu0 %v1274
        %v2413 = vpop.f32.mrf.mxu0
        %v2414 = vadd.f32 %v1385, %v2413
        %v2415 = vpop.f32.mrf.mxu0
        %v2416 = vadd.f32 %v1385, %v2415
        %2417 = vdwg.mxu0
        %2418 = vmatpush.bf16.msra.mxu0 %v1782
        %2419 = vmatpush.bf16.msra.mxu0 %v1770
        %2420 = vmatpush.bf16.msra.mxu0 %v1758
        %2421 = vmatpush.bf16.msra.mxu0 %v1746
        %2422 = vmatpush.bf16.msra.mxu0 %v1734
        %2423 = vmatpush.bf16.msra.mxu0 %v1722
        %2424 = vmatpush.bf16.msra.mxu0 %v1710
        %2425 = vmatpush.bf16.msra.mxu0 %v1698
        %2426 = vmatmul.bf16.gmra.mxu0 %v1267
        %v2427 = vpop.f32.mrf.mxu0
        %v2428 = vadd.f32 %v1386, %v2427
        %v2429 = vpop.f32.mrf.mxu0
        %v2430 = vadd.f32 %v1386, %v2429
        %2431 = vmatmul.bf16.gmra.mxu0 %v1268
        %v2432 = vpop.f32.mrf.mxu0
        %v2433 = vadd.f32 %v1386, %v2432
        %v2434 = vpop.f32.mrf.mxu0
        %v2435 = vadd.f32 %v1386, %v2434
        %2436 = vmatmul.bf16.gmra.mxu0 %v1269
        %v2437 = vpop.f32.mrf.mxu0
        %v2438 = vadd.f32 %v1386, %v2437
        %v2439 = vpop.f32.mrf.mxu0
        %v2440 = vadd.f32 %v1386, %v2439
        %2441 = vmatmul.bf16.gmra.mxu0 %v1270
        %v2442 = vpop.f32.mrf.mxu0
        %v2443 = vadd.f32 %v1386, %v2442
        %v2444 = vpop.f32.mrf.mxu0
        %v2445 = vadd.f32 %v1386, %v2444
        %2446 = vmatmul.bf16.gmra.mxu0 %v1271
        %v2447 = vpop.f32.mrf.mxu0
        %v2448 = vadd.f32 %v1386, %v2447
        %v2449 = vpop.f32.mrf.mxu0
        %v2450 = vadd.f32 %v1386, %v2449
        %2451 = vmatmul.bf16.gmra.mxu0 %v1272
        %v2452 = vpop.f32.mrf.mxu0
        %v2453 = vadd.f32 %v1386, %v2452
        %v2454 = vpop.f32.mrf.mxu0
        %v2455 = vadd.f32 %v1386, %v2454
        %2456 = vmatmul.bf16.gmra.mxu0 %v1273
        %v2457 = vpop.f32.mrf.mxu0
        %v2458 = vadd.f32 %v1386, %v2457
        %v2459 = vpop.f32.mrf.mxu0
        %v2460 = vadd.f32 %v1386, %v2459
        %2461 = vmatmul.bf16.gmra.mxu0 %v1274
        %v2462 = vpop.f32.mrf.mxu0
        %v2463 = vadd.f32 %v1386, %v2462
        %v2464 = vpop.f32.mrf.mxu0
        %v2465 = vadd.f32 %v1386, %v2464
        %2466 = vdwg.mxu0
        %v2467 = vxor.u32 %v1889, 2147483648
        %v2468 = vxor.u32 %v1938, 2147483648
        %v2469 = vxor.u32 %v1987, 2147483648
        %v2470 = vxor.u32 %v2036, 2147483648
        %v2471 = vxor.u32 %v2085, 2147483648
        %v2472 = vxor.u32 %v2134, 2147483648
        %v2473 = vxor.u32 %v2183, 2147483648
        %v2474 = vxor.u32 %v2232, 2147483648
        %v2475 = vxor.u32 %v2281, 2147483648
        %v2476 = vxor.u32 %v2330, 2147483648
        %v2477 = vxor.u32 %v2379, 2147483648
        %v2478 = vxor.u32 %v2428, 2147483648
        %v2479 = vxor.u32 %v1891, 2147483648
        %v2480 = vxor.u32 %v1940, 2147483648
        %v2481 = vxor.u32 %v1989, 2147483648
        %v2482 = vxor.u32 %v2038, 2147483648
        %v2483 = vxor.u32 %v2087, 2147483648
        %v2484 = vxor.u32 %v2136, 2147483648
        %v2485 = vxor.u32 %v2185, 2147483648
        %v2486 = vxor.u32 %v2234, 2147483648
        %v2487 = vxor.u32 %v2283, 2147483648
        %v2488 = vxor.u32 %v2332, 2147483648
        %v2489 = vxor.u32 %v2381, 2147483648
        %v2490 = vxor.u32 %v2430, 2147483648
        %v2491 = vxor.u32 %v1894, 2147483648
        %v2492 = vxor.u32 %v1943, 2147483648
        %v2493 = vxor.u32 %v1992, 2147483648
        %v2494 = vxor.u32 %v2041, 2147483648
        %v2495 = vxor.u32 %v2090, 2147483648
        %v2496 = vxor.u32 %v2139, 2147483648
        %v2497 = vxor.u32 %v2188, 2147483648
        %v2498 = vxor.u32 %v2237, 2147483648
        %v2499 = vxor.u32 %v2286, 2147483648
        %v2500 = vxor.u32 %v2335, 2147483648
        %v2501 = vxor.u32 %v2384, 2147483648
        %v2502 = vxor.u32 %v2433, 2147483648
        %v2503 = vxor.u32 %v1896, 2147483648
        %v2504 = vxor.u32 %v1945, 2147483648
        %v2505 = vxor.u32 %v1994, 2147483648
        %v2506 = vxor.u32 %v2043, 2147483648
        %v2507 = vxor.u32 %v2092, 2147483648
        %v2508 = vxor.u32 %v2141, 2147483648
        %v2509 = vxor.u32 %v2190, 2147483648
        %v2510 = vxor.u32 %v2239, 2147483648
        %v2511 = vxor.u32 %v2288, 2147483648
        %v2512 = vxor.u32 %v2337, 2147483648
        %v2513 = vxor.u32 %v2386, 2147483648
        %v2514 = vxor.u32 %v2435, 2147483648
        %v2515 = vxor.u32 %v1899, 2147483648
        %v2516 = vxor.u32 %v1948, 2147483648
        %v2517 = vxor.u32 %v1997, 2147483648
        %v2518 = vxor.u32 %v2046, 2147483648
        %v2519 = vxor.u32 %v2095, 2147483648
        %v2520 = vxor.u32 %v2144, 2147483648
        %v2521 = vxor.u32 %v2193, 2147483648
        %v2522 = vxor.u32 %v2242, 2147483648
        %v2523 = vxor.u32 %v2291, 2147483648
        %v2524 = vxor.u32 %v2340, 2147483648
        %v2525 = vxor.u32 %v2389, 2147483648
        %v2526 = vxor.u32 %v2438, 2147483648
        %v2527 = vxor.u32 %v1901, 2147483648
        %v2528 = vxor.u32 %v1950, 2147483648
        %v2529 = vxor.u32 %v1999, 2147483648
        %v2530 = vxor.u32 %v2048, 2147483648
        %v2531 = vxor.u32 %v2097, 2147483648
        %v2532 = vxor.u32 %v2146, 2147483648
        %v2533 = vxor.u32 %v2195, 2147483648
        %v2534 = vxor.u32 %v2244, 2147483648
        %v2535 = vxor.u32 %v2293, 2147483648
        %v2536 = vxor.u32 %v2342, 2147483648
        %v2537 = vxor.u32 %v2391, 2147483648
        %v2538 = vxor.u32 %v2440, 2147483648
        %v2539 = vxor.u32 %v1904, 2147483648
        %v2540 = vxor.u32 %v1953, 2147483648
        %v2541 = vxor.u32 %v2002, 2147483648
        %v2542 = vxor.u32 %v2051, 2147483648
        %v2543 = vxor.u32 %v2100, 2147483648
        %v2544 = vxor.u32 %v2149, 2147483648
        %v2545 = vxor.u32 %v2198, 2147483648
        %v2546 = vxor.u32 %v2247, 2147483648
        %v2547 = vxor.u32 %v2296, 2147483648
        %v2548 = vxor.u32 %v2345, 2147483648
        %v2549 = vxor.u32 %v2394, 2147483648
        %v2550 = vxor.u32 %v2443, 2147483648
        %v2551 = vxor.u32 %v1906, 2147483648
        %v2552 = vxor.u32 %v1955, 2147483648
        %v2553 = vxor.u32 %v2004, 2147483648
        %v2554 = vxor.u32 %v2053, 2147483648
        %v2555 = vxor.u32 %v2102, 2147483648
        %v2556 = vxor.u32 %v2151, 2147483648
        %v2557 = vxor.u32 %v2200, 2147483648
        %v2558 = vxor.u32 %v2249, 2147483648
        %v2559 = vxor.u32 %v2298, 2147483648
        %v2560 = vxor.u32 %v2347, 2147483648
        %v2561 = vxor.u32 %v2396, 2147483648
        %v2562 = vxor.u32 %v2445, 2147483648
        %v2563 = vxor.u32 %v1909, 2147483648
        %v2564 = vxor.u32 %v1958, 2147483648
        %v2565 = vxor.u32 %v2007, 2147483648
        %v2566 = vxor.u32 %v2056, 2147483648
        %v2567 = vxor.u32 %v2105, 2147483648
        %v2568 = vxor.u32 %v2154, 2147483648
        %v2569 = vxor.u32 %v2203, 2147483648
        %v2570 = vxor.u32 %v2252, 2147483648
        %v2571 = vxor.u32 %v2301, 2147483648
        %v2572 = vxor.u32 %v2350, 2147483648
        %v2573 = vxor.u32 %v2399, 2147483648
        %v2574 = vxor.u32 %v2448, 2147483648
        %v2575 = vxor.u32 %v1911, 2147483648
        %v2576 = vxor.u32 %v1960, 2147483648
        %v2577 = vxor.u32 %v2009, 2147483648
        %v2578 = vxor.u32 %v2058, 2147483648
        %v2579 = vxor.u32 %v2107, 2147483648
        %v2580 = vxor.u32 %v2156, 2147483648
        %v2581 = vxor.u32 %v2205, 2147483648
        %v2582 = vxor.u32 %v2254, 2147483648
        %v2583 = vxor.u32 %v2303, 2147483648
        %v2584 = vxor.u32 %v2352, 2147483648
        %v2585 = vxor.u32 %v2401, 2147483648
        %v2586 = vxor.u32 %v2450, 2147483648
        %v2587 = vxor.u32 %v1914, 2147483648
        %v2588 = vxor.u32 %v1963, 2147483648
        %v2589 = vxor.u32 %v2012, 2147483648
        %v2590 = vxor.u32 %v2061, 2147483648
        %v2591 = vxor.u32 %v2110, 2147483648
        %v2592 = vxor.u32 %v2159, 2147483648
        %v2593 = vxor.u32 %v2208, 2147483648
        %v2594 = vxor.u32 %v2257, 2147483648
        %v2595 = vxor.u32 %v2306, 2147483648
        %v2596 = vxor.u32 %v2355, 2147483648
        %v2597 = vxor.u32 %v2404, 2147483648
        %v2598 = vxor.u32 %v2453, 2147483648
        %v2599 = vxor.u32 %v1916, 2147483648
        %v2600 = vxor.u32 %v1965, 2147483648
        %v2601 = vxor.u32 %v2014, 2147483648
        %v2602 = vxor.u32 %v2063, 2147483648
        %v2603 = vxor.u32 %v2112, 2147483648
        %v2604 = vxor.u32 %v2161, 2147483648
        %v2605 = vxor.u32 %v2210, 2147483648
        %v2606 = vxor.u32 %v2259, 2147483648
        %v2607 = vxor.u32 %v2308, 2147483648
        %v2608 = vxor.u32 %v2357, 2147483648
        %v2609 = vxor.u32 %v2406, 2147483648
        %v2610 = vxor.u32 %v2455, 2147483648
        %v2611 = vxor.u32 %v1919, 2147483648
        %v2612 = vxor.u32 %v1968, 2147483648
        %v2613 = vxor.u32 %v2017, 2147483648
        %v2614 = vxor.u32 %v2066, 2147483648
        %v2615 = vxor.u32 %v2115, 2147483648
        %v2616 = vxor.u32 %v2164, 2147483648
        %v2617 = vxor.u32 %v2213, 2147483648
        %v2618 = vxor.u32 %v2262, 2147483648
        %v2619 = vxor.u32 %v2311, 2147483648
        %v2620 = vxor.u32 %v2360, 2147483648
        %v2621 = vxor.u32 %v2409, 2147483648
        %v2622 = vxor.u32 %v2458, 2147483648
        %v2623 = vxor.u32 %v1921, 2147483648
        %v2624 = vxor.u32 %v1970, 2147483648
        %v2625 = vxor.u32 %v2019, 2147483648
        %v2626 = vxor.u32 %v2068, 2147483648
        %v2627 = vxor.u32 %v2117, 2147483648
        %v2628 = vxor.u32 %v2166, 2147483648
        %v2629 = vxor.u32 %v2215, 2147483648
        %v2630 = vxor.u32 %v2264, 2147483648
        %v2631 = vxor.u32 %v2313, 2147483648
        %v2632 = vxor.u32 %v2362, 2147483648
        %v2633 = vxor.u32 %v2411, 2147483648
        %v2634 = vxor.u32 %v2460, 2147483648
        %v2635 = vxor.u32 %v1924, 2147483648
        %v2636 = vxor.u32 %v1973, 2147483648
        %v2637 = vxor.u32 %v2022, 2147483648
        %v2638 = vxor.u32 %v2071, 2147483648
        %v2639 = vxor.u32 %v2120, 2147483648
        %v2640 = vxor.u32 %v2169, 2147483648
        %v2641 = vxor.u32 %v2218, 2147483648
        %v2642 = vxor.u32 %v2267, 2147483648
        %v2643 = vxor.u32 %v2316, 2147483648
        %v2644 = vxor.u32 %v2365, 2147483648
        %v2645 = vxor.u32 %v2414, 2147483648
        %v2646 = vxor.u32 %v2463, 2147483648
        %v2647 = vxor.u32 %v1926, 2147483648
        %v2648 = vxor.u32 %v1975, 2147483648
        %v2649 = vxor.u32 %v2024, 2147483648
        %v2650 = vxor.u32 %v2073, 2147483648
        %v2651 = vxor.u32 %v2122, 2147483648
        %v2652 = vxor.u32 %v2171, 2147483648
        %v2653 = vxor.u32 %v2220, 2147483648
        %v2654 = vxor.u32 %v2269, 2147483648
        %v2655 = vxor.u32 %v2318, 2147483648
        %v2656 = vxor.u32 %v2367, 2147483648
        %v2657 = vxor.u32 %v2416, 2147483648
        %v2658 = vxor.u32 %v2465, 2147483648
        %v2659 = vmul.f32 %v2467, 1.442695
        %v2660 = vpow.pop %v2659
        %v2661 = vmul.f32 %v2468, 1.442695
        %v2662 = vpow.pop %v2661
        %v2663 = vmul.f32 %v2469, 1.442695
        %v2664 = vpow.pop %v2663
        %v2665 = vmul.f32 %v2470, 1.442695
        %v2666 = vpow.pop %v2665
        %v2667 = vmul.f32 %v2471, 1.442695
        %v2668 = vpow.pop %v2667
        %v2669 = vmul.f32 %v2472, 1.442695
        %v2670 = vpow.pop %v2669
        %v2671 = vmul.f32 %v2473, 1.442695
        %v2672 = vpow.pop %v2671
        %v2673 = vmul.f32 %v2474, 1.442695
        %v2674 = vpow.pop %v2673
        %v2675 = vmul.f32 %v2475, 1.442695
        %v2676 = vpow.pop %v2675
        %v2677 = vmul.f32 %v2476, 1.442695
        %v2678 = vpow.pop %v2677
        %v2679 = vmul.f32 %v2477, 1.442695
        %v2680 = vpow.pop %v2679
        %v2681 = vmul.f32 %v2478, 1.442695
        %v2682 = vpow.pop %v2681
        %v2683 = vmul.f32 %v2479, 1.442695
        %v2684 = vpow.pop %v2683
        %v2685 = vmul.f32 %v2480, 1.442695
        %v2686 = vpow.pop %v2685
        %v2687 = vmul.f32 %v2481, 1.442695
        %v2688 = vpow.pop %v2687
        %v2689 = vmul.f32 %v2482, 1.442695
        %v2690 = vpow.pop %v2689
        %v2691 = vmul.f32 %v2483, 1.442695
        %v2692 = vpow.pop %v2691
        %v2693 = vmul.f32 %v2484, 1.442695
        %v2694 = vpow.pop %v2693
        %v2695 = vmul.f32 %v2485, 1.442695
        %v2696 = vpow.pop %v2695
        %v2697 = vmul.f32 %v2486, 1.442695
        %v2698 = vpow.pop %v2697
        %v2699 = vmul.f32 %v2487, 1.442695
        %v2700 = vpow.pop %v2699
        %v2701 = vmul.f32 %v2488, 1.442695
        %v2702 = vpow.pop %v2701
        %v2703 = vmul.f32 %v2489, 1.442695
        %v2704 = vpow.pop %v2703
        %v2705 = vmul.f32 %v2490, 1.442695
        %v2706 = vpow.pop %v2705
        %v2707 = vmul.f32 %v2491, 1.442695
        %v2708 = vpow.pop %v2707
        %v2709 = vmul.f32 %v2492, 1.442695
        %v2710 = vpow.pop %v2709
        %v2711 = vmul.f32 %v2493, 1.442695
        %v2712 = vpow.pop %v2711
        %v2713 = vmul.f32 %v2494, 1.442695
        %v2714 = vpow.pop %v2713
        %v2715 = vmul.f32 %v2495, 1.442695
        %v2716 = vpow.pop %v2715
        %v2717 = vmul.f32 %v2496, 1.442695
        %v2718 = vpow.pop %v2717
        %v2719 = vmul.f32 %v2497, 1.442695
        %v2720 = vpow.pop %v2719
        %v2721 = vmul.f32 %v2498, 1.442695
        %v2722 = vpow.pop %v2721
        %v2723 = vmul.f32 %v2499, 1.442695
        %v2724 = vpow.pop %v2723
        %v2725 = vmul.f32 %v2500, 1.442695
        %v2726 = vpow.pop %v2725
        %v2727 = vmul.f32 %v2501, 1.442695
        %v2728 = vpow.pop %v2727
        %v2729 = vmul.f32 %v2502, 1.442695
        %v2730 = vpow.pop %v2729
        %v2731 = vmul.f32 %v2503, 1.442695
        %v2732 = vpow.pop %v2731
        %v2733 = vmul.f32 %v2504, 1.442695
        %v2734 = vpow.pop %v2733
        %v2735 = vmul.f32 %v2505, 1.442695
        %v2736 = vpow.pop %v2735
        %v2737 = vmul.f32 %v2506, 1.442695
        %v2738 = vpow.pop %v2737
        %v2739 = vmul.f32 %v2507, 1.442695
        %v2740 = vpow.pop %v2739
        %v2741 = vmul.f32 %v2508, 1.442695
        %v2742 = vpow.pop %v2741
        %v2743 = vmul.f32 %v2509, 1.442695
        %v2744 = vpow.pop %v2743
        %v2745 = vmul.f32 %v2510, 1.442695
        %v2746 = vpow.pop %v2745
        %v2747 = vmul.f32 %v2511, 1.442695
        %v2748 = vpow.pop %v2747
        %v2749 = vmul.f32 %v2512, 1.442695
        %v2750 = vpow.pop %v2749
        %v2751 = vmul.f32 %v2513, 1.442695
        %v2752 = vpow.pop %v2751
        %v2753 = vmul.f32 %v2514, 1.442695
        %v2754 = vpow.pop %v2753
        %v2755 = vmul.f32 %v2515, 1.442695
        %v2756 = vpow.pop %v2755
        %v2757 = vmul.f32 %v2516, 1.442695
        %v2758 = vpow.pop %v2757
        %v2759 = vmul.f32 %v2517, 1.442695
        %v2760 = vpow.pop %v2759
        %v2761 = vmul.f32 %v2518, 1.442695
        %v2762 = vpow.pop %v2761
        %v2763 = vmul.f32 %v2519, 1.442695
        %v2764 = vpow.pop %v2763
        %v2765 = vmul.f32 %v2520, 1.442695
        %v2766 = vpow.pop %v2765
        %v2767 = vmul.f32 %v2521, 1.442695
        %v2768 = vpow.pop %v2767
        %v2769 = vmul.f32 %v2522, 1.442695
        %v2770 = vpow.pop %v2769
        %v2771 = vmul.f32 %v2523, 1.442695
        %v2772 = vpow.pop %v2771
        %v2773 = vmul.f32 %v2524, 1.442695
        %v2774 = vpow.pop %v2773
        %v2775 = vmul.f32 %v2525, 1.442695
        %v2776 = vpow.pop %v2775
        %v2777 = vmul.f32 %v2526, 1.442695
        %v2778 = vpow.pop %v2777
        %v2779 = vmul.f32 %v2527, 1.442695
        %v2780 = vpow.pop %v2779
        %v2781 = vmul.f32 %v2528, 1.442695
        %v2782 = vpow.pop %v2781
        %v2783 = vmul.f32 %v2529, 1.442695
        %v2784 = vpow.pop %v2783
        %v2785 = vmul.f32 %v2530, 1.442695
        %v2786 = vpow.pop %v2785
        %v2787 = vmul.f32 %v2531, 1.442695
        %v2788 = vpow.pop %v2787
        %v2789 = vmul.f32 %v2532, 1.442695
        %v2790 = vpow.pop %v2789
        %v2791 = vmul.f32 %v2533, 1.442695
        %v2792 = vpow.pop %v2791
        %v2793 = vmul.f32 %v2534, 1.442695
        %v2794 = vpow.pop %v2793
        %v2795 = vmul.f32 %v2535, 1.442695
        %v2796 = vpow.pop %v2795
        %v2797 = vmul.f32 %v2536, 1.442695
        %v2798 = vpow.pop %v2797
        %v2799 = vmul.f32 %v2537, 1.442695
        %v2800 = vpow.pop %v2799
        %v2801 = vmul.f32 %v2538, 1.442695
        %v2802 = vpow.pop %v2801
        %v2803 = vmul.f32 %v2539, 1.442695
        %v2804 = vpow.pop %v2803
        %v2805 = vmul.f32 %v2540, 1.442695
        %v2806 = vpow.pop %v2805
        %v2807 = vmul.f32 %v2541, 1.442695
        %v2808 = vpow.pop %v2807
        %v2809 = vmul.f32 %v2542, 1.442695
        %v2810 = vpow.pop %v2809
        %v2811 = vmul.f32 %v2543, 1.442695
        %v2812 = vpow.pop %v2811
        %v2813 = vmul.f32 %v2544, 1.442695
        %v2814 = vpow.pop %v2813
        %v2815 = vmul.f32 %v2545, 1.442695
        %v2816 = vpow.pop %v2815
        %v2817 = vmul.f32 %v2546, 1.442695
        %v2818 = vpow.pop %v2817
        %v2819 = vmul.f32 %v2547, 1.442695
        %v2820 = vpow.pop %v2819
        %v2821 = vmul.f32 %v2548, 1.442695
        %v2822 = vpow.pop %v2821
        %v2823 = vmul.f32 %v2549, 1.442695
        %v2824 = vpow.pop %v2823
        %v2825 = vmul.f32 %v2550, 1.442695
        %v2826 = vpow.pop %v2825
        %v2827 = vmul.f32 %v2551, 1.442695
        %v2828 = vpow.pop %v2827
        %v2829 = vmul.f32 %v2552, 1.442695
        %v2830 = vpow.pop %v2829
        %v2831 = vmul.f32 %v2553, 1.442695
        %v2832 = vpow.pop %v2831
        %v2833 = vmul.f32 %v2554, 1.442695
        %v2834 = vpow.pop %v2833
        %v2835 = vmul.f32 %v2555, 1.442695
        %v2836 = vpow.pop %v2835
        %v2837 = vmul.f32 %v2556, 1.442695
        %v2838 = vpow.pop %v2837
        %v2839 = vmul.f32 %v2557, 1.442695
        %v2840 = vpow.pop %v2839
        %v2841 = vmul.f32 %v2558, 1.442695
        %v2842 = vpow.pop %v2841
        %v2843 = vmul.f32 %v2559, 1.442695
        %v2844 = vpow.pop %v2843
        %v2845 = vmul.f32 %v2560, 1.442695
        %v2846 = vpow.pop %v2845
        %v2847 = vmul.f32 %v2561, 1.442695
        %v2848 = vpow.pop %v2847
        %v2849 = vmul.f32 %v2562, 1.442695
        %v2850 = vpow.pop %v2849
        %v2851 = vmul.f32 %v2563, 1.442695
        %v2852 = vpow.pop %v2851
        %v2853 = vmul.f32 %v2564, 1.442695
        %v2854 = vpow.pop %v2853
        %v2855 = vmul.f32 %v2565, 1.442695
        %v2856 = vpow.pop %v2855
        %v2857 = vmul.f32 %v2566, 1.442695
        %v2858 = vpow.pop %v2857
        %v2859 = vmul.f32 %v2567, 1.442695
        %v2860 = vpow.pop %v2859
        %v2861 = vmul.f32 %v2568, 1.442695
        %v2862 = vpow.pop %v2861
        %v2863 = vmul.f32 %v2569, 1.442695
        %v2864 = vpow.pop %v2863
        %v2865 = vmul.f32 %v2570, 1.442695
        %v2866 = vpow.pop %v2865
        %v2867 = vmul.f32 %v2571, 1.442695
        %v2868 = vpow.pop %v2867
        %v2869 = vmul.f32 %v2572, 1.442695
        %v2870 = vpow.pop %v2869
        %v2871 = vmul.f32 %v2573, 1.442695
        %v2872 = vpow.pop %v2871
        %v2873 = vmul.f32 %v2574, 1.442695
        %v2874 = vpow.pop %v2873
        %v2875 = vmul.f32 %v2575, 1.442695
        %v2876 = vpow.pop %v2875
        %v2877 = vmul.f32 %v2576, 1.442695
        %v2878 = vpow.pop %v2877
        %v2879 = vmul.f32 %v2577, 1.442695
        %v2880 = vpow.pop %v2879
        %v2881 = vmul.f32 %v2578, 1.442695
        %v2882 = vpow.pop %v2881
        %v2883 = vmul.f32 %v2579, 1.442695
        %v2884 = vpow.pop %v2883
        %v2885 = vmul.f32 %v2580, 1.442695
        %v2886 = vpow.pop %v2885
        %v2887 = vmul.f32 %v2581, 1.442695
        %v2888 = vpow.pop %v2887
        %v2889 = vmul.f32 %v2582, 1.442695
        %v2890 = vpow.pop %v2889
        %v2891 = vmul.f32 %v2583, 1.442695
        %v2892 = vpow.pop %v2891
        %v2893 = vmul.f32 %v2584, 1.442695
        %v2894 = vpow.pop %v2893
        %v2895 = vmul.f32 %v2585, 1.442695
        %v2896 = vpow.pop %v2895
        %v2897 = vmul.f32 %v2586, 1.442695
        %v2898 = vpow.pop %v2897
        %v2899 = vmul.f32 %v2587, 1.442695
        %v2900 = vpow.pop %v2899
        %v2901 = vmul.f32 %v2588, 1.442695
        %v2902 = vpow.pop %v2901
        %v2903 = vmul.f32 %v2589, 1.442695
        %v2904 = vpow.pop %v2903
        %v2905 = vmul.f32 %v2590, 1.442695
        %v2906 = vpow.pop %v2905
        %v2907 = vmul.f32 %v2591, 1.442695
        %v2908 = vpow.pop %v2907
        %v2909 = vmul.f32 %v2592, 1.442695
        %v2910 = vpow.pop %v2909
        %v2911 = vmul.f32 %v2593, 1.442695
        %v2912 = vpow.pop %v2911
        %v2913 = vmul.f32 %v2594, 1.442695
        %v2914 = vpow.pop %v2913
        %v2915 = vmul.f32 %v2595, 1.442695
        %v2916 = vpow.pop %v2915
        %v2917 = vmul.f32 %v2596, 1.442695
        %v2918 = vpow.pop %v2917
        %v2919 = vmul.f32 %v2597, 1.442695
        %v2920 = vpow.pop %v2919
        %v2921 = vmul.f32 %v2598, 1.442695
        %v2922 = vpow.pop %v2921
        %v2923 = vmul.f32 %v2599, 1.442695
        %v2924 = vpow.pop %v2923
        %v2925 = vmul.f32 %v2600, 1.442695
        %v2926 = vpow.pop %v2925
        %v2927 = vmul.f32 %v2601, 1.442695
        %v2928 = vpow.pop %v2927
        %v2929 = vmul.f32 %v2602, 1.442695
        %v2930 = vpow.pop %v2929
        %v2931 = vmul.f32 %v2603, 1.442695
        %v2932 = vpow.pop %v2931
        %v2933 = vmul.f32 %v2604, 1.442695
        %v2934 = vpow.pop %v2933
        %v2935 = vmul.f32 %v2605, 1.442695
        %v2936 = vpow.pop %v2935
        %v2937 = vmul.f32 %v2606, 1.442695
        %v2938 = vpow.pop %v2937
        %v2939 = vmul.f32 %v2607, 1.442695
        %v2940 = vpow.pop %v2939
        %v2941 = vmul.f32 %v2608, 1.442695
        %v2942 = vpow.pop %v2941
        %v2943 = vmul.f32 %v2609, 1.442695
        %v2944 = vpow.pop %v2943
        %v2945 = vmul.f32 %v2610, 1.442695
        %v2946 = vpow.pop %v2945
        %v2947 = vmul.f32 %v2611, 1.442695
        %v2948 = vpow.pop %v2947
        %v2949 = vmul.f32 %v2612, 1.442695
        %v2950 = vpow.pop %v2949
        %v2951 = vmul.f32 %v2613, 1.442695
        %v2952 = vpow.pop %v2951
        %v2953 = vmul.f32 %v2614, 1.442695
        %v2954 = vpow.pop %v2953
        %v2955 = vmul.f32 %v2615, 1.442695
        %v2956 = vpow.pop %v2955
        %v2957 = vmul.f32 %v2616, 1.442695
        %v2958 = vpow.pop %v2957
        %v2959 = vmul.f32 %v2617, 1.442695
        %v2960 = vpow.pop %v2959
        %v2961 = vmul.f32 %v2618, 1.442695
        %v2962 = vpow.pop %v2961
        %v2963 = vmul.f32 %v2619, 1.442695
        %v2964 = vpow.pop %v2963
        %v2965 = vmul.f32 %v2620, 1.442695
        %v2966 = vpow.pop %v2965
        %v2967 = vmul.f32 %v2621, 1.442695
        %v2968 = vpow.pop %v2967
        %v2969 = vmul.f32 %v2622, 1.442695
        %v2970 = vpow.pop %v2969
        %v2971 = vmul.f32 %v2623, 1.442695
        %v2972 = vpow.pop %v2971
        %v2973 = vmul.f32 %v2624, 1.442695
        %v2974 = vpow.pop %v2973
        %v2975 = vmul.f32 %v2625, 1.442695
        %v2976 = vpow.pop %v2975
        %v2977 = vmul.f32 %v2626, 1.442695
        %v2978 = vpow.pop %v2977
        %v2979 = vmul.f32 %v2627, 1.442695
        %v2980 = vpow.pop %v2979
        %v2981 = vmul.f32 %v2628, 1.442695
        %v2982 = vpow.pop %v2981
        %v2983 = vmul.f32 %v2629, 1.442695
        %v2984 = vpow.pop %v2983
        %v2985 = vmul.f32 %v2630, 1.442695
        %v2986 = vpow.pop %v2985
        %v2987 = vmul.f32 %v2631, 1.442695
        %v2988 = vpow.pop %v2987
        %v2989 = vmul.f32 %v2632, 1.442695
        %v2990 = vpow.pop %v2989
        %v2991 = vmul.f32 %v2633, 1.442695
        %v2992 = vpow.pop %v2991
        %v2993 = vmul.f32 %v2634, 1.442695
        %v2994 = vpow.pop %v2993
        %v2995 = vmul.f32 %v2635, 1.442695
        %v2996 = vpow.pop %v2995
        %v2997 = vmul.f32 %v2636, 1.442695
        %v2998 = vpow.pop %v2997
        %v2999 = vmul.f32 %v2637, 1.442695
        %v3000 = vpow.pop %v2999
        %v3001 = vmul.f32 %v2638, 1.442695
        %v3002 = vpow.pop %v3001
        %v3003 = vmul.f32 %v2639, 1.442695
        %v3004 = vpow.pop %v3003
        %v3005 = vmul.f32 %v2640, 1.442695
        %v3006 = vpow.pop %v3005
        %v3007 = vmul.f32 %v2641, 1.442695
        %v3008 = vpow.pop %v3007
        %v3009 = vmul.f32 %v2642, 1.442695
        %v3010 = vpow.pop %v3009
        %v3011 = vmul.f32 %v2643, 1.442695
        %v3012 = vpow.pop %v3011
        %v3013 = vmul.f32 %v2644, 1.442695
        %v3014 = vpow.pop %v3013
        %v3015 = vmul.f32 %v2645, 1.442695
        %v3016 = vpow.pop %v3015
        %v3017 = vmul.f32 %v2646, 1.442695
        %v3018 = vpow.pop %v3017
        %v3019 = vmul.f32 %v2647, 1.442695
        %v3020 = vpow.pop %v3019
        %v3021 = vmul.f32 %v2648, 1.442695
        %v3022 = vpow.pop %v3021
        %v3023 = vmul.f32 %v2649, 1.442695
        %v3024 = vpow.pop %v3023
        %v3025 = vmul.f32 %v2650, 1.442695
        %v3026 = vpow.pop %v3025
        %v3027 = vmul.f32 %v2651, 1.442695
        %v3028 = vpow.pop %v3027
        %v3029 = vmul.f32 %v2652, 1.442695
        %v3030 = vpow.pop %v3029
        %v3031 = vmul.f32 %v2653, 1.442695
        %v3032 = vpow.pop %v3031
        %v3033 = vmul.f32 %v2654, 1.442695
        %v3034 = vpow.pop %v3033
        %v3035 = vmul.f32 %v2655, 1.442695
        %v3036 = vpow.pop %v3035
        %v3037 = vmul.f32 %v2656, 1.442695
        %v3038 = vpow.pop %v3037
        %v3039 = vmul.f32 %v2657, 1.442695
        %v3040 = vpow.pop %v3039
        %v3041 = vmul.f32 %v2658, 1.442695
        %v3042 = vpow.pop %v3041
        %v3043 = vadd.f32 %v2660, 1.0
        %v3044 = vadd.f32 %v2662, 1.0
        %v3045 = vadd.f32 %v2664, 1.0
        %v3046 = vadd.f32 %v2666, 1.0
        %v3047 = vadd.f32 %v2668, 1.0
        %v3048 = vadd.f32 %v2670, 1.0
        %v3049 = vadd.f32 %v2672, 1.0
        %v3050 = vadd.f32 %v2674, 1.0
        %v3051 = vadd.f32 %v2676, 1.0
        %v3052 = vadd.f32 %v2678, 1.0
        %v3053 = vadd.f32 %v2680, 1.0
        %v3054 = vadd.f32 %v2682, 1.0
        %v3055 = vadd.f32 %v2684, 1.0
        %v3056 = vadd.f32 %v2686, 1.0
        %v3057 = vadd.f32 %v2688, 1.0
        %v3058 = vadd.f32 %v2690, 1.0
        %v3059 = vadd.f32 %v2692, 1.0
        %v3060 = vadd.f32 %v2694, 1.0
        %v3061 = vadd.f32 %v2696, 1.0
        %v3062 = vadd.f32 %v2698, 1.0
        %v3063 = vadd.f32 %v2700, 1.0
        %v3064 = vadd.f32 %v2702, 1.0
        %v3065 = vadd.f32 %v2704, 1.0
        %v3066 = vadd.f32 %v2706, 1.0
        %v3067 = vadd.f32 %v2708, 1.0
        %v3068 = vadd.f32 %v2710, 1.0
        %v3069 = vadd.f32 %v2712, 1.0
        %v3070 = vadd.f32 %v2714, 1.0
        %v3071 = vadd.f32 %v2716, 1.0
        %v3072 = vadd.f32 %v2718, 1.0
        %v3073 = vadd.f32 %v2720, 1.0
        %v3074 = vadd.f32 %v2722, 1.0
        %v3075 = vadd.f32 %v2724, 1.0
        %v3076 = vadd.f32 %v2726, 1.0
        %v3077 = vadd.f32 %v2728, 1.0
        %v3078 = vadd.f32 %v2730, 1.0
        %v3079 = vadd.f32 %v2732, 1.0
        %v3080 = vadd.f32 %v2734, 1.0
        %v3081 = vadd.f32 %v2736, 1.0
        %v3082 = vadd.f32 %v2738, 1.0
        %v3083 = vadd.f32 %v2740, 1.0
        %v3084 = vadd.f32 %v2742, 1.0
        %v3085 = vadd.f32 %v2744, 1.0
        %v3086 = vadd.f32 %v2746, 1.0
        %v3087 = vadd.f32 %v2748, 1.0
        %v3088 = vadd.f32 %v2750, 1.0
        %v3089 = vadd.f32 %v2752, 1.0
        %v3090 = vadd.f32 %v2754, 1.0
        %v3091 = vadd.f32 %v2756, 1.0
        %v3092 = vadd.f32 %v2758, 1.0
        %v3093 = vadd.f32 %v2760, 1.0
        %v3094 = vadd.f32 %v2762, 1.0
        %v3095 = vadd.f32 %v2764, 1.0
        %v3096 = vadd.f32 %v2766, 1.0
        %v3097 = vadd.f32 %v2768, 1.0
        %v3098 = vadd.f32 %v2770, 1.0
        %v3099 = vadd.f32 %v2772, 1.0
        %v3100 = vadd.f32 %v2774, 1.0
        %v3101 = vadd.f32 %v2776, 1.0
        %v3102 = vadd.f32 %v2778, 1.0
        %v3103 = vadd.f32 %v2780, 1.0
        %v3104 = vadd.f32 %v2782, 1.0
        %v3105 = vadd.f32 %v2784, 1.0
        %v3106 = vadd.f32 %v2786, 1.0
        %v3107 = vadd.f32 %v2788, 1.0
        %v3108 = vadd.f32 %v2790, 1.0
        %v3109 = vadd.f32 %v2792, 1.0
        %v3110 = vadd.f32 %v2794, 1.0
        %v3111 = vadd.f32 %v2796, 1.0
        %v3112 = vadd.f32 %v2798, 1.0
        %v3113 = vadd.f32 %v2800, 1.0
        %v3114 = vadd.f32 %v2802, 1.0
        %v3115 = vadd.f32 %v2804, 1.0
        %v3116 = vadd.f32 %v2806, 1.0
        %v3117 = vadd.f32 %v2808, 1.0
        %v3118 = vadd.f32 %v2810, 1.0
        %v3119 = vadd.f32 %v2812, 1.0
        %v3120 = vadd.f32 %v2814, 1.0
        %v3121 = vadd.f32 %v2816, 1.0
        %v3122 = vadd.f32 %v2818, 1.0
        %v3123 = vadd.f32 %v2820, 1.0
        %v3124 = vadd.f32 %v2822, 1.0
        %v3125 = vadd.f32 %v2824, 1.0
        %v3126 = vadd.f32 %v2826, 1.0
        %v3127 = vadd.f32 %v2828, 1.0
        %v3128 = vadd.f32 %v2830, 1.0
        %v3129 = vadd.f32 %v2832, 1.0
        %v3130 = vadd.f32 %v2834, 1.0
        %v3131 = vadd.f32 %v2836, 1.0
        %v3132 = vadd.f32 %v2838, 1.0
        %v3133 = vadd.f32 %v2840, 1.0
        %v3134 = vadd.f32 %v2842, 1.0
        %v3135 = vadd.f32 %v2844, 1.0
        %v3136 = vadd.f32 %v2846, 1.0
        %v3137 = vadd.f32 %v2848, 1.0
        %v3138 = vadd.f32 %v2850, 1.0
        %v3139 = vadd.f32 %v2852, 1.0
        %v3140 = vadd.f32 %v2854, 1.0
        %v3141 = vadd.f32 %v2856, 1.0
        %v3142 = vadd.f32 %v2858, 1.0
        %v3143 = vadd.f32 %v2860, 1.0
        %v3144 = vadd.f32 %v2862, 1.0
        %v3145 = vadd.f32 %v2864, 1.0
        %v3146 = vadd.f32 %v2866, 1.0
        %v3147 = vadd.f32 %v2868, 1.0
        %v3148 = vadd.f32 %v2870, 1.0
        %v3149 = vadd.f32 %v2872, 1.0
        %v3150 = vadd.f32 %v2874, 1.0
        %v3151 = vadd.f32 %v2876, 1.0
        %v3152 = vadd.f32 %v2878, 1.0
        %v3153 = vadd.f32 %v2880, 1.0
        %v3154 = vadd.f32 %v2882, 1.0
        %v3155 = vadd.f32 %v2884, 1.0
        %v3156 = vadd.f32 %v2886, 1.0
        %v3157 = vadd.f32 %v2888, 1.0
        %v3158 = vadd.f32 %v2890, 1.0
        %v3159 = vadd.f32 %v2892, 1.0
        %v3160 = vadd.f32 %v2894, 1.0
        %v3161 = vadd.f32 %v2896, 1.0
        %v3162 = vadd.f32 %v2898, 1.0
        %v3163 = vadd.f32 %v2900, 1.0
        %v3164 = vadd.f32 %v2902, 1.0
        %v3165 = vadd.f32 %v2904, 1.0
        %v3166 = vadd.f32 %v2906, 1.0
        %v3167 = vadd.f32 %v2908, 1.0
        %v3168 = vadd.f32 %v2910, 1.0
        %v3169 = vadd.f32 %v2912, 1.0
        %v3170 = vadd.f32 %v2914, 1.0
        %v3171 = vadd.f32 %v2916, 1.0
        %v3172 = vadd.f32 %v2918, 1.0
        %v3173 = vadd.f32 %v2920, 1.0
        %v3174 = vadd.f32 %v2922, 1.0
        %v3175 = vadd.f32 %v2924, 1.0
        %v3176 = vadd.f32 %v2926, 1.0
        %v3177 = vadd.f32 %v2928, 1.0
        %v3178 = vadd.f32 %v2930, 1.0
        %v3179 = vadd.f32 %v2932, 1.0
        %v3180 = vadd.f32 %v2934, 1.0
        %v3181 = vadd.f32 %v2936, 1.0
        %v3182 = vadd.f32 %v2938, 1.0
        %v3183 = vadd.f32 %v2940, 1.0
        %v3184 = vadd.f32 %v2942, 1.0
        %v3185 = vadd.f32 %v2944, 1.0
        %v3186 = vadd.f32 %v2946, 1.0
        %v3187 = vadd.f32 %v2948, 1.0
        %v3188 = vadd.f32 %v2950, 1.0
        %v3189 = vadd.f32 %v2952, 1.0
        %v3190 = vadd.f32 %v2954, 1.0
        %v3191 = vadd.f32 %v2956, 1.0
        %v3192 = vadd.f32 %v2958, 1.0
        %v3193 = vadd.f32 %v2960, 1.0
        %v3194 = vadd.f32 %v2962, 1.0
        %v3195 = vadd.f32 %v2964, 1.0
        %v3196 = vadd.f32 %v2966, 1.0
        %v3197 = vadd.f32 %v2968, 1.0
        %v3198 = vadd.f32 %v2970, 1.0
        %v3199 = vadd.f32 %v2972, 1.0
        %v3200 = vadd.f32 %v2974, 1.0
        %v3201 = vadd.f32 %v2976, 1.0
        %v3202 = vadd.f32 %v2978, 1.0
        %v3203 = vadd.f32 %v2980, 1.0
        %v3204 = vadd.f32 %v2982, 1.0
        %v3205 = vadd.f32 %v2984, 1.0
        %v3206 = vadd.f32 %v2986, 1.0
        %v3207 = vadd.f32 %v2988, 1.0
        %v3208 = vadd.f32 %v2990, 1.0
        %v3209 = vadd.f32 %v2992, 1.0
        %v3210 = vadd.f32 %v2994, 1.0
        %v3211 = vadd.f32 %v2996, 1.0
        %v3212 = vadd.f32 %v2998, 1.0
        %v3213 = vadd.f32 %v3000, 1.0
        %v3214 = vadd.f32 %v3002, 1.0
        %v3215 = vadd.f32 %v3004, 1.0
        %v3216 = vadd.f32 %v3006, 1.0
        %v3217 = vadd.f32 %v3008, 1.0
        %v3218 = vadd.f32 %v3010, 1.0
        %v3219 = vadd.f32 %v3012, 1.0
        %v3220 = vadd.f32 %v3014, 1.0
        %v3221 = vadd.f32 %v3016, 1.0
        %v3222 = vadd.f32 %v3018, 1.0
        %v3223 = vadd.f32 %v3020, 1.0
        %v3224 = vadd.f32 %v3022, 1.0
        %v3225 = vadd.f32 %v3024, 1.0
        %v3226 = vadd.f32 %v3026, 1.0
        %v3227 = vadd.f32 %v3028, 1.0
        %v3228 = vadd.f32 %v3030, 1.0
        %v3229 = vadd.f32 %v3032, 1.0
        %v3230 = vadd.f32 %v3034, 1.0
        %v3231 = vadd.f32 %v3036, 1.0
        %v3232 = vadd.f32 %v3038, 1.0
        %v3233 = vadd.f32 %v3040, 1.0
        %v3234 = vadd.f32 %v3042, 1.0
        %v3235 = vrcp.pop %v3043
        %v3236 = vmul.f32 %v3043, %v3235
        %v3237 = vsub.f32 1.0, %v3236
        %v3238 = vmul.f32 %v3235, %v3237
        %v3239 = vadd.f32 %v3235, %v3238
        %vm3240 = vweird.f32 %v3043
        %vm3241 = vweird.f32 %v3235
        %vm3242 = vmor %vm3240, %vm3241
        %v3243 = vsel %vm3242, %v3235, %v3239
        %v3244 = vand.u32 2147483647, %v3043
        %vm3245 = vcmp.eq.f32.partialorder %v3244, 8.507059e+37
        %v3246 = vand.u32 %v3043, 2147483648
        %v3247 = vor.u32 1.1754944e-38, %v3246
        %v3248 = vsel %vm3245, %v3247, %v3243
        %v3249 = vmul.f32 1.0, %v3248
        %v3250 = vrcp.pop %v3044
        %v3251 = vmul.f32 %v3044, %v3250
        %v3252 = vsub.f32 1.0, %v3251
        %v3253 = vmul.f32 %v3250, %v3252
        %v3254 = vadd.f32 %v3250, %v3253
        %vm3255 = vweird.f32 %v3044
        %vm3256 = vweird.f32 %v3250
        %vm3257 = vmor %vm3255, %vm3256
        %v3258 = vsel %vm3257, %v3250, %v3254
        %v3259 = vand.u32 2147483647, %v3044
        %vm3260 = vcmp.eq.f32.partialorder %v3259, 8.507059e+37
        %v3261 = vand.u32 %v3044, 2147483648
        %v3262 = vor.u32 1.1754944e-38, %v3261
        %v3263 = vsel %vm3260, %v3262, %v3258
        %v3264 = vmul.f32 1.0, %v3263
        %v3265 = vrcp.pop %v3045
        %v3266 = vmul.f32 %v3045, %v3265
        %v3267 = vsub.f32 1.0, %v3266
        %v3268 = vmul.f32 %v3265, %v3267
        %v3269 = vadd.f32 %v3265, %v3268
        %vm3270 = vweird.f32 %v3045
        %vm3271 = vweird.f32 %v3265
        %vm3272 = vmor %vm3270, %vm3271
        %v3273 = vsel %vm3272, %v3265, %v3269
        %v3274 = vand.u32 2147483647, %v3045
        %vm3275 = vcmp.eq.f32.partialorder %v3274, 8.507059e+37
        %v3276 = vand.u32 %v3045, 2147483648
        %v3277 = vor.u32 1.1754944e-38, %v3276
        %v3278 = vsel %vm3275, %v3277, %v3273
        %v3279 = vmul.f32 1.0, %v3278
        %v3280 = vrcp.pop %v3046
        %v3281 = vmul.f32 %v3046, %v3280
        %v3282 = vsub.f32 1.0, %v3281
        %v3283 = vmul.f32 %v3280, %v3282
        %v3284 = vadd.f32 %v3280, %v3283
        %vm3285 = vweird.f32 %v3046
        %vm3286 = vweird.f32 %v3280
        %vm3287 = vmor %vm3285, %vm3286
        %v3288 = vsel %vm3287, %v3280, %v3284
        %v3289 = vand.u32 2147483647, %v3046
        %vm3290 = vcmp.eq.f32.partialorder %v3289, 8.507059e+37
        %v3291 = vand.u32 %v3046, 2147483648
        %v3292 = vor.u32 1.1754944e-38, %v3291
        %v3293 = vsel %vm3290, %v3292, %v3288
        %v3294 = vmul.f32 1.0, %v3293
        %v3295 = vrcp.pop %v3047
        %v3296 = vmul.f32 %v3047, %v3295
        %v3297 = vsub.f32 1.0, %v3296
        %v3298 = vmul.f32 %v3295, %v3297
        %v3299 = vadd.f32 %v3295, %v3298
        %vm3300 = vweird.f32 %v3047
        %vm3301 = vweird.f32 %v3295
        %vm3302 = vmor %vm3300, %vm3301
        %v3303 = vsel %vm3302, %v3295, %v3299
        %v3304 = vand.u32 2147483647, %v3047
        %vm3305 = vcmp.eq.f32.partialorder %v3304, 8.507059e+37
        %v3306 = vand.u32 %v3047, 2147483648
        %v3307 = vor.u32 1.1754944e-38, %v3306
        %v3308 = vsel %vm3305, %v3307, %v3303
        %v3309 = vmul.f32 1.0, %v3308
        %v3310 = vrcp.pop %v3048
        %v3311 = vmul.f32 %v3048, %v3310
        %v3312 = vsub.f32 1.0, %v3311
        %v3313 = vmul.f32 %v3310, %v3312
        %v3314 = vadd.f32 %v3310, %v3313
        %vm3315 = vweird.f32 %v3048
        %vm3316 = vweird.f32 %v3310
        %vm3317 = vmor %vm3315, %vm3316
        %v3318 = vsel %vm3317, %v3310, %v3314
        %v3319 = vand.u32 2147483647, %v3048
        %vm3320 = vcmp.eq.f32.partialorder %v3319, 8.507059e+37
        %v3321 = vand.u32 %v3048, 2147483648
        %v3322 = vor.u32 1.1754944e-38, %v3321
        %v3323 = vsel %vm3320, %v3322, %v3318
        %v3324 = vmul.f32 1.0, %v3323
        %v3325 = vrcp.pop %v3049
        %v3326 = vmul.f32 %v3049, %v3325
        %v3327 = vsub.f32 1.0, %v3326
        %v3328 = vmul.f32 %v3325, %v3327
        %v3329 = vadd.f32 %v3325, %v3328
        %vm3330 = vweird.f32 %v3049
        %vm3331 = vweird.f32 %v3325
        %vm3332 = vmor %vm3330, %vm3331
        %v3333 = vsel %vm3332, %v3325, %v3329
        %v3334 = vand.u32 2147483647, %v3049
        %vm3335 = vcmp.eq.f32.partialorder %v3334, 8.507059e+37
        %v3336 = vand.u32 %v3049, 2147483648
        %v3337 = vor.u32 1.1754944e-38, %v3336
        %v3338 = vsel %vm3335, %v3337, %v3333
        %v3339 = vmul.f32 1.0, %v3338
        %v3340 = vrcp.pop %v3050
        %v3341 = vmul.f32 %v3050, %v3340
        %v3342 = vsub.f32 1.0, %v3341
        %v3343 = vmul.f32 %v3340, %v3342
        %v3344 = vadd.f32 %v3340, %v3343
        %vm3345 = vweird.f32 %v3050
        %vm3346 = vweird.f32 %v3340
        %vm3347 = vmor %vm3345, %vm3346
        %v3348 = vsel %vm3347, %v3340, %v3344
        %v3349 = vand.u32 2147483647, %v3050
        %vm3350 = vcmp.eq.f32.partialorder %v3349, 8.507059e+37
        %v3351 = vand.u32 %v3050, 2147483648
        %v3352 = vor.u32 1.1754944e-38, %v3351
        %v3353 = vsel %vm3350, %v3352, %v3348
        %v3354 = vmul.f32 1.0, %v3353
        %v3355 = vrcp.pop %v3051
        %v3356 = vmul.f32 %v3051, %v3355
        %v3357 = vsub.f32 1.0, %v3356
        %v3358 = vmul.f32 %v3355, %v3357
        %v3359 = vadd.f32 %v3355, %v3358
        %vm3360 = vweird.f32 %v3051
        %vm3361 = vweird.f32 %v3355
        %vm3362 = vmor %vm3360, %vm3361
        %v3363 = vsel %vm3362, %v3355, %v3359
        %v3364 = vand.u32 2147483647, %v3051
        %vm3365 = vcmp.eq.f32.partialorder %v3364, 8.507059e+37
        %v3366 = vand.u32 %v3051, 2147483648
        %v3367 = vor.u32 1.1754944e-38, %v3366
        %v3368 = vsel %vm3365, %v3367, %v3363
        %v3369 = vmul.f32 1.0, %v3368
        %v3370 = vrcp.pop %v3052
        %v3371 = vmul.f32 %v3052, %v3370
        %v3372 = vsub.f32 1.0, %v3371
        %v3373 = vmul.f32 %v3370, %v3372
        %v3374 = vadd.f32 %v3370, %v3373
        %vm3375 = vweird.f32 %v3052
        %vm3376 = vweird.f32 %v3370
        %vm3377 = vmor %vm3375, %vm3376
        %v3378 = vsel %vm3377, %v3370, %v3374
        %v3379 = vand.u32 2147483647, %v3052
        %vm3380 = vcmp.eq.f32.partialorder %v3379, 8.507059e+37
        %v3381 = vand.u32 %v3052, 2147483648
        %v3382 = vor.u32 1.1754944e-38, %v3381
        %v3383 = vsel %vm3380, %v3382, %v3378
        %v3384 = vmul.f32 1.0, %v3383
        %v3385 = vrcp.pop %v3053
        %v3386 = vmul.f32 %v3053, %v3385
        %v3387 = vsub.f32 1.0, %v3386
        %v3388 = vmul.f32 %v3385, %v3387
        %v3389 = vadd.f32 %v3385, %v3388
        %vm3390 = vweird.f32 %v3053
        %vm3391 = vweird.f32 %v3385
        %vm3392 = vmor %vm3390, %vm3391
        %v3393 = vsel %vm3392, %v3385, %v3389
        %v3394 = vand.u32 2147483647, %v3053
        %vm3395 = vcmp.eq.f32.partialorder %v3394, 8.507059e+37
        %v3396 = vand.u32 %v3053, 2147483648
        %v3397 = vor.u32 1.1754944e-38, %v3396
        %v3398 = vsel %vm3395, %v3397, %v3393
        %v3399 = vmul.f32 1.0, %v3398
        %v3400 = vrcp.pop %v3054
        %v3401 = vmul.f32 %v3054, %v3400
        %v3402 = vsub.f32 1.0, %v3401
        %v3403 = vmul.f32 %v3400, %v3402
        %v3404 = vadd.f32 %v3400, %v3403
        %vm3405 = vweird.f32 %v3054
        %vm3406 = vweird.f32 %v3400
        %vm3407 = vmor %vm3405, %vm3406
        %v3408 = vsel %vm3407, %v3400, %v3404
        %v3409 = vand.u32 2147483647, %v3054
        %vm3410 = vcmp.eq.f32.partialorder %v3409, 8.507059e+37
        %v3411 = vand.u32 %v3054, 2147483648
        %v3412 = vor.u32 1.1754944e-38, %v3411
        %v3413 = vsel %vm3410, %v3412, %v3408
        %v3414 = vmul.f32 1.0, %v3413
        %v3415 = vrcp.pop %v3055
        %v3416 = vmul.f32 %v3055, %v3415
        %v3417 = vsub.f32 1.0, %v3416
        %v3418 = vmul.f32 %v3415, %v3417
        %v3419 = vadd.f32 %v3415, %v3418
        %vm3420 = vweird.f32 %v3055
        %vm3421 = vweird.f32 %v3415
        %vm3422 = vmor %vm3420, %vm3421
        %v3423 = vsel %vm3422, %v3415, %v3419
        %v3424 = vand.u32 2147483647, %v3055
        %vm3425 = vcmp.eq.f32.partialorder %v3424, 8.507059e+37
        %v3426 = vand.u32 %v3055, 2147483648
        %v3427 = vor.u32 1.1754944e-38, %v3426
        %v3428 = vsel %vm3425, %v3427, %v3423
        %v3429 = vmul.f32 1.0, %v3428
        %v3430 = vrcp.pop %v3056
        %v3431 = vmul.f32 %v3056, %v3430
        %v3432 = vsub.f32 1.0, %v3431
        %v3433 = vmul.f32 %v3430, %v3432
        %v3434 = vadd.f32 %v3430, %v3433
        %vm3435 = vweird.f32 %v3056
        %vm3436 = vweird.f32 %v3430
        %vm3437 = vmor %vm3435, %vm3436
        %v3438 = vsel %vm3437, %v3430, %v3434
        %v3439 = vand.u32 2147483647, %v3056
        %vm3440 = vcmp.eq.f32.partialorder %v3439, 8.507059e+37
        %v3441 = vand.u32 %v3056, 2147483648
        %v3442 = vor.u32 1.1754944e-38, %v3441
        %v3443 = vsel %vm3440, %v3442, %v3438
        %v3444 = vmul.f32 1.0, %v3443
        %v3445 = vrcp.pop %v3057
        %v3446 = vmul.f32 %v3057, %v3445
        %v3447 = vsub.f32 1.0, %v3446
        %v3448 = vmul.f32 %v3445, %v3447
        %v3449 = vadd.f32 %v3445, %v3448
        %vm3450 = vweird.f32 %v3057
        %vm3451 = vweird.f32 %v3445
        %vm3452 = vmor %vm3450, %vm3451
        %v3453 = vsel %vm3452, %v3445, %v3449
        %v3454 = vand.u32 2147483647, %v3057
        %vm3455 = vcmp.eq.f32.partialorder %v3454, 8.507059e+37
        %v3456 = vand.u32 %v3057, 2147483648
        %v3457 = vor.u32 1.1754944e-38, %v3456
        %v3458 = vsel %vm3455, %v3457, %v3453
        %v3459 = vmul.f32 1.0, %v3458
        %v3460 = vrcp.pop %v3058
        %v3461 = vmul.f32 %v3058, %v3460
        %v3462 = vsub.f32 1.0, %v3461
        %v3463 = vmul.f32 %v3460, %v3462
        %v3464 = vadd.f32 %v3460, %v3463
        %vm3465 = vweird.f32 %v3058
        %vm3466 = vweird.f32 %v3460
        %vm3467 = vmor %vm3465, %vm3466
        %v3468 = vsel %vm3467, %v3460, %v3464
        %v3469 = vand.u32 2147483647, %v3058
        %vm3470 = vcmp.eq.f32.partialorder %v3469, 8.507059e+37
        %v3471 = vand.u32 %v3058, 2147483648
        %v3472 = vor.u32 1.1754944e-38, %v3471
        %v3473 = vsel %vm3470, %v3472, %v3468
        %v3474 = vmul.f32 1.0, %v3473
        %v3475 = vrcp.pop %v3059
        %v3476 = vmul.f32 %v3059, %v3475
        %v3477 = vsub.f32 1.0, %v3476
        %v3478 = vmul.f32 %v3475, %v3477
        %v3479 = vadd.f32 %v3475, %v3478
        %vm3480 = vweird.f32 %v3059
        %vm3481 = vweird.f32 %v3475
        %vm3482 = vmor %vm3480, %vm3481
        %v3483 = vsel %vm3482, %v3475, %v3479
        %v3484 = vand.u32 2147483647, %v3059
        %vm3485 = vcmp.eq.f32.partialorder %v3484, 8.507059e+37
        %v3486 = vand.u32 %v3059, 2147483648
        %v3487 = vor.u32 1.1754944e-38, %v3486
        %v3488 = vsel %vm3485, %v3487, %v3483
        %v3489 = vmul.f32 1.0, %v3488
        %v3490 = vrcp.pop %v3060
        %v3491 = vmul.f32 %v3060, %v3490
        %v3492 = vsub.f32 1.0, %v3491
        %v3493 = vmul.f32 %v3490, %v3492
        %v3494 = vadd.f32 %v3490, %v3493
        %vm3495 = vweird.f32 %v3060
        %vm3496 = vweird.f32 %v3490
        %vm3497 = vmor %vm3495, %vm3496
        %v3498 = vsel %vm3497, %v3490, %v3494
        %v3499 = vand.u32 2147483647, %v3060
        %vm3500 = vcmp.eq.f32.partialorder %v3499, 8.507059e+37
        %v3501 = vand.u32 %v3060, 2147483648
        %v3502 = vor.u32 1.1754944e-38, %v3501
        %v3503 = vsel %vm3500, %v3502, %v3498
        %v3504 = vmul.f32 1.0, %v3503
        %v3505 = vrcp.pop %v3061
        %v3506 = vmul.f32 %v3061, %v3505
        %v3507 = vsub.f32 1.0, %v3506
        %v3508 = vmul.f32 %v3505, %v3507
        %v3509 = vadd.f32 %v3505, %v3508
        %vm3510 = vweird.f32 %v3061
        %vm3511 = vweird.f32 %v3505
        %vm3512 = vmor %vm3510, %vm3511
        %v3513 = vsel %vm3512, %v3505, %v3509
        %v3514 = vand.u32 2147483647, %v3061
        %vm3515 = vcmp.eq.f32.partialorder %v3514, 8.507059e+37
        %v3516 = vand.u32 %v3061, 2147483648
        %v3517 = vor.u32 1.1754944e-38, %v3516
        %v3518 = vsel %vm3515, %v3517, %v3513
        %v3519 = vmul.f32 1.0, %v3518
        %v3520 = vrcp.pop %v3062
        %v3521 = vmul.f32 %v3062, %v3520
        %v3522 = vsub.f32 1.0, %v3521
        %v3523 = vmul.f32 %v3520, %v3522
        %v3524 = vadd.f32 %v3520, %v3523
        %vm3525 = vweird.f32 %v3062
        %vm3526 = vweird.f32 %v3520
        %vm3527 = vmor %vm3525, %vm3526
        %v3528 = vsel %vm3527, %v3520, %v3524
        %v3529 = vand.u32 2147483647, %v3062
        %vm3530 = vcmp.eq.f32.partialorder %v3529, 8.507059e+37
        %v3531 = vand.u32 %v3062, 2147483648
        %v3532 = vor.u32 1.1754944e-38, %v3531
        %v3533 = vsel %vm3530, %v3532, %v3528
        %v3534 = vmul.f32 1.0, %v3533
        %v3535 = vrcp.pop %v3063
        %v3536 = vmul.f32 %v3063, %v3535
        %v3537 = vsub.f32 1.0, %v3536
        %v3538 = vmul.f32 %v3535, %v3537
        %v3539 = vadd.f32 %v3535, %v3538
        %vm3540 = vweird.f32 %v3063
        %vm3541 = vweird.f32 %v3535
        %vm3542 = vmor %vm3540, %vm3541
        %v3543 = vsel %vm3542, %v3535, %v3539
        %v3544 = vand.u32 2147483647, %v3063
        %vm3545 = vcmp.eq.f32.partialorder %v3544, 8.507059e+37
        %v3546 = vand.u32 %v3063, 2147483648
        %v3547 = vor.u32 1.1754944e-38, %v3546
        %v3548 = vsel %vm3545, %v3547, %v3543
        %v3549 = vmul.f32 1.0, %v3548
        %v3550 = vrcp.pop %v3064
        %v3551 = vmul.f32 %v3064, %v3550
        %v3552 = vsub.f32 1.0, %v3551
        %v3553 = vmul.f32 %v3550, %v3552
        %v3554 = vadd.f32 %v3550, %v3553
        %vm3555 = vweird.f32 %v3064
        %vm3556 = vweird.f32 %v3550
        %vm3557 = vmor %vm3555, %vm3556
        %v3558 = vsel %vm3557, %v3550, %v3554
        %v3559 = vand.u32 2147483647, %v3064
        %vm3560 = vcmp.eq.f32.partialorder %v3559, 8.507059e+37
        %v3561 = vand.u32 %v3064, 2147483648
        %v3562 = vor.u32 1.1754944e-38, %v3561
        %v3563 = vsel %vm3560, %v3562, %v3558
        %v3564 = vmul.f32 1.0, %v3563
        %v3565 = vrcp.pop %v3065
        %v3566 = vmul.f32 %v3065, %v3565
        %v3567 = vsub.f32 1.0, %v3566
        %v3568 = vmul.f32 %v3565, %v3567
        %v3569 = vadd.f32 %v3565, %v3568
        %vm3570 = vweird.f32 %v3065
        %vm3571 = vweird.f32 %v3565
        %vm3572 = vmor %vm3570, %vm3571
        %v3573 = vsel %vm3572, %v3565, %v3569
        %v3574 = vand.u32 2147483647, %v3065
        %vm3575 = vcmp.eq.f32.partialorder %v3574, 8.507059e+37
        %v3576 = vand.u32 %v3065, 2147483648
        %v3577 = vor.u32 1.1754944e-38, %v3576
        %v3578 = vsel %vm3575, %v3577, %v3573
        %v3579 = vmul.f32 1.0, %v3578
        %v3580 = vrcp.pop %v3066
        %v3581 = vmul.f32 %v3066, %v3580
        %v3582 = vsub.f32 1.0, %v3581
        %v3583 = vmul.f32 %v3580, %v3582
        %v3584 = vadd.f32 %v3580, %v3583
        %vm3585 = vweird.f32 %v3066
        %vm3586 = vweird.f32 %v3580
        %vm3587 = vmor %vm3585, %vm3586
        %v3588 = vsel %vm3587, %v3580, %v3584
        %v3589 = vand.u32 2147483647, %v3066
        %vm3590 = vcmp.eq.f32.partialorder %v3589, 8.507059e+37
        %v3591 = vand.u32 %v3066, 2147483648
        %v3592 = vor.u32 1.1754944e-38, %v3591
        %v3593 = vsel %vm3590, %v3592, %v3588
        %v3594 = vmul.f32 1.0, %v3593
        %v3595 = vrcp.pop %v3067
        %v3596 = vmul.f32 %v3067, %v3595
        %v3597 = vsub.f32 1.0, %v3596
        %v3598 = vmul.f32 %v3595, %v3597
        %v3599 = vadd.f32 %v3595, %v3598
        %vm3600 = vweird.f32 %v3067
        %vm3601 = vweird.f32 %v3595
        %vm3602 = vmor %vm3600, %vm3601
        %v3603 = vsel %vm3602, %v3595, %v3599
        %v3604 = vand.u32 2147483647, %v3067
        %vm3605 = vcmp.eq.f32.partialorder %v3604, 8.507059e+37
        %v3606 = vand.u32 %v3067, 2147483648
        %v3607 = vor.u32 1.1754944e-38, %v3606
        %v3608 = vsel %vm3605, %v3607, %v3603
        %v3609 = vmul.f32 1.0, %v3608
        %v3610 = vrcp.pop %v3068
        %v3611 = vmul.f32 %v3068, %v3610
        %v3612 = vsub.f32 1.0, %v3611
        %v3613 = vmul.f32 %v3610, %v3612
        %v3614 = vadd.f32 %v3610, %v3613
        %vm3615 = vweird.f32 %v3068
        %vm3616 = vweird.f32 %v3610
        %vm3617 = vmor %vm3615, %vm3616
        %v3618 = vsel %vm3617, %v3610, %v3614
        %v3619 = vand.u32 2147483647, %v3068
        %vm3620 = vcmp.eq.f32.partialorder %v3619, 8.507059e+37
        %v3621 = vand.u32 %v3068, 2147483648
        %v3622 = vor.u32 1.1754944e-38, %v3621
        %v3623 = vsel %vm3620, %v3622, %v3618
        %v3624 = vmul.f32 1.0, %v3623
        %v3625 = vrcp.pop %v3069
        %v3626 = vmul.f32 %v3069, %v3625
        %v3627 = vsub.f32 1.0, %v3626
        %v3628 = vmul.f32 %v3625, %v3627
        %v3629 = vadd.f32 %v3625, %v3628
        %vm3630 = vweird.f32 %v3069
        %vm3631 = vweird.f32 %v3625
        %vm3632 = vmor %vm3630, %vm3631
        %v3633 = vsel %vm3632, %v3625, %v3629
        %v3634 = vand.u32 2147483647, %v3069
        %vm3635 = vcmp.eq.f32.partialorder %v3634, 8.507059e+37
        %v3636 = vand.u32 %v3069, 2147483648
        %v3637 = vor.u32 1.1754944e-38, %v3636
        %v3638 = vsel %vm3635, %v3637, %v3633
        %v3639 = vmul.f32 1.0, %v3638
        %v3640 = vrcp.pop %v3070
        %v3641 = vmul.f32 %v3070, %v3640
        %v3642 = vsub.f32 1.0, %v3641
        %v3643 = vmul.f32 %v3640, %v3642
        %v3644 = vadd.f32 %v3640, %v3643
        %vm3645 = vweird.f32 %v3070
        %vm3646 = vweird.f32 %v3640
        %vm3647 = vmor %vm3645, %vm3646
        %v3648 = vsel %vm3647, %v3640, %v3644
        %v3649 = vand.u32 2147483647, %v3070
        %vm3650 = vcmp.eq.f32.partialorder %v3649, 8.507059e+37
        %v3651 = vand.u32 %v3070, 2147483648
        %v3652 = vor.u32 1.1754944e-38, %v3651
        %v3653 = vsel %vm3650, %v3652, %v3648
        %v3654 = vmul.f32 1.0, %v3653
        %v3655 = vrcp.pop %v3071
        %v3656 = vmul.f32 %v3071, %v3655
        %v3657 = vsub.f32 1.0, %v3656
        %v3658 = vmul.f32 %v3655, %v3657
        %v3659 = vadd.f32 %v3655, %v3658
        %vm3660 = vweird.f32 %v3071
        %vm3661 = vweird.f32 %v3655
        %vm3662 = vmor %vm3660, %vm3661
        %v3663 = vsel %vm3662, %v3655, %v3659
        %v3664 = vand.u32 2147483647, %v3071
        %vm3665 = vcmp.eq.f32.partialorder %v3664, 8.507059e+37
        %v3666 = vand.u32 %v3071, 2147483648
        %v3667 = vor.u32 1.1754944e-38, %v3666
        %v3668 = vsel %vm3665, %v3667, %v3663
        %v3669 = vmul.f32 1.0, %v3668
        %v3670 = vrcp.pop %v3072
        %v3671 = vmul.f32 %v3072, %v3670
        %v3672 = vsub.f32 1.0, %v3671
        %v3673 = vmul.f32 %v3670, %v3672
        %v3674 = vadd.f32 %v3670, %v3673
        %vm3675 = vweird.f32 %v3072
        %vm3676 = vweird.f32 %v3670
        %vm3677 = vmor %vm3675, %vm3676
        %v3678 = vsel %vm3677, %v3670, %v3674
        %v3679 = vand.u32 2147483647, %v3072
        %vm3680 = vcmp.eq.f32.partialorder %v3679, 8.507059e+37
        %v3681 = vand.u32 %v3072, 2147483648
        %v3682 = vor.u32 1.1754944e-38, %v3681
        %v3683 = vsel %vm3680, %v3682, %v3678
        %v3684 = vmul.f32 1.0, %v3683
        %v3685 = vrcp.pop %v3073
        %v3686 = vmul.f32 %v3073, %v3685
        %v3687 = vsub.f32 1.0, %v3686
        %v3688 = vmul.f32 %v3685, %v3687
        %v3689 = vadd.f32 %v3685, %v3688
        %vm3690 = vweird.f32 %v3073
        %vm3691 = vweird.f32 %v3685
        %vm3692 = vmor %vm3690, %vm3691
        %v3693 = vsel %vm3692, %v3685, %v3689
        %v3694 = vand.u32 2147483647, %v3073
        %vm3695 = vcmp.eq.f32.partialorder %v3694, 8.507059e+37
        %v3696 = vand.u32 %v3073, 2147483648
        %v3697 = vor.u32 1.1754944e-38, %v3696
        %v3698 = vsel %vm3695, %v3697, %v3693
        %v3699 = vmul.f32 1.0, %v3698
        %v3700 = vrcp.pop %v3074
        %v3701 = vmul.f32 %v3074, %v3700
        %v3702 = vsub.f32 1.0, %v3701
        %v3703 = vmul.f32 %v3700, %v3702
        %v3704 = vadd.f32 %v3700, %v3703
        %vm3705 = vweird.f32 %v3074
        %vm3706 = vweird.f32 %v3700
        %vm3707 = vmor %vm3705, %vm3706
        %v3708 = vsel %vm3707, %v3700, %v3704
        %v3709 = vand.u32 2147483647, %v3074
        %vm3710 = vcmp.eq.f32.partialorder %v3709, 8.507059e+37
        %v3711 = vand.u32 %v3074, 2147483648
        %v3712 = vor.u32 1.1754944e-38, %v3711
        %v3713 = vsel %vm3710, %v3712, %v3708
        %v3714 = vmul.f32 1.0, %v3713
        %v3715 = vrcp.pop %v3075
        %v3716 = vmul.f32 %v3075, %v3715
        %v3717 = vsub.f32 1.0, %v3716
        %v3718 = vmul.f32 %v3715, %v3717
        %v3719 = vadd.f32 %v3715, %v3718
        %vm3720 = vweird.f32 %v3075
        %vm3721 = vweird.f32 %v3715
        %vm3722 = vmor %vm3720, %vm3721
        %v3723 = vsel %vm3722, %v3715, %v3719
        %v3724 = vand.u32 2147483647, %v3075
        %vm3725 = vcmp.eq.f32.partialorder %v3724, 8.507059e+37
        %v3726 = vand.u32 %v3075, 2147483648
        %v3727 = vor.u32 1.1754944e-38, %v3726
        %v3728 = vsel %vm3725, %v3727, %v3723
        %v3729 = vmul.f32 1.0, %v3728
        %v3730 = vrcp.pop %v3076
        %v3731 = vmul.f32 %v3076, %v3730
        %v3732 = vsub.f32 1.0, %v3731
        %v3733 = vmul.f32 %v3730, %v3732
        %v3734 = vadd.f32 %v3730, %v3733
        %vm3735 = vweird.f32 %v3076
        %vm3736 = vweird.f32 %v3730
        %vm3737 = vmor %vm3735, %vm3736
        %v3738 = vsel %vm3737, %v3730, %v3734
        %v3739 = vand.u32 2147483647, %v3076
        %vm3740 = vcmp.eq.f32.partialorder %v3739, 8.507059e+37
        %v3741 = vand.u32 %v3076, 2147483648
        %v3742 = vor.u32 1.1754944e-38, %v3741
        %v3743 = vsel %vm3740, %v3742, %v3738
        %v3744 = vmul.f32 1.0, %v3743
        %v3745 = vrcp.pop %v3077
        %v3746 = vmul.f32 %v3077, %v3745
        %v3747 = vsub.f32 1.0, %v3746
        %v3748 = vmul.f32 %v3745, %v3747
        %v3749 = vadd.f32 %v3745, %v3748
        %vm3750 = vweird.f32 %v3077
        %vm3751 = vweird.f32 %v3745
        %vm3752 = vmor %vm3750, %vm3751
        %v3753 = vsel %vm3752, %v3745, %v3749
        %v3754 = vand.u32 2147483647, %v3077
        %vm3755 = vcmp.eq.f32.partialorder %v3754, 8.507059e+37
        %v3756 = vand.u32 %v3077, 2147483648
        %v3757 = vor.u32 1.1754944e-38, %v3756
        %v3758 = vsel %vm3755, %v3757, %v3753
        %v3759 = vmul.f32 1.0, %v3758
        %v3760 = vrcp.pop %v3078
        %v3761 = vmul.f32 %v3078, %v3760
        %v3762 = vsub.f32 1.0, %v3761
        %v3763 = vmul.f32 %v3760, %v3762
        %v3764 = vadd.f32 %v3760, %v3763
        %vm3765 = vweird.f32 %v3078
        %vm3766 = vweird.f32 %v3760
        %vm3767 = vmor %vm3765, %vm3766
        %v3768 = vsel %vm3767, %v3760, %v3764
        %v3769 = vand.u32 2147483647, %v3078
        %vm3770 = vcmp.eq.f32.partialorder %v3769, 8.507059e+37
        %v3771 = vand.u32 %v3078, 2147483648
        %v3772 = vor.u32 1.1754944e-38, %v3771
        %v3773 = vsel %vm3770, %v3772, %v3768
        %v3774 = vmul.f32 1.0, %v3773
        %v3775 = vrcp.pop %v3079
        %v3776 = vmul.f32 %v3079, %v3775
        %v3777 = vsub.f32 1.0, %v3776
        %v3778 = vmul.f32 %v3775, %v3777
        %v3779 = vadd.f32 %v3775, %v3778
        %vm3780 = vweird.f32 %v3079
        %vm3781 = vweird.f32 %v3775
        %vm3782 = vmor %vm3780, %vm3781
        %v3783 = vsel %vm3782, %v3775, %v3779
        %v3784 = vand.u32 2147483647, %v3079
        %vm3785 = vcmp.eq.f32.partialorder %v3784, 8.507059e+37
        %v3786 = vand.u32 %v3079, 2147483648
        %v3787 = vor.u32 1.1754944e-38, %v3786
        %v3788 = vsel %vm3785, %v3787, %v3783
        %v3789 = vmul.f32 1.0, %v3788
        %v3790 = vrcp.pop %v3080
        %v3791 = vmul.f32 %v3080, %v3790
        %v3792 = vsub.f32 1.0, %v3791
        %v3793 = vmul.f32 %v3790, %v3792
        %v3794 = vadd.f32 %v3790, %v3793
        %vm3795 = vweird.f32 %v3080
        %vm3796 = vweird.f32 %v3790
        %vm3797 = vmor %vm3795, %vm3796
        %v3798 = vsel %vm3797, %v3790, %v3794
        %v3799 = vand.u32 2147483647, %v3080
        %vm3800 = vcmp.eq.f32.partialorder %v3799, 8.507059e+37
        %v3801 = vand.u32 %v3080, 2147483648
        %v3802 = vor.u32 1.1754944e-38, %v3801
        %v3803 = vsel %vm3800, %v3802, %v3798
        %v3804 = vmul.f32 1.0, %v3803
        %v3805 = vrcp.pop %v3081
        %v3806 = vmul.f32 %v3081, %v3805
        %v3807 = vsub.f32 1.0, %v3806
        %v3808 = vmul.f32 %v3805, %v3807
        %v3809 = vadd.f32 %v3805, %v3808
        %vm3810 = vweird.f32 %v3081
        %vm3811 = vweird.f32 %v3805
        %vm3812 = vmor %vm3810, %vm3811
        %v3813 = vsel %vm3812, %v3805, %v3809
        %v3814 = vand.u32 2147483647, %v3081
        %vm3815 = vcmp.eq.f32.partialorder %v3814, 8.507059e+37
        %v3816 = vand.u32 %v3081, 2147483648
        %v3817 = vor.u32 1.1754944e-38, %v3816
        %v3818 = vsel %vm3815, %v3817, %v3813
        %v3819 = vmul.f32 1.0, %v3818
        %v3820 = vrcp.pop %v3082
        %v3821 = vmul.f32 %v3082, %v3820
        %v3822 = vsub.f32 1.0, %v3821
        %v3823 = vmul.f32 %v3820, %v3822
        %v3824 = vadd.f32 %v3820, %v3823
        %vm3825 = vweird.f32 %v3082
        %vm3826 = vweird.f32 %v3820
        %vm3827 = vmor %vm3825, %vm3826
        %v3828 = vsel %vm3827, %v3820, %v3824
        %v3829 = vand.u32 2147483647, %v3082
        %vm3830 = vcmp.eq.f32.partialorder %v3829, 8.507059e+37
        %v3831 = vand.u32 %v3082, 2147483648
        %v3832 = vor.u32 1.1754944e-38, %v3831
        %v3833 = vsel %vm3830, %v3832, %v3828
        %v3834 = vmul.f32 1.0, %v3833
        %v3835 = vrcp.pop %v3083
        %v3836 = vmul.f32 %v3083, %v3835
        %v3837 = vsub.f32 1.0, %v3836
        %v3838 = vmul.f32 %v3835, %v3837
        %v3839 = vadd.f32 %v3835, %v3838
        %vm3840 = vweird.f32 %v3083
        %vm3841 = vweird.f32 %v3835
        %vm3842 = vmor %vm3840, %vm3841
        %v3843 = vsel %vm3842, %v3835, %v3839
        %v3844 = vand.u32 2147483647, %v3083
        %vm3845 = vcmp.eq.f32.partialorder %v3844, 8.507059e+37
        %v3846 = vand.u32 %v3083, 2147483648
        %v3847 = vor.u32 1.1754944e-38, %v3846
        %v3848 = vsel %vm3845, %v3847, %v3843
        %v3849 = vmul.f32 1.0, %v3848
        %v3850 = vrcp.pop %v3084
        %v3851 = vmul.f32 %v3084, %v3850
        %v3852 = vsub.f32 1.0, %v3851
        %v3853 = vmul.f32 %v3850, %v3852
        %v3854 = vadd.f32 %v3850, %v3853
        %vm3855 = vweird.f32 %v3084
        %vm3856 = vweird.f32 %v3850
        %vm3857 = vmor %vm3855, %vm3856
        %v3858 = vsel %vm3857, %v3850, %v3854
        %v3859 = vand.u32 2147483647, %v3084
        %vm3860 = vcmp.eq.f32.partialorder %v3859, 8.507059e+37
        %v3861 = vand.u32 %v3084, 2147483648
        %v3862 = vor.u32 1.1754944e-38, %v3861
        %v3863 = vsel %vm3860, %v3862, %v3858
        %v3864 = vmul.f32 1.0, %v3863
        %v3865 = vrcp.pop %v3085
        %v3866 = vmul.f32 %v3085, %v3865
        %v3867 = vsub.f32 1.0, %v3866
        %v3868 = vmul.f32 %v3865, %v3867
        %v3869 = vadd.f32 %v3865, %v3868
        %vm3870 = vweird.f32 %v3085
        %vm3871 = vweird.f32 %v3865
        %vm3872 = vmor %vm3870, %vm3871
        %v3873 = vsel %vm3872, %v3865, %v3869
        %v3874 = vand.u32 2147483647, %v3085
        %vm3875 = vcmp.eq.f32.partialorder %v3874, 8.507059e+37
        %v3876 = vand.u32 %v3085, 2147483648
        %v3877 = vor.u32 1.1754944e-38, %v3876
        %v3878 = vsel %vm3875, %v3877, %v3873
        %v3879 = vmul.f32 1.0, %v3878
        %v3880 = vrcp.pop %v3086
        %v3881 = vmul.f32 %v3086, %v3880
        %v3882 = vsub.f32 1.0, %v3881
        %v3883 = vmul.f32 %v3880, %v3882
        %v3884 = vadd.f32 %v3880, %v3883
        %vm3885 = vweird.f32 %v3086
        %vm3886 = vweird.f32 %v3880
        %vm3887 = vmor %vm3885, %vm3886
        %v3888 = vsel %vm3887, %v3880, %v3884
        %v3889 = vand.u32 2147483647, %v3086
        %vm3890 = vcmp.eq.f32.partialorder %v3889, 8.507059e+37
        %v3891 = vand.u32 %v3086, 2147483648
        %v3892 = vor.u32 1.1754944e-38, %v3891
        %v3893 = vsel %vm3890, %v3892, %v3888
        %v3894 = vmul.f32 1.0, %v3893
        %v3895 = vrcp.pop %v3087
        %v3896 = vmul.f32 %v3087, %v3895
        %v3897 = vsub.f32 1.0, %v3896
        %v3898 = vmul.f32 %v3895, %v3897
        %v3899 = vadd.f32 %v3895, %v3898
        %vm3900 = vweird.f32 %v3087
        %vm3901 = vweird.f32 %v3895
        %vm3902 = vmor %vm3900, %vm3901
        %v3903 = vsel %vm3902, %v3895, %v3899
        %v3904 = vand.u32 2147483647, %v3087
        %vm3905 = vcmp.eq.f32.partialorder %v3904, 8.507059e+37
        %v3906 = vand.u32 %v3087, 2147483648
        %v3907 = vor.u32 1.1754944e-38, %v3906
        %v3908 = vsel %vm3905, %v3907, %v3903
        %v3909 = vmul.f32 1.0, %v3908
        %v3910 = vrcp.pop %v3088
        %v3911 = vmul.f32 %v3088, %v3910
        %v3912 = vsub.f32 1.0, %v3911
        %v3913 = vmul.f32 %v3910, %v3912
        %v3914 = vadd.f32 %v3910, %v3913
        %vm3915 = vweird.f32 %v3088
        %vm3916 = vweird.f32 %v3910
        %vm3917 = vmor %vm3915, %vm3916
        %v3918 = vsel %vm3917, %v3910, %v3914
        %v3919 = vand.u32 2147483647, %v3088
        %vm3920 = vcmp.eq.f32.partialorder %v3919, 8.507059e+37
        %v3921 = vand.u32 %v3088, 2147483648
        %v3922 = vor.u32 1.1754944e-38, %v3921
        %v3923 = vsel %vm3920, %v3922, %v3918
        %v3924 = vmul.f32 1.0, %v3923
        %v3925 = vrcp.pop %v3089
        %v3926 = vmul.f32 %v3089, %v3925
        %v3927 = vsub.f32 1.0, %v3926
        %v3928 = vmul.f32 %v3925, %v3927
        %v3929 = vadd.f32 %v3925, %v3928
        %vm3930 = vweird.f32 %v3089
        %vm3931 = vweird.f32 %v3925
        %vm3932 = vmor %vm3930, %vm3931
        %v3933 = vsel %vm3932, %v3925, %v3929
        %v3934 = vand.u32 2147483647, %v3089
        %vm3935 = vcmp.eq.f32.partialorder %v3934, 8.507059e+37
        %v3936 = vand.u32 %v3089, 2147483648
        %v3937 = vor.u32 1.1754944e-38, %v3936
        %v3938 = vsel %vm3935, %v3937, %v3933
        %v3939 = vmul.f32 1.0, %v3938
        %v3940 = vrcp.pop %v3090
        %v3941 = vmul.f32 %v3090, %v3940
        %v3942 = vsub.f32 1.0, %v3941
        %v3943 = vmul.f32 %v3940, %v3942
        %v3944 = vadd.f32 %v3940, %v3943
        %vm3945 = vweird.f32 %v3090
        %vm3946 = vweird.f32 %v3940
        %vm3947 = vmor %vm3945, %vm3946
        %v3948 = vsel %vm3947, %v3940, %v3944
        %v3949 = vand.u32 2147483647, %v3090
        %vm3950 = vcmp.eq.f32.partialorder %v3949, 8.507059e+37
        %v3951 = vand.u32 %v3090, 2147483648
        %v3952 = vor.u32 1.1754944e-38, %v3951
        %v3953 = vsel %vm3950, %v3952, %v3948
        %v3954 = vmul.f32 1.0, %v3953
        %v3955 = vrcp.pop %v3091
        %v3956 = vmul.f32 %v3091, %v3955
        %v3957 = vsub.f32 1.0, %v3956
        %v3958 = vmul.f32 %v3955, %v3957
        %v3959 = vadd.f32 %v3955, %v3958
        %vm3960 = vweird.f32 %v3091
        %vm3961 = vweird.f32 %v3955
        %vm3962 = vmor %vm3960, %vm3961
        %v3963 = vsel %vm3962, %v3955, %v3959
        %v3964 = vand.u32 2147483647, %v3091
        %vm3965 = vcmp.eq.f32.partialorder %v3964, 8.507059e+37
        %v3966 = vand.u32 %v3091, 2147483648
        %v3967 = vor.u32 1.1754944e-38, %v3966
        %v3968 = vsel %vm3965, %v3967, %v3963
        %v3969 = vmul.f32 1.0, %v3968
        %v3970 = vrcp.pop %v3092
        %v3971 = vmul.f32 %v3092, %v3970
        %v3972 = vsub.f32 1.0, %v3971
        %v3973 = vmul.f32 %v3970, %v3972
        %v3974 = vadd.f32 %v3970, %v3973
        %vm3975 = vweird.f32 %v3092
        %vm3976 = vweird.f32 %v3970
        %vm3977 = vmor %vm3975, %vm3976
        %v3978 = vsel %vm3977, %v3970, %v3974
        %v3979 = vand.u32 2147483647, %v3092
        %vm3980 = vcmp.eq.f32.partialorder %v3979, 8.507059e+37
        %v3981 = vand.u32 %v3092, 2147483648
        %v3982 = vor.u32 1.1754944e-38, %v3981
        %v3983 = vsel %vm3980, %v3982, %v3978
        %v3984 = vmul.f32 1.0, %v3983
        %v3985 = vrcp.pop %v3093
        %v3986 = vmul.f32 %v3093, %v3985
        %v3987 = vsub.f32 1.0, %v3986
        %v3988 = vmul.f32 %v3985, %v3987
        %v3989 = vadd.f32 %v3985, %v3988
        %vm3990 = vweird.f32 %v3093
        %vm3991 = vweird.f32 %v3985
        %vm3992 = vmor %vm3990, %vm3991
        %v3993 = vsel %vm3992, %v3985, %v3989
        %v3994 = vand.u32 2147483647, %v3093
        %vm3995 = vcmp.eq.f32.partialorder %v3994, 8.507059e+37
        %v3996 = vand.u32 %v3093, 2147483648
        %v3997 = vor.u32 1.1754944e-38, %v3996
        %v3998 = vsel %vm3995, %v3997, %v3993
        %v3999 = vmul.f32 1.0, %v3998
        %v4000 = vrcp.pop %v3094
        %v4001 = vmul.f32 %v3094, %v4000
        %v4002 = vsub.f32 1.0, %v4001
        %v4003 = vmul.f32 %v4000, %v4002
        %v4004 = vadd.f32 %v4000, %v4003
        %vm4005 = vweird.f32 %v3094
        %vm4006 = vweird.f32 %v4000
        %vm4007 = vmor %vm4005, %vm4006
        %v4008 = vsel %vm4007, %v4000, %v4004
        %v4009 = vand.u32 2147483647, %v3094
        %vm4010 = vcmp.eq.f32.partialorder %v4009, 8.507059e+37
        %v4011 = vand.u32 %v3094, 2147483648
        %v4012 = vor.u32 1.1754944e-38, %v4011
        %v4013 = vsel %vm4010, %v4012, %v4008
        %v4014 = vmul.f32 1.0, %v4013
        %v4015 = vrcp.pop %v3095
        %v4016 = vmul.f32 %v3095, %v4015
        %v4017 = vsub.f32 1.0, %v4016
        %v4018 = vmul.f32 %v4015, %v4017
        %v4019 = vadd.f32 %v4015, %v4018
        %vm4020 = vweird.f32 %v3095
        %vm4021 = vweird.f32 %v4015
        %vm4022 = vmor %vm4020, %vm4021
        %v4023 = vsel %vm4022, %v4015, %v4019
        %v4024 = vand.u32 2147483647, %v3095
        %vm4025 = vcmp.eq.f32.partialorder %v4024, 8.507059e+37
        %v4026 = vand.u32 %v3095, 2147483648
        %v4027 = vor.u32 1.1754944e-38, %v4026
        %v4028 = vsel %vm4025, %v4027, %v4023
        %v4029 = vmul.f32 1.0, %v4028
        %v4030 = vrcp.pop %v3096
        %v4031 = vmul.f32 %v3096, %v4030
        %v4032 = vsub.f32 1.0, %v4031
        %v4033 = vmul.f32 %v4030, %v4032
        %v4034 = vadd.f32 %v4030, %v4033
        %vm4035 = vweird.f32 %v3096
        %vm4036 = vweird.f32 %v4030
        %vm4037 = vmor %vm4035, %vm4036
        %v4038 = vsel %vm4037, %v4030, %v4034
        %v4039 = vand.u32 2147483647, %v3096
        %vm4040 = vcmp.eq.f32.partialorder %v4039, 8.507059e+37
        %v4041 = vand.u32 %v3096, 2147483648
        %v4042 = vor.u32 1.1754944e-38, %v4041
        %v4043 = vsel %vm4040, %v4042, %v4038
        %v4044 = vmul.f32 1.0, %v4043
        %v4045 = vrcp.pop %v3097
        %v4046 = vmul.f32 %v3097, %v4045
        %v4047 = vsub.f32 1.0, %v4046
        %v4048 = vmul.f32 %v4045, %v4047
        %v4049 = vadd.f32 %v4045, %v4048
        %vm4050 = vweird.f32 %v3097
        %vm4051 = vweird.f32 %v4045
        %vm4052 = vmor %vm4050, %vm4051
        %v4053 = vsel %vm4052, %v4045, %v4049
        %v4054 = vand.u32 2147483647, %v3097
        %vm4055 = vcmp.eq.f32.partialorder %v4054, 8.507059e+37
        %v4056 = vand.u32 %v3097, 2147483648
        %v4057 = vor.u32 1.1754944e-38, %v4056
        %v4058 = vsel %vm4055, %v4057, %v4053
        %v4059 = vmul.f32 1.0, %v4058
        %v4060 = vrcp.pop %v3098
        %v4061 = vmul.f32 %v3098, %v4060
        %v4062 = vsub.f32 1.0, %v4061
        %v4063 = vmul.f32 %v4060, %v4062
        %v4064 = vadd.f32 %v4060, %v4063
        %vm4065 = vweird.f32 %v3098
        %vm4066 = vweird.f32 %v4060
        %vm4067 = vmor %vm4065, %vm4066
        %v4068 = vsel %vm4067, %v4060, %v4064
        %v4069 = vand.u32 2147483647, %v3098
        %vm4070 = vcmp.eq.f32.partialorder %v4069, 8.507059e+37
        %v4071 = vand.u32 %v3098, 2147483648
        %v4072 = vor.u32 1.1754944e-38, %v4071
        %v4073 = vsel %vm4070, %v4072, %v4068
        %v4074 = vmul.f32 1.0, %v4073
        %v4075 = vrcp.pop %v3099
        %v4076 = vmul.f32 %v3099, %v4075
        %v4077 = vsub.f32 1.0, %v4076
        %v4078 = vmul.f32 %v4075, %v4077
        %v4079 = vadd.f32 %v4075, %v4078
        %vm4080 = vweird.f32 %v3099
        %vm4081 = vweird.f32 %v4075
        %vm4082 = vmor %vm4080, %vm4081
        %v4083 = vsel %vm4082, %v4075, %v4079
        %v4084 = vand.u32 2147483647, %v3099
        %vm4085 = vcmp.eq.f32.partialorder %v4084, 8.507059e+37
        %v4086 = vand.u32 %v3099, 2147483648
        %v4087 = vor.u32 1.1754944e-38, %v4086
        %v4088 = vsel %vm4085, %v4087, %v4083
        %v4089 = vmul.f32 1.0, %v4088
        %v4090 = vrcp.pop %v3100
        %v4091 = vmul.f32 %v3100, %v4090
        %v4092 = vsub.f32 1.0, %v4091
        %v4093 = vmul.f32 %v4090, %v4092
        %v4094 = vadd.f32 %v4090, %v4093
        %vm4095 = vweird.f32 %v3100
        %vm4096 = vweird.f32 %v4090
        %vm4097 = vmor %vm4095, %vm4096
        %v4098 = vsel %vm4097, %v4090, %v4094
        %v4099 = vand.u32 2147483647, %v3100
        %vm4100 = vcmp.eq.f32.partialorder %v4099, 8.507059e+37
        %v4101 = vand.u32 %v3100, 2147483648
        %v4102 = vor.u32 1.1754944e-38, %v4101
        %v4103 = vsel %vm4100, %v4102, %v4098
        %v4104 = vmul.f32 1.0, %v4103
        %v4105 = vrcp.pop %v3101
        %v4106 = vmul.f32 %v3101, %v4105
        %v4107 = vsub.f32 1.0, %v4106
        %v4108 = vmul.f32 %v4105, %v4107
        %v4109 = vadd.f32 %v4105, %v4108
        %vm4110 = vweird.f32 %v3101
        %vm4111 = vweird.f32 %v4105
        %vm4112 = vmor %vm4110, %vm4111
        %v4113 = vsel %vm4112, %v4105, %v4109
        %v4114 = vand.u32 2147483647, %v3101
        %vm4115 = vcmp.eq.f32.partialorder %v4114, 8.507059e+37
        %v4116 = vand.u32 %v3101, 2147483648
        %v4117 = vor.u32 1.1754944e-38, %v4116
        %v4118 = vsel %vm4115, %v4117, %v4113
        %v4119 = vmul.f32 1.0, %v4118
        %v4120 = vrcp.pop %v3102
        %v4121 = vmul.f32 %v3102, %v4120
        %v4122 = vsub.f32 1.0, %v4121
        %v4123 = vmul.f32 %v4120, %v4122
        %v4124 = vadd.f32 %v4120, %v4123
        %vm4125 = vweird.f32 %v3102
        %vm4126 = vweird.f32 %v4120
        %vm4127 = vmor %vm4125, %vm4126
        %v4128 = vsel %vm4127, %v4120, %v4124
        %v4129 = vand.u32 2147483647, %v3102
        %vm4130 = vcmp.eq.f32.partialorder %v4129, 8.507059e+37
        %v4131 = vand.u32 %v3102, 2147483648
        %v4132 = vor.u32 1.1754944e-38, %v4131
        %v4133 = vsel %vm4130, %v4132, %v4128
        %v4134 = vmul.f32 1.0, %v4133
        %v4135 = vrcp.pop %v3103
        %v4136 = vmul.f32 %v3103, %v4135
        %v4137 = vsub.f32 1.0, %v4136
        %v4138 = vmul.f32 %v4135, %v4137
        %v4139 = vadd.f32 %v4135, %v4138
        %vm4140 = vweird.f32 %v3103
        %vm4141 = vweird.f32 %v4135
        %vm4142 = vmor %vm4140, %vm4141
        %v4143 = vsel %vm4142, %v4135, %v4139
        %v4144 = vand.u32 2147483647, %v3103
        %vm4145 = vcmp.eq.f32.partialorder %v4144, 8.507059e+37
        %v4146 = vand.u32 %v3103, 2147483648
        %v4147 = vor.u32 1.1754944e-38, %v4146
        %v4148 = vsel %vm4145, %v4147, %v4143
        %v4149 = vmul.f32 1.0, %v4148
        %v4150 = vrcp.pop %v3104
        %v4151 = vmul.f32 %v3104, %v4150
        %v4152 = vsub.f32 1.0, %v4151
        %v4153 = vmul.f32 %v4150, %v4152
        %v4154 = vadd.f32 %v4150, %v4153
        %vm4155 = vweird.f32 %v3104
        %vm4156 = vweird.f32 %v4150
        %vm4157 = vmor %vm4155, %vm4156
        %v4158 = vsel %vm4157, %v4150, %v4154
        %v4159 = vand.u32 2147483647, %v3104
        %vm4160 = vcmp.eq.f32.partialorder %v4159, 8.507059e+37
        %v4161 = vand.u32 %v3104, 2147483648
        %v4162 = vor.u32 1.1754944e-38, %v4161
        %v4163 = vsel %vm4160, %v4162, %v4158
        %v4164 = vmul.f32 1.0, %v4163
        %v4165 = vrcp.pop %v3105
        %v4166 = vmul.f32 %v3105, %v4165
        %v4167 = vsub.f32 1.0, %v4166
        %v4168 = vmul.f32 %v4165, %v4167
        %v4169 = vadd.f32 %v4165, %v4168
        %vm4170 = vweird.f32 %v3105
        %vm4171 = vweird.f32 %v4165
        %vm4172 = vmor %vm4170, %vm4171
        %v4173 = vsel %vm4172, %v4165, %v4169
        %v4174 = vand.u32 2147483647, %v3105
        %vm4175 = vcmp.eq.f32.partialorder %v4174, 8.507059e+37
        %v4176 = vand.u32 %v3105, 2147483648
        %v4177 = vor.u32 1.1754944e-38, %v4176
        %v4178 = vsel %vm4175, %v4177, %v4173
        %v4179 = vmul.f32 1.0, %v4178
        %v4180 = vrcp.pop %v3106
        %v4181 = vmul.f32 %v3106, %v4180
        %v4182 = vsub.f32 1.0, %v4181
        %v4183 = vmul.f32 %v4180, %v4182
        %v4184 = vadd.f32 %v4180, %v4183
        %vm4185 = vweird.f32 %v3106
        %vm4186 = vweird.f32 %v4180
        %vm4187 = vmor %vm4185, %vm4186
        %v4188 = vsel %vm4187, %v4180, %v4184
        %v4189 = vand.u32 2147483647, %v3106
        %vm4190 = vcmp.eq.f32.partialorder %v4189, 8.507059e+37
        %v4191 = vand.u32 %v3106, 2147483648
        %v4192 = vor.u32 1.1754944e-38, %v4191
        %v4193 = vsel %vm4190, %v4192, %v4188
        %v4194 = vmul.f32 1.0, %v4193
        %v4195 = vrcp.pop %v3107
        %v4196 = vmul.f32 %v3107, %v4195
        %v4197 = vsub.f32 1.0, %v4196
        %v4198 = vmul.f32 %v4195, %v4197
        %v4199 = vadd.f32 %v4195, %v4198
        %vm4200 = vweird.f32 %v3107
        %vm4201 = vweird.f32 %v4195
        %vm4202 = vmor %vm4200, %vm4201
        %v4203 = vsel %vm4202, %v4195, %v4199
        %v4204 = vand.u32 2147483647, %v3107
        %vm4205 = vcmp.eq.f32.partialorder %v4204, 8.507059e+37
        %v4206 = vand.u32 %v3107, 2147483648
        %v4207 = vor.u32 1.1754944e-38, %v4206
        %v4208 = vsel %vm4205, %v4207, %v4203
        %v4209 = vmul.f32 1.0, %v4208
        %v4210 = vrcp.pop %v3108
        %v4211 = vmul.f32 %v3108, %v4210
        %v4212 = vsub.f32 1.0, %v4211
        %v4213 = vmul.f32 %v4210, %v4212
        %v4214 = vadd.f32 %v4210, %v4213
        %vm4215 = vweird.f32 %v3108
        %vm4216 = vweird.f32 %v4210
        %vm4217 = vmor %vm4215, %vm4216
        %v4218 = vsel %vm4217, %v4210, %v4214
        %v4219 = vand.u32 2147483647, %v3108
        %vm4220 = vcmp.eq.f32.partialorder %v4219, 8.507059e+37
        %v4221 = vand.u32 %v3108, 2147483648
        %v4222 = vor.u32 1.1754944e-38, %v4221
        %v4223 = vsel %vm4220, %v4222, %v4218
        %v4224 = vmul.f32 1.0, %v4223
        %v4225 = vrcp.pop %v3109
        %v4226 = vmul.f32 %v3109, %v4225
        %v4227 = vsub.f32 1.0, %v4226
        %v4228 = vmul.f32 %v4225, %v4227
        %v4229 = vadd.f32 %v4225, %v4228
        %vm4230 = vweird.f32 %v3109
        %vm4231 = vweird.f32 %v4225
        %vm4232 = vmor %vm4230, %vm4231
        %v4233 = vsel %vm4232, %v4225, %v4229
        %v4234 = vand.u32 2147483647, %v3109
        %vm4235 = vcmp.eq.f32.partialorder %v4234, 8.507059e+37
        %v4236 = vand.u32 %v3109, 2147483648
        %v4237 = vor.u32 1.1754944e-38, %v4236
        %v4238 = vsel %vm4235, %v4237, %v4233
        %v4239 = vmul.f32 1.0, %v4238
        %v4240 = vrcp.pop %v3110
        %v4241 = vmul.f32 %v3110, %v4240
        %v4242 = vsub.f32 1.0, %v4241
        %v4243 = vmul.f32 %v4240, %v4242
        %v4244 = vadd.f32 %v4240, %v4243
        %vm4245 = vweird.f32 %v3110
        %vm4246 = vweird.f32 %v4240
        %vm4247 = vmor %vm4245, %vm4246
        %v4248 = vsel %vm4247, %v4240, %v4244
        %v4249 = vand.u32 2147483647, %v3110
        %vm4250 = vcmp.eq.f32.partialorder %v4249, 8.507059e+37
        %v4251 = vand.u32 %v3110, 2147483648
        %v4252 = vor.u32 1.1754944e-38, %v4251
        %v4253 = vsel %vm4250, %v4252, %v4248
        %v4254 = vmul.f32 1.0, %v4253
        %v4255 = vrcp.pop %v3111
        %v4256 = vmul.f32 %v3111, %v4255
        %v4257 = vsub.f32 1.0, %v4256
        %v4258 = vmul.f32 %v4255, %v4257
        %v4259 = vadd.f32 %v4255, %v4258
        %vm4260 = vweird.f32 %v3111
        %vm4261 = vweird.f32 %v4255
        %vm4262 = vmor %vm4260, %vm4261
        %v4263 = vsel %vm4262, %v4255, %v4259
        %v4264 = vand.u32 2147483647, %v3111
        %vm4265 = vcmp.eq.f32.partialorder %v4264, 8.507059e+37
        %v4266 = vand.u32 %v3111, 2147483648
        %v4267 = vor.u32 1.1754944e-38, %v4266
        %v4268 = vsel %vm4265, %v4267, %v4263
        %v4269 = vmul.f32 1.0, %v4268
        %v4270 = vrcp.pop %v3112
        %v4271 = vmul.f32 %v3112, %v4270
        %v4272 = vsub.f32 1.0, %v4271
        %v4273 = vmul.f32 %v4270, %v4272
        %v4274 = vadd.f32 %v4270, %v4273
        %vm4275 = vweird.f32 %v3112
        %vm4276 = vweird.f32 %v4270
        %vm4277 = vmor %vm4275, %vm4276
        %v4278 = vsel %vm4277, %v4270, %v4274
        %v4279 = vand.u32 2147483647, %v3112
        %vm4280 = vcmp.eq.f32.partialorder %v4279, 8.507059e+37
        %v4281 = vand.u32 %v3112, 2147483648
        %v4282 = vor.u32 1.1754944e-38, %v4281
        %v4283 = vsel %vm4280, %v4282, %v4278
        %v4284 = vmul.f32 1.0, %v4283
        %v4285 = vrcp.pop %v3113
        %v4286 = vmul.f32 %v3113, %v4285
        %v4287 = vsub.f32 1.0, %v4286
        %v4288 = vmul.f32 %v4285, %v4287
        %v4289 = vadd.f32 %v4285, %v4288
        %vm4290 = vweird.f32 %v3113
        %vm4291 = vweird.f32 %v4285
        %vm4292 = vmor %vm4290, %vm4291
        %v4293 = vsel %vm4292, %v4285, %v4289
        %v4294 = vand.u32 2147483647, %v3113
        %vm4295 = vcmp.eq.f32.partialorder %v4294, 8.507059e+37
        %v4296 = vand.u32 %v3113, 2147483648
        %v4297 = vor.u32 1.1754944e-38, %v4296
        %v4298 = vsel %vm4295, %v4297, %v4293
        %v4299 = vmul.f32 1.0, %v4298
        %v4300 = vrcp.pop %v3114
        %v4301 = vmul.f32 %v3114, %v4300
        %v4302 = vsub.f32 1.0, %v4301
        %v4303 = vmul.f32 %v4300, %v4302
        %v4304 = vadd.f32 %v4300, %v4303
        %vm4305 = vweird.f32 %v3114
        %vm4306 = vweird.f32 %v4300
        %vm4307 = vmor %vm4305, %vm4306
        %v4308 = vsel %vm4307, %v4300, %v4304
        %v4309 = vand.u32 2147483647, %v3114
        %vm4310 = vcmp.eq.f32.partialorder %v4309, 8.507059e+37
        %v4311 = vand.u32 %v3114, 2147483648
        %v4312 = vor.u32 1.1754944e-38, %v4311
        %v4313 = vsel %vm4310, %v4312, %v4308
        %v4314 = vmul.f32 1.0, %v4313
        %v4315 = vrcp.pop %v3115
        %v4316 = vmul.f32 %v3115, %v4315
        %v4317 = vsub.f32 1.0, %v4316
        %v4318 = vmul.f32 %v4315, %v4317
        %v4319 = vadd.f32 %v4315, %v4318
        %vm4320 = vweird.f32 %v3115
        %vm4321 = vweird.f32 %v4315
        %vm4322 = vmor %vm4320, %vm4321
        %v4323 = vsel %vm4322, %v4315, %v4319
        %v4324 = vand.u32 2147483647, %v3115
        %vm4325 = vcmp.eq.f32.partialorder %v4324, 8.507059e+37
        %v4326 = vand.u32 %v3115, 2147483648
        %v4327 = vor.u32 1.1754944e-38, %v4326
        %v4328 = vsel %vm4325, %v4327, %v4323
        %v4329 = vmul.f32 1.0, %v4328
        %v4330 = vrcp.pop %v3116
        %v4331 = vmul.f32 %v3116, %v4330
        %v4332 = vsub.f32 1.0, %v4331
        %v4333 = vmul.f32 %v4330, %v4332
        %v4334 = vadd.f32 %v4330, %v4333
        %vm4335 = vweird.f32 %v3116
        %vm4336 = vweird.f32 %v4330
        %vm4337 = vmor %vm4335, %vm4336
        %v4338 = vsel %vm4337, %v4330, %v4334
        %v4339 = vand.u32 2147483647, %v3116
        %vm4340 = vcmp.eq.f32.partialorder %v4339, 8.507059e+37
        %v4341 = vand.u32 %v3116, 2147483648
        %v4342 = vor.u32 1.1754944e-38, %v4341
        %v4343 = vsel %vm4340, %v4342, %v4338
        %v4344 = vmul.f32 1.0, %v4343
        %v4345 = vrcp.pop %v3117
        %v4346 = vmul.f32 %v3117, %v4345
        %v4347 = vsub.f32 1.0, %v4346
        %v4348 = vmul.f32 %v4345, %v4347
        %v4349 = vadd.f32 %v4345, %v4348
        %vm4350 = vweird.f32 %v3117
        %vm4351 = vweird.f32 %v4345
        %vm4352 = vmor %vm4350, %vm4351
        %v4353 = vsel %vm4352, %v4345, %v4349
        %v4354 = vand.u32 2147483647, %v3117
        %vm4355 = vcmp.eq.f32.partialorder %v4354, 8.507059e+37
        %v4356 = vand.u32 %v3117, 2147483648
        %v4357 = vor.u32 1.1754944e-38, %v4356
        %v4358 = vsel %vm4355, %v4357, %v4353
        %v4359 = vmul.f32 1.0, %v4358
        %v4360 = vrcp.pop %v3118
        %v4361 = vmul.f32 %v3118, %v4360
        %v4362 = vsub.f32 1.0, %v4361
        %v4363 = vmul.f32 %v4360, %v4362
        %v4364 = vadd.f32 %v4360, %v4363
        %vm4365 = vweird.f32 %v3118
        %vm4366 = vweird.f32 %v4360
        %vm4367 = vmor %vm4365, %vm4366
        %v4368 = vsel %vm4367, %v4360, %v4364
        %v4369 = vand.u32 2147483647, %v3118
        %vm4370 = vcmp.eq.f32.partialorder %v4369, 8.507059e+37
        %v4371 = vand.u32 %v3118, 2147483648
        %v4372 = vor.u32 1.1754944e-38, %v4371
        %v4373 = vsel %vm4370, %v4372, %v4368
        %v4374 = vmul.f32 1.0, %v4373
        %v4375 = vrcp.pop %v3119
        %v4376 = vmul.f32 %v3119, %v4375
        %v4377 = vsub.f32 1.0, %v4376
        %v4378 = vmul.f32 %v4375, %v4377
        %v4379 = vadd.f32 %v4375, %v4378
        %vm4380 = vweird.f32 %v3119
        %vm4381 = vweird.f32 %v4375
        %vm4382 = vmor %vm4380, %vm4381
        %v4383 = vsel %vm4382, %v4375, %v4379
        %v4384 = vand.u32 2147483647, %v3119
        %vm4385 = vcmp.eq.f32.partialorder %v4384, 8.507059e+37
        %v4386 = vand.u32 %v3119, 2147483648
        %v4387 = vor.u32 1.1754944e-38, %v4386
        %v4388 = vsel %vm4385, %v4387, %v4383
        %v4389 = vmul.f32 1.0, %v4388
        %v4390 = vrcp.pop %v3120
        %v4391 = vmul.f32 %v3120, %v4390
        %v4392 = vsub.f32 1.0, %v4391
        %v4393 = vmul.f32 %v4390, %v4392
        %v4394 = vadd.f32 %v4390, %v4393
        %vm4395 = vweird.f32 %v3120
        %vm4396 = vweird.f32 %v4390
        %vm4397 = vmor %vm4395, %vm4396
        %v4398 = vsel %vm4397, %v4390, %v4394
        %v4399 = vand.u32 2147483647, %v3120
        %vm4400 = vcmp.eq.f32.partialorder %v4399, 8.507059e+37
        %v4401 = vand.u32 %v3120, 2147483648
        %v4402 = vor.u32 1.1754944e-38, %v4401
        %v4403 = vsel %vm4400, %v4402, %v4398
        %v4404 = vmul.f32 1.0, %v4403
        %v4405 = vrcp.pop %v3121
        %v4406 = vmul.f32 %v3121, %v4405
        %v4407 = vsub.f32 1.0, %v4406
        %v4408 = vmul.f32 %v4405, %v4407
        %v4409 = vadd.f32 %v4405, %v4408
        %vm4410 = vweird.f32 %v3121
        %vm4411 = vweird.f32 %v4405
        %vm4412 = vmor %vm4410, %vm4411
        %v4413 = vsel %vm4412, %v4405, %v4409
        %v4414 = vand.u32 2147483647, %v3121
        %vm4415 = vcmp.eq.f32.partialorder %v4414, 8.507059e+37
        %v4416 = vand.u32 %v3121, 2147483648
        %v4417 = vor.u32 1.1754944e-38, %v4416
        %v4418 = vsel %vm4415, %v4417, %v4413
        %v4419 = vmul.f32 1.0, %v4418
        %v4420 = vrcp.pop %v3122
        %v4421 = vmul.f32 %v3122, %v4420
        %v4422 = vsub.f32 1.0, %v4421
        %v4423 = vmul.f32 %v4420, %v4422
        %v4424 = vadd.f32 %v4420, %v4423
        %vm4425 = vweird.f32 %v3122
        %vm4426 = vweird.f32 %v4420
        %vm4427 = vmor %vm4425, %vm4426
        %v4428 = vsel %vm4427, %v4420, %v4424
        %v4429 = vand.u32 2147483647, %v3122
        %vm4430 = vcmp.eq.f32.partialorder %v4429, 8.507059e+37
        %v4431 = vand.u32 %v3122, 2147483648
        %v4432 = vor.u32 1.1754944e-38, %v4431
        %v4433 = vsel %vm4430, %v4432, %v4428
        %v4434 = vmul.f32 1.0, %v4433
        %v4435 = vrcp.pop %v3123
        %v4436 = vmul.f32 %v3123, %v4435
        %v4437 = vsub.f32 1.0, %v4436
        %v4438 = vmul.f32 %v4435, %v4437
        %v4439 = vadd.f32 %v4435, %v4438
        %vm4440 = vweird.f32 %v3123
        %vm4441 = vweird.f32 %v4435
        %vm4442 = vmor %vm4440, %vm4441
        %v4443 = vsel %vm4442, %v4435, %v4439
        %v4444 = vand.u32 2147483647, %v3123
        %vm4445 = vcmp.eq.f32.partialorder %v4444, 8.507059e+37
        %v4446 = vand.u32 %v3123, 2147483648
        %v4447 = vor.u32 1.1754944e-38, %v4446
        %v4448 = vsel %vm4445, %v4447, %v4443
        %v4449 = vmul.f32 1.0, %v4448
        %v4450 = vrcp.pop %v3124
        %v4451 = vmul.f32 %v3124, %v4450
        %v4452 = vsub.f32 1.0, %v4451
        %v4453 = vmul.f32 %v4450, %v4452
        %v4454 = vadd.f32 %v4450, %v4453
        %vm4455 = vweird.f32 %v3124
        %vm4456 = vweird.f32 %v4450
        %vm4457 = vmor %vm4455, %vm4456
        %v4458 = vsel %vm4457, %v4450, %v4454
        %v4459 = vand.u32 2147483647, %v3124
        %vm4460 = vcmp.eq.f32.partialorder %v4459, 8.507059e+37
        %v4461 = vand.u32 %v3124, 2147483648
        %v4462 = vor.u32 1.1754944e-38, %v4461
        %v4463 = vsel %vm4460, %v4462, %v4458
        %v4464 = vmul.f32 1.0, %v4463
        %v4465 = vrcp.pop %v3125
        %v4466 = vmul.f32 %v3125, %v4465
        %v4467 = vsub.f32 1.0, %v4466
        %v4468 = vmul.f32 %v4465, %v4467
        %v4469 = vadd.f32 %v4465, %v4468
        %vm4470 = vweird.f32 %v3125
        %vm4471 = vweird.f32 %v4465
        %vm4472 = vmor %vm4470, %vm4471
        %v4473 = vsel %vm4472, %v4465, %v4469
        %v4474 = vand.u32 2147483647, %v3125
        %vm4475 = vcmp.eq.f32.partialorder %v4474, 8.507059e+37
        %v4476 = vand.u32 %v3125, 2147483648
        %v4477 = vor.u32 1.1754944e-38, %v4476
        %v4478 = vsel %vm4475, %v4477, %v4473
        %v4479 = vmul.f32 1.0, %v4478
        %v4480 = vrcp.pop %v3126
        %v4481 = vmul.f32 %v3126, %v4480
        %v4482 = vsub.f32 1.0, %v4481
        %v4483 = vmul.f32 %v4480, %v4482
        %v4484 = vadd.f32 %v4480, %v4483
        %vm4485 = vweird.f32 %v3126
        %vm4486 = vweird.f32 %v4480
        %vm4487 = vmor %vm4485, %vm4486
        %v4488 = vsel %vm4487, %v4480, %v4484
        %v4489 = vand.u32 2147483647, %v3126
        %vm4490 = vcmp.eq.f32.partialorder %v4489, 8.507059e+37
        %v4491 = vand.u32 %v3126, 2147483648
        %v4492 = vor.u32 1.1754944e-38, %v4491
        %v4493 = vsel %vm4490, %v4492, %v4488
        %v4494 = vmul.f32 1.0, %v4493
        %v4495 = vrcp.pop %v3127
        %v4496 = vmul.f32 %v3127, %v4495
        %v4497 = vsub.f32 1.0, %v4496
        %v4498 = vmul.f32 %v4495, %v4497
        %v4499 = vadd.f32 %v4495, %v4498
        %vm4500 = vweird.f32 %v3127
        %vm4501 = vweird.f32 %v4495
        %vm4502 = vmor %vm4500, %vm4501
        %v4503 = vsel %vm4502, %v4495, %v4499
        %v4504 = vand.u32 2147483647, %v3127
        %vm4505 = vcmp.eq.f32.partialorder %v4504, 8.507059e+37
        %v4506 = vand.u32 %v3127, 2147483648
        %v4507 = vor.u32 1.1754944e-38, %v4506
        %v4508 = vsel %vm4505, %v4507, %v4503
        %v4509 = vmul.f32 1.0, %v4508
        %v4510 = vrcp.pop %v3128
        %v4511 = vmul.f32 %v3128, %v4510
        %v4512 = vsub.f32 1.0, %v4511
        %v4513 = vmul.f32 %v4510, %v4512
        %v4514 = vadd.f32 %v4510, %v4513
        %vm4515 = vweird.f32 %v3128
        %vm4516 = vweird.f32 %v4510
        %vm4517 = vmor %vm4515, %vm4516
        %v4518 = vsel %vm4517, %v4510, %v4514
        %v4519 = vand.u32 2147483647, %v3128
        %vm4520 = vcmp.eq.f32.partialorder %v4519, 8.507059e+37
        %v4521 = vand.u32 %v3128, 2147483648
        %v4522 = vor.u32 1.1754944e-38, %v4521
        %v4523 = vsel %vm4520, %v4522, %v4518
        %v4524 = vmul.f32 1.0, %v4523
        %v4525 = vrcp.pop %v3129
        %v4526 = vmul.f32 %v3129, %v4525
        %v4527 = vsub.f32 1.0, %v4526
        %v4528 = vmul.f32 %v4525, %v4527
        %v4529 = vadd.f32 %v4525, %v4528
        %vm4530 = vweird.f32 %v3129
        %vm4531 = vweird.f32 %v4525
        %vm4532 = vmor %vm4530, %vm4531
        %v4533 = vsel %vm4532, %v4525, %v4529
        %v4534 = vand.u32 2147483647, %v3129
        %vm4535 = vcmp.eq.f32.partialorder %v4534, 8.507059e+37
        %v4536 = vand.u32 %v3129, 2147483648
        %v4537 = vor.u32 1.1754944e-38, %v4536
        %v4538 = vsel %vm4535, %v4537, %v4533
        %v4539 = vmul.f32 1.0, %v4538
        %v4540 = vrcp.pop %v3130
        %v4541 = vmul.f32 %v3130, %v4540
        %v4542 = vsub.f32 1.0, %v4541
        %v4543 = vmul.f32 %v4540, %v4542
        %v4544 = vadd.f32 %v4540, %v4543
        %vm4545 = vweird.f32 %v3130
        %vm4546 = vweird.f32 %v4540
        %vm4547 = vmor %vm4545, %vm4546
        %v4548 = vsel %vm4547, %v4540, %v4544
        %v4549 = vand.u32 2147483647, %v3130
        %vm4550 = vcmp.eq.f32.partialorder %v4549, 8.507059e+37
        %v4551 = vand.u32 %v3130, 2147483648
        %v4552 = vor.u32 1.1754944e-38, %v4551
        %v4553 = vsel %vm4550, %v4552, %v4548
        %v4554 = vmul.f32 1.0, %v4553
        %v4555 = vrcp.pop %v3131
        %v4556 = vmul.f32 %v3131, %v4555
        %v4557 = vsub.f32 1.0, %v4556
        %v4558 = vmul.f32 %v4555, %v4557
        %v4559 = vadd.f32 %v4555, %v4558
        %vm4560 = vweird.f32 %v3131
        %vm4561 = vweird.f32 %v4555
        %vm4562 = vmor %vm4560, %vm4561
        %v4563 = vsel %vm4562, %v4555, %v4559
        %v4564 = vand.u32 2147483647, %v3131
        %vm4565 = vcmp.eq.f32.partialorder %v4564, 8.507059e+37
        %v4566 = vand.u32 %v3131, 2147483648
        %v4567 = vor.u32 1.1754944e-38, %v4566
        %v4568 = vsel %vm4565, %v4567, %v4563
        %v4569 = vmul.f32 1.0, %v4568
        %v4570 = vrcp.pop %v3132
        %v4571 = vmul.f32 %v3132, %v4570
        %v4572 = vsub.f32 1.0, %v4571
        %v4573 = vmul.f32 %v4570, %v4572
        %v4574 = vadd.f32 %v4570, %v4573
        %vm4575 = vweird.f32 %v3132
        %vm4576 = vweird.f32 %v4570
        %vm4577 = vmor %vm4575, %vm4576
        %v4578 = vsel %vm4577, %v4570, %v4574
        %v4579 = vand.u32 2147483647, %v3132
        %vm4580 = vcmp.eq.f32.partialorder %v4579, 8.507059e+37
        %v4581 = vand.u32 %v3132, 2147483648
        %v4582 = vor.u32 1.1754944e-38, %v4581
        %v4583 = vsel %vm4580, %v4582, %v4578
        %v4584 = vmul.f32 1.0, %v4583
        %v4585 = vrcp.pop %v3133
        %v4586 = vmul.f32 %v3133, %v4585
        %v4587 = vsub.f32 1.0, %v4586
        %v4588 = vmul.f32 %v4585, %v4587
        %v4589 = vadd.f32 %v4585, %v4588
        %vm4590 = vweird.f32 %v3133
        %vm4591 = vweird.f32 %v4585
        %vm4592 = vmor %vm4590, %vm4591
        %v4593 = vsel %vm4592, %v4585, %v4589
        %v4594 = vand.u32 2147483647, %v3133
        %vm4595 = vcmp.eq.f32.partialorder %v4594, 8.507059e+37
        %v4596 = vand.u32 %v3133, 2147483648
        %v4597 = vor.u32 1.1754944e-38, %v4596
        %v4598 = vsel %vm4595, %v4597, %v4593
        %v4599 = vmul.f32 1.0, %v4598
        %v4600 = vrcp.pop %v3134
        %v4601 = vmul.f32 %v3134, %v4600
        %v4602 = vsub.f32 1.0, %v4601
        %v4603 = vmul.f32 %v4600, %v4602
        %v4604 = vadd.f32 %v4600, %v4603
        %vm4605 = vweird.f32 %v3134
        %vm4606 = vweird.f32 %v4600
        %vm4607 = vmor %vm4605, %vm4606
        %v4608 = vsel %vm4607, %v4600, %v4604
        %v4609 = vand.u32 2147483647, %v3134
        %vm4610 = vcmp.eq.f32.partialorder %v4609, 8.507059e+37
        %v4611 = vand.u32 %v3134, 2147483648
        %v4612 = vor.u32 1.1754944e-38, %v4611
        %v4613 = vsel %vm4610, %v4612, %v4608
        %v4614 = vmul.f32 1.0, %v4613
        %v4615 = vrcp.pop %v3135
        %v4616 = vmul.f32 %v3135, %v4615
        %v4617 = vsub.f32 1.0, %v4616
        %v4618 = vmul.f32 %v4615, %v4617
        %v4619 = vadd.f32 %v4615, %v4618
        %vm4620 = vweird.f32 %v3135
        %vm4621 = vweird.f32 %v4615
        %vm4622 = vmor %vm4620, %vm4621
        %v4623 = vsel %vm4622, %v4615, %v4619
        %v4624 = vand.u32 2147483647, %v3135
        %vm4625 = vcmp.eq.f32.partialorder %v4624, 8.507059e+37
        %v4626 = vand.u32 %v3135, 2147483648
        %v4627 = vor.u32 1.1754944e-38, %v4626
        %v4628 = vsel %vm4625, %v4627, %v4623
        %v4629 = vmul.f32 1.0, %v4628
        %v4630 = vrcp.pop %v3136
        %v4631 = vmul.f32 %v3136, %v4630
        %v4632 = vsub.f32 1.0, %v4631
        %v4633 = vmul.f32 %v4630, %v4632
        %v4634 = vadd.f32 %v4630, %v4633
        %vm4635 = vweird.f32 %v3136
        %vm4636 = vweird.f32 %v4630
        %vm4637 = vmor %vm4635, %vm4636
        %v4638 = vsel %vm4637, %v4630, %v4634
        %v4639 = vand.u32 2147483647, %v3136
        %vm4640 = vcmp.eq.f32.partialorder %v4639, 8.507059e+37
        %v4641 = vand.u32 %v3136, 2147483648
        %v4642 = vor.u32 1.1754944e-38, %v4641
        %v4643 = vsel %vm4640, %v4642, %v4638
        %v4644 = vmul.f32 1.0, %v4643
        %v4645 = vrcp.pop %v3137
        %v4646 = vmul.f32 %v3137, %v4645
        %v4647 = vsub.f32 1.0, %v4646
        %v4648 = vmul.f32 %v4645, %v4647
        %v4649 = vadd.f32 %v4645, %v4648
        %vm4650 = vweird.f32 %v3137
        %vm4651 = vweird.f32 %v4645
        %vm4652 = vmor %vm4650, %vm4651
        %v4653 = vsel %vm4652, %v4645, %v4649
        %v4654 = vand.u32 2147483647, %v3137
        %vm4655 = vcmp.eq.f32.partialorder %v4654, 8.507059e+37
        %v4656 = vand.u32 %v3137, 2147483648
        %v4657 = vor.u32 1.1754944e-38, %v4656
        %v4658 = vsel %vm4655, %v4657, %v4653
        %v4659 = vmul.f32 1.0, %v4658
        %v4660 = vrcp.pop %v3138
        %v4661 = vmul.f32 %v3138, %v4660
        %v4662 = vsub.f32 1.0, %v4661
        %v4663 = vmul.f32 %v4660, %v4662
        %v4664 = vadd.f32 %v4660, %v4663
        %vm4665 = vweird.f32 %v3138
        %vm4666 = vweird.f32 %v4660
        %vm4667 = vmor %vm4665, %vm4666
        %v4668 = vsel %vm4667, %v4660, %v4664
        %v4669 = vand.u32 2147483647, %v3138
        %vm4670 = vcmp.eq.f32.partialorder %v4669, 8.507059e+37
        %v4671 = vand.u32 %v3138, 2147483648
        %v4672 = vor.u32 1.1754944e-38, %v4671
        %v4673 = vsel %vm4670, %v4672, %v4668
        %v4674 = vmul.f32 1.0, %v4673
        %v4675 = vrcp.pop %v3139
        %v4676 = vmul.f32 %v3139, %v4675
        %v4677 = vsub.f32 1.0, %v4676
        %v4678 = vmul.f32 %v4675, %v4677
        %v4679 = vadd.f32 %v4675, %v4678
        %vm4680 = vweird.f32 %v3139
        %vm4681 = vweird.f32 %v4675
        %vm4682 = vmor %vm4680, %vm4681
        %v4683 = vsel %vm4682, %v4675, %v4679
        %v4684 = vand.u32 2147483647, %v3139
        %vm4685 = vcmp.eq.f32.partialorder %v4684, 8.507059e+37
        %v4686 = vand.u32 %v3139, 2147483648
        %v4687 = vor.u32 1.1754944e-38, %v4686
        %v4688 = vsel %vm4685, %v4687, %v4683
        %v4689 = vmul.f32 1.0, %v4688
        %v4690 = vrcp.pop %v3140
        %v4691 = vmul.f32 %v3140, %v4690
        %v4692 = vsub.f32 1.0, %v4691
        %v4693 = vmul.f32 %v4690, %v4692
        %v4694 = vadd.f32 %v4690, %v4693
        %vm4695 = vweird.f32 %v3140
        %vm4696 = vweird.f32 %v4690
        %vm4697 = vmor %vm4695, %vm4696
        %v4698 = vsel %vm4697, %v4690, %v4694
        %v4699 = vand.u32 2147483647, %v3140
        %vm4700 = vcmp.eq.f32.partialorder %v4699, 8.507059e+37
        %v4701 = vand.u32 %v3140, 2147483648
        %v4702 = vor.u32 1.1754944e-38, %v4701
        %v4703 = vsel %vm4700, %v4702, %v4698
        %v4704 = vmul.f32 1.0, %v4703
        %v4705 = vrcp.pop %v3141
        %v4706 = vmul.f32 %v3141, %v4705
        %v4707 = vsub.f32 1.0, %v4706
        %v4708 = vmul.f32 %v4705, %v4707
        %v4709 = vadd.f32 %v4705, %v4708
        %vm4710 = vweird.f32 %v3141
        %vm4711 = vweird.f32 %v4705
        %vm4712 = vmor %vm4710, %vm4711
        %v4713 = vsel %vm4712, %v4705, %v4709
        %v4714 = vand.u32 2147483647, %v3141
        %vm4715 = vcmp.eq.f32.partialorder %v4714, 8.507059e+37
        %v4716 = vand.u32 %v3141, 2147483648
        %v4717 = vor.u32 1.1754944e-38, %v4716
        %v4718 = vsel %vm4715, %v4717, %v4713
        %v4719 = vmul.f32 1.0, %v4718
        %v4720 = vrcp.pop %v3142
        %v4721 = vmul.f32 %v3142, %v4720
        %v4722 = vsub.f32 1.0, %v4721
        %v4723 = vmul.f32 %v4720, %v4722
        %v4724 = vadd.f32 %v4720, %v4723
        %vm4725 = vweird.f32 %v3142
        %vm4726 = vweird.f32 %v4720
        %vm4727 = vmor %vm4725, %vm4726
        %v4728 = vsel %vm4727, %v4720, %v4724
        %v4729 = vand.u32 2147483647, %v3142
        %vm4730 = vcmp.eq.f32.partialorder %v4729, 8.507059e+37
        %v4731 = vand.u32 %v3142, 2147483648
        %v4732 = vor.u32 1.1754944e-38, %v4731
        %v4733 = vsel %vm4730, %v4732, %v4728
        %v4734 = vmul.f32 1.0, %v4733
        %v4735 = vrcp.pop %v3143
        %v4736 = vmul.f32 %v3143, %v4735
        %v4737 = vsub.f32 1.0, %v4736
        %v4738 = vmul.f32 %v4735, %v4737
        %v4739 = vadd.f32 %v4735, %v4738
        %vm4740 = vweird.f32 %v3143
        %vm4741 = vweird.f32 %v4735
        %vm4742 = vmor %vm4740, %vm4741
        %v4743 = vsel %vm4742, %v4735, %v4739
        %v4744 = vand.u32 2147483647, %v3143
        %vm4745 = vcmp.eq.f32.partialorder %v4744, 8.507059e+37
        %v4746 = vand.u32 %v3143, 2147483648
        %v4747 = vor.u32 1.1754944e-38, %v4746
        %v4748 = vsel %vm4745, %v4747, %v4743
        %v4749 = vmul.f32 1.0, %v4748
        %v4750 = vrcp.pop %v3144
        %v4751 = vmul.f32 %v3144, %v4750
        %v4752 = vsub.f32 1.0, %v4751
        %v4753 = vmul.f32 %v4750, %v4752
        %v4754 = vadd.f32 %v4750, %v4753
        %vm4755 = vweird.f32 %v3144
        %vm4756 = vweird.f32 %v4750
        %vm4757 = vmor %vm4755, %vm4756
        %v4758 = vsel %vm4757, %v4750, %v4754
        %v4759 = vand.u32 2147483647, %v3144
        %vm4760 = vcmp.eq.f32.partialorder %v4759, 8.507059e+37
        %v4761 = vand.u32 %v3144, 2147483648
        %v4762 = vor.u32 1.1754944e-38, %v4761
        %v4763 = vsel %vm4760, %v4762, %v4758
        %v4764 = vmul.f32 1.0, %v4763
        %v4765 = vrcp.pop %v3145
        %v4766 = vmul.f32 %v3145, %v4765
        %v4767 = vsub.f32 1.0, %v4766
        %v4768 = vmul.f32 %v4765, %v4767
        %v4769 = vadd.f32 %v4765, %v4768
        %vm4770 = vweird.f32 %v3145
        %vm4771 = vweird.f32 %v4765
        %vm4772 = vmor %vm4770, %vm4771
        %v4773 = vsel %vm4772, %v4765, %v4769
        %v4774 = vand.u32 2147483647, %v3145
        %vm4775 = vcmp.eq.f32.partialorder %v4774, 8.507059e+37
        %v4776 = vand.u32 %v3145, 2147483648
        %v4777 = vor.u32 1.1754944e-38, %v4776
        %v4778 = vsel %vm4775, %v4777, %v4773
        %v4779 = vmul.f32 1.0, %v4778
        %v4780 = vrcp.pop %v3146
        %v4781 = vmul.f32 %v3146, %v4780
        %v4782 = vsub.f32 1.0, %v4781
        %v4783 = vmul.f32 %v4780, %v4782
        %v4784 = vadd.f32 %v4780, %v4783
        %vm4785 = vweird.f32 %v3146
        %vm4786 = vweird.f32 %v4780
        %vm4787 = vmor %vm4785, %vm4786
        %v4788 = vsel %vm4787, %v4780, %v4784
        %v4789 = vand.u32 2147483647, %v3146
        %vm4790 = vcmp.eq.f32.partialorder %v4789, 8.507059e+37
        %v4791 = vand.u32 %v3146, 2147483648
        %v4792 = vor.u32 1.1754944e-38, %v4791
        %v4793 = vsel %vm4790, %v4792, %v4788
        %v4794 = vmul.f32 1.0, %v4793
        %v4795 = vrcp.pop %v3147
        %v4796 = vmul.f32 %v3147, %v4795
        %v4797 = vsub.f32 1.0, %v4796
        %v4798 = vmul.f32 %v4795, %v4797
        %v4799 = vadd.f32 %v4795, %v4798
        %vm4800 = vweird.f32 %v3147
        %vm4801 = vweird.f32 %v4795
        %vm4802 = vmor %vm4800, %vm4801
        %v4803 = vsel %vm4802, %v4795, %v4799
        %v4804 = vand.u32 2147483647, %v3147
        %vm4805 = vcmp.eq.f32.partialorder %v4804, 8.507059e+37
        %v4806 = vand.u32 %v3147, 2147483648
        %v4807 = vor.u32 1.1754944e-38, %v4806
        %v4808 = vsel %vm4805, %v4807, %v4803
        %v4809 = vmul.f32 1.0, %v4808
        %v4810 = vrcp.pop %v3148
        %v4811 = vmul.f32 %v3148, %v4810
        %v4812 = vsub.f32 1.0, %v4811
        %v4813 = vmul.f32 %v4810, %v4812
        %v4814 = vadd.f32 %v4810, %v4813
        %vm4815 = vweird.f32 %v3148
        %vm4816 = vweird.f32 %v4810
        %vm4817 = vmor %vm4815, %vm4816
        %v4818 = vsel %vm4817, %v4810, %v4814
        %v4819 = vand.u32 2147483647, %v3148
        %vm4820 = vcmp.eq.f32.partialorder %v4819, 8.507059e+37
        %v4821 = vand.u32 %v3148, 2147483648
        %v4822 = vor.u32 1.1754944e-38, %v4821
        %v4823 = vsel %vm4820, %v4822, %v4818
        %v4824 = vmul.f32 1.0, %v4823
        %v4825 = vrcp.pop %v3149
        %v4826 = vmul.f32 %v3149, %v4825
        %v4827 = vsub.f32 1.0, %v4826
        %v4828 = vmul.f32 %v4825, %v4827
        %v4829 = vadd.f32 %v4825, %v4828
        %vm4830 = vweird.f32 %v3149
        %vm4831 = vweird.f32 %v4825
        %vm4832 = vmor %vm4830, %vm4831
        %v4833 = vsel %vm4832, %v4825, %v4829
        %v4834 = vand.u32 2147483647, %v3149
        %vm4835 = vcmp.eq.f32.partialorder %v4834, 8.507059e+37
        %v4836 = vand.u32 %v3149, 2147483648
        %v4837 = vor.u32 1.1754944e-38, %v4836
        %v4838 = vsel %vm4835, %v4837, %v4833
        %v4839 = vmul.f32 1.0, %v4838
        %v4840 = vrcp.pop %v3150
        %v4841 = vmul.f32 %v3150, %v4840
        %v4842 = vsub.f32 1.0, %v4841
        %v4843 = vmul.f32 %v4840, %v4842
        %v4844 = vadd.f32 %v4840, %v4843
        %vm4845 = vweird.f32 %v3150
        %vm4846 = vweird.f32 %v4840
        %vm4847 = vmor %vm4845, %vm4846
        %v4848 = vsel %vm4847, %v4840, %v4844
        %v4849 = vand.u32 2147483647, %v3150
        %vm4850 = vcmp.eq.f32.partialorder %v4849, 8.507059e+37
        %v4851 = vand.u32 %v3150, 2147483648
        %v4852 = vor.u32 1.1754944e-38, %v4851
        %v4853 = vsel %vm4850, %v4852, %v4848
        %v4854 = vmul.f32 1.0, %v4853
        %v4855 = vrcp.pop %v3151
        %v4856 = vmul.f32 %v3151, %v4855
        %v4857 = vsub.f32 1.0, %v4856
        %v4858 = vmul.f32 %v4855, %v4857
        %v4859 = vadd.f32 %v4855, %v4858
        %vm4860 = vweird.f32 %v3151
        %vm4861 = vweird.f32 %v4855
        %vm4862 = vmor %vm4860, %vm4861
        %v4863 = vsel %vm4862, %v4855, %v4859
        %v4864 = vand.u32 2147483647, %v3151
        %vm4865 = vcmp.eq.f32.partialorder %v4864, 8.507059e+37
        %v4866 = vand.u32 %v3151, 2147483648
        %v4867 = vor.u32 1.1754944e-38, %v4866
        %v4868 = vsel %vm4865, %v4867, %v4863
        %v4869 = vmul.f32 1.0, %v4868
        %v4870 = vrcp.pop %v3152
        %v4871 = vmul.f32 %v3152, %v4870
        %v4872 = vsub.f32 1.0, %v4871
        %v4873 = vmul.f32 %v4870, %v4872
        %v4874 = vadd.f32 %v4870, %v4873
        %vm4875 = vweird.f32 %v3152
        %vm4876 = vweird.f32 %v4870
        %vm4877 = vmor %vm4875, %vm4876
        %v4878 = vsel %vm4877, %v4870, %v4874
        %v4879 = vand.u32 2147483647, %v3152
        %vm4880 = vcmp.eq.f32.partialorder %v4879, 8.507059e+37
        %v4881 = vand.u32 %v3152, 2147483648
        %v4882 = vor.u32 1.1754944e-38, %v4881
        %v4883 = vsel %vm4880, %v4882, %v4878
        %v4884 = vmul.f32 1.0, %v4883
        %v4885 = vrcp.pop %v3153
        %v4886 = vmul.f32 %v3153, %v4885
        %v4887 = vsub.f32 1.0, %v4886
        %v4888 = vmul.f32 %v4885, %v4887
        %v4889 = vadd.f32 %v4885, %v4888
        %vm4890 = vweird.f32 %v3153
        %vm4891 = vweird.f32 %v4885
        %vm4892 = vmor %vm4890, %vm4891
        %v4893 = vsel %vm4892, %v4885, %v4889
        %v4894 = vand.u32 2147483647, %v3153
        %vm4895 = vcmp.eq.f32.partialorder %v4894, 8.507059e+37
        %v4896 = vand.u32 %v3153, 2147483648
        %v4897 = vor.u32 1.1754944e-38, %v4896
        %v4898 = vsel %vm4895, %v4897, %v4893
        %v4899 = vmul.f32 1.0, %v4898
        %v4900 = vrcp.pop %v3154
        %v4901 = vmul.f32 %v3154, %v4900
        %v4902 = vsub.f32 1.0, %v4901
        %v4903 = vmul.f32 %v4900, %v4902
        %v4904 = vadd.f32 %v4900, %v4903
        %vm4905 = vweird.f32 %v3154
        %vm4906 = vweird.f32 %v4900
        %vm4907 = vmor %vm4905, %vm4906
        %v4908 = vsel %vm4907, %v4900, %v4904
        %v4909 = vand.u32 2147483647, %v3154
        %vm4910 = vcmp.eq.f32.partialorder %v4909, 8.507059e+37
        %v4911 = vand.u32 %v3154, 2147483648
        %v4912 = vor.u32 1.1754944e-38, %v4911
        %v4913 = vsel %vm4910, %v4912, %v4908
        %v4914 = vmul.f32 1.0, %v4913
        %v4915 = vrcp.pop %v3155
        %v4916 = vmul.f32 %v3155, %v4915
        %v4917 = vsub.f32 1.0, %v4916
        %v4918 = vmul.f32 %v4915, %v4917
        %v4919 = vadd.f32 %v4915, %v4918
        %vm4920 = vweird.f32 %v3155
        %vm4921 = vweird.f32 %v4915
        %vm4922 = vmor %vm4920, %vm4921
        %v4923 = vsel %vm4922, %v4915, %v4919
        %v4924 = vand.u32 2147483647, %v3155
        %vm4925 = vcmp.eq.f32.partialorder %v4924, 8.507059e+37
        %v4926 = vand.u32 %v3155, 2147483648
        %v4927 = vor.u32 1.1754944e-38, %v4926
        %v4928 = vsel %vm4925, %v4927, %v4923
        %v4929 = vmul.f32 1.0, %v4928
        %v4930 = vrcp.pop %v3156
        %v4931 = vmul.f32 %v3156, %v4930
        %v4932 = vsub.f32 1.0, %v4931
        %v4933 = vmul.f32 %v4930, %v4932
        %v4934 = vadd.f32 %v4930, %v4933
        %vm4935 = vweird.f32 %v3156
        %vm4936 = vweird.f32 %v4930
        %vm4937 = vmor %vm4935, %vm4936
        %v4938 = vsel %vm4937, %v4930, %v4934
        %v4939 = vand.u32 2147483647, %v3156
        %vm4940 = vcmp.eq.f32.partialorder %v4939, 8.507059e+37
        %v4941 = vand.u32 %v3156, 2147483648
        %v4942 = vor.u32 1.1754944e-38, %v4941
        %v4943 = vsel %vm4940, %v4942, %v4938
        %v4944 = vmul.f32 1.0, %v4943
        %v4945 = vrcp.pop %v3157
        %v4946 = vmul.f32 %v3157, %v4945
        %v4947 = vsub.f32 1.0, %v4946
        %v4948 = vmul.f32 %v4945, %v4947
        %v4949 = vadd.f32 %v4945, %v4948
        %vm4950 = vweird.f32 %v3157
        %vm4951 = vweird.f32 %v4945
        %vm4952 = vmor %vm4950, %vm4951
        %v4953 = vsel %vm4952, %v4945, %v4949
        %v4954 = vand.u32 2147483647, %v3157
        %vm4955 = vcmp.eq.f32.partialorder %v4954, 8.507059e+37
        %v4956 = vand.u32 %v3157, 2147483648
        %v4957 = vor.u32 1.1754944e-38, %v4956
        %v4958 = vsel %vm4955, %v4957, %v4953
        %v4959 = vmul.f32 1.0, %v4958
        %v4960 = vrcp.pop %v3158
        %v4961 = vmul.f32 %v3158, %v4960
        %v4962 = vsub.f32 1.0, %v4961
        %v4963 = vmul.f32 %v4960, %v4962
        %v4964 = vadd.f32 %v4960, %v4963
        %vm4965 = vweird.f32 %v3158
        %vm4966 = vweird.f32 %v4960
        %vm4967 = vmor %vm4965, %vm4966
        %v4968 = vsel %vm4967, %v4960, %v4964
        %v4969 = vand.u32 2147483647, %v3158
        %vm4970 = vcmp.eq.f32.partialorder %v4969, 8.507059e+37
        %v4971 = vand.u32 %v3158, 2147483648
        %v4972 = vor.u32 1.1754944e-38, %v4971
        %v4973 = vsel %vm4970, %v4972, %v4968
        %v4974 = vmul.f32 1.0, %v4973
        %v4975 = vrcp.pop %v3159
        %v4976 = vmul.f32 %v3159, %v4975
        %v4977 = vsub.f32 1.0, %v4976
        %v4978 = vmul.f32 %v4975, %v4977
        %v4979 = vadd.f32 %v4975, %v4978
        %vm4980 = vweird.f32 %v3159
        %vm4981 = vweird.f32 %v4975
        %vm4982 = vmor %vm4980, %vm4981
        %v4983 = vsel %vm4982, %v4975, %v4979
        %v4984 = vand.u32 2147483647, %v3159
        %vm4985 = vcmp.eq.f32.partialorder %v4984, 8.507059e+37
        %v4986 = vand.u32 %v3159, 2147483648
        %v4987 = vor.u32 1.1754944e-38, %v4986
        %v4988 = vsel %vm4985, %v4987, %v4983
        %v4989 = vmul.f32 1.0, %v4988
        %v4990 = vrcp.pop %v3160
        %v4991 = vmul.f32 %v3160, %v4990
        %v4992 = vsub.f32 1.0, %v4991
        %v4993 = vmul.f32 %v4990, %v4992
        %v4994 = vadd.f32 %v4990, %v4993
        %vm4995 = vweird.f32 %v3160
        %vm4996 = vweird.f32 %v4990
        %vm4997 = vmor %vm4995, %vm4996
        %v4998 = vsel %vm4997, %v4990, %v4994
        %v4999 = vand.u32 2147483647, %v3160
        %vm5000 = vcmp.eq.f32.partialorder %v4999, 8.507059e+37
        %v5001 = vand.u32 %v3160, 2147483648
        %v5002 = vor.u32 1.1754944e-38, %v5001
        %v5003 = vsel %vm5000, %v5002, %v4998
        %v5004 = vmul.f32 1.0, %v5003
        %v5005 = vrcp.pop %v3161
        %v5006 = vmul.f32 %v3161, %v5005
        %v5007 = vsub.f32 1.0, %v5006
        %v5008 = vmul.f32 %v5005, %v5007
        %v5009 = vadd.f32 %v5005, %v5008
        %vm5010 = vweird.f32 %v3161
        %vm5011 = vweird.f32 %v5005
        %vm5012 = vmor %vm5010, %vm5011
        %v5013 = vsel %vm5012, %v5005, %v5009
        %v5014 = vand.u32 2147483647, %v3161
        %vm5015 = vcmp.eq.f32.partialorder %v5014, 8.507059e+37
        %v5016 = vand.u32 %v3161, 2147483648
        %v5017 = vor.u32 1.1754944e-38, %v5016
        %v5018 = vsel %vm5015, %v5017, %v5013
        %v5019 = vmul.f32 1.0, %v5018
        %v5020 = vrcp.pop %v3162
        %v5021 = vmul.f32 %v3162, %v5020
        %v5022 = vsub.f32 1.0, %v5021
        %v5023 = vmul.f32 %v5020, %v5022
        %v5024 = vadd.f32 %v5020, %v5023
        %vm5025 = vweird.f32 %v3162
        %vm5026 = vweird.f32 %v5020
        %vm5027 = vmor %vm5025, %vm5026
        %v5028 = vsel %vm5027, %v5020, %v5024
        %v5029 = vand.u32 2147483647, %v3162
        %vm5030 = vcmp.eq.f32.partialorder %v5029, 8.507059e+37
        %v5031 = vand.u32 %v3162, 2147483648
        %v5032 = vor.u32 1.1754944e-38, %v5031
        %v5033 = vsel %vm5030, %v5032, %v5028
        %v5034 = vmul.f32 1.0, %v5033
        %v5035 = vrcp.pop %v3163
        %v5036 = vmul.f32 %v3163, %v5035
        %v5037 = vsub.f32 1.0, %v5036
        %v5038 = vmul.f32 %v5035, %v5037
        %v5039 = vadd.f32 %v5035, %v5038
        %vm5040 = vweird.f32 %v3163
        %vm5041 = vweird.f32 %v5035
        %vm5042 = vmor %vm5040, %vm5041
        %v5043 = vsel %vm5042, %v5035, %v5039
        %v5044 = vand.u32 2147483647, %v3163
        %vm5045 = vcmp.eq.f32.partialorder %v5044, 8.507059e+37
        %v5046 = vand.u32 %v3163, 2147483648
        %v5047 = vor.u32 1.1754944e-38, %v5046
        %v5048 = vsel %vm5045, %v5047, %v5043
        %v5049 = vmul.f32 1.0, %v5048
        %v5050 = vrcp.pop %v3164
        %v5051 = vmul.f32 %v3164, %v5050
        %v5052 = vsub.f32 1.0, %v5051
        %v5053 = vmul.f32 %v5050, %v5052
        %v5054 = vadd.f32 %v5050, %v5053
        %vm5055 = vweird.f32 %v3164
        %vm5056 = vweird.f32 %v5050
        %vm5057 = vmor %vm5055, %vm5056
        %v5058 = vsel %vm5057, %v5050, %v5054
        %v5059 = vand.u32 2147483647, %v3164
        %vm5060 = vcmp.eq.f32.partialorder %v5059, 8.507059e+37
        %v5061 = vand.u32 %v3164, 2147483648
        %v5062 = vor.u32 1.1754944e-38, %v5061
        %v5063 = vsel %vm5060, %v5062, %v5058
        %v5064 = vmul.f32 1.0, %v5063
        %v5065 = vrcp.pop %v3165
        %v5066 = vmul.f32 %v3165, %v5065
        %v5067 = vsub.f32 1.0, %v5066
        %v5068 = vmul.f32 %v5065, %v5067
        %v5069 = vadd.f32 %v5065, %v5068
        %vm5070 = vweird.f32 %v3165
        %vm5071 = vweird.f32 %v5065
        %vm5072 = vmor %vm5070, %vm5071
        %v5073 = vsel %vm5072, %v5065, %v5069
        %v5074 = vand.u32 2147483647, %v3165
        %vm5075 = vcmp.eq.f32.partialorder %v5074, 8.507059e+37
        %v5076 = vand.u32 %v3165, 2147483648
        %v5077 = vor.u32 1.1754944e-38, %v5076
        %v5078 = vsel %vm5075, %v5077, %v5073
        %v5079 = vmul.f32 1.0, %v5078
        %v5080 = vrcp.pop %v3166
        %v5081 = vmul.f32 %v3166, %v5080
        %v5082 = vsub.f32 1.0, %v5081
        %v5083 = vmul.f32 %v5080, %v5082
        %v5084 = vadd.f32 %v5080, %v5083
        %vm5085 = vweird.f32 %v3166
        %vm5086 = vweird.f32 %v5080
        %vm5087 = vmor %vm5085, %vm5086
        %v5088 = vsel %vm5087, %v5080, %v5084
        %v5089 = vand.u32 2147483647, %v3166
        %vm5090 = vcmp.eq.f32.partialorder %v5089, 8.507059e+37
        %v5091 = vand.u32 %v3166, 2147483648
        %v5092 = vor.u32 1.1754944e-38, %v5091
        %v5093 = vsel %vm5090, %v5092, %v5088
        %v5094 = vmul.f32 1.0, %v5093
        %v5095 = vrcp.pop %v3167
        %v5096 = vmul.f32 %v3167, %v5095
        %v5097 = vsub.f32 1.0, %v5096
        %v5098 = vmul.f32 %v5095, %v5097
        %v5099 = vadd.f32 %v5095, %v5098
        %vm5100 = vweird.f32 %v3167
        %vm5101 = vweird.f32 %v5095
        %vm5102 = vmor %vm5100, %vm5101
        %v5103 = vsel %vm5102, %v5095, %v5099
        %v5104 = vand.u32 2147483647, %v3167
        %vm5105 = vcmp.eq.f32.partialorder %v5104, 8.507059e+37
        %v5106 = vand.u32 %v3167, 2147483648
        %v5107 = vor.u32 1.1754944e-38, %v5106
        %v5108 = vsel %vm5105, %v5107, %v5103
        %v5109 = vmul.f32 1.0, %v5108
        %v5110 = vrcp.pop %v3168
        %v5111 = vmul.f32 %v3168, %v5110
        %v5112 = vsub.f32 1.0, %v5111
        %v5113 = vmul.f32 %v5110, %v5112
        %v5114 = vadd.f32 %v5110, %v5113
        %vm5115 = vweird.f32 %v3168
        %vm5116 = vweird.f32 %v5110
        %vm5117 = vmor %vm5115, %vm5116
        %v5118 = vsel %vm5117, %v5110, %v5114
        %v5119 = vand.u32 2147483647, %v3168
        %vm5120 = vcmp.eq.f32.partialorder %v5119, 8.507059e+37
        %v5121 = vand.u32 %v3168, 2147483648
        %v5122 = vor.u32 1.1754944e-38, %v5121
        %v5123 = vsel %vm5120, %v5122, %v5118
        %v5124 = vmul.f32 1.0, %v5123
        %v5125 = vrcp.pop %v3169
        %v5126 = vmul.f32 %v3169, %v5125
        %v5127 = vsub.f32 1.0, %v5126
        %v5128 = vmul.f32 %v5125, %v5127
        %v5129 = vadd.f32 %v5125, %v5128
        %vm5130 = vweird.f32 %v3169
        %vm5131 = vweird.f32 %v5125
        %vm5132 = vmor %vm5130, %vm5131
        %v5133 = vsel %vm5132, %v5125, %v5129
        %v5134 = vand.u32 2147483647, %v3169
        %vm5135 = vcmp.eq.f32.partialorder %v5134, 8.507059e+37
        %v5136 = vand.u32 %v3169, 2147483648
        %v5137 = vor.u32 1.1754944e-38, %v5136
        %v5138 = vsel %vm5135, %v5137, %v5133
        %v5139 = vmul.f32 1.0, %v5138
        %v5140 = vrcp.pop %v3170
        %v5141 = vmul.f32 %v3170, %v5140
        %v5142 = vsub.f32 1.0, %v5141
        %v5143 = vmul.f32 %v5140, %v5142
        %v5144 = vadd.f32 %v5140, %v5143
        %vm5145 = vweird.f32 %v3170
        %vm5146 = vweird.f32 %v5140
        %vm5147 = vmor %vm5145, %vm5146
        %v5148 = vsel %vm5147, %v5140, %v5144
        %v5149 = vand.u32 2147483647, %v3170
        %vm5150 = vcmp.eq.f32.partialorder %v5149, 8.507059e+37
        %v5151 = vand.u32 %v3170, 2147483648
        %v5152 = vor.u32 1.1754944e-38, %v5151
        %v5153 = vsel %vm5150, %v5152, %v5148
        %v5154 = vmul.f32 1.0, %v5153
        %v5155 = vrcp.pop %v3171
        %v5156 = vmul.f32 %v3171, %v5155
        %v5157 = vsub.f32 1.0, %v5156
        %v5158 = vmul.f32 %v5155, %v5157
        %v5159 = vadd.f32 %v5155, %v5158
        %vm5160 = vweird.f32 %v3171
        %vm5161 = vweird.f32 %v5155
        %vm5162 = vmor %vm5160, %vm5161
        %v5163 = vsel %vm5162, %v5155, %v5159
        %v5164 = vand.u32 2147483647, %v3171
        %vm5165 = vcmp.eq.f32.partialorder %v5164, 8.507059e+37
        %v5166 = vand.u32 %v3171, 2147483648
        %v5167 = vor.u32 1.1754944e-38, %v5166
        %v5168 = vsel %vm5165, %v5167, %v5163
        %v5169 = vmul.f32 1.0, %v5168
        %v5170 = vrcp.pop %v3172
        %v5171 = vmul.f32 %v3172, %v5170
        %v5172 = vsub.f32 1.0, %v5171
        %v5173 = vmul.f32 %v5170, %v5172
        %v5174 = vadd.f32 %v5170, %v5173
        %vm5175 = vweird.f32 %v3172
        %vm5176 = vweird.f32 %v5170
        %vm5177 = vmor %vm5175, %vm5176
        %v5178 = vsel %vm5177, %v5170, %v5174
        %v5179 = vand.u32 2147483647, %v3172
        %vm5180 = vcmp.eq.f32.partialorder %v5179, 8.507059e+37
        %v5181 = vand.u32 %v3172, 2147483648
        %v5182 = vor.u32 1.1754944e-38, %v5181
        %v5183 = vsel %vm5180, %v5182, %v5178
        %v5184 = vmul.f32 1.0, %v5183
        %v5185 = vrcp.pop %v3173
        %v5186 = vmul.f32 %v3173, %v5185
        %v5187 = vsub.f32 1.0, %v5186
        %v5188 = vmul.f32 %v5185, %v5187
        %v5189 = vadd.f32 %v5185, %v5188
        %vm5190 = vweird.f32 %v3173
        %vm5191 = vweird.f32 %v5185
        %vm5192 = vmor %vm5190, %vm5191
        %v5193 = vsel %vm5192, %v5185, %v5189
        %v5194 = vand.u32 2147483647, %v3173
        %vm5195 = vcmp.eq.f32.partialorder %v5194, 8.507059e+37
        %v5196 = vand.u32 %v3173, 2147483648
        %v5197 = vor.u32 1.1754944e-38, %v5196
        %v5198 = vsel %vm5195, %v5197, %v5193
        %v5199 = vmul.f32 1.0, %v5198
        %v5200 = vrcp.pop %v3174
        %v5201 = vmul.f32 %v3174, %v5200
        %v5202 = vsub.f32 1.0, %v5201
        %v5203 = vmul.f32 %v5200, %v5202
        %v5204 = vadd.f32 %v5200, %v5203
        %vm5205 = vweird.f32 %v3174
        %vm5206 = vweird.f32 %v5200
        %vm5207 = vmor %vm5205, %vm5206
        %v5208 = vsel %vm5207, %v5200, %v5204
        %v5209 = vand.u32 2147483647, %v3174
        %vm5210 = vcmp.eq.f32.partialorder %v5209, 8.507059e+37
        %v5211 = vand.u32 %v3174, 2147483648
        %v5212 = vor.u32 1.1754944e-38, %v5211
        %v5213 = vsel %vm5210, %v5212, %v5208
        %v5214 = vmul.f32 1.0, %v5213
        %v5215 = vrcp.pop %v3175
        %v5216 = vmul.f32 %v3175, %v5215
        %v5217 = vsub.f32 1.0, %v5216
        %v5218 = vmul.f32 %v5215, %v5217
        %v5219 = vadd.f32 %v5215, %v5218
        %vm5220 = vweird.f32 %v3175
        %vm5221 = vweird.f32 %v5215
        %vm5222 = vmor %vm5220, %vm5221
        %v5223 = vsel %vm5222, %v5215, %v5219
        %v5224 = vand.u32 2147483647, %v3175
        %vm5225 = vcmp.eq.f32.partialorder %v5224, 8.507059e+37
        %v5226 = vand.u32 %v3175, 2147483648
        %v5227 = vor.u32 1.1754944e-38, %v5226
        %v5228 = vsel %vm5225, %v5227, %v5223
        %v5229 = vmul.f32 1.0, %v5228
        %v5230 = vrcp.pop %v3176
        %v5231 = vmul.f32 %v3176, %v5230
        %v5232 = vsub.f32 1.0, %v5231
        %v5233 = vmul.f32 %v5230, %v5232
        %v5234 = vadd.f32 %v5230, %v5233
        %vm5235 = vweird.f32 %v3176
        %vm5236 = vweird.f32 %v5230
        %vm5237 = vmor %vm5235, %vm5236
        %v5238 = vsel %vm5237, %v5230, %v5234
        %v5239 = vand.u32 2147483647, %v3176
        %vm5240 = vcmp.eq.f32.partialorder %v5239, 8.507059e+37
        %v5241 = vand.u32 %v3176, 2147483648
        %v5242 = vor.u32 1.1754944e-38, %v5241
        %v5243 = vsel %vm5240, %v5242, %v5238
        %v5244 = vmul.f32 1.0, %v5243
        %v5245 = vrcp.pop %v3177
        %v5246 = vmul.f32 %v3177, %v5245
        %v5247 = vsub.f32 1.0, %v5246
        %v5248 = vmul.f32 %v5245, %v5247
        %v5249 = vadd.f32 %v5245, %v5248
        %vm5250 = vweird.f32 %v3177
        %vm5251 = vweird.f32 %v5245
        %vm5252 = vmor %vm5250, %vm5251
        %v5253 = vsel %vm5252, %v5245, %v5249
        %v5254 = vand.u32 2147483647, %v3177
        %vm5255 = vcmp.eq.f32.partialorder %v5254, 8.507059e+37
        %v5256 = vand.u32 %v3177, 2147483648
        %v5257 = vor.u32 1.1754944e-38, %v5256
        %v5258 = vsel %vm5255, %v5257, %v5253
        %v5259 = vmul.f32 1.0, %v5258
        %v5260 = vrcp.pop %v3178
        %v5261 = vmul.f32 %v3178, %v5260
        %v5262 = vsub.f32 1.0, %v5261
        %v5263 = vmul.f32 %v5260, %v5262
        %v5264 = vadd.f32 %v5260, %v5263
        %vm5265 = vweird.f32 %v3178
        %vm5266 = vweird.f32 %v5260
        %vm5267 = vmor %vm5265, %vm5266
        %v5268 = vsel %vm5267, %v5260, %v5264
        %v5269 = vand.u32 2147483647, %v3178
        %vm5270 = vcmp.eq.f32.partialorder %v5269, 8.507059e+37
        %v5271 = vand.u32 %v3178, 2147483648
        %v5272 = vor.u32 1.1754944e-38, %v5271
        %v5273 = vsel %vm5270, %v5272, %v5268
        %v5274 = vmul.f32 1.0, %v5273
        %v5275 = vrcp.pop %v3179
        %v5276 = vmul.f32 %v3179, %v5275
        %v5277 = vsub.f32 1.0, %v5276
        %v5278 = vmul.f32 %v5275, %v5277
        %v5279 = vadd.f32 %v5275, %v5278
        %vm5280 = vweird.f32 %v3179
        %vm5281 = vweird.f32 %v5275
        %vm5282 = vmor %vm5280, %vm5281
        %v5283 = vsel %vm5282, %v5275, %v5279
        %v5284 = vand.u32 2147483647, %v3179
        %vm5285 = vcmp.eq.f32.partialorder %v5284, 8.507059e+37
        %v5286 = vand.u32 %v3179, 2147483648
        %v5287 = vor.u32 1.1754944e-38, %v5286
        %v5288 = vsel %vm5285, %v5287, %v5283
        %v5289 = vmul.f32 1.0, %v5288
        %v5290 = vrcp.pop %v3180
        %v5291 = vmul.f32 %v3180, %v5290
        %v5292 = vsub.f32 1.0, %v5291
        %v5293 = vmul.f32 %v5290, %v5292
        %v5294 = vadd.f32 %v5290, %v5293
        %vm5295 = vweird.f32 %v3180
        %vm5296 = vweird.f32 %v5290
        %vm5297 = vmor %vm5295, %vm5296
        %v5298 = vsel %vm5297, %v5290, %v5294
        %v5299 = vand.u32 2147483647, %v3180
        %vm5300 = vcmp.eq.f32.partialorder %v5299, 8.507059e+37
        %v5301 = vand.u32 %v3180, 2147483648
        %v5302 = vor.u32 1.1754944e-38, %v5301
        %v5303 = vsel %vm5300, %v5302, %v5298
        %v5304 = vmul.f32 1.0, %v5303
        %v5305 = vrcp.pop %v3181
        %v5306 = vmul.f32 %v3181, %v5305
        %v5307 = vsub.f32 1.0, %v5306
        %v5308 = vmul.f32 %v5305, %v5307
        %v5309 = vadd.f32 %v5305, %v5308
        %vm5310 = vweird.f32 %v3181
        %vm5311 = vweird.f32 %v5305
        %vm5312 = vmor %vm5310, %vm5311
        %v5313 = vsel %vm5312, %v5305, %v5309
        %v5314 = vand.u32 2147483647, %v3181
        %vm5315 = vcmp.eq.f32.partialorder %v5314, 8.507059e+37
        %v5316 = vand.u32 %v3181, 2147483648
        %v5317 = vor.u32 1.1754944e-38, %v5316
        %v5318 = vsel %vm5315, %v5317, %v5313
        %v5319 = vmul.f32 1.0, %v5318
        %v5320 = vrcp.pop %v3182
        %v5321 = vmul.f32 %v3182, %v5320
        %v5322 = vsub.f32 1.0, %v5321
        %v5323 = vmul.f32 %v5320, %v5322
        %v5324 = vadd.f32 %v5320, %v5323
        %vm5325 = vweird.f32 %v3182
        %vm5326 = vweird.f32 %v5320
        %vm5327 = vmor %vm5325, %vm5326
        %v5328 = vsel %vm5327, %v5320, %v5324
        %v5329 = vand.u32 2147483647, %v3182
        %vm5330 = vcmp.eq.f32.partialorder %v5329, 8.507059e+37
        %v5331 = vand.u32 %v3182, 2147483648
        %v5332 = vor.u32 1.1754944e-38, %v5331
        %v5333 = vsel %vm5330, %v5332, %v5328
        %v5334 = vmul.f32 1.0, %v5333
        %v5335 = vrcp.pop %v3183
        %v5336 = vmul.f32 %v3183, %v5335
        %v5337 = vsub.f32 1.0, %v5336
        %v5338 = vmul.f32 %v5335, %v5337
        %v5339 = vadd.f32 %v5335, %v5338
        %vm5340 = vweird.f32 %v3183
        %vm5341 = vweird.f32 %v5335
        %vm5342 = vmor %vm5340, %vm5341
        %v5343 = vsel %vm5342, %v5335, %v5339
        %v5344 = vand.u32 2147483647, %v3183
        %vm5345 = vcmp.eq.f32.partialorder %v5344, 8.507059e+37
        %v5346 = vand.u32 %v3183, 2147483648
        %v5347 = vor.u32 1.1754944e-38, %v5346
        %v5348 = vsel %vm5345, %v5347, %v5343
        %v5349 = vmul.f32 1.0, %v5348
        %v5350 = vrcp.pop %v3184
        %v5351 = vmul.f32 %v3184, %v5350
        %v5352 = vsub.f32 1.0, %v5351
        %v5353 = vmul.f32 %v5350, %v5352
        %v5354 = vadd.f32 %v5350, %v5353
        %vm5355 = vweird.f32 %v3184
        %vm5356 = vweird.f32 %v5350
        %vm5357 = vmor %vm5355, %vm5356
        %v5358 = vsel %vm5357, %v5350, %v5354
        %v5359 = vand.u32 2147483647, %v3184
        %vm5360 = vcmp.eq.f32.partialorder %v5359, 8.507059e+37
        %v5361 = vand.u32 %v3184, 2147483648
        %v5362 = vor.u32 1.1754944e-38, %v5361
        %v5363 = vsel %vm5360, %v5362, %v5358
        %v5364 = vmul.f32 1.0, %v5363
        %v5365 = vrcp.pop %v3185
        %v5366 = vmul.f32 %v3185, %v5365
        %v5367 = vsub.f32 1.0, %v5366
        %v5368 = vmul.f32 %v5365, %v5367
        %v5369 = vadd.f32 %v5365, %v5368
        %vm5370 = vweird.f32 %v3185
        %vm5371 = vweird.f32 %v5365
        %vm5372 = vmor %vm5370, %vm5371
        %v5373 = vsel %vm5372, %v5365, %v5369
        %v5374 = vand.u32 2147483647, %v3185
        %vm5375 = vcmp.eq.f32.partialorder %v5374, 8.507059e+37
        %v5376 = vand.u32 %v3185, 2147483648
        %v5377 = vor.u32 1.1754944e-38, %v5376
        %v5378 = vsel %vm5375, %v5377, %v5373
        %v5379 = vmul.f32 1.0, %v5378
        %v5380 = vrcp.pop %v3186
        %v5381 = vmul.f32 %v3186, %v5380
        %v5382 = vsub.f32 1.0, %v5381
        %v5383 = vmul.f32 %v5380, %v5382
        %v5384 = vadd.f32 %v5380, %v5383
        %vm5385 = vweird.f32 %v3186
        %vm5386 = vweird.f32 %v5380
        %vm5387 = vmor %vm5385, %vm5386
        %v5388 = vsel %vm5387, %v5380, %v5384
        %v5389 = vand.u32 2147483647, %v3186
        %vm5390 = vcmp.eq.f32.partialorder %v5389, 8.507059e+37
        %v5391 = vand.u32 %v3186, 2147483648
        %v5392 = vor.u32 1.1754944e-38, %v5391
        %v5393 = vsel %vm5390, %v5392, %v5388
        %v5394 = vmul.f32 1.0, %v5393
        %v5395 = vrcp.pop %v3187
        %v5396 = vmul.f32 %v3187, %v5395
        %v5397 = vsub.f32 1.0, %v5396
        %v5398 = vmul.f32 %v5395, %v5397
        %v5399 = vadd.f32 %v5395, %v5398
        %vm5400 = vweird.f32 %v3187
        %vm5401 = vweird.f32 %v5395
        %vm5402 = vmor %vm5400, %vm5401
        %v5403 = vsel %vm5402, %v5395, %v5399
        %v5404 = vand.u32 2147483647, %v3187
        %vm5405 = vcmp.eq.f32.partialorder %v5404, 8.507059e+37
        %v5406 = vand.u32 %v3187, 2147483648
        %v5407 = vor.u32 1.1754944e-38, %v5406
        %v5408 = vsel %vm5405, %v5407, %v5403
        %v5409 = vmul.f32 1.0, %v5408
        %v5410 = vrcp.pop %v3188
        %v5411 = vmul.f32 %v3188, %v5410
        %v5412 = vsub.f32 1.0, %v5411
        %v5413 = vmul.f32 %v5410, %v5412
        %v5414 = vadd.f32 %v5410, %v5413
        %vm5415 = vweird.f32 %v3188
        %vm5416 = vweird.f32 %v5410
        %vm5417 = vmor %vm5415, %vm5416
        %v5418 = vsel %vm5417, %v5410, %v5414
        %v5419 = vand.u32 2147483647, %v3188
        %vm5420 = vcmp.eq.f32.partialorder %v5419, 8.507059e+37
        %v5421 = vand.u32 %v3188, 2147483648
        %v5422 = vor.u32 1.1754944e-38, %v5421
        %v5423 = vsel %vm5420, %v5422, %v5418
        %v5424 = vmul.f32 1.0, %v5423
        %v5425 = vrcp.pop %v3189
        %v5426 = vmul.f32 %v3189, %v5425
        %v5427 = vsub.f32 1.0, %v5426
        %v5428 = vmul.f32 %v5425, %v5427
        %v5429 = vadd.f32 %v5425, %v5428
        %vm5430 = vweird.f32 %v3189
        %vm5431 = vweird.f32 %v5425
        %vm5432 = vmor %vm5430, %vm5431
        %v5433 = vsel %vm5432, %v5425, %v5429
        %v5434 = vand.u32 2147483647, %v3189
        %vm5435 = vcmp.eq.f32.partialorder %v5434, 8.507059e+37
        %v5436 = vand.u32 %v3189, 2147483648
        %v5437 = vor.u32 1.1754944e-38, %v5436
        %v5438 = vsel %vm5435, %v5437, %v5433
        %v5439 = vmul.f32 1.0, %v5438
        %v5440 = vrcp.pop %v3190
        %v5441 = vmul.f32 %v3190, %v5440
        %v5442 = vsub.f32 1.0, %v5441
        %v5443 = vmul.f32 %v5440, %v5442
        %v5444 = vadd.f32 %v5440, %v5443
        %vm5445 = vweird.f32 %v3190
        %vm5446 = vweird.f32 %v5440
        %vm5447 = vmor %vm5445, %vm5446
        %v5448 = vsel %vm5447, %v5440, %v5444
        %v5449 = vand.u32 2147483647, %v3190
        %vm5450 = vcmp.eq.f32.partialorder %v5449, 8.507059e+37
        %v5451 = vand.u32 %v3190, 2147483648
        %v5452 = vor.u32 1.1754944e-38, %v5451
        %v5453 = vsel %vm5450, %v5452, %v5448
        %v5454 = vmul.f32 1.0, %v5453
        %v5455 = vrcp.pop %v3191
        %v5456 = vmul.f32 %v3191, %v5455
        %v5457 = vsub.f32 1.0, %v5456
        %v5458 = vmul.f32 %v5455, %v5457
        %v5459 = vadd.f32 %v5455, %v5458
        %vm5460 = vweird.f32 %v3191
        %vm5461 = vweird.f32 %v5455
        %vm5462 = vmor %vm5460, %vm5461
        %v5463 = vsel %vm5462, %v5455, %v5459
        %v5464 = vand.u32 2147483647, %v3191
        %vm5465 = vcmp.eq.f32.partialorder %v5464, 8.507059e+37
        %v5466 = vand.u32 %v3191, 2147483648
        %v5467 = vor.u32 1.1754944e-38, %v5466
        %v5468 = vsel %vm5465, %v5467, %v5463
        %v5469 = vmul.f32 1.0, %v5468
        %v5470 = vrcp.pop %v3192
        %v5471 = vmul.f32 %v3192, %v5470
        %v5472 = vsub.f32 1.0, %v5471
        %v5473 = vmul.f32 %v5470, %v5472
        %v5474 = vadd.f32 %v5470, %v5473
        %vm5475 = vweird.f32 %v3192
        %vm5476 = vweird.f32 %v5470
        %vm5477 = vmor %vm5475, %vm5476
        %v5478 = vsel %vm5477, %v5470, %v5474
        %v5479 = vand.u32 2147483647, %v3192
        %vm5480 = vcmp.eq.f32.partialorder %v5479, 8.507059e+37
        %v5481 = vand.u32 %v3192, 2147483648
        %v5482 = vor.u32 1.1754944e-38, %v5481
        %v5483 = vsel %vm5480, %v5482, %v5478
        %v5484 = vmul.f32 1.0, %v5483
        %v5485 = vrcp.pop %v3193
        %v5486 = vmul.f32 %v3193, %v5485
        %v5487 = vsub.f32 1.0, %v5486
        %v5488 = vmul.f32 %v5485, %v5487
        %v5489 = vadd.f32 %v5485, %v5488
        %vm5490 = vweird.f32 %v3193
        %vm5491 = vweird.f32 %v5485
        %vm5492 = vmor %vm5490, %vm5491
        %v5493 = vsel %vm5492, %v5485, %v5489
        %v5494 = vand.u32 2147483647, %v3193
        %vm5495 = vcmp.eq.f32.partialorder %v5494, 8.507059e+37
        %v5496 = vand.u32 %v3193, 2147483648
        %v5497 = vor.u32 1.1754944e-38, %v5496
        %v5498 = vsel %vm5495, %v5497, %v5493
        %v5499 = vmul.f32 1.0, %v5498
        %v5500 = vrcp.pop %v3194
        %v5501 = vmul.f32 %v3194, %v5500
        %v5502 = vsub.f32 1.0, %v5501
        %v5503 = vmul.f32 %v5500, %v5502
        %v5504 = vadd.f32 %v5500, %v5503
        %vm5505 = vweird.f32 %v3194
        %vm5506 = vweird.f32 %v5500
        %vm5507 = vmor %vm5505, %vm5506
        %v5508 = vsel %vm5507, %v5500, %v5504
        %v5509 = vand.u32 2147483647, %v3194
        %vm5510 = vcmp.eq.f32.partialorder %v5509, 8.507059e+37
        %v5511 = vand.u32 %v3194, 2147483648
        %v5512 = vor.u32 1.1754944e-38, %v5511
        %v5513 = vsel %vm5510, %v5512, %v5508
        %v5514 = vmul.f32 1.0, %v5513
        %v5515 = vrcp.pop %v3195
        %v5516 = vmul.f32 %v3195, %v5515
        %v5517 = vsub.f32 1.0, %v5516
        %v5518 = vmul.f32 %v5515, %v5517
        %v5519 = vadd.f32 %v5515, %v5518
        %vm5520 = vweird.f32 %v3195
        %vm5521 = vweird.f32 %v5515
        %vm5522 = vmor %vm5520, %vm5521
        %v5523 = vsel %vm5522, %v5515, %v5519
        %v5524 = vand.u32 2147483647, %v3195
        %vm5525 = vcmp.eq.f32.partialorder %v5524, 8.507059e+37
        %v5526 = vand.u32 %v3195, 2147483648
        %v5527 = vor.u32 1.1754944e-38, %v5526
        %v5528 = vsel %vm5525, %v5527, %v5523
        %v5529 = vmul.f32 1.0, %v5528
        %v5530 = vrcp.pop %v3196
        %v5531 = vmul.f32 %v3196, %v5530
        %v5532 = vsub.f32 1.0, %v5531
        %v5533 = vmul.f32 %v5530, %v5532
        %v5534 = vadd.f32 %v5530, %v5533
        %vm5535 = vweird.f32 %v3196
        %vm5536 = vweird.f32 %v5530
        %vm5537 = vmor %vm5535, %vm5536
        %v5538 = vsel %vm5537, %v5530, %v5534
        %v5539 = vand.u32 2147483647, %v3196
        %vm5540 = vcmp.eq.f32.partialorder %v5539, 8.507059e+37
        %v5541 = vand.u32 %v3196, 2147483648
        %v5542 = vor.u32 1.1754944e-38, %v5541
        %v5543 = vsel %vm5540, %v5542, %v5538
        %v5544 = vmul.f32 1.0, %v5543
        %v5545 = vrcp.pop %v3197
        %v5546 = vmul.f32 %v3197, %v5545
        %v5547 = vsub.f32 1.0, %v5546
        %v5548 = vmul.f32 %v5545, %v5547
        %v5549 = vadd.f32 %v5545, %v5548
        %vm5550 = vweird.f32 %v3197
        %vm5551 = vweird.f32 %v5545
        %vm5552 = vmor %vm5550, %vm5551
        %v5553 = vsel %vm5552, %v5545, %v5549
        %v5554 = vand.u32 2147483647, %v3197
        %vm5555 = vcmp.eq.f32.partialorder %v5554, 8.507059e+37
        %v5556 = vand.u32 %v3197, 2147483648
        %v5557 = vor.u32 1.1754944e-38, %v5556
        %v5558 = vsel %vm5555, %v5557, %v5553
        %v5559 = vmul.f32 1.0, %v5558
        %v5560 = vrcp.pop %v3198
        %v5561 = vmul.f32 %v3198, %v5560
        %v5562 = vsub.f32 1.0, %v5561
        %v5563 = vmul.f32 %v5560, %v5562
        %v5564 = vadd.f32 %v5560, %v5563
        %vm5565 = vweird.f32 %v3198
        %vm5566 = vweird.f32 %v5560
        %vm5567 = vmor %vm5565, %vm5566
        %v5568 = vsel %vm5567, %v5560, %v5564
        %v5569 = vand.u32 2147483647, %v3198
        %vm5570 = vcmp.eq.f32.partialorder %v5569, 8.507059e+37
        %v5571 = vand.u32 %v3198, 2147483648
        %v5572 = vor.u32 1.1754944e-38, %v5571
        %v5573 = vsel %vm5570, %v5572, %v5568
        %v5574 = vmul.f32 1.0, %v5573
        %v5575 = vrcp.pop %v3199
        %v5576 = vmul.f32 %v3199, %v5575
        %v5577 = vsub.f32 1.0, %v5576
        %v5578 = vmul.f32 %v5575, %v5577
        %v5579 = vadd.f32 %v5575, %v5578
        %vm5580 = vweird.f32 %v3199
        %vm5581 = vweird.f32 %v5575
        %vm5582 = vmor %vm5580, %vm5581
        %v5583 = vsel %vm5582, %v5575, %v5579
        %v5584 = vand.u32 2147483647, %v3199
        %vm5585 = vcmp.eq.f32.partialorder %v5584, 8.507059e+37
        %v5586 = vand.u32 %v3199, 2147483648
        %v5587 = vor.u32 1.1754944e-38, %v5586
        %v5588 = vsel %vm5585, %v5587, %v5583
        %v5589 = vmul.f32 1.0, %v5588
        %v5590 = vrcp.pop %v3200
        %v5591 = vmul.f32 %v3200, %v5590
        %v5592 = vsub.f32 1.0, %v5591
        %v5593 = vmul.f32 %v5590, %v5592
        %v5594 = vadd.f32 %v5590, %v5593
        %vm5595 = vweird.f32 %v3200
        %vm5596 = vweird.f32 %v5590
        %vm5597 = vmor %vm5595, %vm5596
        %v5598 = vsel %vm5597, %v5590, %v5594
        %v5599 = vand.u32 2147483647, %v3200
        %vm5600 = vcmp.eq.f32.partialorder %v5599, 8.507059e+37
        %v5601 = vand.u32 %v3200, 2147483648
        %v5602 = vor.u32 1.1754944e-38, %v5601
        %v5603 = vsel %vm5600, %v5602, %v5598
        %v5604 = vmul.f32 1.0, %v5603
        %v5605 = vrcp.pop %v3201
        %v5606 = vmul.f32 %v3201, %v5605
        %v5607 = vsub.f32 1.0, %v5606
        %v5608 = vmul.f32 %v5605, %v5607
        %v5609 = vadd.f32 %v5605, %v5608
        %vm5610 = vweird.f32 %v3201
        %vm5611 = vweird.f32 %v5605
        %vm5612 = vmor %vm5610, %vm5611
        %v5613 = vsel %vm5612, %v5605, %v5609
        %v5614 = vand.u32 2147483647, %v3201
        %vm5615 = vcmp.eq.f32.partialorder %v5614, 8.507059e+37
        %v5616 = vand.u32 %v3201, 2147483648
        %v5617 = vor.u32 1.1754944e-38, %v5616
        %v5618 = vsel %vm5615, %v5617, %v5613
        %v5619 = vmul.f32 1.0, %v5618
        %v5620 = vrcp.pop %v3202
        %v5621 = vmul.f32 %v3202, %v5620
        %v5622 = vsub.f32 1.0, %v5621
        %v5623 = vmul.f32 %v5620, %v5622
        %v5624 = vadd.f32 %v5620, %v5623
        %vm5625 = vweird.f32 %v3202
        %vm5626 = vweird.f32 %v5620
        %vm5627 = vmor %vm5625, %vm5626
        %v5628 = vsel %vm5627, %v5620, %v5624
        %v5629 = vand.u32 2147483647, %v3202
        %vm5630 = vcmp.eq.f32.partialorder %v5629, 8.507059e+37
        %v5631 = vand.u32 %v3202, 2147483648
        %v5632 = vor.u32 1.1754944e-38, %v5631
        %v5633 = vsel %vm5630, %v5632, %v5628
        %v5634 = vmul.f32 1.0, %v5633
        %v5635 = vrcp.pop %v3203
        %v5636 = vmul.f32 %v3203, %v5635
        %v5637 = vsub.f32 1.0, %v5636
        %v5638 = vmul.f32 %v5635, %v5637
        %v5639 = vadd.f32 %v5635, %v5638
        %vm5640 = vweird.f32 %v3203
        %vm5641 = vweird.f32 %v5635
        %vm5642 = vmor %vm5640, %vm5641
        %v5643 = vsel %vm5642, %v5635, %v5639
        %v5644 = vand.u32 2147483647, %v3203
        %vm5645 = vcmp.eq.f32.partialorder %v5644, 8.507059e+37
        %v5646 = vand.u32 %v3203, 2147483648
        %v5647 = vor.u32 1.1754944e-38, %v5646
        %v5648 = vsel %vm5645, %v5647, %v5643
        %v5649 = vmul.f32 1.0, %v5648
        %v5650 = vrcp.pop %v3204
        %v5651 = vmul.f32 %v3204, %v5650
        %v5652 = vsub.f32 1.0, %v5651
        %v5653 = vmul.f32 %v5650, %v5652
        %v5654 = vadd.f32 %v5650, %v5653
        %vm5655 = vweird.f32 %v3204
        %vm5656 = vweird.f32 %v5650
        %vm5657 = vmor %vm5655, %vm5656
        %v5658 = vsel %vm5657, %v5650, %v5654
        %v5659 = vand.u32 2147483647, %v3204
        %vm5660 = vcmp.eq.f32.partialorder %v5659, 8.507059e+37
        %v5661 = vand.u32 %v3204, 2147483648
        %v5662 = vor.u32 1.1754944e-38, %v5661
        %v5663 = vsel %vm5660, %v5662, %v5658
        %v5664 = vmul.f32 1.0, %v5663
        %v5665 = vrcp.pop %v3205
        %v5666 = vmul.f32 %v3205, %v5665
        %v5667 = vsub.f32 1.0, %v5666
        %v5668 = vmul.f32 %v5665, %v5667
        %v5669 = vadd.f32 %v5665, %v5668
        %vm5670 = vweird.f32 %v3205
        %vm5671 = vweird.f32 %v5665
        %vm5672 = vmor %vm5670, %vm5671
        %v5673 = vsel %vm5672, %v5665, %v5669
        %v5674 = vand.u32 2147483647, %v3205
        %vm5675 = vcmp.eq.f32.partialorder %v5674, 8.507059e+37
        %v5676 = vand.u32 %v3205, 2147483648
        %v5677 = vor.u32 1.1754944e-38, %v5676
        %v5678 = vsel %vm5675, %v5677, %v5673
        %v5679 = vmul.f32 1.0, %v5678
        %v5680 = vrcp.pop %v3206
        %v5681 = vmul.f32 %v3206, %v5680
        %v5682 = vsub.f32 1.0, %v5681
        %v5683 = vmul.f32 %v5680, %v5682
        %v5684 = vadd.f32 %v5680, %v5683
        %vm5685 = vweird.f32 %v3206
        %vm5686 = vweird.f32 %v5680
        %vm5687 = vmor %vm5685, %vm5686
        %v5688 = vsel %vm5687, %v5680, %v5684
        %v5689 = vand.u32 2147483647, %v3206
        %vm5690 = vcmp.eq.f32.partialorder %v5689, 8.507059e+37
        %v5691 = vand.u32 %v3206, 2147483648
        %v5692 = vor.u32 1.1754944e-38, %v5691
        %v5693 = vsel %vm5690, %v5692, %v5688
        %v5694 = vmul.f32 1.0, %v5693
        %v5695 = vrcp.pop %v3207
        %v5696 = vmul.f32 %v3207, %v5695
        %v5697 = vsub.f32 1.0, %v5696
        %v5698 = vmul.f32 %v5695, %v5697
        %v5699 = vadd.f32 %v5695, %v5698
        %vm5700 = vweird.f32 %v3207
        %vm5701 = vweird.f32 %v5695
        %vm5702 = vmor %vm5700, %vm5701
        %v5703 = vsel %vm5702, %v5695, %v5699
        %v5704 = vand.u32 2147483647, %v3207
        %vm5705 = vcmp.eq.f32.partialorder %v5704, 8.507059e+37
        %v5706 = vand.u32 %v3207, 2147483648
        %v5707 = vor.u32 1.1754944e-38, %v5706
        %v5708 = vsel %vm5705, %v5707, %v5703
        %v5709 = vmul.f32 1.0, %v5708
        %v5710 = vrcp.pop %v3208
        %v5711 = vmul.f32 %v3208, %v5710
        %v5712 = vsub.f32 1.0, %v5711
        %v5713 = vmul.f32 %v5710, %v5712
        %v5714 = vadd.f32 %v5710, %v5713
        %vm5715 = vweird.f32 %v3208
        %vm5716 = vweird.f32 %v5710
        %vm5717 = vmor %vm5715, %vm5716
        %v5718 = vsel %vm5717, %v5710, %v5714
        %v5719 = vand.u32 2147483647, %v3208
        %vm5720 = vcmp.eq.f32.partialorder %v5719, 8.507059e+37
        %v5721 = vand.u32 %v3208, 2147483648
        %v5722 = vor.u32 1.1754944e-38, %v5721
        %v5723 = vsel %vm5720, %v5722, %v5718
        %v5724 = vmul.f32 1.0, %v5723
        %v5725 = vrcp.pop %v3209
        %v5726 = vmul.f32 %v3209, %v5725
        %v5727 = vsub.f32 1.0, %v5726
        %v5728 = vmul.f32 %v5725, %v5727
        %v5729 = vadd.f32 %v5725, %v5728
        %vm5730 = vweird.f32 %v3209
        %vm5731 = vweird.f32 %v5725
        %vm5732 = vmor %vm5730, %vm5731
        %v5733 = vsel %vm5732, %v5725, %v5729
        %v5734 = vand.u32 2147483647, %v3209
        %vm5735 = vcmp.eq.f32.partialorder %v5734, 8.507059e+37
        %v5736 = vand.u32 %v3209, 2147483648
        %v5737 = vor.u32 1.1754944e-38, %v5736
        %v5738 = vsel %vm5735, %v5737, %v5733
        %v5739 = vmul.f32 1.0, %v5738
        %v5740 = vrcp.pop %v3210
        %v5741 = vmul.f32 %v3210, %v5740
        %v5742 = vsub.f32 1.0, %v5741
        %v5743 = vmul.f32 %v5740, %v5742
        %v5744 = vadd.f32 %v5740, %v5743
        %vm5745 = vweird.f32 %v3210
        %vm5746 = vweird.f32 %v5740
        %vm5747 = vmor %vm5745, %vm5746
        %v5748 = vsel %vm5747, %v5740, %v5744
        %v5749 = vand.u32 2147483647, %v3210
        %vm5750 = vcmp.eq.f32.partialorder %v5749, 8.507059e+37
        %v5751 = vand.u32 %v3210, 2147483648
        %v5752 = vor.u32 1.1754944e-38, %v5751
        %v5753 = vsel %vm5750, %v5752, %v5748
        %v5754 = vmul.f32 1.0, %v5753
        %v5755 = vrcp.pop %v3211
        %v5756 = vmul.f32 %v3211, %v5755
        %v5757 = vsub.f32 1.0, %v5756
        %v5758 = vmul.f32 %v5755, %v5757
        %v5759 = vadd.f32 %v5755, %v5758
        %vm5760 = vweird.f32 %v3211
        %vm5761 = vweird.f32 %v5755
        %vm5762 = vmor %vm5760, %vm5761
        %v5763 = vsel %vm5762, %v5755, %v5759
        %v5764 = vand.u32 2147483647, %v3211
        %vm5765 = vcmp.eq.f32.partialorder %v5764, 8.507059e+37
        %v5766 = vand.u32 %v3211, 2147483648
        %v5767 = vor.u32 1.1754944e-38, %v5766
        %v5768 = vsel %vm5765, %v5767, %v5763
        %v5769 = vmul.f32 1.0, %v5768
        %v5770 = vrcp.pop %v3212
        %v5771 = vmul.f32 %v3212, %v5770
        %v5772 = vsub.f32 1.0, %v5771
        %v5773 = vmul.f32 %v5770, %v5772
        %v5774 = vadd.f32 %v5770, %v5773
        %vm5775 = vweird.f32 %v3212
        %vm5776 = vweird.f32 %v5770
        %vm5777 = vmor %vm5775, %vm5776
        %v5778 = vsel %vm5777, %v5770, %v5774
        %v5779 = vand.u32 2147483647, %v3212
        %vm5780 = vcmp.eq.f32.partialorder %v5779, 8.507059e+37
        %v5781 = vand.u32 %v3212, 2147483648
        %v5782 = vor.u32 1.1754944e-38, %v5781
        %v5783 = vsel %vm5780, %v5782, %v5778
        %v5784 = vmul.f32 1.0, %v5783
        %v5785 = vrcp.pop %v3213
        %v5786 = vmul.f32 %v3213, %v5785
        %v5787 = vsub.f32 1.0, %v5786
        %v5788 = vmul.f32 %v5785, %v5787
        %v5789 = vadd.f32 %v5785, %v5788
        %vm5790 = vweird.f32 %v3213
        %vm5791 = vweird.f32 %v5785
        %vm5792 = vmor %vm5790, %vm5791
        %v5793 = vsel %vm5792, %v5785, %v5789
        %v5794 = vand.u32 2147483647, %v3213
        %vm5795 = vcmp.eq.f32.partialorder %v5794, 8.507059e+37
        %v5796 = vand.u32 %v3213, 2147483648
        %v5797 = vor.u32 1.1754944e-38, %v5796
        %v5798 = vsel %vm5795, %v5797, %v5793
        %v5799 = vmul.f32 1.0, %v5798
        %v5800 = vrcp.pop %v3214
        %v5801 = vmul.f32 %v3214, %v5800
        %v5802 = vsub.f32 1.0, %v5801
        %v5803 = vmul.f32 %v5800, %v5802
        %v5804 = vadd.f32 %v5800, %v5803
        %vm5805 = vweird.f32 %v3214
        %vm5806 = vweird.f32 %v5800
        %vm5807 = vmor %vm5805, %vm5806
        %v5808 = vsel %vm5807, %v5800, %v5804
        %v5809 = vand.u32 2147483647, %v3214
        %vm5810 = vcmp.eq.f32.partialorder %v5809, 8.507059e+37
        %v5811 = vand.u32 %v3214, 2147483648
        %v5812 = vor.u32 1.1754944e-38, %v5811
        %v5813 = vsel %vm5810, %v5812, %v5808
        %v5814 = vmul.f32 1.0, %v5813
        %v5815 = vrcp.pop %v3215
        %v5816 = vmul.f32 %v3215, %v5815
        %v5817 = vsub.f32 1.0, %v5816
        %v5818 = vmul.f32 %v5815, %v5817
        %v5819 = vadd.f32 %v5815, %v5818
        %vm5820 = vweird.f32 %v3215
        %vm5821 = vweird.f32 %v5815
        %vm5822 = vmor %vm5820, %vm5821
        %v5823 = vsel %vm5822, %v5815, %v5819
        %v5824 = vand.u32 2147483647, %v3215
        %vm5825 = vcmp.eq.f32.partialorder %v5824, 8.507059e+37
        %v5826 = vand.u32 %v3215, 2147483648
        %v5827 = vor.u32 1.1754944e-38, %v5826
        %v5828 = vsel %vm5825, %v5827, %v5823
        %v5829 = vmul.f32 1.0, %v5828
        %v5830 = vrcp.pop %v3216
        %v5831 = vmul.f32 %v3216, %v5830
        %v5832 = vsub.f32 1.0, %v5831
        %v5833 = vmul.f32 %v5830, %v5832
        %v5834 = vadd.f32 %v5830, %v5833
        %vm5835 = vweird.f32 %v3216
        %vm5836 = vweird.f32 %v5830
        %vm5837 = vmor %vm5835, %vm5836
        %v5838 = vsel %vm5837, %v5830, %v5834
        %v5839 = vand.u32 2147483647, %v3216
        %vm5840 = vcmp.eq.f32.partialorder %v5839, 8.507059e+37
        %v5841 = vand.u32 %v3216, 2147483648
        %v5842 = vor.u32 1.1754944e-38, %v5841
        %v5843 = vsel %vm5840, %v5842, %v5838
        %v5844 = vmul.f32 1.0, %v5843
        %v5845 = vrcp.pop %v3217
        %v5846 = vmul.f32 %v3217, %v5845
        %v5847 = vsub.f32 1.0, %v5846
        %v5848 = vmul.f32 %v5845, %v5847
        %v5849 = vadd.f32 %v5845, %v5848
        %vm5850 = vweird.f32 %v3217
        %vm5851 = vweird.f32 %v5845
        %vm5852 = vmor %vm5850, %vm5851
        %v5853 = vsel %vm5852, %v5845, %v5849
        %v5854 = vand.u32 2147483647, %v3217
        %vm5855 = vcmp.eq.f32.partialorder %v5854, 8.507059e+37
        %v5856 = vand.u32 %v3217, 2147483648
        %v5857 = vor.u32 1.1754944e-38, %v5856
        %v5858 = vsel %vm5855, %v5857, %v5853
        %v5859 = vmul.f32 1.0, %v5858
        %v5860 = vrcp.pop %v3218
        %v5861 = vmul.f32 %v3218, %v5860
        %v5862 = vsub.f32 1.0, %v5861
        %v5863 = vmul.f32 %v5860, %v5862
        %v5864 = vadd.f32 %v5860, %v5863
        %vm5865 = vweird.f32 %v3218
        %vm5866 = vweird.f32 %v5860
        %vm5867 = vmor %vm5865, %vm5866
        %v5868 = vsel %vm5867, %v5860, %v5864
        %v5869 = vand.u32 2147483647, %v3218
        %vm5870 = vcmp.eq.f32.partialorder %v5869, 8.507059e+37
        %v5871 = vand.u32 %v3218, 2147483648
        %v5872 = vor.u32 1.1754944e-38, %v5871
        %v5873 = vsel %vm5870, %v5872, %v5868
        %v5874 = vmul.f32 1.0, %v5873
        %v5875 = vrcp.pop %v3219
        %v5876 = vmul.f32 %v3219, %v5875
        %v5877 = vsub.f32 1.0, %v5876
        %v5878 = vmul.f32 %v5875, %v5877
        %v5879 = vadd.f32 %v5875, %v5878
        %vm5880 = vweird.f32 %v3219
        %vm5881 = vweird.f32 %v5875
        %vm5882 = vmor %vm5880, %vm5881
        %v5883 = vsel %vm5882, %v5875, %v5879
        %v5884 = vand.u32 2147483647, %v3219
        %vm5885 = vcmp.eq.f32.partialorder %v5884, 8.507059e+37
        %v5886 = vand.u32 %v3219, 2147483648
        %v5887 = vor.u32 1.1754944e-38, %v5886
        %v5888 = vsel %vm5885, %v5887, %v5883
        %v5889 = vmul.f32 1.0, %v5888
        %v5890 = vrcp.pop %v3220
        %v5891 = vmul.f32 %v3220, %v5890
        %v5892 = vsub.f32 1.0, %v5891
        %v5893 = vmul.f32 %v5890, %v5892
        %v5894 = vadd.f32 %v5890, %v5893
        %vm5895 = vweird.f32 %v3220
        %vm5896 = vweird.f32 %v5890
        %vm5897 = vmor %vm5895, %vm5896
        %v5898 = vsel %vm5897, %v5890, %v5894
        %v5899 = vand.u32 2147483647, %v3220
        %vm5900 = vcmp.eq.f32.partialorder %v5899, 8.507059e+37
        %v5901 = vand.u32 %v3220, 2147483648
        %v5902 = vor.u32 1.1754944e-38, %v5901
        %v5903 = vsel %vm5900, %v5902, %v5898
        %v5904 = vmul.f32 1.0, %v5903
        %v5905 = vrcp.pop %v3221
        %v5906 = vmul.f32 %v3221, %v5905
        %v5907 = vsub.f32 1.0, %v5906
        %v5908 = vmul.f32 %v5905, %v5907
        %v5909 = vadd.f32 %v5905, %v5908
        %vm5910 = vweird.f32 %v3221
        %vm5911 = vweird.f32 %v5905
        %vm5912 = vmor %vm5910, %vm5911
        %v5913 = vsel %vm5912, %v5905, %v5909
        %v5914 = vand.u32 2147483647, %v3221
        %vm5915 = vcmp.eq.f32.partialorder %v5914, 8.507059e+37
        %v5916 = vand.u32 %v3221, 2147483648
        %v5917 = vor.u32 1.1754944e-38, %v5916
        %v5918 = vsel %vm5915, %v5917, %v5913
        %v5919 = vmul.f32 1.0, %v5918
        %v5920 = vrcp.pop %v3222
        %v5921 = vmul.f32 %v3222, %v5920
        %v5922 = vsub.f32 1.0, %v5921
        %v5923 = vmul.f32 %v5920, %v5922
        %v5924 = vadd.f32 %v5920, %v5923
        %vm5925 = vweird.f32 %v3222
        %vm5926 = vweird.f32 %v5920
        %vm5927 = vmor %vm5925, %vm5926
        %v5928 = vsel %vm5927, %v5920, %v5924
        %v5929 = vand.u32 2147483647, %v3222
        %vm5930 = vcmp.eq.f32.partialorder %v5929, 8.507059e+37
        %v5931 = vand.u32 %v3222, 2147483648
        %v5932 = vor.u32 1.1754944e-38, %v5931
        %v5933 = vsel %vm5930, %v5932, %v5928
        %v5934 = vmul.f32 1.0, %v5933
        %v5935 = vrcp.pop %v3223
        %v5936 = vmul.f32 %v3223, %v5935
        %v5937 = vsub.f32 1.0, %v5936
        %v5938 = vmul.f32 %v5935, %v5937
        %v5939 = vadd.f32 %v5935, %v5938
        %vm5940 = vweird.f32 %v3223
        %vm5941 = vweird.f32 %v5935
        %vm5942 = vmor %vm5940, %vm5941
        %v5943 = vsel %vm5942, %v5935, %v5939
        %v5944 = vand.u32 2147483647, %v3223
        %vm5945 = vcmp.eq.f32.partialorder %v5944, 8.507059e+37
        %v5946 = vand.u32 %v3223, 2147483648
        %v5947 = vor.u32 1.1754944e-38, %v5946
        %v5948 = vsel %vm5945, %v5947, %v5943
        %v5949 = vmul.f32 1.0, %v5948
        %v5950 = vrcp.pop %v3224
        %v5951 = vmul.f32 %v3224, %v5950
        %v5952 = vsub.f32 1.0, %v5951
        %v5953 = vmul.f32 %v5950, %v5952
        %v5954 = vadd.f32 %v5950, %v5953
        %vm5955 = vweird.f32 %v3224
        %vm5956 = vweird.f32 %v5950
        %vm5957 = vmor %vm5955, %vm5956
        %v5958 = vsel %vm5957, %v5950, %v5954
        %v5959 = vand.u32 2147483647, %v3224
        %vm5960 = vcmp.eq.f32.partialorder %v5959, 8.507059e+37
        %v5961 = vand.u32 %v3224, 2147483648
        %v5962 = vor.u32 1.1754944e-38, %v5961
        %v5963 = vsel %vm5960, %v5962, %v5958
        %v5964 = vmul.f32 1.0, %v5963
        %v5965 = vrcp.pop %v3225
        %v5966 = vmul.f32 %v3225, %v5965
        %v5967 = vsub.f32 1.0, %v5966
        %v5968 = vmul.f32 %v5965, %v5967
        %v5969 = vadd.f32 %v5965, %v5968
        %vm5970 = vweird.f32 %v3225
        %vm5971 = vweird.f32 %v5965
        %vm5972 = vmor %vm5970, %vm5971
        %v5973 = vsel %vm5972, %v5965, %v5969
        %v5974 = vand.u32 2147483647, %v3225
        %vm5975 = vcmp.eq.f32.partialorder %v5974, 8.507059e+37
        %v5976 = vand.u32 %v3225, 2147483648
        %v5977 = vor.u32 1.1754944e-38, %v5976
        %v5978 = vsel %vm5975, %v5977, %v5973
        %v5979 = vmul.f32 1.0, %v5978
        %v5980 = vrcp.pop %v3226
        %v5981 = vmul.f32 %v3226, %v5980
        %v5982 = vsub.f32 1.0, %v5981
        %v5983 = vmul.f32 %v5980, %v5982
        %v5984 = vadd.f32 %v5980, %v5983
        %vm5985 = vweird.f32 %v3226
        %vm5986 = vweird.f32 %v5980
        %vm5987 = vmor %vm5985, %vm5986
        %v5988 = vsel %vm5987, %v5980, %v5984
        %v5989 = vand.u32 2147483647, %v3226
        %vm5990 = vcmp.eq.f32.partialorder %v5989, 8.507059e+37
        %v5991 = vand.u32 %v3226, 2147483648
        %v5992 = vor.u32 1.1754944e-38, %v5991
        %v5993 = vsel %vm5990, %v5992, %v5988
        %v5994 = vmul.f32 1.0, %v5993
        %v5995 = vrcp.pop %v3227
        %v5996 = vmul.f32 %v3227, %v5995
        %v5997 = vsub.f32 1.0, %v5996
        %v5998 = vmul.f32 %v5995, %v5997
        %v5999 = vadd.f32 %v5995, %v5998
        %vm6000 = vweird.f32 %v3227
        %vm6001 = vweird.f32 %v5995
        %vm6002 = vmor %vm6000, %vm6001
        %v6003 = vsel %vm6002, %v5995, %v5999
        %v6004 = vand.u32 2147483647, %v3227
        %vm6005 = vcmp.eq.f32.partialorder %v6004, 8.507059e+37
        %v6006 = vand.u32 %v3227, 2147483648
        %v6007 = vor.u32 1.1754944e-38, %v6006
        %v6008 = vsel %vm6005, %v6007, %v6003
        %v6009 = vmul.f32 1.0, %v6008
        %v6010 = vrcp.pop %v3228
        %v6011 = vmul.f32 %v3228, %v6010
        %v6012 = vsub.f32 1.0, %v6011
        %v6013 = vmul.f32 %v6010, %v6012
        %v6014 = vadd.f32 %v6010, %v6013
        %vm6015 = vweird.f32 %v3228
        %vm6016 = vweird.f32 %v6010
        %vm6017 = vmor %vm6015, %vm6016
        %v6018 = vsel %vm6017, %v6010, %v6014
        %v6019 = vand.u32 2147483647, %v3228
        %vm6020 = vcmp.eq.f32.partialorder %v6019, 8.507059e+37
        %v6021 = vand.u32 %v3228, 2147483648
        %v6022 = vor.u32 1.1754944e-38, %v6021
        %v6023 = vsel %vm6020, %v6022, %v6018
        %v6024 = vmul.f32 1.0, %v6023
        %v6025 = vrcp.pop %v3229
        %v6026 = vmul.f32 %v3229, %v6025
        %v6027 = vsub.f32 1.0, %v6026
        %v6028 = vmul.f32 %v6025, %v6027
        %v6029 = vadd.f32 %v6025, %v6028
        %vm6030 = vweird.f32 %v3229
        %vm6031 = vweird.f32 %v6025
        %vm6032 = vmor %vm6030, %vm6031
        %v6033 = vsel %vm6032, %v6025, %v6029
        %v6034 = vand.u32 2147483647, %v3229
        %vm6035 = vcmp.eq.f32.partialorder %v6034, 8.507059e+37
        %v6036 = vand.u32 %v3229, 2147483648
        %v6037 = vor.u32 1.1754944e-38, %v6036
        %v6038 = vsel %vm6035, %v6037, %v6033
        %v6039 = vmul.f32 1.0, %v6038
        %v6040 = vrcp.pop %v3230
        %v6041 = vmul.f32 %v3230, %v6040
        %v6042 = vsub.f32 1.0, %v6041
        %v6043 = vmul.f32 %v6040, %v6042
        %v6044 = vadd.f32 %v6040, %v6043
        %vm6045 = vweird.f32 %v3230
        %vm6046 = vweird.f32 %v6040
        %vm6047 = vmor %vm6045, %vm6046
        %v6048 = vsel %vm6047, %v6040, %v6044
        %v6049 = vand.u32 2147483647, %v3230
        %vm6050 = vcmp.eq.f32.partialorder %v6049, 8.507059e+37
        %v6051 = vand.u32 %v3230, 2147483648
        %v6052 = vor.u32 1.1754944e-38, %v6051
        %v6053 = vsel %vm6050, %v6052, %v6048
        %v6054 = vmul.f32 1.0, %v6053
        %v6055 = vrcp.pop %v3231
        %v6056 = vmul.f32 %v3231, %v6055
        %v6057 = vsub.f32 1.0, %v6056
        %v6058 = vmul.f32 %v6055, %v6057
        %v6059 = vadd.f32 %v6055, %v6058
        %vm6060 = vweird.f32 %v3231
        %vm6061 = vweird.f32 %v6055
        %vm6062 = vmor %vm6060, %vm6061
        %v6063 = vsel %vm6062, %v6055, %v6059
        %v6064 = vand.u32 2147483647, %v3231
        %vm6065 = vcmp.eq.f32.partialorder %v6064, 8.507059e+37
        %v6066 = vand.u32 %v3231, 2147483648
        %v6067 = vor.u32 1.1754944e-38, %v6066
        %v6068 = vsel %vm6065, %v6067, %v6063
        %v6069 = vmul.f32 1.0, %v6068
        %v6070 = vrcp.pop %v3232
        %v6071 = vmul.f32 %v3232, %v6070
        %v6072 = vsub.f32 1.0, %v6071
        %v6073 = vmul.f32 %v6070, %v6072
        %v6074 = vadd.f32 %v6070, %v6073
        %vm6075 = vweird.f32 %v3232
        %vm6076 = vweird.f32 %v6070
        %vm6077 = vmor %vm6075, %vm6076
        %v6078 = vsel %vm6077, %v6070, %v6074
        %v6079 = vand.u32 2147483647, %v3232
        %vm6080 = vcmp.eq.f32.partialorder %v6079, 8.507059e+37
        %v6081 = vand.u32 %v3232, 2147483648
        %v6082 = vor.u32 1.1754944e-38, %v6081
        %v6083 = vsel %vm6080, %v6082, %v6078
        %v6084 = vmul.f32 1.0, %v6083
        %v6085 = vrcp.pop %v3233
        %v6086 = vmul.f32 %v3233, %v6085
        %v6087 = vsub.f32 1.0, %v6086
        %v6088 = vmul.f32 %v6085, %v6087
        %v6089 = vadd.f32 %v6085, %v6088
        %vm6090 = vweird.f32 %v3233
        %vm6091 = vweird.f32 %v6085
        %vm6092 = vmor %vm6090, %vm6091
        %v6093 = vsel %vm6092, %v6085, %v6089
        %v6094 = vand.u32 2147483647, %v3233
        %vm6095 = vcmp.eq.f32.partialorder %v6094, 8.507059e+37
        %v6096 = vand.u32 %v3233, 2147483648
        %v6097 = vor.u32 1.1754944e-38, %v6096
        %v6098 = vsel %vm6095, %v6097, %v6093
        %v6099 = vmul.f32 1.0, %v6098
        %v6100 = vrcp.pop %v3234
        %v6101 = vmul.f32 %v3234, %v6100
        %v6102 = vsub.f32 1.0, %v6101
        %v6103 = vmul.f32 %v6100, %v6102
        %v6104 = vadd.f32 %v6100, %v6103
        %vm6105 = vweird.f32 %v3234
        %vm6106 = vweird.f32 %v6100
        %vm6107 = vmor %vm6105, %vm6106
        %v6108 = vsel %vm6107, %v6100, %v6104
        %v6109 = vand.u32 2147483647, %v3234
        %vm6110 = vcmp.eq.f32.partialorder %v6109, 8.507059e+37
        %v6111 = vand.u32 %v3234, 2147483648
        %v6112 = vor.u32 1.1754944e-38, %v6111
        %v6113 = vsel %vm6110, %v6112, %v6108
        %v6114 = vmul.f32 1.0, %v6113
        %v6115 = vmul.f32 %v1889, %v3249
        %v6116 = vmul.f32 %v1938, %v3264
        %v6117 = vmul.f32 %v1987, %v3279
        %v6118 = vmul.f32 %v2036, %v3294
        %v6119 = vmul.f32 %v2085, %v3309
        %v6120 = vmul.f32 %v2134, %v3324
        %v6121 = vmul.f32 %v2183, %v3339
        %v6122 = vmul.f32 %v2232, %v3354
        %v6123 = vmul.f32 %v2281, %v3369
        %v6124 = vmul.f32 %v2330, %v3384
        %v6125 = vmul.f32 %v2379, %v3399
        %v6126 = vmul.f32 %v2428, %v3414
        %v6127 = vmul.f32 %v1891, %v3429
        %v6128 = vmul.f32 %v1940, %v3444
        %v6129 = vmul.f32 %v1989, %v3459
        %v6130 = vmul.f32 %v2038, %v3474
        %v6131 = vmul.f32 %v2087, %v3489
        %v6132 = vmul.f32 %v2136, %v3504
        %v6133 = vmul.f32 %v2185, %v3519
        %v6134 = vmul.f32 %v2234, %v3534
        %v6135 = vmul.f32 %v2283, %v3549
        %v6136 = vmul.f32 %v2332, %v3564
        %v6137 = vmul.f32 %v2381, %v3579
        %v6138 = vmul.f32 %v2430, %v3594
        %v6139 = vmul.f32 %v1894, %v3609
        %v6140 = vmul.f32 %v1943, %v3624
        %v6141 = vmul.f32 %v1992, %v3639
        %v6142 = vmul.f32 %v2041, %v3654
        %v6143 = vmul.f32 %v2090, %v3669
        %v6144 = vmul.f32 %v2139, %v3684
        %v6145 = vmul.f32 %v2188, %v3699
        %v6146 = vmul.f32 %v2237, %v3714
        %v6147 = vmul.f32 %v2286, %v3729
        %v6148 = vmul.f32 %v2335, %v3744
        %v6149 = vmul.f32 %v2384, %v3759
        %v6150 = vmul.f32 %v2433, %v3774
        %v6151 = vmul.f32 %v1896, %v3789
        %v6152 = vmul.f32 %v1945, %v3804
        %v6153 = vmul.f32 %v1994, %v3819
        %v6154 = vmul.f32 %v2043, %v3834
        %v6155 = vmul.f32 %v2092, %v3849
        %v6156 = vmul.f32 %v2141, %v3864
        %v6157 = vmul.f32 %v2190, %v3879
        %v6158 = vmul.f32 %v2239, %v3894
        %v6159 = vmul.f32 %v2288, %v3909
        %v6160 = vmul.f32 %v2337, %v3924
        %v6161 = vmul.f32 %v2386, %v3939
        %v6162 = vmul.f32 %v2435, %v3954
        %v6163 = vmul.f32 %v1899, %v3969
        %v6164 = vmul.f32 %v1948, %v3984
        %v6165 = vmul.f32 %v1997, %v3999
        %v6166 = vmul.f32 %v2046, %v4014
        %v6167 = vmul.f32 %v2095, %v4029
        %v6168 = vmul.f32 %v2144, %v4044
        %v6169 = vmul.f32 %v2193, %v4059
        %v6170 = vmul.f32 %v2242, %v4074
        %v6171 = vmul.f32 %v2291, %v4089
        %v6172 = vmul.f32 %v2340, %v4104
        %v6173 = vmul.f32 %v2389, %v4119
        %v6174 = vmul.f32 %v2438, %v4134
        %v6175 = vmul.f32 %v1901, %v4149
        %v6176 = vmul.f32 %v1950, %v4164
        %v6177 = vmul.f32 %v1999, %v4179
        %v6178 = vmul.f32 %v2048, %v4194
        %v6179 = vmul.f32 %v2097, %v4209
        %v6180 = vmul.f32 %v2146, %v4224
        %v6181 = vmul.f32 %v2195, %v4239
        %v6182 = vmul.f32 %v2244, %v4254
        %v6183 = vmul.f32 %v2293, %v4269
        %v6184 = vmul.f32 %v2342, %v4284
        %v6185 = vmul.f32 %v2391, %v4299
        %v6186 = vmul.f32 %v2440, %v4314
        %v6187 = vmul.f32 %v1904, %v4329
        %v6188 = vmul.f32 %v1953, %v4344
        %v6189 = vmul.f32 %v2002, %v4359
        %v6190 = vmul.f32 %v2051, %v4374
        %v6191 = vmul.f32 %v2100, %v4389
        %v6192 = vmul.f32 %v2149, %v4404
        %v6193 = vmul.f32 %v2198, %v4419
        %v6194 = vmul.f32 %v2247, %v4434
        %v6195 = vmul.f32 %v2296, %v4449
        %v6196 = vmul.f32 %v2345, %v4464
        %v6197 = vmul.f32 %v2394, %v4479
        %v6198 = vmul.f32 %v2443, %v4494
        %v6199 = vmul.f32 %v1906, %v4509
        %v6200 = vmul.f32 %v1955, %v4524
        %v6201 = vmul.f32 %v2004, %v4539
        %v6202 = vmul.f32 %v2053, %v4554
        %v6203 = vmul.f32 %v2102, %v4569
        %v6204 = vmul.f32 %v2151, %v4584
        %v6205 = vmul.f32 %v2200, %v4599
        %v6206 = vmul.f32 %v2249, %v4614
        %v6207 = vmul.f32 %v2298, %v4629
        %v6208 = vmul.f32 %v2347, %v4644
        %v6209 = vmul.f32 %v2396, %v4659
        %v6210 = vmul.f32 %v2445, %v4674
        %v6211 = vmul.f32 %v1909, %v4689
        %v6212 = vmul.f32 %v1958, %v4704
        %v6213 = vmul.f32 %v2007, %v4719
        %v6214 = vmul.f32 %v2056, %v4734
        %v6215 = vmul.f32 %v2105, %v4749
        %v6216 = vmul.f32 %v2154, %v4764
        %v6217 = vmul.f32 %v2203, %v4779
        %v6218 = vmul.f32 %v2252, %v4794
        %v6219 = vmul.f32 %v2301, %v4809
        %v6220 = vmul.f32 %v2350, %v4824
        %v6221 = vmul.f32 %v2399, %v4839
        %v6222 = vmul.f32 %v2448, %v4854
        %v6223 = vmul.f32 %v1911, %v4869
        %v6224 = vmul.f32 %v1960, %v4884
        %v6225 = vmul.f32 %v2009, %v4899
        %v6226 = vmul.f32 %v2058, %v4914
        %v6227 = vmul.f32 %v2107, %v4929
        %v6228 = vmul.f32 %v2156, %v4944
        %v6229 = vmul.f32 %v2205, %v4959
        %v6230 = vmul.f32 %v2254, %v4974
        %v6231 = vmul.f32 %v2303, %v4989
        %v6232 = vmul.f32 %v2352, %v5004
        %v6233 = vmul.f32 %v2401, %v5019
        %v6234 = vmul.f32 %v2450, %v5034
        %v6235 = vmul.f32 %v1914, %v5049
        %v6236 = vmul.f32 %v1963, %v5064
        %v6237 = vmul.f32 %v2012, %v5079
        %v6238 = vmul.f32 %v2061, %v5094
        %v6239 = vmul.f32 %v2110, %v5109
        %v6240 = vmul.f32 %v2159, %v5124
        %v6241 = vmul.f32 %v2208, %v5139
        %v6242 = vmul.f32 %v2257, %v5154
        %v6243 = vmul.f32 %v2306, %v5169
        %v6244 = vmul.f32 %v2355, %v5184
        %v6245 = vmul.f32 %v2404, %v5199
        %v6246 = vmul.f32 %v2453, %v5214
        %v6247 = vmul.f32 %v1916, %v5229
        %v6248 = vmul.f32 %v1965, %v5244
        %v6249 = vmul.f32 %v2014, %v5259
        %v6250 = vmul.f32 %v2063, %v5274
        %v6251 = vmul.f32 %v2112, %v5289
        %v6252 = vmul.f32 %v2161, %v5304
        %v6253 = vmul.f32 %v2210, %v5319
        %v6254 = vmul.f32 %v2259, %v5334
        %v6255 = vmul.f32 %v2308, %v5349
        %v6256 = vmul.f32 %v2357, %v5364
        %v6257 = vmul.f32 %v2406, %v5379
        %v6258 = vmul.f32 %v2455, %v5394
        %v6259 = vmul.f32 %v1919, %v5409
        %v6260 = vmul.f32 %v1968, %v5424
        %v6261 = vmul.f32 %v2017, %v5439
        %v6262 = vmul.f32 %v2066, %v5454
        %v6263 = vmul.f32 %v2115, %v5469
        %v6264 = vmul.f32 %v2164, %v5484
        %v6265 = vmul.f32 %v2213, %v5499
        %v6266 = vmul.f32 %v2262, %v5514
        %v6267 = vmul.f32 %v2311, %v5529
        %v6268 = vmul.f32 %v2360, %v5544
        %v6269 = vmul.f32 %v2409, %v5559
        %v6270 = vmul.f32 %v2458, %v5574
        %v6271 = vmul.f32 %v1921, %v5589
        %v6272 = vmul.f32 %v1970, %v5604
        %v6273 = vmul.f32 %v2019, %v5619
        %v6274 = vmul.f32 %v2068, %v5634
        %v6275 = vmul.f32 %v2117, %v5649
        %v6276 = vmul.f32 %v2166, %v5664
        %v6277 = vmul.f32 %v2215, %v5679
        %v6278 = vmul.f32 %v2264, %v5694
        %v6279 = vmul.f32 %v2313, %v5709
        %v6280 = vmul.f32 %v2362, %v5724
        %v6281 = vmul.f32 %v2411, %v5739
        %v6282 = vmul.f32 %v2460, %v5754
        %v6283 = vmul.f32 %v1924, %v5769
        %v6284 = vmul.f32 %v1973, %v5784
        %v6285 = vmul.f32 %v2022, %v5799
        %v6286 = vmul.f32 %v2071, %v5814
        %v6287 = vmul.f32 %v2120, %v5829
        %v6288 = vmul.f32 %v2169, %v5844
        %v6289 = vmul.f32 %v2218, %v5859
        %v6290 = vmul.f32 %v2267, %v5874
        %v6291 = vmul.f32 %v2316, %v5889
        %v6292 = vmul.f32 %v2365, %v5904
        %v6293 = vmul.f32 %v2414, %v5919
        %v6294 = vmul.f32 %v2463, %v5934
        %v6295 = vmul.f32 %v1926, %v5949
        %v6296 = vmul.f32 %v1975, %v5964
        %v6297 = vmul.f32 %v2024, %v5979
        %v6298 = vmul.f32 %v2073, %v5994
        %v6299 = vmul.f32 %v2122, %v6009
        %v6300 = vmul.f32 %v2171, %v6024
        %v6301 = vmul.f32 %v2220, %v6039
        %v6302 = vmul.f32 %v2269, %v6054
        %v6303 = vmul.f32 %v2318, %v6069
        %v6304 = vmul.f32 %v2367, %v6084
        %v6305 = vmul.f32 %v2416, %v6099
        %v6306 = vmul.f32 %v2465, %v6114
        %s6307 = smul.u32 %s28, 128
        %v6308 = vlaneseq
        %v6309 = vand.u32 %v6308, 127
        %v6310 = vstv %s6307
        %v6311 = vadd.s32 %v6310, %v6309
        %vm6312 = vcmp.lt.s32.totalorder %v6311, 256
        %v6313 = vsel %vm6312, 1.0, 0.0
        %v6314 = vld [vmem:[#allocation2] sm:$0xff]
        %v6315 = vld [vmem:[#allocation2 + $0x8] sm:$0xf]
        %6316 = vmatpush.msra.mxu0 %v6295
        %6317 = vmatpush.msra.mxu0 %v6283
        %6318 = vmatpush.msra.mxu0 %v6271
        %6319 = vmatpush.msra.mxu0 %v6259
        %6320 = vmatpush.msra.mxu0 %v6247
        %6321 = vmatpush.msra.mxu0 %v6235
        %6322 = vmatpush.msra.mxu0 %v6223
        %6323 = vmatpush.msra.mxu0 %v6211
        %6324 = vmatpush.msra.mxu0 %v6199
        %6325 = vmatpush.msra.mxu0 %v6187
        %6326 = vmatpush.msra.mxu0 %v6175
        %6327 = vmatpush.msra.mxu0 %v6163
        %6328 = vmatpush.msra.mxu0 %v6151
        %6329 = vmatpush.msra.mxu0 %v6139
        %6330 = vmatpush.msra.mxu0 %v6127
        %6331 = vmatpush.msra.mxu0 %v6115
        %6332 = vmatmul.f32.gmra.mxu0 %v6313
        %v6333 = vpop.f32.mrf.mxu0
        %v6334 = vadd.f32 0.0, %v6333
        %6335 = vdwg.mxu0
        %6336 = vmatpush.msra.mxu0 %v6296
        %6337 = vmatpush.msra.mxu0 %v6284
        %6338 = vmatpush.msra.mxu0 %v6272
        %6339 = vmatpush.msra.mxu0 %v6260
        %6340 = vmatpush.msra.mxu0 %v6248
        %6341 = vmatpush.msra.mxu0 %v6236
        %6342 = vmatpush.msra.mxu0 %v6224
        %6343 = vmatpush.msra.mxu0 %v6212
        %6344 = vmatpush.msra.mxu0 %v6200
        %6345 = vmatpush.msra.mxu0 %v6188
        %6346 = vmatpush.msra.mxu0 %v6176
        %6347 = vmatpush.msra.mxu0 %v6164
        %6348 = vmatpush.msra.mxu0 %v6152
        %6349 = vmatpush.msra.mxu0 %v6140
        %6350 = vmatpush.msra.mxu0 %v6128
        %6351 = vmatpush.msra.mxu0 %v6116
        %6352 = vmatmul.f32.gmra.mxu0 %v6313
        %v6353 = vpop.f32.mrf.mxu0
        %v6354 = vadd.f32 0.0, %v6353
        %6355 = vdwg.mxu0
        %6356 = vmatpush.msra.mxu0 %v6297
        %6357 = vmatpush.msra.mxu0 %v6285
        %6358 = vmatpush.msra.mxu0 %v6273
        %6359 = vmatpush.msra.mxu0 %v6261
        %6360 = vmatpush.msra.mxu0 %v6249
        %6361 = vmatpush.msra.mxu0 %v6237
        %6362 = vmatpush.msra.mxu0 %v6225
        %6363 = vmatpush.msra.mxu0 %v6213
        %6364 = vmatpush.msra.mxu0 %v6201
        %6365 = vmatpush.msra.mxu0 %v6189
        %6366 = vmatpush.msra.mxu0 %v6177
        %6367 = vmatpush.msra.mxu0 %v6165
        %6368 = vmatpush.msra.mxu0 %v6153
        %6369 = vmatpush.msra.mxu0 %v6141
        %6370 = vmatpush.msra.mxu0 %v6129
        %6371 = vmatpush.msra.mxu0 %v6117
        %6372 = vmatmul.f32.gmra.mxu0 %v6313
        %v6373 = vpop.f32.mrf.mxu0
        %v6374 = vadd.f32 0.0, %v6373
        %6375 = vdwg.mxu0
        %6376 = vmatpush.msra.mxu0 %v6298
        %6377 = vmatpush.msra.mxu0 %v6286
        %6378 = vmatpush.msra.mxu0 %v6274
        %6379 = vmatpush.msra.mxu0 %v6262
        %6380 = vmatpush.msra.mxu0 %v6250
        %6381 = vmatpush.msra.mxu0 %v6238
        %6382 = vmatpush.msra.mxu0 %v6226
        %6383 = vmatpush.msra.mxu0 %v6214
        %6384 = vmatpush.msra.mxu0 %v6202
        %6385 = vmatpush.msra.mxu0 %v6190
        %6386 = vmatpush.msra.mxu0 %v6178
        %6387 = vmatpush.msra.mxu0 %v6166
        %6388 = vmatpush.msra.mxu0 %v6154
        %6389 = vmatpush.msra.mxu0 %v6142
        %6390 = vmatpush.msra.mxu0 %v6130
        %6391 = vmatpush.msra.mxu0 %v6118
        %6392 = vmatmul.f32.gmra.mxu0 %v6313
        %v6393 = vpop.f32.mrf.mxu0
        %v6394 = vadd.f32 0.0, %v6393
        %6395 = vdwg.mxu0
        %6396 = vmatpush.msra.mxu0 %v6299
        %6397 = vmatpush.msra.mxu0 %v6287
        %6398 = vmatpush.msra.mxu0 %v6275
        %6399 = vmatpush.msra.mxu0 %v6263
        %6400 = vmatpush.msra.mxu0 %v6251
        %6401 = vmatpush.msra.mxu0 %v6239
        %6402 = vmatpush.msra.mxu0 %v6227
        %6403 = vmatpush.msra.mxu0 %v6215
        %6404 = vmatpush.msra.mxu0 %v6203
        %6405 = vmatpush.msra.mxu0 %v6191
        %6406 = vmatpush.msra.mxu0 %v6179
        %6407 = vmatpush.msra.mxu0 %v6167
        %6408 = vmatpush.msra.mxu0 %v6155
        %6409 = vmatpush.msra.mxu0 %v6143
        %6410 = vmatpush.msra.mxu0 %v6131
        %6411 = vmatpush.msra.mxu0 %v6119
        %6412 = vmatmul.f32.gmra.mxu0 %v6313
        %v6413 = vpop.f32.mrf.mxu0
        %v6414 = vadd.f32 0.0, %v6413
        %6415 = vdwg.mxu0
        %6416 = vmatpush.msra.mxu0 %v6300
        %6417 = vmatpush.msra.mxu0 %v6288
        %6418 = vmatpush.msra.mxu0 %v6276
        %6419 = vmatpush.msra.mxu0 %v6264
        %6420 = vmatpush.msra.mxu0 %v6252
        %6421 = vmatpush.msra.mxu0 %v6240
        %6422 = vmatpush.msra.mxu0 %v6228
        %6423 = vmatpush.msra.mxu0 %v6216
        %6424 = vmatpush.msra.mxu0 %v6204
        %6425 = vmatpush.msra.mxu0 %v6192
        %6426 = vmatpush.msra.mxu0 %v6180
        %6427 = vmatpush.msra.mxu0 %v6168
        %6428 = vmatpush.msra.mxu0 %v6156
        %6429 = vmatpush.msra.mxu0 %v6144
        %6430 = vmatpush.msra.mxu0 %v6132
        %6431 = vmatpush.msra.mxu0 %v6120
        %6432 = vmatmul.f32.gmra.mxu0 %v6313
        %v6433 = vpop.f32.mrf.mxu0
        %v6434 = vadd.f32 0.0, %v6433
        %6435 = vdwg.mxu0
        %6436 = vmatpush.msra.mxu0 %v6301
        %6437 = vmatpush.msra.mxu0 %v6289
        %6438 = vmatpush.msra.mxu0 %v6277
        %6439 = vmatpush.msra.mxu0 %v6265
        %6440 = vmatpush.msra.mxu0 %v6253
        %6441 = vmatpush.msra.mxu0 %v6241
        %6442 = vmatpush.msra.mxu0 %v6229
        %6443 = vmatpush.msra.mxu0 %v6217
        %6444 = vmatpush.msra.mxu0 %v6205
        %6445 = vmatpush.msra.mxu0 %v6193
        %6446 = vmatpush.msra.mxu0 %v6181
        %6447 = vmatpush.msra.mxu0 %v6169
        %6448 = vmatpush.msra.mxu0 %v6157
        %6449 = vmatpush.msra.mxu0 %v6145
        %6450 = vmatpush.msra.mxu0 %v6133
        %6451 = vmatpush.msra.mxu0 %v6121
        %6452 = vmatmul.f32.gmra.mxu0 %v6313
        %v6453 = vpop.f32.mrf.mxu0
        %v6454 = vadd.f32 0.0, %v6453
        %6455 = vdwg.mxu0
        %6456 = vmatpush.msra.mxu0 %v6302
        %6457 = vmatpush.msra.mxu0 %v6290
        %6458 = vmatpush.msra.mxu0 %v6278
        %6459 = vmatpush.msra.mxu0 %v6266
        %6460 = vmatpush.msra.mxu0 %v6254
        %6461 = vmatpush.msra.mxu0 %v6242
        %6462 = vmatpush.msra.mxu0 %v6230
        %6463 = vmatpush.msra.mxu0 %v6218
        %6464 = vmatpush.msra.mxu0 %v6206
        %6465 = vmatpush.msra.mxu0 %v6194
        %6466 = vmatpush.msra.mxu0 %v6182
        %6467 = vmatpush.msra.mxu0 %v6170
        %6468 = vmatpush.msra.mxu0 %v6158
        %6469 = vmatpush.msra.mxu0 %v6146
        %6470 = vmatpush.msra.mxu0 %v6134
        %6471 = vmatpush.msra.mxu0 %v6122
        %6472 = vmatmul.f32.gmra.mxu0 %v6313
        %v6473 = vpop.f32.mrf.mxu0
        %v6474 = vadd.f32 0.0, %v6473
        %6475 = vdwg.mxu0
        %6476 = vmatpush.msra.mxu0 %v6303
        %6477 = vmatpush.msra.mxu0 %v6291
        %6478 = vmatpush.msra.mxu0 %v6279
        %6479 = vmatpush.msra.mxu0 %v6267
        %6480 = vmatpush.msra.mxu0 %v6255
        %6481 = vmatpush.msra.mxu0 %v6243
        %6482 = vmatpush.msra.mxu0 %v6231
        %6483 = vmatpush.msra.mxu0 %v6219
        %6484 = vmatpush.msra.mxu0 %v6207
        %6485 = vmatpush.msra.mxu0 %v6195
        %6486 = vmatpush.msra.mxu0 %v6183
        %6487 = vmatpush.msra.mxu0 %v6171
        %6488 = vmatpush.msra.mxu0 %v6159
        %6489 = vmatpush.msra.mxu0 %v6147
        %6490 = vmatpush.msra.mxu0 %v6135
        %6491 = vmatpush.msra.mxu0 %v6123
        %6492 = vmatmul.f32.gmra.mxu0 %v6313
        %v6493 = vpop.f32.mrf.mxu0
        %v6494 = vadd.f32 0.0, %v6493
        %6495 = vdwg.mxu0
        %6496 = vmatpush.msra.mxu0 %v6304
        %6497 = vmatpush.msra.mxu0 %v6292
        %6498 = vmatpush.msra.mxu0 %v6280
        %6499 = vmatpush.msra.mxu0 %v6268
        %6500 = vmatpush.msra.mxu0 %v6256
        %6501 = vmatpush.msra.mxu0 %v6244
        %6502 = vmatpush.msra.mxu0 %v6232
        %6503 = vmatpush.msra.mxu0 %v6220
        %6504 = vmatpush.msra.mxu0 %v6208
        %6505 = vmatpush.msra.mxu0 %v6196
        %6506 = vmatpush.msra.mxu0 %v6184
        %6507 = vmatpush.msra.mxu0 %v6172
        %6508 = vmatpush.msra.mxu0 %v6160
        %6509 = vmatpush.msra.mxu0 %v6148
        %6510 = vmatpush.msra.mxu0 %v6136
        %6511 = vmatpush.msra.mxu0 %v6124
        %6512 = vmatmul.f32.gmra.mxu0 %v6313
        %v6513 = vpop.f32.mrf.mxu0
        %v6514 = vadd.f32 0.0, %v6513
        %6515 = vdwg.mxu0
        %6516 = vmatpush.msra.mxu0 %v6305
        %6517 = vmatpush.msra.mxu0 %v6293
        %6518 = vmatpush.msra.mxu0 %v6281
        %6519 = vmatpush.msra.mxu0 %v6269
        %6520 = vmatpush.msra.mxu0 %v6257
        %6521 = vmatpush.msra.mxu0 %v6245
        %6522 = vmatpush.msra.mxu0 %v6233
        %6523 = vmatpush.msra.mxu0 %v6221
        %6524 = vmatpush.msra.mxu0 %v6209
        %6525 = vmatpush.msra.mxu0 %v6197
        %6526 = vmatpush.msra.mxu0 %v6185
        %6527 = vmatpush.msra.mxu0 %v6173
        %6528 = vmatpush.msra.mxu0 %v6161
        %6529 = vmatpush.msra.mxu0 %v6149
        %6530 = vmatpush.msra.mxu0 %v6137
        %6531 = vmatpush.msra.mxu0 %v6125
        %6532 = vmatmul.f32.gmra.mxu0 %v6313
        %v6533 = vpop.f32.mrf.mxu0
        %v6534 = vadd.f32 0.0, %v6533
        %6535 = vdwg.mxu0
        %6536 = vmatpush.msra.mxu0 %v6306
        %6537 = vmatpush.msra.mxu0 %v6294
        %6538 = vmatpush.msra.mxu0 %v6282
        %6539 = vmatpush.msra.mxu0 %v6270
        %6540 = vmatpush.msra.mxu0 %v6258
        %6541 = vmatpush.msra.mxu0 %v6246
        %6542 = vmatpush.msra.mxu0 %v6234
        %6543 = vmatpush.msra.mxu0 %v6222
        %6544 = vmatpush.msra.mxu0 %v6210
        %6545 = vmatpush.msra.mxu0 %v6198
        %6546 = vmatpush.msra.mxu0 %v6186
        %6547 = vmatpush.msra.mxu0 %v6174
        %6548 = vmatpush.msra.mxu0 %v6162
        %6549 = vmatpush.msra.mxu0 %v6150
        %6550 = vmatpush.msra.mxu0 %v6138
        %6551 = vmatpush.msra.mxu0 %v6126
        %6552 = vmatmul.f32.gmra.mxu0 %v6313
        %v6553 = vpop.f32.mrf.mxu0
        %v6554 = vadd.f32 0.0, %v6553
        %6555 = vdwg.mxu0
        %v6568 = vrot.slane %v6354, 7
        %v6569 = vrot.slane %v6374, 6
        %v6570 = vrot.slane %v6394, 5
        %v6571 = vrot.slane %v6414, 4
        %v6572 = vrot.slane %v6434, 3
        %v6573 = vrot.slane %v6454, 2
        %v6574 = vrot.slane %v6474, 1
        %v6575 = vrot.slane %v6514, 7
        %v6576 = vrot.slane %v6534, 6
        %v6577 = vrot.slane %v6554, 5
        %vm6578 = vcmask 1040384
        %v6579 = vsel %vm6578, %v6334, %v6568
        %vm6580 = vcmask 1042434
        %v6581 = vsel %vm6580, %v6569, %v6570
        %vm6582 = vcmask 1041408
        %v6583 = vsel %vm6582, %v6579, %v6581
        %vm6584 = vcmask 1044484
        %v6585 = vsel %vm6584, %v6571, %v6572
        %vm6586 = vcmask 1046534
        %v6587 = vsel %vm6586, %v6573, %v6574
        %vm6588 = vcmask 1045508
        %v6589 = vsel %vm6588, %v6585, %v6587
        %vm6590 = vcmask 1043456
        %v6591 = vsel %vm6590, %v6583, %v6589
        %v6592 = vsel %vm6578, %v6494, %v6575
        %v6593 = vsel %vm6580, %v6576, %v6577
        %v6594 = vsel %vm6582, %v6592, %v6593
        %v6597 = vadd.f32 %v6314, %v6591
        %v6598 = vadd.f32 %v6315, %v6594
        %6599 = vst [vmem:[#allocation2] sm:$0xff] %v6597
        %v6600 = vlaneseq
        %vm6601 = vcmp.ge.s32.totalorder %v6600, 0
        %vm6602 = vcmp.lt.s32.totalorder %v6600, 512
        %vm6603 = vmand %vm6601, %vm6602
        %6604 = vst.msk [vmem:[#allocation2 + $0x8] sm:$0xf] %vm6603, %v6598
        %p6605 = scmp.eq.s32.totalorder %s28, 1
        // Predicated region
        $region61: #{my_model_forward.1} parent=55 // pred_check
          %p6606 = pneg %p6605
        $region62: #{my_model_forward.1} parent=55 // pred_check_branch
          %6608 = sbr.rel (%p6606) target = $region64
        $region63: #{my_model_forward.1} parent=55 // pred_region
          %v6609 = vld [vmem:[#allocation2] sm:$0xff]
          %v6610 = vld [vmem:[#allocation2 + $0x8] sm:$0xf]
          %v6611 = vmul.f32 %v6609, 0.00390625
          %v6612 = vmul.f32 %v6610, 0.00390625
          %v6615 = vperm.slane %v6611, 0
          %v6616 = vperm.slane %v6611, 1
          %v6617 = vperm.slane %v6611, 2
          %v6618 = vperm.slane %v6611, 3
          %v6619 = vperm.slane %v6611, 4
          %v6620 = vperm.slane %v6611, 5
          %v6621 = vperm.slane %v6611, 6
          %v6622 = vperm.slane %v6611, 7
          %v6623 = vperm.slane %v6612, 0
          %v6624 = vperm.slane %v6612, 1
          %v6625 = vperm.slane %v6612, 2
          %v6626 = vperm.slane %v6612, 3
          %v6639 = vpack.c.bf16 %v6615, %v6615
          %v6640 = vpack.c.bf16 %v6616, %v6616
          %v6641 = vpack.c.bf16 %v6617, %v6617
          %v6642 = vpack.c.bf16 %v6618, %v6618
          %v6643 = vpack.c.bf16 %v6619, %v6619
          %v6644 = vpack.c.bf16 %v6620, %v6620
          %v6645 = vpack.c.bf16 %v6621, %v6621
          %v6646 = vpack.c.bf16 %v6622, %v6622
          %v6647 = vpack.c.bf16 %v6623, %v6623
          %v6648 = vpack.c.bf16 %v6624, %v6624
          %v6649 = vpack.c.bf16 %v6625, %v6625
          %v6650 = vpack.c.bf16 %v6626, %v6626
          %v6651 = vld [vmem:[%s7] sm:$0xf]
          %v6652 = vld [vmem:[%s7 + $0x4] sm:$0xf]
          %v6653 = vld [vmem:[%s7 + $0x8] sm:$0xf]
          %v6654 = vld [vmem:[%s7 + $0xc] sm:$0xf]
          %v6655 = vld [vmem:[%s7 + $0x10] sm:$0xf]
          %v6656 = vld [vmem:[%s7 + $0x14] sm:$0xf]
          %v6657 = vld [vmem:[%s7 + $0x18] sm:$0xf]
          %v6658 = vld [vmem:[%s7 + $0x1c] sm:$0xf]
          %v6659 = vld [vmem:[%s7 + $0x20] sm:$0xf]
          %v6660 = vld [vmem:[%s7 + $0x24] sm:$0xf]
          %v6661 = vld [vmem:[%s7 + $0x28] sm:$0xf]
          %v6662 = vld [vmem:[%s7 + $0x2c] sm:$0xf]
          %v6663 = vld [vmem:[%s7 + $0x30] sm:$0xf]
          %v6664 = vld [vmem:[%s7 + $0x34] sm:$0xf]
          %v6665 = vld [vmem:[%s7 + $0x38] sm:$0xf]
          %v6666 = vld [vmem:[%s7 + $0x3c] sm:$0xf]
          %v6667 = vld [vmem:[%s7 + $0x40] sm:$0xf]
          %v6668 = vld [vmem:[%s7 + $0x44] sm:$0xf]
          %v6669 = vld [vmem:[%s7 + $0x48] sm:$0xf]
          %v6670 = vld [vmem:[%s7 + $0x4c] sm:$0xf]
          %v6671 = vld [vmem:[%s7 + $0x50] sm:$0xf]
          %v6672 = vld [vmem:[%s7 + $0x54] sm:$0xf]
          %v6673 = vld [vmem:[%s7 + $0x58] sm:$0xf]
          %v6674 = vld [vmem:[%s7 + $0x5c] sm:$0xf]
          %v6675 = vld [vmem:[%s7 + $0x60] sm:$0xf]
          %v6676 = vld [vmem:[%s7 + $0x64] sm:$0xf]
          %v6677 = vld [vmem:[%s7 + $0x68] sm:$0xf]
          %v6678 = vld [vmem:[%s7 + $0x6c] sm:$0xf]
          %v6679 = vld [vmem:[%s7 + $0x70] sm:$0xf]
          %v6680 = vld [vmem:[%s7 + $0x74] sm:$0xf]
          %v6681 = vld [vmem:[%s7 + $0x78] sm:$0xf]
          %v6682 = vld [vmem:[%s7 + $0x7c] sm:$0xf]
          %v6683 = vld [vmem:[%s7 + $0x80] sm:$0xf]
          %v6684 = vld [vmem:[%s7 + $0x84] sm:$0xf]
          %v6685 = vld [vmem:[%s7 + $0x88] sm:$0xf]
          %v6686 = vld [vmem:[%s7 + $0x8c] sm:$0xf]
          %v6687 = vld [vmem:[%s7 + $0x90] sm:$0xf]
          %v6688 = vld [vmem:[%s7 + $0x94] sm:$0xf]
          %v6689 = vld [vmem:[%s7 + $0x98] sm:$0xf]
          %v6690 = vld [vmem:[%s7 + $0x9c] sm:$0xf]
          %v6691 = vld [vmem:[%s7 + $0xa0] sm:$0xf]
          %v6692 = vld [vmem:[%s7 + $0xa4] sm:$0xf]
          %v6693 = vld [vmem:[%s7 + $0xa8] sm:$0xf]
          %v6694 = vld [vmem:[%s7 + $0xac] sm:$0xf]
          %v6695 = vld [vmem:[%s7 + $0xb0] sm:$0xf]
          %v6696 = vld [vmem:[%s7 + $0xb4] sm:$0xf]
          %v6697 = vld [vmem:[%s7 + $0xb8] sm:$0xf]
          %v6698 = vld [vmem:[%s7 + $0xbc] sm:$0xf]
          %v6699 = vld [vmem:[%s7 + $0xc0] sm:$0xf]
          %v6700 = vld [vmem:[%s7 + $0xc4] sm:$0xf]
          %v6701 = vld [vmem:[%s7 + $0xc8] sm:$0xf]
          %v6702 = vld [vmem:[%s7 + $0xcc] sm:$0xf]
          %v6703 = vld [vmem:[%s7 + $0xd0] sm:$0xf]
          %v6704 = vld [vmem:[%s7 + $0xd4] sm:$0xf]
          %v6705 = vld [vmem:[%s7 + $0xd8] sm:$0xf]
          %v6706 = vld [vmem:[%s7 + $0xdc] sm:$0xf]
          %v6707 = vld [vmem:[%s7 + $0xe0] sm:$0xf]
          %v6708 = vld [vmem:[%s7 + $0xe4] sm:$0xf]
          %v6709 = vld [vmem:[%s7 + $0xe8] sm:$0xf]
          %v6710 = vld [vmem:[%s7 + $0xec] sm:$0xf]
          %v6711 = vld [vmem:[%s7 + $0xf0] sm:$0xf]
          %v6712 = vld [vmem:[%s7 + $0xf4] sm:$0xf]
          %v6713 = vld [vmem:[%s7 + $0xf8] sm:$0xf]
          %v6714 = vld [vmem:[%s7 + $0xfc] sm:$0xf]
          %v6715 = vld [vmem:[%s7 + $0x100] sm:$0xf]
          %v6716 = vld [vmem:[%s7 + $0x104] sm:$0xf]
          %v6717 = vld [vmem:[%s7 + $0x108] sm:$0xf]
          %v6718 = vld [vmem:[%s7 + $0x10c] sm:$0xf]
          %v6719 = vld [vmem:[%s7 + $0x110] sm:$0xf]
          %v6720 = vld [vmem:[%s7 + $0x114] sm:$0xf]
          %v6721 = vld [vmem:[%s7 + $0x118] sm:$0xf]
          %v6722 = vld [vmem:[%s7 + $0x11c] sm:$0xf]
          %v6723 = vld [vmem:[%s7 + $0x120] sm:$0xf]
          %v6724 = vld [vmem:[%s7 + $0x124] sm:$0xf]
          %v6725 = vld [vmem:[%s7 + $0x128] sm:$0xf]
          %v6726 = vld [vmem:[%s7 + $0x12c] sm:$0xf]
          %v6727 = vld [vmem:[%s7 + $0x130] sm:$0xf]
          %v6728 = vld [vmem:[%s7 + $0x134] sm:$0xf]
          %v6729 = vld [vmem:[%s7 + $0x138] sm:$0xf]
          %v6730 = vld [vmem:[%s7 + $0x13c] sm:$0xf]
          %v6731 = vld [vmem:[%s7 + $0x140] sm:$0xf]
          %v6732 = vld [vmem:[%s7 + $0x144] sm:$0xf]
          %v6733 = vld [vmem:[%s7 + $0x148] sm:$0xf]
          %v6734 = vld [vmem:[%s7 + $0x14c] sm:$0xf]
          %v6735 = vld [vmem:[%s7 + $0x150] sm:$0xf]
          %v6736 = vld [vmem:[%s7 + $0x154] sm:$0xf]
          %v6737 = vld [vmem:[%s7 + $0x158] sm:$0xf]
          %v6738 = vld [vmem:[%s7 + $0x15c] sm:$0xf]
          %v6739 = vld [vmem:[%s7 + $0x160] sm:$0xf]
          %v6740 = vld [vmem:[%s7 + $0x164] sm:$0xf]
          %v6741 = vld [vmem:[%s7 + $0x168] sm:$0xf]
          %v6742 = vld [vmem:[%s7 + $0x16c] sm:$0xf]
          %v6743 = vld [vmem:[%s7 + $0x170] sm:$0xf]
          %v6744 = vld [vmem:[%s7 + $0x174] sm:$0xf]
          %v6745 = vld [vmem:[%s7 + $0x178] sm:$0xf]
          %v6746 = vld [vmem:[%s7 + $0x17c] sm:$0xf]
          %v6747 = vld [vmem:[%s7 + $0x180] sm:$0xf]
          %v6748 = vld [vmem:[%s7 + $0x184] sm:$0xf]
          %v6749 = vld [vmem:[%s7 + $0x188] sm:$0xf]
          %v6750 = vld [vmem:[%s7 + $0x18c] sm:$0xf]
          %v6751 = vld [vmem:[%s7 + $0x190] sm:$0xf]
          %v6752 = vld [vmem:[%s7 + $0x194] sm:$0xf]
          %v6753 = vld [vmem:[%s7 + $0x198] sm:$0xf]
          %v6754 = vld [vmem:[%s7 + $0x19c] sm:$0xf]
          %v6755 = vld [vmem:[%s7 + $0x1a0] sm:$0xf]
          %v6756 = vld [vmem:[%s7 + $0x1a4] sm:$0xf]
          %v6757 = vld [vmem:[%s7 + $0x1a8] sm:$0xf]
          %v6758 = vld [vmem:[%s7 + $0x1ac] sm:$0xf]
          %v6759 = vld [vmem:[%s7 + $0x1b0] sm:$0xf]
          %v6760 = vld [vmem:[%s7 + $0x1b4] sm:$0xf]
          %v6761 = vld [vmem:[%s7 + $0x1b8] sm:$0xf]
          %v6762 = vld [vmem:[%s7 + $0x1bc] sm:$0xf]
          %v6763 = vld [vmem:[%s7 + $0x1c0] sm:$0xf]
          %v6764 = vld [vmem:[%s7 + $0x1c4] sm:$0xf]
          %v6765 = vld [vmem:[%s7 + $0x1c8] sm:$0xf]
          %v6766 = vld [vmem:[%s7 + $0x1cc] sm:$0xf]
          %v6767 = vld [vmem:[%s7 + $0x1d0] sm:$0xf]
          %v6768 = vld [vmem:[%s7 + $0x1d4] sm:$0xf]
          %v6769 = vld [vmem:[%s7 + $0x1d8] sm:$0xf]
          %v6770 = vld [vmem:[%s7 + $0x1dc] sm:$0xf]
          %v6771 = vld [vmem:[%s7 + $0x1e0] sm:$0xf]
          %v6772 = vld [vmem:[%s7 + $0x1e4] sm:$0xf]
          %v6773 = vld [vmem:[%s7 + $0x1e8] sm:$0xf]
          %v6774 = vld [vmem:[%s7 + $0x1ec] sm:$0xf]
          %v6775 = vld [vmem:[%s7 + $0x1f0] sm:$0xf]
          %v6776 = vld [vmem:[%s7 + $0x1f4] sm:$0xf]
          %v6777 = vld [vmem:[%s7 + $0x1f8] sm:$0xf]
          %v6778 = vld [vmem:[%s7 + $0x1fc] sm:$0xf]
          %v6779 = vld [vmem:[%s7 + $0x200] sm:$0xf]
          %v6780 = vld [vmem:[%s7 + $0x204] sm:$0xf]
          %v6781 = vld [vmem:[%s7 + $0x208] sm:$0xf]
          %v6782 = vld [vmem:[%s7 + $0x20c] sm:$0xf]
          %v6783 = vld [vmem:[%s7 + $0x210] sm:$0xf]
          %v6784 = vld [vmem:[%s7 + $0x214] sm:$0xf]
          %v6785 = vld [vmem:[%s7 + $0x218] sm:$0xf]
          %v6786 = vld [vmem:[%s7 + $0x21c] sm:$0xf]
          %v6787 = vld [vmem:[%s7 + $0x220] sm:$0xf]
          %v6788 = vld [vmem:[%s7 + $0x224] sm:$0xf]
          %v6789 = vld [vmem:[%s7 + $0x228] sm:$0xf]
          %v6790 = vld [vmem:[%s7 + $0x22c] sm:$0xf]
          %v6791 = vld [vmem:[%s7 + $0x230] sm:$0xf]
          %v6792 = vld [vmem:[%s7 + $0x234] sm:$0xf]
          %v6793 = vld [vmem:[%s7 + $0x238] sm:$0xf]
          %v6794 = vld [vmem:[%s7 + $0x23c] sm:$0xf]
          %v6795 = vld [vmem:[%s7 + $0x240] sm:$0xf]
          %v6796 = vld [vmem:[%s7 + $0x244] sm:$0xf]
          %v6797 = vld [vmem:[%s7 + $0x248] sm:$0xf]
          %v6798 = vld [vmem:[%s7 + $0x24c] sm:$0xf]
          %v6799 = vld [vmem:[%s7 + $0x250] sm:$0xf]
          %v6800 = vld [vmem:[%s7 + $0x254] sm:$0xf]
          %v6801 = vld [vmem:[%s7 + $0x258] sm:$0xf]
          %v6802 = vld [vmem:[%s7 + $0x25c] sm:$0xf]
          %v6803 = vld [vmem:[%s7 + $0x260] sm:$0xf]
          %v6804 = vld [vmem:[%s7 + $0x264] sm:$0xf]
          %v6805 = vld [vmem:[%s7 + $0x268] sm:$0xf]
          %v6806 = vld [vmem:[%s7 + $0x26c] sm:$0xf]
          %v6807 = vld [vmem:[%s7 + $0x270] sm:$0xf]
          %v6808 = vld [vmem:[%s7 + $0x274] sm:$0xf]
          %v6809 = vld [vmem:[%s7 + $0x278] sm:$0xf]
          %v6810 = vld [vmem:[%s7 + $0x27c] sm:$0xf]
          %v6811 = vld [vmem:[%s7 + $0x280] sm:$0xf]
          %v6812 = vld [vmem:[%s7 + $0x284] sm:$0xf]
          %v6813 = vld [vmem:[%s7 + $0x288] sm:$0xf]
          %v6814 = vld [vmem:[%s7 + $0x28c] sm:$0xf]
          %v6815 = vld [vmem:[%s7 + $0x290] sm:$0xf]
          %v6816 = vld [vmem:[%s7 + $0x294] sm:$0xf]
          %v6817 = vld [vmem:[%s7 + $0x298] sm:$0xf]
          %v6818 = vld [vmem:[%s7 + $0x29c] sm:$0xf]
          %v6819 = vld [vmem:[%s7 + $0x2a0] sm:$0xf]
          %v6820 = vld [vmem:[%s7 + $0x2a4] sm:$0xf]
          %v6821 = vld [vmem:[%s7 + $0x2a8] sm:$0xf]
          %v6822 = vld [vmem:[%s7 + $0x2ac] sm:$0xf]
          %v6823 = vld [vmem:[%s7 + $0x2b0] sm:$0xf]
          %v6824 = vld [vmem:[%s7 + $0x2b4] sm:$0xf]
          %v6825 = vld [vmem:[%s7 + $0x2b8] sm:$0xf]
          %v6826 = vld [vmem:[%s7 + $0x2bc] sm:$0xf]
          %v6827 = vld [vmem:[%s7 + $0x2c0] sm:$0xf]
          %v6828 = vld [vmem:[%s7 + $0x2c4] sm:$0xf]
          %v6829 = vld [vmem:[%s7 + $0x2c8] sm:$0xf]
          %v6830 = vld [vmem:[%s7 + $0x2cc] sm:$0xf]
          %v6831 = vld [vmem:[%s7 + $0x2d0] sm:$0xf]
          %v6832 = vld [vmem:[%s7 + $0x2d4] sm:$0xf]
          %v6833 = vld [vmem:[%s7 + $0x2d8] sm:$0xf]
          %v6834 = vld [vmem:[%s7 + $0x2dc] sm:$0xf]
          %v6835 = vld [vmem:[%s7 + $0x2e0] sm:$0xf]
          %v6836 = vld [vmem:[%s7 + $0x2e4] sm:$0xf]
          %v6837 = vld [vmem:[%s7 + $0x2e8] sm:$0xf]
          %v6838 = vld [vmem:[%s7 + $0x2ec] sm:$0xf]
          %v6839 = vld [vmem:[%s7 + $0x2f0] sm:$0xf]
          %v6840 = vld [vmem:[%s7 + $0x2f4] sm:$0xf]
          %v6841 = vld [vmem:[%s7 + $0x2f8] sm:$0xf]
          %v6842 = vld [vmem:[%s7 + $0x2fc] sm:$0xf]
          %v6843 = vld [vmem:[%s8] sm:$0x1]
          %v7036 = vunpack.c.l.b16 %v6651
          %v7037 = vunpack.c.l.b16 %v6652
          %v7038 = vunpack.c.l.b16 %v6653
          %v7039 = vunpack.c.l.b16 %v6654
          %v7040 = vunpack.c.l.b16 %v6655
          %v7041 = vunpack.c.l.b16 %v6656
          %v7042 = vunpack.c.l.b16 %v6657
          %v7043 = vunpack.c.l.b16 %v6658
          %v7044 = vunpack.c.l.b16 %v6659
          %v7045 = vunpack.c.l.b16 %v6660
          %v7046 = vunpack.c.l.b16 %v6661
          %v7047 = vunpack.c.l.b16 %v6662
          %v7048 = vunpack.c.l.b16 %v6663
          %v7049 = vunpack.c.l.b16 %v6664
          %v7050 = vunpack.c.l.b16 %v6665
          %v7051 = vunpack.c.l.b16 %v6666
          %v7052 = vunpack.c.l.b16 %v6667
          %v7053 = vunpack.c.l.b16 %v6668
          %v7054 = vunpack.c.l.b16 %v6669
          %v7055 = vunpack.c.l.b16 %v6670
          %v7056 = vunpack.c.l.b16 %v6671
          %v7057 = vunpack.c.l.b16 %v6672
          %v7058 = vunpack.c.l.b16 %v6673
          %v7059 = vunpack.c.l.b16 %v6674
          %v7060 = vunpack.c.l.b16 %v6675
          %v7061 = vunpack.c.l.b16 %v6676
          %v7062 = vunpack.c.l.b16 %v6677
          %v7063 = vunpack.c.l.b16 %v6678
          %v7064 = vunpack.c.l.b16 %v6679
          %v7065 = vunpack.c.l.b16 %v6680
          %v7066 = vunpack.c.l.b16 %v6681
          %v7067 = vunpack.c.l.b16 %v6682
          %v7068 = vunpack.c.l.b16 %v6683
          %v7069 = vunpack.c.l.b16 %v6684
          %v7070 = vunpack.c.l.b16 %v6685
          %v7071 = vunpack.c.l.b16 %v6686
          %v7072 = vunpack.c.l.b16 %v6687
          %v7073 = vunpack.c.l.b16 %v6688
          %v7074 = vunpack.c.l.b16 %v6689
          %v7075 = vunpack.c.l.b16 %v6690
          %v7076 = vunpack.c.l.b16 %v6691
          %v7077 = vunpack.c.l.b16 %v6692
          %v7078 = vunpack.c.l.b16 %v6693
          %v7079 = vunpack.c.l.b16 %v6694
          %v7080 = vunpack.c.l.b16 %v6695
          %v7081 = vunpack.c.l.b16 %v6696
          %v7082 = vunpack.c.l.b16 %v6697
          %v7083 = vunpack.c.l.b16 %v6698
          %v7084 = vunpack.c.l.b16 %v6699
          %v7085 = vunpack.c.l.b16 %v6700
          %v7086 = vunpack.c.l.b16 %v6701
          %v7087 = vunpack.c.l.b16 %v6702
          %v7088 = vunpack.c.l.b16 %v6703
          %v7089 = vunpack.c.l.b16 %v6704
          %v7090 = vunpack.c.l.b16 %v6705
          %v7091 = vunpack.c.l.b16 %v6706
          %v7092 = vunpack.c.l.b16 %v6707
          %v7093 = vunpack.c.l.b16 %v6708
          %v7094 = vunpack.c.l.b16 %v6709
          %v7095 = vunpack.c.l.b16 %v6710
          %v7096 = vunpack.c.l.b16 %v6711
          %v7097 = vunpack.c.l.b16 %v6712
          %v7098 = vunpack.c.l.b16 %v6713
          %v7099 = vunpack.c.l.b16 %v6714
          %v7100 = vunpack.c.l.b16 %v6715
          %v7101 = vunpack.c.l.b16 %v6716
          %v7102 = vunpack.c.l.b16 %v6717
          %v7103 = vunpack.c.l.b16 %v6718
          %v7104 = vunpack.c.l.b16 %v6719
          %v7105 = vunpack.c.l.b16 %v6720
          %v7106 = vunpack.c.l.b16 %v6721
          %v7107 = vunpack.c.l.b16 %v6722
          %v7108 = vunpack.c.l.b16 %v6723
          %v7109 = vunpack.c.l.b16 %v6724
          %v7110 = vunpack.c.l.b16 %v6725
          %v7111 = vunpack.c.l.b16 %v6726
          %v7112 = vunpack.c.l.b16 %v6727
          %v7113 = vunpack.c.l.b16 %v6728
          %v7114 = vunpack.c.l.b16 %v6729
          %v7115 = vunpack.c.l.b16 %v6730
          %v7116 = vunpack.c.l.b16 %v6731
          %v7117 = vunpack.c.l.b16 %v6732
          %v7118 = vunpack.c.l.b16 %v6733
          %v7119 = vunpack.c.l.b16 %v6734
          %v7120 = vunpack.c.l.b16 %v6735
          %v7121 = vunpack.c.l.b16 %v6736
          %v7122 = vunpack.c.l.b16 %v6737
          %v7123 = vunpack.c.l.b16 %v6738
          %v7124 = vunpack.c.l.b16 %v6739
          %v7125 = vunpack.c.l.b16 %v6740
          %v7126 = vunpack.c.l.b16 %v6741
          %v7127 = vunpack.c.l.b16 %v6742
          %v7128 = vunpack.c.l.b16 %v6743
          %v7129 = vunpack.c.l.b16 %v6744
          %v7130 = vunpack.c.l.b16 %v6745
          %v7131 = vunpack.c.l.b16 %v6746
          %v7132 = vunpack.c.l.b16 %v6747
          %v7133 = vunpack.c.l.b16 %v6748
          %v7134 = vunpack.c.l.b16 %v6749
          %v7135 = vunpack.c.l.b16 %v6750
          %v7136 = vunpack.c.l.b16 %v6751
          %v7137 = vunpack.c.l.b16 %v6752
          %v7138 = vunpack.c.l.b16 %v6753
          %v7139 = vunpack.c.l.b16 %v6754
          %v7140 = vunpack.c.l.b16 %v6755
          %v7141 = vunpack.c.l.b16 %v6756
          %v7142 = vunpack.c.l.b16 %v6757
          %v7143 = vunpack.c.l.b16 %v6758
          %v7144 = vunpack.c.l.b16 %v6759
          %v7145 = vunpack.c.l.b16 %v6760
          %v7146 = vunpack.c.l.b16 %v6761
          %v7147 = vunpack.c.l.b16 %v6762
          %v7148 = vunpack.c.l.b16 %v6763
          %v7149 = vunpack.c.l.b16 %v6764
          %v7150 = vunpack.c.l.b16 %v6765
          %v7151 = vunpack.c.l.b16 %v6766
          %v7152 = vunpack.c.l.b16 %v6767
          %v7153 = vunpack.c.l.b16 %v6768
          %v7154 = vunpack.c.l.b16 %v6769
          %v7155 = vunpack.c.l.b16 %v6770
          %v7156 = vunpack.c.l.b16 %v6771
          %v7157 = vunpack.c.l.b16 %v6772
          %v7158 = vunpack.c.l.b16 %v6773
          %v7159 = vunpack.c.l.b16 %v6774
          %v7160 = vunpack.c.l.b16 %v6775
          %v7161 = vunpack.c.l.b16 %v6776
          %v7162 = vunpack.c.l.b16 %v6777
          %v7163 = vunpack.c.l.b16 %v6778
          %v7164 = vunpack.c.l.b16 %v6779
          %v7165 = vunpack.c.l.b16 %v6780
          %v7166 = vunpack.c.l.b16 %v6781
          %v7167 = vunpack.c.l.b16 %v6782
          %v7168 = vunpack.c.l.b16 %v6783
          %v7169 = vunpack.c.l.b16 %v6784
          %v7170 = vunpack.c.l.b16 %v6785
          %v7171 = vunpack.c.l.b16 %v6786
          %v7172 = vunpack.c.l.b16 %v6787
          %v7173 = vunpack.c.l.b16 %v6788
          %v7174 = vunpack.c.l.b16 %v6789
          %v7175 = vunpack.c.l.b16 %v6790
          %v7176 = vunpack.c.l.b16 %v6791
          %v7177 = vunpack.c.l.b16 %v6792
          %v7178 = vunpack.c.l.b16 %v6793
          %v7179 = vunpack.c.l.b16 %v6794
          %v7180 = vunpack.c.l.b16 %v6795
          %v7181 = vunpack.c.l.b16 %v6796
          %v7182 = vunpack.c.l.b16 %v6797
          %v7183 = vunpack.c.l.b16 %v6798
          %v7184 = vunpack.c.l.b16 %v6799
          %v7185 = vunpack.c.l.b16 %v6800
          %v7186 = vunpack.c.l.b16 %v6801
          %v7187 = vunpack.c.l.b16 %v6802
          %v7188 = vunpack.c.l.b16 %v6803
          %v7189 = vunpack.c.l.b16 %v6804
          %v7190 = vunpack.c.l.b16 %v6805
          %v7191 = vunpack.c.l.b16 %v6806
          %v7192 = vunpack.c.l.b16 %v6807
          %v7193 = vunpack.c.l.b16 %v6808
          %v7194 = vunpack.c.l.b16 %v6809
          %v7195 = vunpack.c.l.b16 %v6810
          %v7196 = vunpack.c.l.b16 %v6811
          %v7197 = vunpack.c.l.b16 %v6812
          %v7198 = vunpack.c.l.b16 %v6813
          %v7199 = vunpack.c.l.b16 %v6814
          %v7200 = vunpack.c.l.b16 %v6815
          %v7201 = vunpack.c.l.b16 %v6816
          %v7202 = vunpack.c.l.b16 %v6817
          %v7203 = vunpack.c.l.b16 %v6818
          %v7204 = vunpack.c.l.b16 %v6819
          %v7205 = vunpack.c.l.b16 %v6820
          %v7206 = vunpack.c.l.b16 %v6821
          %v7207 = vunpack.c.l.b16 %v6822
          %v7208 = vunpack.c.l.b16 %v6823
          %v7209 = vunpack.c.l.b16 %v6824
          %v7210 = vunpack.c.l.b16 %v6825
          %v7211 = vunpack.c.l.b16 %v6826
          %v7212 = vunpack.c.l.b16 %v6827
          %v7213 = vunpack.c.l.b16 %v6828
          %v7214 = vunpack.c.l.b16 %v6829
          %v7215 = vunpack.c.l.b16 %v6830
          %v7216 = vunpack.c.l.b16 %v6831
          %v7217 = vunpack.c.l.b16 %v6832
          %v7218 = vunpack.c.l.b16 %v6833
          %v7219 = vunpack.c.l.b16 %v6834
          %v7220 = vunpack.c.l.b16 %v6835
          %v7221 = vunpack.c.l.b16 %v6836
          %v7222 = vunpack.c.l.b16 %v6837
          %v7223 = vunpack.c.l.b16 %v6838
          %v7224 = vunpack.c.l.b16 %v6839
          %v7225 = vunpack.c.l.b16 %v6840
          %v7226 = vunpack.c.l.b16 %v6841
          %v7227 = vunpack.c.l.b16 %v6842
          %v7228 = vpack.c.b16 %v7037, %v7036
          %v7229 = vpack.c.b16 %v7039, %v7038
          %v7230 = vpack.c.b16 %v7041, %v7040
          %v7231 = vpack.c.b16 %v7043, %v7042
          %v7232 = vpack.c.b16 %v7045, %v7044
          %v7233 = vpack.c.b16 %v7047, %v7046
          %v7234 = vpack.c.b16 %v7049, %v7048
          %v7235 = vpack.c.b16 %v7051, %v7050
          %v7236 = vpack.c.b16 %v7053, %v7052
          %v7237 = vpack.c.b16 %v7055, %v7054
          %v7238 = vpack.c.b16 %v7057, %v7056
          %v7239 = vpack.c.b16 %v7059, %v7058
          %v7240 = vpack.c.b16 %v7061, %v7060
          %v7241 = vpack.c.b16 %v7063, %v7062
          %v7242 = vpack.c.b16 %v7065, %v7064
          %v7243 = vpack.c.b16 %v7067, %v7066
          %v7244 = vpack.c.b16 %v7069, %v7068
          %v7245 = vpack.c.b16 %v7071, %v7070
          %v7246 = vpack.c.b16 %v7073, %v7072
          %v7247 = vpack.c.b16 %v7075, %v7074
          %v7248 = vpack.c.b16 %v7077, %v7076
          %v7249 = vpack.c.b16 %v7079, %v7078
          %v7250 = vpack.c.b16 %v7081, %v7080
          %v7251 = vpack.c.b16 %v7083, %v7082
          %v7252 = vpack.c.b16 %v7085, %v7084
          %v7253 = vpack.c.b16 %v7087, %v7086
          %v7254 = vpack.c.b16 %v7089, %v7088
          %v7255 = vpack.c.b16 %v7091, %v7090
          %v7256 = vpack.c.b16 %v7093, %v7092
          %v7257 = vpack.c.b16 %v7095, %v7094
          %v7258 = vpack.c.b16 %v7097, %v7096
          %v7259 = vpack.c.b16 %v7099, %v7098
          %v7260 = vpack.c.b16 %v7101, %v7100
          %v7261 = vpack.c.b16 %v7103, %v7102
          %v7262 = vpack.c.b16 %v7105, %v7104
          %v7263 = vpack.c.b16 %v7107, %v7106
          %v7264 = vpack.c.b16 %v7109, %v7108
          %v7265 = vpack.c.b16 %v7111, %v7110
          %v7266 = vpack.c.b16 %v7113, %v7112
          %v7267 = vpack.c.b16 %v7115, %v7114
          %v7268 = vpack.c.b16 %v7117, %v7116
          %v7269 = vpack.c.b16 %v7119, %v7118
          %v7270 = vpack.c.b16 %v7121, %v7120
          %v7271 = vpack.c.b16 %v7123, %v7122
          %v7272 = vpack.c.b16 %v7125, %v7124
          %v7273 = vpack.c.b16 %v7127, %v7126
          %v7274 = vpack.c.b16 %v7129, %v7128
          %v7275 = vpack.c.b16 %v7131, %v7130
          %v7276 = vpack.c.b16 %v7133, %v7132
          %v7277 = vpack.c.b16 %v7135, %v7134
          %v7278 = vpack.c.b16 %v7137, %v7136
          %v7279 = vpack.c.b16 %v7139, %v7138
          %v7280 = vpack.c.b16 %v7141, %v7140
          %v7281 = vpack.c.b16 %v7143, %v7142
          %v7282 = vpack.c.b16 %v7145, %v7144
          %v7283 = vpack.c.b16 %v7147, %v7146
          %v7284 = vpack.c.b16 %v7149, %v7148
          %v7285 = vpack.c.b16 %v7151, %v7150
          %v7286 = vpack.c.b16 %v7153, %v7152
          %v7287 = vpack.c.b16 %v7155, %v7154
          %v7288 = vpack.c.b16 %v7157, %v7156
          %v7289 = vpack.c.b16 %v7159, %v7158
          %v7290 = vpack.c.b16 %v7161, %v7160
          %v7291 = vpack.c.b16 %v7163, %v7162
          %v7292 = vpack.c.b16 %v7165, %v7164
          %v7293 = vpack.c.b16 %v7167, %v7166
          %v7294 = vpack.c.b16 %v7169, %v7168
          %v7295 = vpack.c.b16 %v7171, %v7170
          %v7296 = vpack.c.b16 %v7173, %v7172
          %v7297 = vpack.c.b16 %v7175, %v7174
          %v7298 = vpack.c.b16 %v7177, %v7176
          %v7299 = vpack.c.b16 %v7179, %v7178
          %v7300 = vpack.c.b16 %v7181, %v7180
          %v7301 = vpack.c.b16 %v7183, %v7182
          %v7302 = vpack.c.b16 %v7185, %v7184
          %v7303 = vpack.c.b16 %v7187, %v7186
          %v7304 = vpack.c.b16 %v7189, %v7188
          %v7305 = vpack.c.b16 %v7191, %v7190
          %v7306 = vpack.c.b16 %v7193, %v7192
          %v7307 = vpack.c.b16 %v7195, %v7194
          %v7308 = vpack.c.b16 %v7197, %v7196
          %v7309 = vpack.c.b16 %v7199, %v7198
          %v7310 = vpack.c.b16 %v7201, %v7200
          %v7311 = vpack.c.b16 %v7203, %v7202
          %v7312 = vpack.c.b16 %v7205, %v7204
          %v7313 = vpack.c.b16 %v7207, %v7206
          %v7314 = vpack.c.b16 %v7209, %v7208
          %v7315 = vpack.c.b16 %v7211, %v7210
          %v7316 = vpack.c.b16 %v7213, %v7212
          %v7317 = vpack.c.b16 %v7215, %v7214
          %v7318 = vpack.c.b16 %v7217, %v7216
          %v7319 = vpack.c.b16 %v7219, %v7218
          %v7320 = vpack.c.b16 %v7221, %v7220
          %v7321 = vpack.c.b16 %v7223, %v7222
          %v7322 = vpack.c.b16 %v7225, %v7224
          %v7323 = vpack.c.b16 %v7227, %v7226
          %7420 = vmatpush.bf16.msra.mxu0 %v7235
          %7421 = vmatpush.bf16.msra.mxu0 %v7234
          %7422 = vmatpush.bf16.msra.mxu0 %v7233
          %7423 = vmatpush.bf16.msra.mxu0 %v7232
          %7424 = vmatpush.bf16.msra.mxu0 %v7231
          %7425 = vmatpush.bf16.msra.mxu0 %v7230
          %7426 = vmatpush.bf16.msra.mxu0 %v7229
          %7427 = vmatpush.bf16.msra.mxu0 %v7228
          %7428 = vmatmul.bf16.gmra.mxu0 %v6639
          %v7429 = vpop.f32.mrf.mxu0
          %v7430 = vadd.f32 %v6843, %v7429
          %v7431 = vpop.f32.mrf.mxu0
          %7432 = vdwg.mxu0
          %7433 = vmatpush.bf16.msra.mxu0 %v7243
          %7434 = vmatpush.bf16.msra.mxu0 %v7242
          %7435 = vmatpush.bf16.msra.mxu0 %v7241
          %7436 = vmatpush.bf16.msra.mxu0 %v7240
          %7437 = vmatpush.bf16.msra.mxu0 %v7239
          %7438 = vmatpush.bf16.msra.mxu0 %v7238
          %7439 = vmatpush.bf16.msra.mxu0 %v7237
          %7440 = vmatpush.bf16.msra.mxu0 %v7236
          %7441 = vmatmul.bf16.gmra.mxu0 %v6640
          %v7442 = vpop.f32.mrf.mxu0
          %v7443 = vadd.f32 %v7430, %v7442
          %v7444 = vpop.f32.mrf.mxu0
          %7445 = vdwg.mxu0
          %7446 = vmatpush.bf16.msra.mxu0 %v7251
          %7447 = vmatpush.bf16.msra.mxu0 %v7250
          %7448 = vmatpush.bf16.msra.mxu0 %v7249
          %7449 = vmatpush.bf16.msra.mxu0 %v7248
          %7450 = vmatpush.bf16.msra.mxu0 %v7247
          %7451 = vmatpush.bf16.msra.mxu0 %v7246
          %7452 = vmatpush.bf16.msra.mxu0 %v7245
          %7453 = vmatpush.bf16.msra.mxu0 %v7244
          %7454 = vmatmul.bf16.gmra.mxu0 %v6641
          %v7455 = vpop.f32.mrf.mxu0
          %v7456 = vadd.f32 %v7443, %v7455
          %v7457 = vpop.f32.mrf.mxu0
          %7458 = vdwg.mxu0
          %7459 = vmatpush.bf16.msra.mxu0 %v7259
          %7460 = vmatpush.bf16.msra.mxu0 %v7258
          %7461 = vmatpush.bf16.msra.mxu0 %v7257
          %7462 = vmatpush.bf16.msra.mxu0 %v7256
          %7463 = vmatpush.bf16.msra.mxu0 %v7255
          %7464 = vmatpush.bf16.msra.mxu0 %v7254
          %7465 = vmatpush.bf16.msra.mxu0 %v7253
          %7466 = vmatpush.bf16.msra.mxu0 %v7252
          %7467 = vmatmul.bf16.gmra.mxu0 %v6642
          %v7468 = vpop.f32.mrf.mxu0
          %v7469 = vadd.f32 %v7456, %v7468
          %v7470 = vpop.f32.mrf.mxu0
          %7471 = vdwg.mxu0
          %7472 = vmatpush.bf16.msra.mxu0 %v7267
          %7473 = vmatpush.bf16.msra.mxu0 %v7266
          %7474 = vmatpush.bf16.msra.mxu0 %v7265
          %7475 = vmatpush.bf16.msra.mxu0 %v7264
          %7476 = vmatpush.bf16.msra.mxu0 %v7263
          %7477 = vmatpush.bf16.msra.mxu0 %v7262
          %7478 = vmatpush.bf16.msra.mxu0 %v7261
          %7479 = vmatpush.bf16.msra.mxu0 %v7260
          %7480 = vmatmul.bf16.gmra.mxu0 %v6643
          %v7481 = vpop.f32.mrf.mxu0
          %v7482 = vadd.f32 %v7469, %v7481
          %v7483 = vpop.f32.mrf.mxu0
          %7484 = vdwg.mxu0
          %7485 = vmatpush.bf16.msra.mxu0 %v7275
          %7486 = vmatpush.bf16.msra.mxu0 %v7274
          %7487 = vmatpush.bf16.msra.mxu0 %v7273
          %7488 = vmatpush.bf16.msra.mxu0 %v7272
          %7489 = vmatpush.bf16.msra.mxu0 %v7271
          %7490 = vmatpush.bf16.msra.mxu0 %v7270
          %7491 = vmatpush.bf16.msra.mxu0 %v7269
          %7492 = vmatpush.bf16.msra.mxu0 %v7268
          %7493 = vmatmul.bf16.gmra.mxu0 %v6644
          %v7494 = vpop.f32.mrf.mxu0
          %v7495 = vadd.f32 %v7482, %v7494
          %v7496 = vpop.f32.mrf.mxu0
          %7497 = vdwg.mxu0
          %7498 = vmatpush.bf16.msra.mxu0 %v7283
          %7499 = vmatpush.bf16.msra.mxu0 %v7282
          %7500 = vmatpush.bf16.msra.mxu0 %v7281
          %7501 = vmatpush.bf16.msra.mxu0 %v7280
          %7502 = vmatpush.bf16.msra.mxu0 %v7279
          %7503 = vmatpush.bf16.msra.mxu0 %v7278
          %7504 = vmatpush.bf16.msra.mxu0 %v7277
          %7505 = vmatpush.bf16.msra.mxu0 %v7276
          %7506 = vmatmul.bf16.gmra.mxu0 %v6645
          %v7507 = vpop.f32.mrf.mxu0
          %v7508 = vadd.f32 %v7495, %v7507
          %v7509 = vpop.f32.mrf.mxu0
          %7510 = vdwg.mxu0
          %7511 = vmatpush.bf16.msra.mxu0 %v7291
          %7512 = vmatpush.bf16.msra.mxu0 %v7290
          %7513 = vmatpush.bf16.msra.mxu0 %v7289
          %7514 = vmatpush.bf16.msra.mxu0 %v7288
          %7515 = vmatpush.bf16.msra.mxu0 %v7287
          %7516 = vmatpush.bf16.msra.mxu0 %v7286
          %7517 = vmatpush.bf16.msra.mxu0 %v7285
          %7518 = vmatpush.bf16.msra.mxu0 %v7284
          %7519 = vmatmul.bf16.gmra.mxu0 %v6646
          %v7520 = vpop.f32.mrf.mxu0
          %v7521 = vadd.f32 %v7508, %v7520
          %v7522 = vpop.f32.mrf.mxu0
          %7523 = vdwg.mxu0
          %7524 = vmatpush.bf16.msra.mxu0 %v7299
          %7525 = vmatpush.bf16.msra.mxu0 %v7298
          %7526 = vmatpush.bf16.msra.mxu0 %v7297
          %7527 = vmatpush.bf16.msra.mxu0 %v7296
          %7528 = vmatpush.bf16.msra.mxu0 %v7295
          %7529 = vmatpush.bf16.msra.mxu0 %v7294
          %7530 = vmatpush.bf16.msra.mxu0 %v7293
          %7531 = vmatpush.bf16.msra.mxu0 %v7292
          %7532 = vmatmul.bf16.gmra.mxu0 %v6647
          %v7533 = vpop.f32.mrf.mxu0
          %v7534 = vadd.f32 %v7521, %v7533
          %v7535 = vpop.f32.mrf.mxu0
          %7536 = vdwg.mxu0
          %7537 = vmatpush.bf16.msra.mxu0 %v7307
          %7538 = vmatpush.bf16.msra.mxu0 %v7306
          %7539 = vmatpush.bf16.msra.mxu0 %v7305
          %7540 = vmatpush.bf16.msra.mxu0 %v7304
          %7541 = vmatpush.bf16.msra.mxu0 %v7303
          %7542 = vmatpush.bf16.msra.mxu0 %v7302
          %7543 = vmatpush.bf16.msra.mxu0 %v7301
          %7544 = vmatpush.bf16.msra.mxu0 %v7300
          %7545 = vmatmul.bf16.gmra.mxu0 %v6648
          %v7546 = vpop.f32.mrf.mxu0
          %v7547 = vadd.f32 %v7534, %v7546
          %v7548 = vpop.f32.mrf.mxu0
          %7549 = vdwg.mxu0
          %7550 = vmatpush.bf16.msra.mxu0 %v7315
          %7551 = vmatpush.bf16.msra.mxu0 %v7314
          %7552 = vmatpush.bf16.msra.mxu0 %v7313
          %7553 = vmatpush.bf16.msra.mxu0 %v7312
          %7554 = vmatpush.bf16.msra.mxu0 %v7311
          %7555 = vmatpush.bf16.msra.mxu0 %v7310
          %7556 = vmatpush.bf16.msra.mxu0 %v7309
          %7557 = vmatpush.bf16.msra.mxu0 %v7308
          %7558 = vmatmul.bf16.gmra.mxu0 %v6649
          %v7559 = vpop.f32.mrf.mxu0
          %v7560 = vadd.f32 %v7547, %v7559
          %v7561 = vpop.f32.mrf.mxu0
          %7562 = vdwg.mxu0
          %7563 = vmatpush.bf16.msra.mxu0 %v7323
          %7564 = vmatpush.bf16.msra.mxu0 %v7322
          %7565 = vmatpush.bf16.msra.mxu0 %v7321
          %7566 = vmatpush.bf16.msra.mxu0 %v7320
          %7567 = vmatpush.bf16.msra.mxu0 %v7319
          %7568 = vmatpush.bf16.msra.mxu0 %v7318
          %7569 = vmatpush.bf16.msra.mxu0 %v7317
          %7570 = vmatpush.bf16.msra.mxu0 %v7316
          %7571 = vmatmul.bf16.gmra.mxu0 %v6650
          %v7572 = vpop.f32.mrf.mxu0
          %v7573 = vadd.f32 %v7560, %v7572
          %v7574 = vpop.f32.mrf.mxu0
          %7575 = vdwg.mxu0
          %7576 = vst [vmem:[%s347] sm:$0x1] %v7573
        $region64: #{my_model_forward.1} parent=55 // pred_fallthru
          _
        %s7577 = sand.u32 %s239, 1
        %s7578 = scalar_lea.sflag [#allocation4], %s7577
        %s7579 = sand.u32 %s239, 1
        %s7580 = scalar_lea.vmem [#allocation3], %s7579
        // Predicated region
        $region65: #{my_model_forward.1} parent=55 // pred_check
          %p7581 = pneg %p249
        $region66: #{my_model_forward.1} parent=55 // pred_check_branch
          %7583 = sbr.rel (%p7581) target = $region68
        $region67: #{my_model_forward.1} parent=55 // pred_region
          %7585 = vsyncadd %s7578, 0
          %s7586 = scalar_lea.hbm %s9, %s27
          %s7588 = sshll.u32 %s7580, 4
          %s7589 = int_to_ptr.vmem [resolvable:$true] %s7588
          %s7590 = sshll.u32 %s7586, 4
          %s7591 = int_to_ptr.hbm [resolvable:$true] %s7590
          %7593 = dma.vmem_to_hbm [thread:$0]  %s7589, 16, %s7591, %s7578
        $region68: #{my_model_forward.1} parent=55 // pred_fallthru
          _
      $region56: #{my_model_forward.1} parent=5 // pred_fallthru
        _
      %p7594 = scmp.le.s32.totalorder 2, %s18
      // Predicated region
      $region69: #{my_model_forward.1} parent=5 // pred_check
        %p7595 = pneg %p7594
      $region70: #{my_model_forward.1} parent=5 // pred_check_branch
        %7597 = sbr.rel (%p7595) target = $region72
      $region71: #{my_model_forward.1} parent=5 // pred_region
        %s7598 = ssub.s32 %s18, 2
        // Predicated region
        $region73: #{my_model_forward.1} parent=71 // pred_check
          %p7599 = pneg %p255
        $region74: #{my_model_forward.1} parent=71 // pred_check_branch
          %7601 = sbr.rel (%p7599) target = $region76
        $region75: #{my_model_forward.1} parent=71 // pred_region
          %s7602 = sand.u32 %s240, 1
          %s7603 = scalar_lea.sflag [#allocation4], %s7602
          %s7604 = sand.u32 %s240, 1
          %s7605 = scalar_lea.vmem [#allocation3], %s7604
          %7607 = dma.done %s7603, 16
        $region76: #{my_model_forward.1} parent=71 // pred_fallthru
          _
      $region72: #{my_model_forward.1} parent=5 // pred_fallthru
        _
    $region6: #{my_model_forward.1} parent=1 // loop_footer
      %s22 = sadd.s32 1, %s18
    $region7: #{my_model_forward.1} parent=1 // loop_footer_branch
      %17 = sbr.rel target = $region3
    $region8: #{my_model_forward.1} parent=1 // loop_exit
      _
    %7608 = vsyncpa [#allocation4], 1
    %s7609 = scalar_lea.sflag [#allocation4], 1
    %7610 = vsyncpa %s7609, 1

</llo_original>
